<compile_context>
chip_gen: v7x
topology: tpu7x:2x2x1
jax: 0.10.0
libtpu: 0.0.40
codegen_flags: <defaults>
</compile_context>

<pallas_src>
import functools

import jax
import jax.numpy as jnp
from jax.experimental import pallas as pl
from jax.experimental.pallas import tpu as pltpu


# ---------------- fused Pallas kernel (hot path) ----------------

def _ac_fused_kernel(patches_ref, convw_ref, convb_ref, fcw_ref, fcb_ref,
                     headw_ref, headb_ref, out_ref):
    # patches: (64, K, TB)    feature-major im2col, batch on lanes, K = C*9
    # convw:   (64, 16, K)    conv weight broadcast over the 64 output pos.
    # convb:   (16, 1)
    # fcw:     (128, 1024)    fc_hidden weight, column = hw*16 + c (pre-baked)
    # fcb:     (128, 1)
    # headw:   (128, 128)     rows = [policy | value | zero-pad] outputs
    # headb:   (128, 1)
    # out:     (128, TB)      lane-dense, batch on lanes

    # --- conv 3x3 VALID + SiLU, batched over the 64 output positions ---
    z = jnp.einsum("hnk,hkb->hnb", convw_ref[...], patches_ref[...],
                   preferred_element_type=jnp.float32)          # (64, 16, TB)
    z = z + convb_ref[...]
    a = z * jax.nn.sigmoid(z)                                    # SiLU

    # merge (hw, c) -> 1024 contraction rows; layout-free (last dim unchanged,
    # merged second-to-last dim 16 is a sublane multiple).
    a2d = a.reshape(a.shape[0] * a.shape[1], a.shape[2])         # (1024, TB)

    # --- fc_hidden: single K=1024 MXU matmul + dSiLU (no materialized
    #     per-position intermediate, no reduction) ---
    h = jnp.dot(fcw_ref[...], a2d,
                preferred_element_type=jnp.float32) + fcb_ref[...]   # (128, TB)
    s = jax.nn.sigmoid(h)
    h = s * (1.0 + h * (1.0 - s))                                 # dSiLU

    # --- merged policy/value heads, single lane-dense store ---
    out_ref[...] = (jnp.dot(headw_ref[...], h,
                            preferred_element_type=jnp.float32)
                    + headb_ref[...])


# ---------------- JAX glue ----------------

def _round_up(n, m):
    return ((n + m - 1) // m) * m


def im2col_featmajor(x):
    """x: (B, C, 10, 10) -> (64, C*9, B)  [hw, c*9+kh*3+kw, b].

    Row ordering of the first axis = oh*8 + ow (conv output position); the
    second axis matches the PyTorch Conv2d weight layout c*9 + kh*3 + kw;
    batch lives on the last (lane) axis.
    """
    B, C, H, W = x.shape
    cols = [x[:, :, kh:kh + 8, kw:kw + 8] for kh in range(3) for kw in range(3)]
    p = jnp.stack(cols, axis=2)          # (B, C, 9, 8, 8)
    p = p.transpose(3, 4, 1, 2, 0)       # (8, 8, C, 9, B)
    return p.reshape(64, C * 9, B)


def prepare_params(params):
    """One-time weight repack (amortized across forward calls)."""
    C = params["conv_w"].shape[1]
    A = params["policy_w"].shape[0]
    K = C * 9
    assert A + 1 <= 128, "merged head layout needs num_actions + 1 <= 128"

    convw = params["conv_w"].reshape(16, K).astype(jnp.float32)    # (16, K)
    convw_b = jnp.broadcast_to(convw[None], (64, 16, K))            # (64, 16, K)
    convb = params["conv_b"].reshape(16, 1).astype(jnp.float32)

    # fc_w: (128, 1024) with PyTorch flat index c*64 + hw  ->  column hw*16 + c
    fcw = jnp.transpose(params["fc_w"].reshape(128, 16, 64),
                        (0, 2, 1)).reshape(128, 1024).astype(jnp.float32)
    fcb = params["fc_b"].reshape(128, 1).astype(jnp.float32)

    # Merge policy (A rows) + value (1 row) heads, zero-pad to 128 outputs.
    headw = jnp.zeros((128, 128), jnp.float32)
    headw = headw.at[:A, :].set(params["policy_w"])
    headw = headw.at[A, :].set(params["value_w"][0])
    headb = jnp.zeros((128, 1), jnp.float32)
    headb = headb.at[:A, 0].set(params["policy_b"])
    headb = headb.at[A, 0].set(params["value_b"][0])

    return {"convw": convw_b, "convb": convb, "fcw": fcw, "fcb": fcb,
            "headw": headw, "headb": headb}


def _pick_batch_tile(Bp):
    """Largest multiple-of-128 tile (<=512) dividing Bp, preferring >=2 steps."""
    if Bp <= 128:
        return Bp
    for cand in (512, 384, 256, 128):
        if Bp % cand == 0 and Bp // cand >= 2:
            return cand
    return 128


@functools.partial(jax.jit, static_argnames=("num_actions",))
def ac_network_forward(x, prep, num_actions):
    B = x.shape[0]
    x = x.reshape(B, -1, 10, 10).astype(jnp.float32)
    C = x.shape[1]
    K = C * 9

    Bp = _round_up(B, 128)
    TB = _pick_batch_tile(Bp)
    if Bp != B:
        x = jnp.pad(x, ((0, Bp - B), (0, 0), (0, 0), (0, 0)))

    patches = im2col_featmajor(x)                                 # (64, K, Bp)

    flops = 2 * Bp * (64 * 16 * K + 1024 * 128 + 128 * 128)
    transcendentals = Bp * (64 * 16 + 128)
    bytes_accessed = 4 * (64 * K * Bp + 64 * 16 * K + 16 + 128 * 1024 + 128
                          + 128 * 128 + 128 + 128 * Bp)

    out = pl.pallas_call(
        _ac_fused_kernel,
        out_shape=jax.ShapeDtypeStruct((128, Bp), jnp.float32),
        grid=(Bp // TB,),
        in_specs=[
            pl.BlockSpec((64, K, TB), lambda i: (0, 0, i)),       # patches
            pl.BlockSpec((64, 16, K), lambda i: (0, 0, 0)),       # conv weight
            pl.BlockSpec((16, 1), lambda i: (0, 0)),              # conv bias
            pl.BlockSpec((128, 1024), lambda i: (0, 0)),          # fc weight
            pl.BlockSpec((128, 1), lambda i: (0, 0)),             # fc bias
            pl.BlockSpec((128, 128), lambda i: (0, 0)),           # heads weight
            pl.BlockSpec((128, 1), lambda i: (0, 0)),             # heads bias
        ],
        out_specs=pl.BlockSpec((128, TB), lambda i: (0, i)),
        compiler_params=pltpu.CompilerParams(
            dimension_semantics=("parallel",),
            vmem_limit_bytes=48 * 1024 * 1024),
        cost_estimate=pl.CostEstimate(
            flops=flops, transcendentals=transcendentals,
            bytes_accessed=bytes_accessed),
    )(patches, prep["convw"], prep["convb"], prep["fcw"], prep["fcb"],
      prep["headw"], prep["headb"])

    policy = out[:num_actions, :B].T                              # (B, A)
    value = out[num_actions:num_actions + 1, :B].T                # (B, 1)
    return policy, value


# ---------------- deterministic synthetic parameters ----------------

def init_params(key, in_channels, num_actions):
    ks = jax.random.split(key, 6)
    return {
        "conv_w": jax.random.normal(ks[0], (16, in_channels, 3, 3), jnp.float32) * 0.1,
        "conv_b": jax.random.normal(ks[1], (16,), jnp.float32) * 0.1,
        "fc_w": jax.random.normal(ks[2], (128, 16 * 8 * 8), jnp.float32) * 0.03,
        "fc_b": jax.random.normal(ks[3], (128,), jnp.float32) * 0.03,
        "policy_w": jax.random.normal(ks[4], (num_actions, 128), jnp.float32) * 0.05,
        "policy_b": jax.random.normal(ks[5], (num_actions,), jnp.float32) * 0.05,
        # nn.init.constant_(value.weight/bias, 0.0)
        "value_w": jnp.zeros((1, 128), jnp.float32),
        "value_b": jnp.zeros((1,), jnp.float32),
    }


def reference_forward(x, params):
    """Pure-JAX reference mirroring the PyTorch forward exactly."""
    B = x.shape[0]
    x = x.reshape(B, -1, 10, 10)
    z = jax.lax.conv_general_dilated(
        x, params["conv_w"], window_strides=(1, 1), padding="VALID",
        dimension_numbers=("NCHW", "OIHW", "NCHW"),
    ) + params["conv_b"][None, :, None, None]
    z = z * jax.nn.sigmoid(z)                                  # SiLU
    flat = z.reshape(B, -1)
    h = flat @ params["fc_w"].T + params["fc_b"]
    s = jax.nn.sigmoid(h)
    h = s * (1.0 + h * (1.0 - s))                              # dSiLU
    policy = h @ params["policy_w"].T + params["policy_b"]
    value = h @ params["value_w"].T + params["value_b"]
    return policy, value


if __name__ == "__main__":
    B, in_channels, num_actions = 2, 4, 6
    key = jax.random.PRNGKey(0)
    k_x, k_p = jax.random.split(key)
    x = jax.random.normal(k_x, (B, in_channels, 10, 10), jnp.float32)
    params = init_params(k_p, in_channels, num_actions)

    prep = prepare_params(params)   # one-time weight repack (amortized)

    policy, value = jax.block_until_ready(
        ac_network_forward(x, prep, num_actions))
    policy_ref, value_ref = reference_forward(x, params)

    assert policy.shape == (B, num_actions) and value.shape == (B, 1)
    assert jnp.allclose(policy, policy_ref, rtol=1e-4, atol=1e-4)
    assert jnp.allclose(value, value_ref, rtol=1e-4, atol=1e-4)
    print("KERNEL_OK")
</pallas_src>

<mosaic_0001>
module attributes {stable_mosaic.version = 11 : i64} {
  func.func @_ac_fused_kernel(%arg0: i32, %arg1: memref<64x36x128xf32, #tpu.memory_space<vmem>>, %arg2: memref<64x16x36xf32, #tpu.memory_space<vmem>>, %arg3: memref<16x1xf32, #tpu.memory_space<vmem>>, %arg4: memref<128x1024xf32, #tpu.memory_space<vmem>>, %arg5: memref<128x1xf32, #tpu.memory_space<vmem>>, %arg6: memref<128x128xf32, #tpu.memory_space<vmem>>, %arg7: memref<128x1xf32, #tpu.memory_space<vmem>>, %arg8: memref<128x128xf32, #tpu.memory_space<vmem>>) attributes {dimension_semantics = [#tpu.dimension_semantics<parallel>], iteration_bounds = array<i64: 1>, scalar_prefetch = 0 : i64, scratch_operands = 0 : i64, tpu.core_type = #tpu.core_type<tc>, window_params = [{transform_indices = @transform_0, window_bounds = array<i64: 64, 36, 128>}, {pipeline_mode = #tpu.pipeline_mode<synchronous>, transform_indices = @transform_1, window_bounds = array<i64: 64, 16, 36>}, {pipeline_mode = #tpu.pipeline_mode<synchronous>, transform_indices = @transform_2, window_bounds = array<i64: 16, 1>}, {pipeline_mode = #tpu.pipeline_mode<synchronous>, transform_indices = @transform_3, window_bounds = array<i64: 128, 1024>}, {pipeline_mode = #tpu.pipeline_mode<synchronous>, transform_indices = @transform_4, window_bounds = array<i64: 128, 1>}, {pipeline_mode = #tpu.pipeline_mode<synchronous>, transform_indices = @transform_5, window_bounds = array<i64: 128, 128>}, {pipeline_mode = #tpu.pipeline_mode<synchronous>, transform_indices = @transform_6, window_bounds = array<i64: 128, 1>}, {transform_indices = @transform_7, window_bounds = array<i64: 128, 128>}]} {
    %c0 = arith.constant 0 : index
    %c0_0 = arith.constant 0 : index
    %c0_1 = arith.constant 0 : index
    %0 = vector.load %arg2[%c0, %c0_0, %c0_1] : memref<64x16x36xf32, #tpu.memory_space<vmem>>, vector<64x16x36xf32>
    %c0_2 = arith.constant 0 : index
    %c0_3 = arith.constant 0 : index
    %c0_4 = arith.constant 0 : index
    %1 = vector.load %arg1[%c0_2, %c0_3, %c0_4] : memref<64x36x128xf32, #tpu.memory_space<vmem>>, vector<64x36x128xf32>
    "tpu.trace_start"() <{level = 10 : i32, message = "hnk,hkb->hnb"}> : () -> ()
    %cst = arith.constant dense<0.000000e+00> : vector<64x16x128xf32>
    %2 = tpu.matmul %0, %1, %cst {dimension_numbers = #tpu.dot_dimension_numbers<[2], [1], [1], [2], [0, 0, 0, 1, 1, 2], [0], [0]>} : vector<64x16x36xf32>, vector<64x36x128xf32>, vector<64x16x128xf32> -> vector<64x16x128xf32>
    "tpu.trace_stop"() : () -> ()
    %c0_5 = arith.constant 0 : index
    %c0_6 = arith.constant 0 : index
    %3 = vector.load %arg3[%c0_5, %c0_6] : memref<16x1xf32, #tpu.memory_space<vmem>>, vector<16x1xf32>
    %4 = vector.shape_cast %3 : vector<16x1xf32> to vector<1x16x1xf32>
    %5 = vector.broadcast %4 : vector<1x16x1xf32> to vector<64x16x128xf32>
    %6 = arith.addf %2, %5 : vector<64x16x128xf32>
    %7 = arith.negf %6 : vector<64x16x128xf32>
    %8 = math.exp %7 : vector<64x16x128xf32>
    %cst_7 = arith.constant 1.000000e+00 : f32
    %9 = vector.broadcast %cst_7 : f32 to vector<64x16x128xf32>
    %10 = arith.addf %9, %8 : vector<64x16x128xf32>
    %11 = arith.divf %9, %10 : vector<64x16x128xf32>
    %12 = arith.mulf %6, %11 : vector<64x16x128xf32>
    %13 = vector.shape_cast %12 : vector<64x16x128xf32> to vector<1024x128xf32>
    %c0_8 = arith.constant 0 : index
    %c0_9 = arith.constant 0 : index
    %14 = vector.load %arg4[%c0_8, %c0_9] : memref<128x1024xf32, #tpu.memory_space<vmem>>, vector<128x1024xf32>
    %cst_10 = arith.constant dense<0.000000e+00> : vector<128x128xf32>
    %15 = tpu.matmul %14, %13, %cst_10 {dimension_numbers = #tpu.dot_dimension_numbers<[1], [0], [0], [1], [0, 0, 1, 1], [], []>} : vector<128x1024xf32>, vector<1024x128xf32>, vector<128x128xf32> -> vector<128x128xf32>
    %c0_11 = arith.constant 0 : index
    %c0_12 = arith.constant 0 : index
    %16 = vector.load %arg5[%c0_11, %c0_12] : memref<128x1xf32, #tpu.memory_space<vmem>>, vector<128x1xf32>
    %17 = vector.broadcast %16 : vector<128x1xf32> to vector<128x128xf32>
    %18 = arith.addf %15, %17 : vector<128x128xf32>
    %19 = arith.negf %18 : vector<128x128xf32>
    %20 = math.exp %19 : vector<128x128xf32>
    %cst_13 = arith.constant 1.000000e+00 : f32
    %21 = vector.broadcast %cst_13 : f32 to vector<128x128xf32>
    %22 = arith.addf %21, %20 : vector<128x128xf32>
    %23 = arith.divf %21, %22 : vector<128x128xf32>
    %cst_14 = arith.constant 1.000000e+00 : f32
    %24 = vector.broadcast %cst_14 : f32 to vector<128x128xf32>
    %25 = arith.subf %24, %23 : vector<128x128xf32>
    %26 = arith.mulf %18, %25 : vector<128x128xf32>
    %cst_15 = arith.constant 1.000000e+00 : f32
    %27 = vector.broadcast %cst_15 : f32 to vector<128x128xf32>
    %28 = arith.addf %27, %26 : vector<128x128xf32>
    %29 = arith.mulf %23, %28 : vector<128x128xf32>
    %c0_16 = arith.constant 0 : index
    %c0_17 = arith.constant 0 : index
    %30 = vector.load %arg6[%c0_16, %c0_17] : memref<128x128xf32, #tpu.memory_space<vmem>>, vector<128x128xf32>
    %cst_18 = arith.constant dense<0.000000e+00> : vector<128x128xf32>
    %31 = tpu.matmul %30, %29, %cst_18 {dimension_numbers = #tpu.dot_dimension_numbers<[1], [0], [0], [1], [0, 0, 1, 1], [], []>} : vector<128x128xf32>, vector<128x128xf32>, vector<128x128xf32> -> vector<128x128xf32>
    %c0_19 = arith.constant 0 : index
    %c0_20 = arith.constant 0 : index
    %32 = vector.load %arg7[%c0_19, %c0_20] : memref<128x1xf32, #tpu.memory_space<vmem>>, vector<128x1xf32>
    %33 = vector.broadcast %32 : vector<128x1xf32> to vector<128x128xf32>
    %34 = arith.addf %31, %33 : vector<128x128xf32>
    %c0_21 = arith.constant 0 : index
    %c0_22 = arith.constant 0 : index
    %35 = vector.load %arg8[%c0_21, %c0_22] : memref<128x128xf32, #tpu.memory_space<vmem>>, vector<128x128xf32>
    tpu.vector_store %arg8[%c0_21, %c0_22], %34 {strides = array<i32>} : memref<128x128xf32, #tpu.memory_space<vmem>>, vector<128x128xf32>,
    return
  }
  func.func @transform_0(%arg0: i32) -> (i32, i32, i32) {
    %c0_i32 = arith.constant 0 : i32
    %c0_i32_0 = arith.constant 0 : i32
    %c0_i32_1 = arith.constant 0 : i32
    return %c0_i32, %c0_i32_0, %arg0 : i32, i32, i32
  }
  func.func @transform_1(%arg0: i32) -> (i32, i32, i32) {
    %c0_i32 = arith.constant 0 : i32
    %c0_i32_0 = arith.constant 0 : i32
    %c0_i32_1 = arith.constant 0 : i32
    %c0_i32_2 = arith.constant 0 : i32
    return %c0_i32, %c0_i32_0, %c0_i32_1 : i32, i32, i32
  }
  func.func @transform_2(%arg0: i32) -> (i32, i32) {
    %c0_i32 = arith.constant 0 : i32
    %c0_i32_0 = arith.constant 0 : i32
    %c0_i32_1 = arith.constant 0 : i32
    return %c0_i32, %c0_i32_0 : i32, i32
  }
  func.func @transform_3(%arg0: i32) -> (i32, i32) {
    %c0_i32 = arith.constant 0 : i32
    %c0_i32_0 = arith.constant 0 : i32
    %c0_i32_1 = arith.constant 0 : i32
    return %c0_i32, %c0_i32_0 : i32, i32
  }
  func.func @transform_4(%arg0: i32) -> (i32, i32) {
    %c0_i32 = arith.constant 0 : i32
    %c0_i32_0 = arith.constant 0 : i32
    %c0_i32_1 = arith.constant 0 : i32
    return %c0_i32, %c0_i32_0 : i32, i32
  }
  func.func @transform_5(%arg0: i32) -> (i32, i32) {
    %c0_i32 = arith.constant 0 : i32
    %c0_i32_0 = arith.constant 0 : i32
    %c0_i32_1 = arith.constant 0 : i32
    return %c0_i32, %c0_i32_0 : i32, i32
  }
  func.func @transform_6(%arg0: i32) -> (i32, i32) {
    %c0_i32 = arith.constant 0 : i32
    %c0_i32_0 = arith.constant 0 : i32
    %c0_i32_1 = arith.constant 0 : i32
    return %c0_i32, %c0_i32_0 : i32, i32
  }
  func.func @transform_7(%arg0: i32) -> (i32, i32) {
    %c0_i32 = arith.constant 0 : i32
    %c0_i32_0 = arith.constant 0 : i32
    return %c0_i32, %arg0 : i32, i32
  }
}

</mosaic_0001>

<llo_original>
// kernel: ac_network_forward.1
$region0: #{ac_network_forward.1}
  #allocation0 [shape = 'u32[]', space=smem, size = 0x4, offset = 0x4, fixed_abs, tag = 'smem constant byte address 0x4 - core index']
  #allocation1 [shape = 'u32[144,128]{1,0:T(1,128)}', space=vmem, size = 0x12000, scoped, tag = 'internal scratch']
  %s0 = inlined_call_operand.vmem [shape: f32[64,36,128], index: 0, kind: input, shape index: {}]
  %s1 = inlined_call_operand.vmem [shape: f32[64,16,36], index: 1, kind: input, shape index: {}]
  %s2 = inlined_call_operand.vmem [shape: f32[16,1], index: 2, kind: input, shape index: {}]
  %s3 = inlined_call_operand.vmem [shape: f32[128,1024], index: 3, kind: input, shape index: {}]
  %s4 = inlined_call_operand.vmem [shape: f32[128,1], index: 4, kind: input, shape index: {}]
  %s5 = inlined_call_operand.vmem [shape: f32[128,128], index: 5, kind: input, shape index: {}]
  %s6 = inlined_call_operand.vmem [shape: f32[128,1], index: 6, kind: input, shape index: {}]
  %s7 = inlined_call_operand.vmem [shape: f32[128,128], index: 7, kind: output, shape index: {}]
  %s8 = sld [smem:[#allocation0]]
  $region38: #{ac_network_forward.1} parent=0
    _
  %s10 = ssub.s32 1, %s8
  %s11 = scalar_select 0, %s10, %s8
  // Predicated region
  $region2: #{ac_network_forward.1} parent=0 // pred_check
    _
  $region3: #{ac_network_forward.1} parent=0 // pred_check_branch
    %13 = sbr.rel (0) target = $region5
  $region4: #{ac_network_forward.1} parent=0 // pred_region
    _
  $region5: #{ac_network_forward.1} parent=0 // pred_fallthru
    _
  // Predicated region
  $region6: #{ac_network_forward.1} parent=0 // pred_check
    _
  $region7: #{ac_network_forward.1} parent=0 // pred_check_branch
    %15 = sbr.rel (0) target = $region9
  $region8: #{ac_network_forward.1} parent=0 // pred_region
    _
  $region9: #{ac_network_forward.1} parent=0 // pred_fallthru
    _
  // Predicated region
  $region10: #{ac_network_forward.1} parent=0 // pred_check
    _
  $region11: #{ac_network_forward.1} parent=0 // pred_check_branch
    %17 = sbr.rel (0) target = $region13
  $region12: #{ac_network_forward.1} parent=0 // pred_region
    _
  $region13: #{ac_network_forward.1} parent=0 // pred_fallthru
    _
  // Predicated region
  $region14: #{ac_network_forward.1} parent=0 // pred_check
    _
  $region15: #{ac_network_forward.1} parent=0 // pred_check_branch
    %19 = sbr.rel (0) target = $region17
  $region16: #{ac_network_forward.1} parent=0 // pred_region
    _
  $region17: #{ac_network_forward.1} parent=0 // pred_fallthru
    _
  // Predicated region
  $region18: #{ac_network_forward.1} parent=0 // pred_check
    _
  $region19: #{ac_network_forward.1} parent=0 // pred_check_branch
    %21 = sbr.rel (0) target = $region21
  $region20: #{ac_network_forward.1} parent=0 // pred_region
    _
  $region21: #{ac_network_forward.1} parent=0 // pred_fallthru
    _
  // Predicated region
  $region22: #{ac_network_forward.1} parent=0 // pred_check
    _
  $region23: #{ac_network_forward.1} parent=0 // pred_check_branch
    %23 = sbr.rel (0) target = $region25
  $region24: #{ac_network_forward.1} parent=0 // pred_region
    _
  $region25: #{ac_network_forward.1} parent=0 // pred_fallthru
    _
  // Predicated region
  $region26: #{ac_network_forward.1} parent=0 // pred_check
    _
  $region27: #{ac_network_forward.1} parent=0 // pred_check_branch
    %25 = sbr.rel (0) target = $region29
  $region28: #{ac_network_forward.1} parent=0 // pred_region
    _
  $region29: #{ac_network_forward.1} parent=0 // pred_fallthru
    _
  %v26 = vld [vmem:[%s1] sm:$0xff]
  %v27 = vld [vmem:[%s1 + $0x8] sm:$0xff]
  %v28 = vld [vmem:[%s1 + $0x10] sm:$0xff]
  %v29 = vld [vmem:[%s1 + $0x18] sm:$0xff]
  %v30 = vld [vmem:[%s1 + $0x20] sm:$0xff]
  %v31 = vld [vmem:[%s1 + $0x28] sm:$0xff]
  %v32 = vld [vmem:[%s1 + $0x30] sm:$0xff]
  %v33 = vld [vmem:[%s1 + $0x38] sm:$0xff]
  %v34 = vld [vmem:[%s1 + $0x40] sm:$0xff]
  %v35 = vld [vmem:[%s1 + $0x48] sm:$0xff]
  %v36 = vld [vmem:[%s1 + $0x50] sm:$0xff]
  %v37 = vld [vmem:[%s1 + $0x58] sm:$0xff]
  %v38 = vld [vmem:[%s1 + $0x60] sm:$0xff]
  %v39 = vld [vmem:[%s1 + $0x68] sm:$0xff]
  %v40 = vld [vmem:[%s1 + $0x70] sm:$0xff]
  %v41 = vld [vmem:[%s1 + $0x78] sm:$0xff]
  %v42 = vld [vmem:[%s1 + $0x80] sm:$0xff]
  %v43 = vld [vmem:[%s1 + $0x88] sm:$0xff]
  %v44 = vld [vmem:[%s1 + $0x90] sm:$0xff]
  %v45 = vld [vmem:[%s1 + $0x98] sm:$0xff]
  %v46 = vld [vmem:[%s1 + $0xa0] sm:$0xff]
  %v47 = vld [vmem:[%s1 + $0xa8] sm:$0xff]
  %v48 = vld [vmem:[%s1 + $0xb0] sm:$0xff]
  %v49 = vld [vmem:[%s1 + $0xb8] sm:$0xff]
  %v50 = vld [vmem:[%s1 + $0xc0] sm:$0xff]
  %v51 = vld [vmem:[%s1 + $0xc8] sm:$0xff]
  %v52 = vld [vmem:[%s1 + $0xd0] sm:$0xff]
  %v53 = vld [vmem:[%s1 + $0xd8] sm:$0xff]
  %v54 = vld [vmem:[%s1 + $0xe0] sm:$0xff]
  %v55 = vld [vmem:[%s1 + $0xe8] sm:$0xff]
  %v56 = vld [vmem:[%s1 + $0xf0] sm:$0xff]
  %v57 = vld [vmem:[%s1 + $0xf8] sm:$0xff]
  %v58 = vld [vmem:[%s1 + $0x100] sm:$0xff]
  %v59 = vld [vmem:[%s1 + $0x108] sm:$0xff]
  %v60 = vld [vmem:[%s1 + $0x110] sm:$0xff]
  %v61 = vld [vmem:[%s1 + $0x118] sm:$0xff]
  %v62 = vld [vmem:[%s1 + $0x120] sm:$0xff]
  %v63 = vld [vmem:[%s1 + $0x128] sm:$0xff]
  %v64 = vld [vmem:[%s1 + $0x130] sm:$0xff]
  %v65 = vld [vmem:[%s1 + $0x138] sm:$0xff]
  %v66 = vld [vmem:[%s1 + $0x140] sm:$0xff]
  %v67 = vld [vmem:[%s1 + $0x148] sm:$0xff]
  %v68 = vld [vmem:[%s1 + $0x150] sm:$0xff]
  %v69 = vld [vmem:[%s1 + $0x158] sm:$0xff]
  %v70 = vld [vmem:[%s1 + $0x160] sm:$0xff]
  %v71 = vld [vmem:[%s1 + $0x168] sm:$0xff]
  %v72 = vld [vmem:[%s1 + $0x170] sm:$0xff]
  %v73 = vld [vmem:[%s1 + $0x178] sm:$0xff]
  %v74 = vld [vmem:[%s1 + $0x180] sm:$0xff]
  %v75 = vld [vmem:[%s1 + $0x188] sm:$0xff]
  %v76 = vld [vmem:[%s1 + $0x190] sm:$0xff]
  %v77 = vld [vmem:[%s1 + $0x198] sm:$0xff]
  %v78 = vld [vmem:[%s1 + $0x1a0] sm:$0xff]
  %v79 = vld [vmem:[%s1 + $0x1a8] sm:$0xff]
  %v80 = vld [vmem:[%s1 + $0x1b0] sm:$0xff]
  %v81 = vld [vmem:[%s1 + $0x1b8] sm:$0xff]
  %v82 = vld [vmem:[%s1 + $0x1c0] sm:$0xff]
  %v83 = vld [vmem:[%s1 + $0x1c8] sm:$0xff]
  %v84 = vld [vmem:[%s1 + $0x1d0] sm:$0xff]
  %v85 = vld [vmem:[%s1 + $0x1d8] sm:$0xff]
  %v86 = vld [vmem:[%s1 + $0x1e0] sm:$0xff]
  %v87 = vld [vmem:[%s1 + $0x1e8] sm:$0xff]
  %v88 = vld [vmem:[%s1 + $0x1f0] sm:$0xff]
  %v89 = vld [vmem:[%s1 + $0x1f8] sm:$0xff]
  %v90 = vld [vmem:[%s1 + $0x200] sm:$0xff]
  %v91 = vld [vmem:[%s1 + $0x208] sm:$0xff]
  %v92 = vld [vmem:[%s1 + $0x210] sm:$0xff]
  %v93 = vld [vmem:[%s1 + $0x218] sm:$0xff]
  %v94 = vld [vmem:[%s1 + $0x220] sm:$0xff]
  %v95 = vld [vmem:[%s1 + $0x228] sm:$0xff]
  %v96 = vld [vmem:[%s1 + $0x230] sm:$0xff]
  %v97 = vld [vmem:[%s1 + $0x238] sm:$0xff]
  %v98 = vld [vmem:[%s1 + $0x240] sm:$0xff]
  %v99 = vld [vmem:[%s1 + $0x248] sm:$0xff]
  %v100 = vld [vmem:[%s1 + $0x250] sm:$0xff]
  %v101 = vld [vmem:[%s1 + $0x258] sm:$0xff]
  %v102 = vld [vmem:[%s1 + $0x260] sm:$0xff]
  %v103 = vld [vmem:[%s1 + $0x268] sm:$0xff]
  %v104 = vld [vmem:[%s1 + $0x270] sm:$0xff]
  %v105 = vld [vmem:[%s1 + $0x278] sm:$0xff]
  %v106 = vld [vmem:[%s1 + $0x280] sm:$0xff]
  %v107 = vld [vmem:[%s1 + $0x288] sm:$0xff]
  %v108 = vld [vmem:[%s1 + $0x290] sm:$0xff]
  %v109 = vld [vmem:[%s1 + $0x298] sm:$0xff]
  %v110 = vld [vmem:[%s1 + $0x2a0] sm:$0xff]
  %v111 = vld [vmem:[%s1 + $0x2a8] sm:$0xff]
  %v112 = vld [vmem:[%s1 + $0x2b0] sm:$0xff]
  %v113 = vld [vmem:[%s1 + $0x2b8] sm:$0xff]
  %v114 = vld [vmem:[%s1 + $0x2c0] sm:$0xff]
  %v115 = vld [vmem:[%s1 + $0x2c8] sm:$0xff]
  %v116 = vld [vmem:[%s1 + $0x2d0] sm:$0xff]
  %v117 = vld [vmem:[%s1 + $0x2d8] sm:$0xff]
  %v118 = vld [vmem:[%s1 + $0x2e0] sm:$0xff]
  %v119 = vld [vmem:[%s1 + $0x2e8] sm:$0xff]
  %v120 = vld [vmem:[%s1 + $0x2f0] sm:$0xff]
  %v121 = vld [vmem:[%s1 + $0x2f8] sm:$0xff]
  %v122 = vld [vmem:[%s1 + $0x300] sm:$0xff]
  %v123 = vld [vmem:[%s1 + $0x308] sm:$0xff]
  %v124 = vld [vmem:[%s1 + $0x310] sm:$0xff]
  %v125 = vld [vmem:[%s1 + $0x318] sm:$0xff]
  %v126 = vld [vmem:[%s1 + $0x320] sm:$0xff]
  %v127 = vld [vmem:[%s1 + $0x328] sm:$0xff]
  %v128 = vld [vmem:[%s1 + $0x330] sm:$0xff]
  %v129 = vld [vmem:[%s1 + $0x338] sm:$0xff]
  %v130 = vld [vmem:[%s1 + $0x340] sm:$0xff]
  %v131 = vld [vmem:[%s1 + $0x348] sm:$0xff]
  %v132 = vld [vmem:[%s1 + $0x350] sm:$0xff]
  %v133 = vld [vmem:[%s1 + $0x358] sm:$0xff]
  %v134 = vld [vmem:[%s1 + $0x360] sm:$0xff]
  %v135 = vld [vmem:[%s1 + $0x368] sm:$0xff]
  %v136 = vld [vmem:[%s1 + $0x370] sm:$0xff]
  %v137 = vld [vmem:[%s1 + $0x378] sm:$0xff]
  %v138 = vld [vmem:[%s1 + $0x380] sm:$0xff]
  %v139 = vld [vmem:[%s1 + $0x388] sm:$0xff]
  %v140 = vld [vmem:[%s1 + $0x390] sm:$0xff]
  %v141 = vld [vmem:[%s1 + $0x398] sm:$0xff]
  %v142 = vld [vmem:[%s1 + $0x3a0] sm:$0xff]
  %v143 = vld [vmem:[%s1 + $0x3a8] sm:$0xff]
  %v144 = vld [vmem:[%s1 + $0x3b0] sm:$0xff]
  %v145 = vld [vmem:[%s1 + $0x3b8] sm:$0xff]
  %v146 = vld [vmem:[%s1 + $0x3c0] sm:$0xff]
  %v147 = vld [vmem:[%s1 + $0x3c8] sm:$0xff]
  %v148 = vld [vmem:[%s1 + $0x3d0] sm:$0xff]
  %v149 = vld [vmem:[%s1 + $0x3d8] sm:$0xff]
  %v150 = vld [vmem:[%s1 + $0x3e0] sm:$0xff]
  %v151 = vld [vmem:[%s1 + $0x3e8] sm:$0xff]
  %v152 = vld [vmem:[%s1 + $0x3f0] sm:$0xff]
  %v153 = vld [vmem:[%s1 + $0x3f8] sm:$0xff]
  %v154 = vld [vmem:[%s0] sm:$0xff]
  %v155 = vld [vmem:[%s0 + $0x8] sm:$0xff]
  %v156 = vld [vmem:[%s0 + $0x10] sm:$0xff]
  %v157 = vld [vmem:[%s0 + $0x18] sm:$0xff]
  %v158 = vld [vmem:[%s0 + $0x20] sm:$0xf]
  %v159 = vld [vmem:[%s0 + $0x28] sm:$0xff]
  %v160 = vld [vmem:[%s0 + $0x30] sm:$0xff]
  %v161 = vld [vmem:[%s0 + $0x38] sm:$0xff]
  %v162 = vld [vmem:[%s0 + $0x40] sm:$0xff]
  %v163 = vld [vmem:[%s0 + $0x48] sm:$0xf]
  %v164 = vld [vmem:[%s0 + $0x50] sm:$0xff]
  %v165 = vld [vmem:[%s0 + $0x58] sm:$0xff]
  %v166 = vld [vmem:[%s0 + $0x60] sm:$0xff]
  %v167 = vld [vmem:[%s0 + $0x68] sm:$0xff]
  %v168 = vld [vmem:[%s0 + $0x70] sm:$0xf]
  %v169 = vld [vmem:[%s0 + $0x78] sm:$0xff]
  %v170 = vld [vmem:[%s0 + $0x80] sm:$0xff]
  %v171 = vld [vmem:[%s0 + $0x88] sm:$0xff]
  %v172 = vld [vmem:[%s0 + $0x90] sm:$0xff]
  %v173 = vld [vmem:[%s0 + $0x98] sm:$0xf]
  %v174 = vld [vmem:[%s0 + $0xa0] sm:$0xff]
  %v175 = vld [vmem:[%s0 + $0xa8] sm:$0xff]
  %v176 = vld [vmem:[%s0 + $0xb0] sm:$0xff]
  %v177 = vld [vmem:[%s0 + $0xb8] sm:$0xff]
  %v178 = vld [vmem:[%s0 + $0xc0] sm:$0xf]
  %v179 = vld [vmem:[%s0 + $0xc8] sm:$0xff]
  %v180 = vld [vmem:[%s0 + $0xd0] sm:$0xff]
  %v181 = vld [vmem:[%s0 + $0xd8] sm:$0xff]
  %v182 = vld [vmem:[%s0 + $0xe0] sm:$0xff]
  %v183 = vld [vmem:[%s0 + $0xe8] sm:$0xf]
  %v184 = vld [vmem:[%s0 + $0xf0] sm:$0xff]
  %v185 = vld [vmem:[%s0 + $0xf8] sm:$0xff]
  %v186 = vld [vmem:[%s0 + $0x100] sm:$0xff]
  %v187 = vld [vmem:[%s0 + $0x108] sm:$0xff]
  %v188 = vld [vmem:[%s0 + $0x110] sm:$0xf]
  %v189 = vld [vmem:[%s0 + $0x118] sm:$0xff]
  %v190 = vld [vmem:[%s0 + $0x120] sm:$0xff]
  %v191 = vld [vmem:[%s0 + $0x128] sm:$0xff]
  %v192 = vld [vmem:[%s0 + $0x130] sm:$0xff]
  %v193 = vld [vmem:[%s0 + $0x138] sm:$0xf]
  %v194 = vld [vmem:[%s0 + $0x140] sm:$0xff]
  %v195 = vld [vmem:[%s0 + $0x148] sm:$0xff]
  %v196 = vld [vmem:[%s0 + $0x150] sm:$0xff]
  %v197 = vld [vmem:[%s0 + $0x158] sm:$0xff]
  %v198 = vld [vmem:[%s0 + $0x160] sm:$0xf]
  %v199 = vld [vmem:[%s0 + $0x168] sm:$0xff]
  %v200 = vld [vmem:[%s0 + $0x170] sm:$0xff]
  %v201 = vld [vmem:[%s0 + $0x178] sm:$0xff]
  %v202 = vld [vmem:[%s0 + $0x180] sm:$0xff]
  %v203 = vld [vmem:[%s0 + $0x188] sm:$0xf]
  %v204 = vld [vmem:[%s0 + $0x190] sm:$0xff]
  %v205 = vld [vmem:[%s0 + $0x198] sm:$0xff]
  %v206 = vld [vmem:[%s0 + $0x1a0] sm:$0xff]
  %v207 = vld [vmem:[%s0 + $0x1a8] sm:$0xff]
  %v208 = vld [vmem:[%s0 + $0x1b0] sm:$0xf]
  %v209 = vld [vmem:[%s0 + $0x1b8] sm:$0xff]
  %v210 = vld [vmem:[%s0 + $0x1c0] sm:$0xff]
  %v211 = vld [vmem:[%s0 + $0x1c8] sm:$0xff]
  %v212 = vld [vmem:[%s0 + $0x1d0] sm:$0xff]
  %v213 = vld [vmem:[%s0 + $0x1d8] sm:$0xf]
  %v214 = vld [vmem:[%s0 + $0x1e0] sm:$0xff]
  %v215 = vld [vmem:[%s0 + $0x1e8] sm:$0xff]
  %v216 = vld [vmem:[%s0 + $0x1f0] sm:$0xff]
  %v217 = vld [vmem:[%s0 + $0x1f8] sm:$0xff]
  %v218 = vld [vmem:[%s0 + $0x200] sm:$0xf]
  %v219 = vld [vmem:[%s0 + $0x208] sm:$0xff]
  %v220 = vld [vmem:[%s0 + $0x210] sm:$0xff]
  %v221 = vld [vmem:[%s0 + $0x218] sm:$0xff]
  %v222 = vld [vmem:[%s0 + $0x220] sm:$0xff]
  %v223 = vld [vmem:[%s0 + $0x228] sm:$0xf]
  %v224 = vld [vmem:[%s0 + $0x230] sm:$0xff]
  %v225 = vld [vmem:[%s0 + $0x238] sm:$0xff]
  %v226 = vld [vmem:[%s0 + $0x240] sm:$0xff]
  %v227 = vld [vmem:[%s0 + $0x248] sm:$0xff]
  %v228 = vld [vmem:[%s0 + $0x250] sm:$0xf]
  %v229 = vld [vmem:[%s0 + $0x258] sm:$0xff]
  %v230 = vld [vmem:[%s0 + $0x260] sm:$0xff]
  %v231 = vld [vmem:[%s0 + $0x268] sm:$0xff]
  %v232 = vld [vmem:[%s0 + $0x270] sm:$0xff]
  %v233 = vld [vmem:[%s0 + $0x278] sm:$0xf]
  %v234 = vld [vmem:[%s0 + $0x280] sm:$0xff]
  %v235 = vld [vmem:[%s0 + $0x288] sm:$0xff]
  %v236 = vld [vmem:[%s0 + $0x290] sm:$0xff]
  %v237 = vld [vmem:[%s0 + $0x298] sm:$0xff]
  %v238 = vld [vmem:[%s0 + $0x2a0] sm:$0xf]
  %v239 = vld [vmem:[%s0 + $0x2a8] sm:$0xff]
  %v240 = vld [vmem:[%s0 + $0x2b0] sm:$0xff]
  %v241 = vld [vmem:[%s0 + $0x2b8] sm:$0xff]
  %v242 = vld [vmem:[%s0 + $0x2c0] sm:$0xff]
  %v243 = vld [vmem:[%s0 + $0x2c8] sm:$0xf]
  %v244 = vld [vmem:[%s0 + $0x2d0] sm:$0xff]
  %v245 = vld [vmem:[%s0 + $0x2d8] sm:$0xff]
  %v246 = vld [vmem:[%s0 + $0x2e0] sm:$0xff]
  %v247 = vld [vmem:[%s0 + $0x2e8] sm:$0xff]
  %v248 = vld [vmem:[%s0 + $0x2f0] sm:$0xf]
  %v249 = vld [vmem:[%s0 + $0x2f8] sm:$0xff]
  %v250 = vld [vmem:[%s0 + $0x300] sm:$0xff]
  %v251 = vld [vmem:[%s0 + $0x308] sm:$0xff]
  %v252 = vld [vmem:[%s0 + $0x310] sm:$0xff]
  %v253 = vld [vmem:[%s0 + $0x318] sm:$0xf]
  %v254 = vld [vmem:[%s0 + $0x320] sm:$0xff]
  %v255 = vld [vmem:[%s0 + $0x328] sm:$0xff]
  %v256 = vld [vmem:[%s0 + $0x330] sm:$0xff]
  %v257 = vld [vmem:[%s0 + $0x338] sm:$0xff]
  %v258 = vld [vmem:[%s0 + $0x340] sm:$0xf]
  %v259 = vld [vmem:[%s0 + $0x348] sm:$0xff]
  %v260 = vld [vmem:[%s0 + $0x350] sm:$0xff]
  %v261 = vld [vmem:[%s0 + $0x358] sm:$0xff]
  %v262 = vld [vmem:[%s0 + $0x360] sm:$0xff]
  %v263 = vld [vmem:[%s0 + $0x368] sm:$0xf]
  %v264 = vld [vmem:[%s0 + $0x370] sm:$0xff]
  %v265 = vld [vmem:[%s0 + $0x378] sm:$0xff]
  %v266 = vld [vmem:[%s0 + $0x380] sm:$0xff]
  %v267 = vld [vmem:[%s0 + $0x388] sm:$0xff]
  %v268 = vld [vmem:[%s0 + $0x390] sm:$0xf]
  %v269 = vld [vmem:[%s0 + $0x398] sm:$0xff]
  %v270 = vld [vmem:[%s0 + $0x3a0] sm:$0xff]
  %v271 = vld [vmem:[%s0 + $0x3a8] sm:$0xff]
  %v272 = vld [vmem:[%s0 + $0x3b0] sm:$0xff]
  %v273 = vld [vmem:[%s0 + $0x3b8] sm:$0xf]
  %v274 = vld [vmem:[%s0 + $0x3c0] sm:$0xff]
  %v275 = vld [vmem:[%s0 + $0x3c8] sm:$0xff]
  %v276 = vld [vmem:[%s0 + $0x3d0] sm:$0xff]
  %v277 = vld [vmem:[%s0 + $0x3d8] sm:$0xff]
  %v278 = vld [vmem:[%s0 + $0x3e0] sm:$0xf]
  %v279 = vld [vmem:[%s0 + $0x3e8] sm:$0xff]
  %v280 = vld [vmem:[%s0 + $0x3f0] sm:$0xff]
  %v281 = vld [vmem:[%s0 + $0x3f8] sm:$0xff]
  %v282 = vld [vmem:[%s0 + $0x400] sm:$0xff]
  %v283 = vld [vmem:[%s0 + $0x408] sm:$0xf]
  %v284 = vld [vmem:[%s0 + $0x410] sm:$0xff]
  %v285 = vld [vmem:[%s0 + $0x418] sm:$0xff]
  %v286 = vld [vmem:[%s0 + $0x420] sm:$0xff]
  %v287 = vld [vmem:[%s0 + $0x428] sm:$0xff]
  %v288 = vld [vmem:[%s0 + $0x430] sm:$0xf]
  %v289 = vld [vmem:[%s0 + $0x438] sm:$0xff]
  %v290 = vld [vmem:[%s0 + $0x440] sm:$0xff]
  %v291 = vld [vmem:[%s0 + $0x448] sm:$0xff]
  %v292 = vld [vmem:[%s0 + $0x450] sm:$0xff]
  %v293 = vld [vmem:[%s0 + $0x458] sm:$0xf]
  %v294 = vld [vmem:[%s0 + $0x460] sm:$0xff]
  %v295 = vld [vmem:[%s0 + $0x468] sm:$0xff]
  %v296 = vld [vmem:[%s0 + $0x470] sm:$0xff]
  %v297 = vld [vmem:[%s0 + $0x478] sm:$0xff]
  %v298 = vld [vmem:[%s0 + $0x480] sm:$0xf]
  %v299 = vld [vmem:[%s0 + $0x488] sm:$0xff]
  %v300 = vld [vmem:[%s0 + $0x490] sm:$0xff]
  %v301 = vld [vmem:[%s0 + $0x498] sm:$0xff]
  %v302 = vld [vmem:[%s0 + $0x4a0] sm:$0xff]
  %v303 = vld [vmem:[%s0 + $0x4a8] sm:$0xf]
  %v304 = vld [vmem:[%s0 + $0x4b0] sm:$0xff]
  %v305 = vld [vmem:[%s0 + $0x4b8] sm:$0xff]
  %v306 = vld [vmem:[%s0 + $0x4c0] sm:$0xff]
  %v307 = vld [vmem:[%s0 + $0x4c8] sm:$0xff]
  %v308 = vld [vmem:[%s0 + $0x4d0] sm:$0xf]
  %v309 = vld [vmem:[%s0 + $0x4d8] sm:$0xff]
  %v310 = vld [vmem:[%s0 + $0x4e0] sm:$0xff]
  %v311 = vld [vmem:[%s0 + $0x4e8] sm:$0xff]
  %v312 = vld [vmem:[%s0 + $0x4f0] sm:$0xff]
  %v313 = vld [vmem:[%s0 + $0x4f8] sm:$0xf]
  %v314 = vld [vmem:[%s0 + $0x500] sm:$0xff]
  %v315 = vld [vmem:[%s0 + $0x508] sm:$0xff]
  %v316 = vld [vmem:[%s0 + $0x510] sm:$0xff]
  %v317 = vld [vmem:[%s0 + $0x518] sm:$0xff]
  %v318 = vld [vmem:[%s0 + $0x520] sm:$0xf]
  %v319 = vld [vmem:[%s0 + $0x528] sm:$0xff]
  %v320 = vld [vmem:[%s0 + $0x530] sm:$0xff]
  %v321 = vld [vmem:[%s0 + $0x538] sm:$0xff]
  %v322 = vld [vmem:[%s0 + $0x540] sm:$0xff]
  %v323 = vld [vmem:[%s0 + $0x548] sm:$0xf]
  %v324 = vld [vmem:[%s0 + $0x550] sm:$0xff]
  %v325 = vld [vmem:[%s0 + $0x558] sm:$0xff]
  %v326 = vld [vmem:[%s0 + $0x560] sm:$0xff]
  %v327 = vld [vmem:[%s0 + $0x568] sm:$0xff]
  %v328 = vld [vmem:[%s0 + $0x570] sm:$0xf]
  %v329 = vld [vmem:[%s0 + $0x578] sm:$0xff]
  %v330 = vld [vmem:[%s0 + $0x580] sm:$0xff]
  %v331 = vld [vmem:[%s0 + $0x588] sm:$0xff]
  %v332 = vld [vmem:[%s0 + $0x590] sm:$0xff]
  %v333 = vld [vmem:[%s0 + $0x598] sm:$0xf]
  %v334 = vld [vmem:[%s0 + $0x5a0] sm:$0xff]
  %v335 = vld [vmem:[%s0 + $0x5a8] sm:$0xff]
  %v336 = vld [vmem:[%s0 + $0x5b0] sm:$0xff]
  %v337 = vld [vmem:[%s0 + $0x5b8] sm:$0xff]
  %v338 = vld [vmem:[%s0 + $0x5c0] sm:$0xf]
  %v339 = vld [vmem:[%s0 + $0x5c8] sm:$0xff]
  %v340 = vld [vmem:[%s0 + $0x5d0] sm:$0xff]
  %v341 = vld [vmem:[%s0 + $0x5d8] sm:$0xff]
  %v342 = vld [vmem:[%s0 + $0x5e0] sm:$0xff]
  %v343 = vld [vmem:[%s0 + $0x5e8] sm:$0xf]
  %v344 = vld [vmem:[%s0 + $0x5f0] sm:$0xff]
  %v345 = vld [vmem:[%s0 + $0x5f8] sm:$0xff]
  %v346 = vld [vmem:[%s0 + $0x600] sm:$0xff]
  %v347 = vld [vmem:[%s0 + $0x608] sm:$0xff]
  %v348 = vld [vmem:[%s0 + $0x610] sm:$0xf]
  %v349 = vld [vmem:[%s0 + $0x618] sm:$0xff]
  %v350 = vld [vmem:[%s0 + $0x620] sm:$0xff]
  %v351 = vld [vmem:[%s0 + $0x628] sm:$0xff]
  %v352 = vld [vmem:[%s0 + $0x630] sm:$0xff]
  %v353 = vld [vmem:[%s0 + $0x638] sm:$0xf]
  %v354 = vld [vmem:[%s0 + $0x640] sm:$0xff]
  %v355 = vld [vmem:[%s0 + $0x648] sm:$0xff]
  %v356 = vld [vmem:[%s0 + $0x650] sm:$0xff]
  %v357 = vld [vmem:[%s0 + $0x658] sm:$0xff]
  %v358 = vld [vmem:[%s0 + $0x660] sm:$0xf]
  %v359 = vld [vmem:[%s0 + $0x668] sm:$0xff]
  %v360 = vld [vmem:[%s0 + $0x670] sm:$0xff]
  %v361 = vld [vmem:[%s0 + $0x678] sm:$0xff]
  %v362 = vld [vmem:[%s0 + $0x680] sm:$0xff]
  %v363 = vld [vmem:[%s0 + $0x688] sm:$0xf]
  %v364 = vld [vmem:[%s0 + $0x690] sm:$0xff]
  %v365 = vld [vmem:[%s0 + $0x698] sm:$0xff]
  %v366 = vld [vmem:[%s0 + $0x6a0] sm:$0xff]
  %v367 = vld [vmem:[%s0 + $0x6a8] sm:$0xff]
  %v368 = vld [vmem:[%s0 + $0x6b0] sm:$0xf]
  %v369 = vld [vmem:[%s0 + $0x6b8] sm:$0xff]
  %v370 = vld [vmem:[%s0 + $0x6c0] sm:$0xff]
  %v371 = vld [vmem:[%s0 + $0x6c8] sm:$0xff]
  %v372 = vld [vmem:[%s0 + $0x6d0] sm:$0xff]
  %v373 = vld [vmem:[%s0 + $0x6d8] sm:$0xf]
  %v374 = vld [vmem:[%s0 + $0x6e0] sm:$0xff]
  %v375 = vld [vmem:[%s0 + $0x6e8] sm:$0xff]
  %v376 = vld [vmem:[%s0 + $0x6f0] sm:$0xff]
  %v377 = vld [vmem:[%s0 + $0x6f8] sm:$0xff]
  %v378 = vld [vmem:[%s0 + $0x700] sm:$0xf]
  %v379 = vld [vmem:[%s0 + $0x708] sm:$0xff]
  %v380 = vld [vmem:[%s0 + $0x710] sm:$0xff]
  %v381 = vld [vmem:[%s0 + $0x718] sm:$0xff]
  %v382 = vld [vmem:[%s0 + $0x720] sm:$0xff]
  %v383 = vld [vmem:[%s0 + $0x728] sm:$0xf]
  %v384 = vld [vmem:[%s0 + $0x730] sm:$0xff]
  %v385 = vld [vmem:[%s0 + $0x738] sm:$0xff]
  %v386 = vld [vmem:[%s0 + $0x740] sm:$0xff]
  %v387 = vld [vmem:[%s0 + $0x748] sm:$0xff]
  %v388 = vld [vmem:[%s0 + $0x750] sm:$0xf]
  %v389 = vld [vmem:[%s0 + $0x758] sm:$0xff]
  %v390 = vld [vmem:[%s0 + $0x760] sm:$0xff]
  %v391 = vld [vmem:[%s0 + $0x768] sm:$0xff]
  %v392 = vld [vmem:[%s0 + $0x770] sm:$0xff]
  %v393 = vld [vmem:[%s0 + $0x778] sm:$0xf]
  %v394 = vld [vmem:[%s0 + $0x780] sm:$0xff]
  %v395 = vld [vmem:[%s0 + $0x788] sm:$0xff]
  %v396 = vld [vmem:[%s0 + $0x790] sm:$0xff]
  %v397 = vld [vmem:[%s0 + $0x798] sm:$0xff]
  %v398 = vld [vmem:[%s0 + $0x7a0] sm:$0xf]
  %v399 = vld [vmem:[%s0 + $0x7a8] sm:$0xff]
  %v400 = vld [vmem:[%s0 + $0x7b0] sm:$0xff]
  %v401 = vld [vmem:[%s0 + $0x7b8] sm:$0xff]
  %v402 = vld [vmem:[%s0 + $0x7c0] sm:$0xff]
  %v403 = vld [vmem:[%s0 + $0x7c8] sm:$0xf]
  %v404 = vld [vmem:[%s0 + $0x7d0] sm:$0xff]
  %v405 = vld [vmem:[%s0 + $0x7d8] sm:$0xff]
  %v406 = vld [vmem:[%s0 + $0x7e0] sm:$0xff]
  %v407 = vld [vmem:[%s0 + $0x7e8] sm:$0xff]
  %v408 = vld [vmem:[%s0 + $0x7f0] sm:$0xf]
  %v409 = vld [vmem:[%s0 + $0x7f8] sm:$0xff]
  %v410 = vld [vmem:[%s0 + $0x800] sm:$0xff]
  %v411 = vld [vmem:[%s0 + $0x808] sm:$0xff]
  %v412 = vld [vmem:[%s0 + $0x810] sm:$0xff]
  %v413 = vld [vmem:[%s0 + $0x818] sm:$0xf]
  %v414 = vld [vmem:[%s0 + $0x820] sm:$0xff]
  %v415 = vld [vmem:[%s0 + $0x828] sm:$0xff]
  %v416 = vld [vmem:[%s0 + $0x830] sm:$0xff]
  %v417 = vld [vmem:[%s0 + $0x838] sm:$0xff]
  %v418 = vld [vmem:[%s0 + $0x840] sm:$0xf]
  %v419 = vld [vmem:[%s0 + $0x848] sm:$0xff]
  %v420 = vld [vmem:[%s0 + $0x850] sm:$0xff]
  %v421 = vld [vmem:[%s0 + $0x858] sm:$0xff]
  %v422 = vld [vmem:[%s0 + $0x860] sm:$0xff]
  %v423 = vld [vmem:[%s0 + $0x868] sm:$0xf]
  %v424 = vld [vmem:[%s0 + $0x870] sm:$0xff]
  %v425 = vld [vmem:[%s0 + $0x878] sm:$0xff]
  %v426 = vld [vmem:[%s0 + $0x880] sm:$0xff]
  %v427 = vld [vmem:[%s0 + $0x888] sm:$0xff]
  %v428 = vld [vmem:[%s0 + $0x890] sm:$0xf]
  %v429 = vld [vmem:[%s0 + $0x898] sm:$0xff]
  %v430 = vld [vmem:[%s0 + $0x8a0] sm:$0xff]
  %v431 = vld [vmem:[%s0 + $0x8a8] sm:$0xff]
  %v432 = vld [vmem:[%s0 + $0x8b0] sm:$0xff]
  %v433 = vld [vmem:[%s0 + $0x8b8] sm:$0xf]
  %v434 = vld [vmem:[%s0 + $0x8c0] sm:$0xff]
  %v435 = vld [vmem:[%s0 + $0x8c8] sm:$0xff]
  %v436 = vld [vmem:[%s0 + $0x8d0] sm:$0xff]
  %v437 = vld [vmem:[%s0 + $0x8d8] sm:$0xff]
  %v438 = vld [vmem:[%s0 + $0x8e0] sm:$0xf]
  %v439 = vld [vmem:[%s0 + $0x8e8] sm:$0xff]
  %v440 = vld [vmem:[%s0 + $0x8f0] sm:$0xff]
  %v441 = vld [vmem:[%s0 + $0x8f8] sm:$0xff]
  %v442 = vld [vmem:[%s0 + $0x900] sm:$0xff]
  %v443 = vld [vmem:[%s0 + $0x908] sm:$0xf]
  %v444 = vld [vmem:[%s0 + $0x910] sm:$0xff]
  %v445 = vld [vmem:[%s0 + $0x918] sm:$0xff]
  %v446 = vld [vmem:[%s0 + $0x920] sm:$0xff]
  %v447 = vld [vmem:[%s0 + $0x928] sm:$0xff]
  %v448 = vld [vmem:[%s0 + $0x930] sm:$0xf]
  %v449 = vld [vmem:[%s0 + $0x938] sm:$0xff]
  %v450 = vld [vmem:[%s0 + $0x940] sm:$0xff]
  %v451 = vld [vmem:[%s0 + $0x948] sm:$0xff]
  %v452 = vld [vmem:[%s0 + $0x950] sm:$0xff]
  %v453 = vld [vmem:[%s0 + $0x958] sm:$0xf]
  %v454 = vld [vmem:[%s0 + $0x960] sm:$0xff]
  %v455 = vld [vmem:[%s0 + $0x968] sm:$0xff]
  %v456 = vld [vmem:[%s0 + $0x970] sm:$0xff]
  %v457 = vld [vmem:[%s0 + $0x978] sm:$0xff]
  %v458 = vld [vmem:[%s0 + $0x980] sm:$0xf]
  %v459 = vld [vmem:[%s0 + $0x988] sm:$0xff]
  %v460 = vld [vmem:[%s0 + $0x990] sm:$0xff]
  %v461 = vld [vmem:[%s0 + $0x998] sm:$0xff]
  %v462 = vld [vmem:[%s0 + $0x9a0] sm:$0xff]
  %v463 = vld [vmem:[%s0 + $0x9a8] sm:$0xf]
  %v464 = vld [vmem:[%s0 + $0x9b0] sm:$0xff]
  %v465 = vld [vmem:[%s0 + $0x9b8] sm:$0xff]
  %v466 = vld [vmem:[%s0 + $0x9c0] sm:$0xff]
  %v467 = vld [vmem:[%s0 + $0x9c8] sm:$0xff]
  %v468 = vld [vmem:[%s0 + $0x9d0] sm:$0xf]
  %v469 = vld [vmem:[%s0 + $0x9d8] sm:$0xff]
  %v470 = vld [vmem:[%s0 + $0x9e0] sm:$0xff]
  %v471 = vld [vmem:[%s0 + $0x9e8] sm:$0xff]
  %v472 = vld [vmem:[%s0 + $0x9f0] sm:$0xff]
  %v473 = vld [vmem:[%s0 + $0x9f8] sm:$0xf]
  %v474 = vld [vmem:[%s2] sm:$0xff]
  %v475 = vld [vmem:[%s2 + $0x8] sm:$0xff]
  %477 = vset.pattern.permute.xlu0 0
  %478 = vperm.xlu0 %477, %v474
  %v479 = vpop.permute.xlu0 %478
  %482 = vset.pattern.permute.xlu0 0
  %483 = vperm.xlu0 %482, %v475
  %v484 = vpop.permute.xlu0 %483
  %vm486 = vcmask 293888
  %v488 = vsel %vm486, %v26, 0
  %v491 = vsel %vm486, %v27, 0
  %vm493 = vcmask 1043456
  %v495 = vsel %vm493, %v158, 0
  %497 = vmatprep.subr.mxu0 0.0
  %498 = vmatpush1.msra.mxu0 %v154
  %499 = vmatprep.subr.mxu0 0.0
  %500 = vmatpush1.msra.mxu0 %v155
  %501 = vmatprep.subr.mxu0 0.0
  %502 = vmatpush1.msra.mxu0 %v156
  %503 = vmatprep.subr.mxu0 0.0
  %504 = vmatpush1.msra.mxu0 %v157
  %505 = vmatprep.subr.mxu0 0.0
  %506 = vmatpush1.msra.mxu0 %v495
  %507 = vmatprep.subr.mxu0 0.0
  %508 = vmatpush1.msra.mxu0 0.0
  %509 = vmatprep.subr.mxu0 0.0
  %510 = vmatpush1.msra.mxu0 0.0
  %511 = vmatprep.subr.mxu0 0.0
  %512 = vmatpush1.msra.mxu0 0.0
  %513 = vmatprep.subr.mxu0 0.0
  %514 = vmatpush1.msra.mxu0 0.0
  %515 = vmatprep.subr.mxu0 0.0
  %516 = vmatpush1.msra.mxu0 0.0
  %517 = vmatprep.subr.mxu0 0.0
  %518 = vmatpush1.msra.mxu0 0.0
  %519 = vmatprep.subr.mxu0 0.0
  %520 = vmatpush1.msra.mxu0 0.0
  %521 = vmatprep.subr.mxu0 0.0
  %522 = vmatpush1.msra.mxu0 0.0
  %523 = vmatprep.subr.mxu0 0.0
  %524 = vmatpush1.msra.mxu0 0.0
  %525 = vmatprep.subr.mxu0 0.0
  %526 = vmatpush1.msra.mxu0 0.0
  %527 = vmatprep.subr.mxu0 0.0
  %528 = vmatpush1.msra.mxu0 0.0
  %529 = vmatprep.subr.mxu0 0.0
  %530 = vmatpush1.msra.mxu0 0.0
  %531 = vmatprep.subr.mxu0 0.0
  %532 = vmatpush1.msra.mxu0 0.0
  %533 = vmatprep.subr.mxu0 0.0
  %534 = vmatpush1.msra.mxu0 0.0
  %535 = vmatprep.subr.mxu0 0.0
  %536 = vmatpush1.msra.mxu0 0.0
  %537 = vmatprep.subr.mxu0 0.0
  %538 = vmatpush1.msra.mxu0 0.0
  %539 = vmatprep.subr.mxu0 0.0
  %540 = vmatpush1.msra.mxu0 0.0
  %541 = vmatprep.subr.mxu0 0.0
  %542 = vmatpush1.msra.mxu0 0.0
  %543 = vmatprep.subr.mxu0 0.0
  %544 = vmatpush1.msra.mxu0 0.0
  %545 = vmatprep.subr.mxu0 0.0
  %546 = vmatpush1.msra.mxu0 0.0
  %547 = vmatprep.subr.mxu0 0.0
  %548 = vmatpush1.msra.mxu0 0.0
  %549 = vmatprep.subr.mxu0 0.0
  %550 = vmatpush1.msra.mxu0 0.0
  %551 = vmatprep.subr.mxu0 0.0
  %552 = vmatpush1.msra.mxu0 0.0
  %553 = vmatprep.subr.mxu0 0.0
  %554 = vmatpush1.msra.mxu0 0.0
  %555 = vmatprep.subr.mxu0 0.0
  %556 = vmatpush1.msra.mxu0 0.0
  %557 = vmatprep.subr.mxu0 0.0
  %558 = vmatpush1.msra.mxu0 0.0
  %559 = vmatprep.subr.mxu0 0.0
  %560 = vmatpush1.msra.mxu0 0.0
  %561 = vmatprep.mubr.f32.mxu0 0.0
  %562 = vmatmul.mubr.f32.gmra.mrb[0].mxu0 %v488
  %v563 = vpop.f32.mrb[0].mxu0
  %v564 = vadd.f32 %v479, %v563
  %v565 = vpop.f32.mrb[0].mxu0
  %566 = vmatprep.mubr.f32.mxu0 0.0
  %567 = vmatmul.mubr.f32.gmra.mrb[0].mxu0 %v491
  %v568 = vpop.f32.mrb[0].mxu0
  %v569 = vadd.f32 %v484, %v568
  %v570 = vpop.f32.mrb[0].mxu0
  %571 = vdwg.mxu0
  %v573 = vsel %vm486, %v28, 0
  %v576 = vsel %vm486, %v29, 0
  %v579 = vsel %vm493, %v163, 0
  %581 = vmatprep.subr.mxu0 0.0
  %582 = vmatpush1.msra.mxu0 %v159
  %583 = vmatprep.subr.mxu0 0.0
  %584 = vmatpush1.msra.mxu0 %v160
  %585 = vmatprep.subr.mxu0 0.0
  %586 = vmatpush1.msra.mxu0 %v161
  %587 = vmatprep.subr.mxu0 0.0
  %588 = vmatpush1.msra.mxu0 %v162
  %589 = vmatprep.subr.mxu0 0.0
  %590 = vmatpush1.msra.mxu0 %v579
  %591 = vmatprep.subr.mxu0 0.0
  %592 = vmatpush1.msra.mxu0 0.0
  %593 = vmatprep.subr.mxu0 0.0
  %594 = vmatpush1.msra.mxu0 0.0
  %595 = vmatprep.subr.mxu0 0.0
  %596 = vmatpush1.msra.mxu0 0.0
  %597 = vmatprep.subr.mxu0 0.0
  %598 = vmatpush1.msra.mxu0 0.0
  %599 = vmatprep.subr.mxu0 0.0
  %600 = vmatpush1.msra.mxu0 0.0
  %601 = vmatprep.subr.mxu0 0.0
  %602 = vmatpush1.msra.mxu0 0.0
  %603 = vmatprep.subr.mxu0 0.0
  %604 = vmatpush1.msra.mxu0 0.0
  %605 = vmatprep.subr.mxu0 0.0
  %606 = vmatpush1.msra.mxu0 0.0
  %607 = vmatprep.subr.mxu0 0.0
  %608 = vmatpush1.msra.mxu0 0.0
  %609 = vmatprep.subr.mxu0 0.0
  %610 = vmatpush1.msra.mxu0 0.0
  %611 = vmatprep.subr.mxu0 0.0
  %612 = vmatpush1.msra.mxu0 0.0
  %613 = vmatprep.subr.mxu0 0.0
  %614 = vmatpush1.msra.mxu0 0.0
  %615 = vmatprep.subr.mxu0 0.0
  %616 = vmatpush1.msra.mxu0 0.0
  %617 = vmatprep.subr.mxu0 0.0
  %618 = vmatpush1.msra.mxu0 0.0
  %619 = vmatprep.subr.mxu0 0.0
  %620 = vmatpush1.msra.mxu0 0.0
  %621 = vmatprep.subr.mxu0 0.0
  %622 = vmatpush1.msra.mxu0 0.0
  %623 = vmatprep.subr.mxu0 0.0
  %624 = vmatpush1.msra.mxu0 0.0
  %625 = vmatprep.subr.mxu0 0.0
  %626 = vmatpush1.msra.mxu0 0.0
  %627 = vmatprep.subr.mxu0 0.0
  %628 = vmatpush1.msra.mxu0 0.0
  %629 = vmatprep.subr.mxu0 0.0
  %630 = vmatpush1.msra.mxu0 0.0
  %631 = vmatprep.subr.mxu0 0.0
  %632 = vmatpush1.msra.mxu0 0.0
  %633 = vmatprep.subr.mxu0 0.0
  %634 = vmatpush1.msra.mxu0 0.0
  %635 = vmatprep.subr.mxu0 0.0
  %636 = vmatpush1.msra.mxu0 0.0
  %637 = vmatprep.subr.mxu0 0.0
  %638 = vmatpush1.msra.mxu0 0.0
  %639 = vmatprep.subr.mxu0 0.0
  %640 = vmatpush1.msra.mxu0 0.0
  %641 = vmatprep.subr.mxu0 0.0
  %642 = vmatpush1.msra.mxu0 0.0
  %643 = vmatprep.subr.mxu0 0.0
  %644 = vmatpush1.msra.mxu0 0.0
  %645 = vmatprep.mubr.f32.mxu0 0.0
  %646 = vmatmul.mubr.f32.gmra.mrb[0].mxu0 %v573
  %v647 = vpop.f32.mrb[0].mxu0
  %v648 = vadd.f32 %v479, %v647
  %v649 = vpop.f32.mrb[0].mxu0
  %650 = vmatprep.mubr.f32.mxu0 0.0
  %651 = vmatmul.mubr.f32.gmra.mrb[0].mxu0 %v576
  %v652 = vpop.f32.mrb[0].mxu0
  %v653 = vadd.f32 %v484, %v652
  %v654 = vpop.f32.mrb[0].mxu0
  %655 = vdwg.mxu0
  %v657 = vsel %vm486, %v30, 0
  %v660 = vsel %vm486, %v31, 0
  %v663 = vsel %vm493, %v168, 0
  %665 = vmatprep.subr.mxu0 0.0
  %666 = vmatpush1.msra.mxu0 %v164
  %667 = vmatprep.subr.mxu0 0.0
  %668 = vmatpush1.msra.mxu0 %v165
  %669 = vmatprep.subr.mxu0 0.0
  %670 = vmatpush1.msra.mxu0 %v166
  %671 = vmatprep.subr.mxu0 0.0
  %672 = vmatpush1.msra.mxu0 %v167
  %673 = vmatprep.subr.mxu0 0.0
  %674 = vmatpush1.msra.mxu0 %v663
  %675 = vmatprep.subr.mxu0 0.0
  %676 = vmatpush1.msra.mxu0 0.0
  %677 = vmatprep.subr.mxu0 0.0
  %678 = vmatpush1.msra.mxu0 0.0
  %679 = vmatprep.subr.mxu0 0.0
  %680 = vmatpush1.msra.mxu0 0.0
  %681 = vmatprep.subr.mxu0 0.0
  %682 = vmatpush1.msra.mxu0 0.0
  %683 = vmatprep.subr.mxu0 0.0
  %684 = vmatpush1.msra.mxu0 0.0
  %685 = vmatprep.subr.mxu0 0.0
  %686 = vmatpush1.msra.mxu0 0.0
  %687 = vmatprep.subr.mxu0 0.0
  %688 = vmatpush1.msra.mxu0 0.0
  %689 = vmatprep.subr.mxu0 0.0
  %690 = vmatpush1.msra.mxu0 0.0
  %691 = vmatprep.subr.mxu0 0.0
  %692 = vmatpush1.msra.mxu0 0.0
  %693 = vmatprep.subr.mxu0 0.0
  %694 = vmatpush1.msra.mxu0 0.0
  %695 = vmatprep.subr.mxu0 0.0
  %696 = vmatpush1.msra.mxu0 0.0
  %697 = vmatprep.subr.mxu0 0.0
  %698 = vmatpush1.msra.mxu0 0.0
  %699 = vmatprep.subr.mxu0 0.0
  %700 = vmatpush1.msra.mxu0 0.0
  %701 = vmatprep.subr.mxu0 0.0
  %702 = vmatpush1.msra.mxu0 0.0
  %703 = vmatprep.subr.mxu0 0.0
  %704 = vmatpush1.msra.mxu0 0.0
  %705 = vmatprep.subr.mxu0 0.0
  %706 = vmatpush1.msra.mxu0 0.0
  %707 = vmatprep.subr.mxu0 0.0
  %708 = vmatpush1.msra.mxu0 0.0
  %709 = vmatprep.subr.mxu0 0.0
  %710 = vmatpush1.msra.mxu0 0.0
  %711 = vmatprep.subr.mxu0 0.0
  %712 = vmatpush1.msra.mxu0 0.0
  %713 = vmatprep.subr.mxu0 0.0
  %714 = vmatpush1.msra.mxu0 0.0
  %715 = vmatprep.subr.mxu0 0.0
  %716 = vmatpush1.msra.mxu0 0.0
  %717 = vmatprep.subr.mxu0 0.0
  %718 = vmatpush1.msra.mxu0 0.0
  %719 = vmatprep.subr.mxu0 0.0
  %720 = vmatpush1.msra.mxu0 0.0
  %721 = vmatprep.subr.mxu0 0.0
  %722 = vmatpush1.msra.mxu0 0.0
  %723 = vmatprep.subr.mxu0 0.0
  %724 = vmatpush1.msra.mxu0 0.0
  %725 = vmatprep.subr.mxu0 0.0
  %726 = vmatpush1.msra.mxu0 0.0
  %727 = vmatprep.subr.mxu0 0.0
  %728 = vmatpush1.msra.mxu0 0.0
  %729 = vmatprep.mubr.f32.mxu0 0.0
  %730 = vmatmul.mubr.f32.gmra.mrb[0].mxu0 %v657
  %v731 = vpop.f32.mrb[0].mxu0
  %v732 = vadd.f32 %v479, %v731
  %v733 = vpop.f32.mrb[0].mxu0
  %734 = vmatprep.mubr.f32.mxu0 0.0
  %735 = vmatmul.mubr.f32.gmra.mrb[0].mxu0 %v660
  %v736 = vpop.f32.mrb[0].mxu0
  %v737 = vadd.f32 %v484, %v736
  %v738 = vpop.f32.mrb[0].mxu0
  %739 = vdwg.mxu0
  %v741 = vsel %vm486, %v32, 0
  %v744 = vsel %vm486, %v33, 0
  %v747 = vsel %vm493, %v173, 0
  %749 = vmatprep.subr.mxu0 0.0
  %750 = vmatpush1.msra.mxu0 %v169
  %751 = vmatprep.subr.mxu0 0.0
  %752 = vmatpush1.msra.mxu0 %v170
  %753 = vmatprep.subr.mxu0 0.0
  %754 = vmatpush1.msra.mxu0 %v171
  %755 = vmatprep.subr.mxu0 0.0
  %756 = vmatpush1.msra.mxu0 %v172
  %757 = vmatprep.subr.mxu0 0.0
  %758 = vmatpush1.msra.mxu0 %v747
  %759 = vmatprep.subr.mxu0 0.0
  %760 = vmatpush1.msra.mxu0 0.0
  %761 = vmatprep.subr.mxu0 0.0
  %762 = vmatpush1.msra.mxu0 0.0
  %763 = vmatprep.subr.mxu0 0.0
  %764 = vmatpush1.msra.mxu0 0.0
  %765 = vmatprep.subr.mxu0 0.0
  %766 = vmatpush1.msra.mxu0 0.0
  %767 = vmatprep.subr.mxu0 0.0
  %768 = vmatpush1.msra.mxu0 0.0
  %769 = vmatprep.subr.mxu0 0.0
  %770 = vmatpush1.msra.mxu0 0.0
  %771 = vmatprep.subr.mxu0 0.0
  %772 = vmatpush1.msra.mxu0 0.0
  %773 = vmatprep.subr.mxu0 0.0
  %774 = vmatpush1.msra.mxu0 0.0
  %775 = vmatprep.subr.mxu0 0.0
  %776 = vmatpush1.msra.mxu0 0.0
  %777 = vmatprep.subr.mxu0 0.0
  %778 = vmatpush1.msra.mxu0 0.0
  %779 = vmatprep.subr.mxu0 0.0
  %780 = vmatpush1.msra.mxu0 0.0
  %781 = vmatprep.subr.mxu0 0.0
  %782 = vmatpush1.msra.mxu0 0.0
  %783 = vmatprep.subr.mxu0 0.0
  %784 = vmatpush1.msra.mxu0 0.0
  %785 = vmatprep.subr.mxu0 0.0
  %786 = vmatpush1.msra.mxu0 0.0
  %787 = vmatprep.subr.mxu0 0.0
  %788 = vmatpush1.msra.mxu0 0.0
  %789 = vmatprep.subr.mxu0 0.0
  %790 = vmatpush1.msra.mxu0 0.0
  %791 = vmatprep.subr.mxu0 0.0
  %792 = vmatpush1.msra.mxu0 0.0
  %793 = vmatprep.subr.mxu0 0.0
  %794 = vmatpush1.msra.mxu0 0.0
  %795 = vmatprep.subr.mxu0 0.0
  %796 = vmatpush1.msra.mxu0 0.0
  %797 = vmatprep.subr.mxu0 0.0
  %798 = vmatpush1.msra.mxu0 0.0
  %799 = vmatprep.subr.mxu0 0.0
  %800 = vmatpush1.msra.mxu0 0.0
  %801 = vmatprep.subr.mxu0 0.0
  %802 = vmatpush1.msra.mxu0 0.0
  %803 = vmatprep.subr.mxu0 0.0
  %804 = vmatpush1.msra.mxu0 0.0
  %805 = vmatprep.subr.mxu0 0.0
  %806 = vmatpush1.msra.mxu0 0.0
  %807 = vmatprep.subr.mxu0 0.0
  %808 = vmatpush1.msra.mxu0 0.0
  %809 = vmatprep.subr.mxu0 0.0
  %810 = vmatpush1.msra.mxu0 0.0
  %811 = vmatprep.subr.mxu0 0.0
  %812 = vmatpush1.msra.mxu0 0.0
  %813 = vmatprep.mubr.f32.mxu0 0.0
  %814 = vmatmul.mubr.f32.gmra.mrb[0].mxu0 %v741
  %v815 = vpop.f32.mrb[0].mxu0
  %v816 = vadd.f32 %v479, %v815
  %v817 = vpop.f32.mrb[0].mxu0
  %818 = vmatprep.mubr.f32.mxu0 0.0
  %819 = vmatmul.mubr.f32.gmra.mrb[0].mxu0 %v744
  %v820 = vpop.f32.mrb[0].mxu0
  %v821 = vadd.f32 %v484, %v820
  %v822 = vpop.f32.mrb[0].mxu0
  %823 = vdwg.mxu0
  %v825 = vsel %vm486, %v34, 0
  %v828 = vsel %vm486, %v35, 0
  %v831 = vsel %vm493, %v178, 0
  %833 = vmatprep.subr.mxu0 0.0
  %834 = vmatpush1.msra.mxu0 %v174
  %835 = vmatprep.subr.mxu0 0.0
  %836 = vmatpush1.msra.mxu0 %v175
  %837 = vmatprep.subr.mxu0 0.0
  %838 = vmatpush1.msra.mxu0 %v176
  %839 = vmatprep.subr.mxu0 0.0
  %840 = vmatpush1.msra.mxu0 %v177
  %841 = vmatprep.subr.mxu0 0.0
  %842 = vmatpush1.msra.mxu0 %v831
  %843 = vmatprep.subr.mxu0 0.0
  %844 = vmatpush1.msra.mxu0 0.0
  %845 = vmatprep.subr.mxu0 0.0
  %846 = vmatpush1.msra.mxu0 0.0
  %847 = vmatprep.subr.mxu0 0.0
  %848 = vmatpush1.msra.mxu0 0.0
  %849 = vmatprep.subr.mxu0 0.0
  %850 = vmatpush1.msra.mxu0 0.0
  %851 = vmatprep.subr.mxu0 0.0
  %852 = vmatpush1.msra.mxu0 0.0
  %853 = vmatprep.subr.mxu0 0.0
  %854 = vmatpush1.msra.mxu0 0.0
  %855 = vmatprep.subr.mxu0 0.0
  %856 = vmatpush1.msra.mxu0 0.0
  %857 = vmatprep.subr.mxu0 0.0
  %858 = vmatpush1.msra.mxu0 0.0
  %859 = vmatprep.subr.mxu0 0.0
  %860 = vmatpush1.msra.mxu0 0.0
  %861 = vmatprep.subr.mxu0 0.0
  %862 = vmatpush1.msra.mxu0 0.0
  %863 = vmatprep.subr.mxu0 0.0
  %864 = vmatpush1.msra.mxu0 0.0
  %865 = vmatprep.subr.mxu0 0.0
  %866 = vmatpush1.msra.mxu0 0.0
  %867 = vmatprep.subr.mxu0 0.0
  %868 = vmatpush1.msra.mxu0 0.0
  %869 = vmatprep.subr.mxu0 0.0
  %870 = vmatpush1.msra.mxu0 0.0
  %871 = vmatprep.subr.mxu0 0.0
  %872 = vmatpush1.msra.mxu0 0.0
  %873 = vmatprep.subr.mxu0 0.0
  %874 = vmatpush1.msra.mxu0 0.0
  %875 = vmatprep.subr.mxu0 0.0
  %876 = vmatpush1.msra.mxu0 0.0
  %877 = vmatprep.subr.mxu0 0.0
  %878 = vmatpush1.msra.mxu0 0.0
  %879 = vmatprep.subr.mxu0 0.0
  %880 = vmatpush1.msra.mxu0 0.0
  %881 = vmatprep.subr.mxu0 0.0
  %882 = vmatpush1.msra.mxu0 0.0
  %883 = vmatprep.subr.mxu0 0.0
  %884 = vmatpush1.msra.mxu0 0.0
  %885 = vmatprep.subr.mxu0 0.0
  %886 = vmatpush1.msra.mxu0 0.0
  %887 = vmatprep.subr.mxu0 0.0
  %888 = vmatpush1.msra.mxu0 0.0
  %889 = vmatprep.subr.mxu0 0.0
  %890 = vmatpush1.msra.mxu0 0.0
  %891 = vmatprep.subr.mxu0 0.0
  %892 = vmatpush1.msra.mxu0 0.0
  %893 = vmatprep.subr.mxu0 0.0
  %894 = vmatpush1.msra.mxu0 0.0
  %895 = vmatprep.subr.mxu0 0.0
  %896 = vmatpush1.msra.mxu0 0.0
  %897 = vmatprep.mubr.f32.mxu0 0.0
  %898 = vmatmul.mubr.f32.gmra.mrb[0].mxu0 %v825
  %v899 = vpop.f32.mrb[0].mxu0
  %v900 = vadd.f32 %v479, %v899
  %v901 = vpop.f32.mrb[0].mxu0
  %902 = vmatprep.mubr.f32.mxu0 0.0
  %903 = vmatmul.mubr.f32.gmra.mrb[0].mxu0 %v828
  %v904 = vpop.f32.mrb[0].mxu0
  %v905 = vadd.f32 %v484, %v904
  %v906 = vpop.f32.mrb[0].mxu0
  %907 = vdwg.mxu0
  %v909 = vsel %vm486, %v36, 0
  %v912 = vsel %vm486, %v37, 0
  %v915 = vsel %vm493, %v183, 0
  %917 = vmatprep.subr.mxu0 0.0
  %918 = vmatpush1.msra.mxu0 %v179
  %919 = vmatprep.subr.mxu0 0.0
  %920 = vmatpush1.msra.mxu0 %v180
  %921 = vmatprep.subr.mxu0 0.0
  %922 = vmatpush1.msra.mxu0 %v181
  %923 = vmatprep.subr.mxu0 0.0
  %924 = vmatpush1.msra.mxu0 %v182
  %925 = vmatprep.subr.mxu0 0.0
  %926 = vmatpush1.msra.mxu0 %v915
  %927 = vmatprep.subr.mxu0 0.0
  %928 = vmatpush1.msra.mxu0 0.0
  %929 = vmatprep.subr.mxu0 0.0
  %930 = vmatpush1.msra.mxu0 0.0
  %931 = vmatprep.subr.mxu0 0.0
  %932 = vmatpush1.msra.mxu0 0.0
  %933 = vmatprep.subr.mxu0 0.0
  %934 = vmatpush1.msra.mxu0 0.0
  %935 = vmatprep.subr.mxu0 0.0
  %936 = vmatpush1.msra.mxu0 0.0
  %937 = vmatprep.subr.mxu0 0.0
  %938 = vmatpush1.msra.mxu0 0.0
  %939 = vmatprep.subr.mxu0 0.0
  %940 = vmatpush1.msra.mxu0 0.0
  %941 = vmatprep.subr.mxu0 0.0
  %942 = vmatpush1.msra.mxu0 0.0
  %943 = vmatprep.subr.mxu0 0.0
  %944 = vmatpush1.msra.mxu0 0.0
  %945 = vmatprep.subr.mxu0 0.0
  %946 = vmatpush1.msra.mxu0 0.0
  %947 = vmatprep.subr.mxu0 0.0
  %948 = vmatpush1.msra.mxu0 0.0
  %949 = vmatprep.subr.mxu0 0.0
  %950 = vmatpush1.msra.mxu0 0.0
  %951 = vmatprep.subr.mxu0 0.0
  %952 = vmatpush1.msra.mxu0 0.0
  %953 = vmatprep.subr.mxu0 0.0
  %954 = vmatpush1.msra.mxu0 0.0
  %955 = vmatprep.subr.mxu0 0.0
  %956 = vmatpush1.msra.mxu0 0.0
  %957 = vmatprep.subr.mxu0 0.0
  %958 = vmatpush1.msra.mxu0 0.0
  %959 = vmatprep.subr.mxu0 0.0
  %960 = vmatpush1.msra.mxu0 0.0
  %961 = vmatprep.subr.mxu0 0.0
  %962 = vmatpush1.msra.mxu0 0.0
  %963 = vmatprep.subr.mxu0 0.0
  %964 = vmatpush1.msra.mxu0 0.0
  %965 = vmatprep.subr.mxu0 0.0
  %966 = vmatpush1.msra.mxu0 0.0
  %967 = vmatprep.subr.mxu0 0.0
  %968 = vmatpush1.msra.mxu0 0.0
  %969 = vmatprep.subr.mxu0 0.0
  %970 = vmatpush1.msra.mxu0 0.0
  %971 = vmatprep.subr.mxu0 0.0
  %972 = vmatpush1.msra.mxu0 0.0
  %973 = vmatprep.subr.mxu0 0.0
  %974 = vmatpush1.msra.mxu0 0.0
  %975 = vmatprep.subr.mxu0 0.0
  %976 = vmatpush1.msra.mxu0 0.0
  %977 = vmatprep.subr.mxu0 0.0
  %978 = vmatpush1.msra.mxu0 0.0
  %979 = vmatprep.subr.mxu0 0.0
  %980 = vmatpush1.msra.mxu0 0.0
  %981 = vmatprep.mubr.f32.mxu0 0.0
  %982 = vmatmul.mubr.f32.gmra.mrb[0].mxu0 %v909
  %v983 = vpop.f32.mrb[0].mxu0
  %v984 = vadd.f32 %v479, %v983
  %v985 = vpop.f32.mrb[0].mxu0
  %986 = vmatprep.mubr.f32.mxu0 0.0
  %987 = vmatmul.mubr.f32.gmra.mrb[0].mxu0 %v912
  %v988 = vpop.f32.mrb[0].mxu0
  %v989 = vadd.f32 %v484, %v988
  %v990 = vpop.f32.mrb[0].mxu0
  %991 = vdwg.mxu0
  %v993 = vsel %vm486, %v38, 0
  %v996 = vsel %vm486, %v39, 0
  %v999 = vsel %vm493, %v188, 0
  %1001 = vmatprep.subr.mxu0 0.0
  %1002 = vmatpush1.msra.mxu0 %v184
  %1003 = vmatprep.subr.mxu0 0.0
  %1004 = vmatpush1.msra.mxu0 %v185
  %1005 = vmatprep.subr.mxu0 0.0
  %1006 = vmatpush1.msra.mxu0 %v186
  %1007 = vmatprep.subr.mxu0 0.0
  %1008 = vmatpush1.msra.mxu0 %v187
  %1009 = vmatprep.subr.mxu0 0.0
  %1010 = vmatpush1.msra.mxu0 %v999
  %1011 = vmatprep.subr.mxu0 0.0
  %1012 = vmatpush1.msra.mxu0 0.0
  %1013 = vmatprep.subr.mxu0 0.0
  %1014 = vmatpush1.msra.mxu0 0.0
  %1015 = vmatprep.subr.mxu0 0.0
  %1016 = vmatpush1.msra.mxu0 0.0
  %1017 = vmatprep.subr.mxu0 0.0
  %1018 = vmatpush1.msra.mxu0 0.0
  %1019 = vmatprep.subr.mxu0 0.0
  %1020 = vmatpush1.msra.mxu0 0.0
  %1021 = vmatprep.subr.mxu0 0.0
  %1022 = vmatpush1.msra.mxu0 0.0
  %1023 = vmatprep.subr.mxu0 0.0
  %1024 = vmatpush1.msra.mxu0 0.0
  %1025 = vmatprep.subr.mxu0 0.0
  %1026 = vmatpush1.msra.mxu0 0.0
  %1027 = vmatprep.subr.mxu0 0.0
  %1028 = vmatpush1.msra.mxu0 0.0
  %1029 = vmatprep.subr.mxu0 0.0
  %1030 = vmatpush1.msra.mxu0 0.0
  %1031 = vmatprep.subr.mxu0 0.0
  %1032 = vmatpush1.msra.mxu0 0.0
  %1033 = vmatprep.subr.mxu0 0.0
  %1034 = vmatpush1.msra.mxu0 0.0
  %1035 = vmatprep.subr.mxu0 0.0
  %1036 = vmatpush1.msra.mxu0 0.0
  %1037 = vmatprep.subr.mxu0 0.0
  %1038 = vmatpush1.msra.mxu0 0.0
  %1039 = vmatprep.subr.mxu0 0.0
  %1040 = vmatpush1.msra.mxu0 0.0
  %1041 = vmatprep.subr.mxu0 0.0
  %1042 = vmatpush1.msra.mxu0 0.0
  %1043 = vmatprep.subr.mxu0 0.0
  %1044 = vmatpush1.msra.mxu0 0.0
  %1045 = vmatprep.subr.mxu0 0.0
  %1046 = vmatpush1.msra.mxu0 0.0
  %1047 = vmatprep.subr.mxu0 0.0
  %1048 = vmatpush1.msra.mxu0 0.0
  %1049 = vmatprep.subr.mxu0 0.0
  %1050 = vmatpush1.msra.mxu0 0.0
  %1051 = vmatprep.subr.mxu0 0.0
  %1052 = vmatpush1.msra.mxu0 0.0
  %1053 = vmatprep.subr.mxu0 0.0
  %1054 = vmatpush1.msra.mxu0 0.0
  %1055 = vmatprep.subr.mxu0 0.0
  %1056 = vmatpush1.msra.mxu0 0.0
  %1057 = vmatprep.subr.mxu0 0.0
  %1058 = vmatpush1.msra.mxu0 0.0
  %1059 = vmatprep.subr.mxu0 0.0
  %1060 = vmatpush1.msra.mxu0 0.0
  %1061 = vmatprep.subr.mxu0 0.0
  %1062 = vmatpush1.msra.mxu0 0.0
  %1063 = vmatprep.subr.mxu0 0.0
  %1064 = vmatpush1.msra.mxu0 0.0
  %1065 = vmatprep.mubr.f32.mxu0 0.0
  %1066 = vmatmul.mubr.f32.gmra.mrb[0].mxu0 %v993
  %v1067 = vpop.f32.mrb[0].mxu0
  %v1068 = vadd.f32 %v479, %v1067
  %v1069 = vpop.f32.mrb[0].mxu0
  %1070 = vmatprep.mubr.f32.mxu0 0.0
  %1071 = vmatmul.mubr.f32.gmra.mrb[0].mxu0 %v996
  %v1072 = vpop.f32.mrb[0].mxu0
  %v1073 = vadd.f32 %v484, %v1072
  %v1074 = vpop.f32.mrb[0].mxu0
  %1075 = vdwg.mxu0
  %v1077 = vsel %vm486, %v40, 0
  %v1080 = vsel %vm486, %v41, 0
  %v1083 = vsel %vm493, %v193, 0
  %1085 = vmatprep.subr.mxu0 0.0
  %1086 = vmatpush1.msra.mxu0 %v189
  %1087 = vmatprep.subr.mxu0 0.0
  %1088 = vmatpush1.msra.mxu0 %v190
  %1089 = vmatprep.subr.mxu0 0.0
  %1090 = vmatpush1.msra.mxu0 %v191
  %1091 = vmatprep.subr.mxu0 0.0
  %1092 = vmatpush1.msra.mxu0 %v192
  %1093 = vmatprep.subr.mxu0 0.0
  %1094 = vmatpush1.msra.mxu0 %v1083
  %1095 = vmatprep.subr.mxu0 0.0
  %1096 = vmatpush1.msra.mxu0 0.0
  %1097 = vmatprep.subr.mxu0 0.0
  %1098 = vmatpush1.msra.mxu0 0.0
  %1099 = vmatprep.subr.mxu0 0.0
  %1100 = vmatpush1.msra.mxu0 0.0
  %1101 = vmatprep.subr.mxu0 0.0
  %1102 = vmatpush1.msra.mxu0 0.0
  %1103 = vmatprep.subr.mxu0 0.0
  %1104 = vmatpush1.msra.mxu0 0.0
  %1105 = vmatprep.subr.mxu0 0.0
  %1106 = vmatpush1.msra.mxu0 0.0
  %1107 = vmatprep.subr.mxu0 0.0
  %1108 = vmatpush1.msra.mxu0 0.0
  %1109 = vmatprep.subr.mxu0 0.0
  %1110 = vmatpush1.msra.mxu0 0.0
  %1111 = vmatprep.subr.mxu0 0.0
  %1112 = vmatpush1.msra.mxu0 0.0
  %1113 = vmatprep.subr.mxu0 0.0
  %1114 = vmatpush1.msra.mxu0 0.0
  %1115 = vmatprep.subr.mxu0 0.0
  %1116 = vmatpush1.msra.mxu0 0.0
  %1117 = vmatprep.subr.mxu0 0.0
  %1118 = vmatpush1.msra.mxu0 0.0
  %1119 = vmatprep.subr.mxu0 0.0
  %1120 = vmatpush1.msra.mxu0 0.0
  %1121 = vmatprep.subr.mxu0 0.0
  %1122 = vmatpush1.msra.mxu0 0.0
  %1123 = vmatprep.subr.mxu0 0.0
  %1124 = vmatpush1.msra.mxu0 0.0
  %1125 = vmatprep.subr.mxu0 0.0
  %1126 = vmatpush1.msra.mxu0 0.0
  %1127 = vmatprep.subr.mxu0 0.0
  %1128 = vmatpush1.msra.mxu0 0.0
  %1129 = vmatprep.subr.mxu0 0.0
  %1130 = vmatpush1.msra.mxu0 0.0
  %1131 = vmatprep.subr.mxu0 0.0
  %1132 = vmatpush1.msra.mxu0 0.0
  %1133 = vmatprep.subr.mxu0 0.0
  %1134 = vmatpush1.msra.mxu0 0.0
  %1135 = vmatprep.subr.mxu0 0.0
  %1136 = vmatpush1.msra.mxu0 0.0
  %1137 = vmatprep.subr.mxu0 0.0
  %1138 = vmatpush1.msra.mxu0 0.0
  %1139 = vmatprep.subr.mxu0 0.0
  %1140 = vmatpush1.msra.mxu0 0.0
  %1141 = vmatprep.subr.mxu0 0.0
  %1142 = vmatpush1.msra.mxu0 0.0
  %1143 = vmatprep.subr.mxu0 0.0
  %1144 = vmatpush1.msra.mxu0 0.0
  %1145 = vmatprep.subr.mxu0 0.0
  %1146 = vmatpush1.msra.mxu0 0.0
  %1147 = vmatprep.subr.mxu0 0.0
  %1148 = vmatpush1.msra.mxu0 0.0
  %1149 = vmatprep.mubr.f32.mxu0 0.0
  %1150 = vmatmul.mubr.f32.gmra.mrb[0].mxu0 %v1077
  %v1151 = vpop.f32.mrb[0].mxu0
  %v1152 = vadd.f32 %v479, %v1151
  %v1153 = vpop.f32.mrb[0].mxu0
  %1154 = vmatprep.mubr.f32.mxu0 0.0
  %1155 = vmatmul.mubr.f32.gmra.mrb[0].mxu0 %v1080
  %v1156 = vpop.f32.mrb[0].mxu0
  %v1157 = vadd.f32 %v484, %v1156
  %v1158 = vpop.f32.mrb[0].mxu0
  %1159 = vdwg.mxu0
  %v1161 = vsel %vm486, %v42, 0
  %v1164 = vsel %vm486, %v43, 0
  %v1167 = vsel %vm493, %v198, 0
  %1169 = vmatprep.subr.mxu0 0.0
  %1170 = vmatpush1.msra.mxu0 %v194
  %1171 = vmatprep.subr.mxu0 0.0
  %1172 = vmatpush1.msra.mxu0 %v195
  %1173 = vmatprep.subr.mxu0 0.0
  %1174 = vmatpush1.msra.mxu0 %v196
  %1175 = vmatprep.subr.mxu0 0.0
  %1176 = vmatpush1.msra.mxu0 %v197
  %1177 = vmatprep.subr.mxu0 0.0
  %1178 = vmatpush1.msra.mxu0 %v1167
  %1179 = vmatprep.subr.mxu0 0.0
  %1180 = vmatpush1.msra.mxu0 0.0
  %1181 = vmatprep.subr.mxu0 0.0
  %1182 = vmatpush1.msra.mxu0 0.0
  %1183 = vmatprep.subr.mxu0 0.0
  %1184 = vmatpush1.msra.mxu0 0.0
  %1185 = vmatprep.subr.mxu0 0.0
  %1186 = vmatpush1.msra.mxu0 0.0
  %1187 = vmatprep.subr.mxu0 0.0
  %1188 = vmatpush1.msra.mxu0 0.0
  %1189 = vmatprep.subr.mxu0 0.0
  %1190 = vmatpush1.msra.mxu0 0.0
  %1191 = vmatprep.subr.mxu0 0.0
  %1192 = vmatpush1.msra.mxu0 0.0
  %1193 = vmatprep.subr.mxu0 0.0
  %1194 = vmatpush1.msra.mxu0 0.0
  %1195 = vmatprep.subr.mxu0 0.0
  %1196 = vmatpush1.msra.mxu0 0.0
  %1197 = vmatprep.subr.mxu0 0.0
  %1198 = vmatpush1.msra.mxu0 0.0
  %1199 = vmatprep.subr.mxu0 0.0
  %1200 = vmatpush1.msra.mxu0 0.0
  %1201 = vmatprep.subr.mxu0 0.0
  %1202 = vmatpush1.msra.mxu0 0.0
  %1203 = vmatprep.subr.mxu0 0.0
  %1204 = vmatpush1.msra.mxu0 0.0
  %1205 = vmatprep.subr.mxu0 0.0
  %1206 = vmatpush1.msra.mxu0 0.0
  %1207 = vmatprep.subr.mxu0 0.0
  %1208 = vmatpush1.msra.mxu0 0.0
  %1209 = vmatprep.subr.mxu0 0.0
  %1210 = vmatpush1.msra.mxu0 0.0
  %1211 = vmatprep.subr.mxu0 0.0
  %1212 = vmatpush1.msra.mxu0 0.0
  %1213 = vmatprep.subr.mxu0 0.0
  %1214 = vmatpush1.msra.mxu0 0.0
  %1215 = vmatprep.subr.mxu0 0.0
  %1216 = vmatpush1.msra.mxu0 0.0
  %1217 = vmatprep.subr.mxu0 0.0
  %1218 = vmatpush1.msra.mxu0 0.0
  %1219 = vmatprep.subr.mxu0 0.0
  %1220 = vmatpush1.msra.mxu0 0.0
  %1221 = vmatprep.subr.mxu0 0.0
  %1222 = vmatpush1.msra.mxu0 0.0
  %1223 = vmatprep.subr.mxu0 0.0
  %1224 = vmatpush1.msra.mxu0 0.0
  %1225 = vmatprep.subr.mxu0 0.0
  %1226 = vmatpush1.msra.mxu0 0.0
  %1227 = vmatprep.subr.mxu0 0.0
  %1228 = vmatpush1.msra.mxu0 0.0
  %1229 = vmatprep.subr.mxu0 0.0
  %1230 = vmatpush1.msra.mxu0 0.0
  %1231 = vmatprep.subr.mxu0 0.0
  %1232 = vmatpush1.msra.mxu0 0.0
  %1233 = vmatprep.mubr.f32.mxu0 0.0
  %1234 = vmatmul.mubr.f32.gmra.mrb[0].mxu0 %v1161
  %v1235 = vpop.f32.mrb[0].mxu0
  %v1236 = vadd.f32 %v479, %v1235
  %v1237 = vpop.f32.mrb[0].mxu0
  %1238 = vmatprep.mubr.f32.mxu0 0.0
  %1239 = vmatmul.mubr.f32.gmra.mrb[0].mxu0 %v1164
  %v1240 = vpop.f32.mrb[0].mxu0
  %v1241 = vadd.f32 %v484, %v1240
  %v1242 = vpop.f32.mrb[0].mxu0
  %1243 = vdwg.mxu0
  %v1245 = vsel %vm486, %v44, 0
  %v1248 = vsel %vm486, %v45, 0
  %v1251 = vsel %vm493, %v203, 0
  %1253 = vmatprep.subr.mxu0 0.0
  %1254 = vmatpush1.msra.mxu0 %v199
  %1255 = vmatprep.subr.mxu0 0.0
  %1256 = vmatpush1.msra.mxu0 %v200
  %1257 = vmatprep.subr.mxu0 0.0
  %1258 = vmatpush1.msra.mxu0 %v201
  %1259 = vmatprep.subr.mxu0 0.0
  %1260 = vmatpush1.msra.mxu0 %v202
  %1261 = vmatprep.subr.mxu0 0.0
  %1262 = vmatpush1.msra.mxu0 %v1251
  %1263 = vmatprep.subr.mxu0 0.0
  %1264 = vmatpush1.msra.mxu0 0.0
  %1265 = vmatprep.subr.mxu0 0.0
  %1266 = vmatpush1.msra.mxu0 0.0
  %1267 = vmatprep.subr.mxu0 0.0
  %1268 = vmatpush1.msra.mxu0 0.0
  %1269 = vmatprep.subr.mxu0 0.0
  %1270 = vmatpush1.msra.mxu0 0.0
  %1271 = vmatprep.subr.mxu0 0.0
  %1272 = vmatpush1.msra.mxu0 0.0
  %1273 = vmatprep.subr.mxu0 0.0
  %1274 = vmatpush1.msra.mxu0 0.0
  %1275 = vmatprep.subr.mxu0 0.0
  %1276 = vmatpush1.msra.mxu0 0.0
  %1277 = vmatprep.subr.mxu0 0.0
  %1278 = vmatpush1.msra.mxu0 0.0
  %1279 = vmatprep.subr.mxu0 0.0
  %1280 = vmatpush1.msra.mxu0 0.0
  %1281 = vmatprep.subr.mxu0 0.0
  %1282 = vmatpush1.msra.mxu0 0.0
  %1283 = vmatprep.subr.mxu0 0.0
  %1284 = vmatpush1.msra.mxu0 0.0
  %1285 = vmatprep.subr.mxu0 0.0
  %1286 = vmatpush1.msra.mxu0 0.0
  %1287 = vmatprep.subr.mxu0 0.0
  %1288 = vmatpush1.msra.mxu0 0.0
  %1289 = vmatprep.subr.mxu0 0.0
  %1290 = vmatpush1.msra.mxu0 0.0
  %1291 = vmatprep.subr.mxu0 0.0
  %1292 = vmatpush1.msra.mxu0 0.0
  %1293 = vmatprep.subr.mxu0 0.0
  %1294 = vmatpush1.msra.mxu0 0.0
  %1295 = vmatprep.subr.mxu0 0.0
  %1296 = vmatpush1.msra.mxu0 0.0
  %1297 = vmatprep.subr.mxu0 0.0
  %1298 = vmatpush1.msra.mxu0 0.0
  %1299 = vmatprep.subr.mxu0 0.0
  %1300 = vmatpush1.msra.mxu0 0.0
  %1301 = vmatprep.subr.mxu0 0.0
  %1302 = vmatpush1.msra.mxu0 0.0
  %1303 = vmatprep.subr.mxu0 0.0
  %1304 = vmatpush1.msra.mxu0 0.0
  %1305 = vmatprep.subr.mxu0 0.0
  %1306 = vmatpush1.msra.mxu0 0.0
  %1307 = vmatprep.subr.mxu0 0.0
  %1308 = vmatpush1.msra.mxu0 0.0
  %1309 = vmatprep.subr.mxu0 0.0
  %1310 = vmatpush1.msra.mxu0 0.0
  %1311 = vmatprep.subr.mxu0 0.0
  %1312 = vmatpush1.msra.mxu0 0.0
  %1313 = vmatprep.subr.mxu0 0.0
  %1314 = vmatpush1.msra.mxu0 0.0
  %1315 = vmatprep.subr.mxu0 0.0
  %1316 = vmatpush1.msra.mxu0 0.0
  %1317 = vmatprep.mubr.f32.mxu0 0.0
  %1318 = vmatmul.mubr.f32.gmra.mrb[0].mxu0 %v1245
  %v1319 = vpop.f32.mrb[0].mxu0
  %v1320 = vadd.f32 %v479, %v1319
  %v1321 = vpop.f32.mrb[0].mxu0
  %1322 = vmatprep.mubr.f32.mxu0 0.0
  %1323 = vmatmul.mubr.f32.gmra.mrb[0].mxu0 %v1248
  %v1324 = vpop.f32.mrb[0].mxu0
  %v1325 = vadd.f32 %v484, %v1324
  %v1326 = vpop.f32.mrb[0].mxu0
  %1327 = vdwg.mxu0
  %v1329 = vsel %vm486, %v46, 0
  %v1332 = vsel %vm486, %v47, 0
  %v1335 = vsel %vm493, %v208, 0
  %1337 = vmatprep.subr.mxu0 0.0
  %1338 = vmatpush1.msra.mxu0 %v204
  %1339 = vmatprep.subr.mxu0 0.0
  %1340 = vmatpush1.msra.mxu0 %v205
  %1341 = vmatprep.subr.mxu0 0.0
  %1342 = vmatpush1.msra.mxu0 %v206
  %1343 = vmatprep.subr.mxu0 0.0
  %1344 = vmatpush1.msra.mxu0 %v207
  %1345 = vmatprep.subr.mxu0 0.0
  %1346 = vmatpush1.msra.mxu0 %v1335
  %1347 = vmatprep.subr.mxu0 0.0
  %1348 = vmatpush1.msra.mxu0 0.0
  %1349 = vmatprep.subr.mxu0 0.0
  %1350 = vmatpush1.msra.mxu0 0.0
  %1351 = vmatprep.subr.mxu0 0.0
  %1352 = vmatpush1.msra.mxu0 0.0
  %1353 = vmatprep.subr.mxu0 0.0
  %1354 = vmatpush1.msra.mxu0 0.0
  %1355 = vmatprep.subr.mxu0 0.0
  %1356 = vmatpush1.msra.mxu0 0.0
  %1357 = vmatprep.subr.mxu0 0.0
  %1358 = vmatpush1.msra.mxu0 0.0
  %1359 = vmatprep.subr.mxu0 0.0
  %1360 = vmatpush1.msra.mxu0 0.0
  %1361 = vmatprep.subr.mxu0 0.0
  %1362 = vmatpush1.msra.mxu0 0.0
  %1363 = vmatprep.subr.mxu0 0.0
  %1364 = vmatpush1.msra.mxu0 0.0
  %1365 = vmatprep.subr.mxu0 0.0
  %1366 = vmatpush1.msra.mxu0 0.0
  %1367 = vmatprep.subr.mxu0 0.0
  %1368 = vmatpush1.msra.mxu0 0.0
  %1369 = vmatprep.subr.mxu0 0.0
  %1370 = vmatpush1.msra.mxu0 0.0
  %1371 = vmatprep.subr.mxu0 0.0
  %1372 = vmatpush1.msra.mxu0 0.0
  %1373 = vmatprep.subr.mxu0 0.0
  %1374 = vmatpush1.msra.mxu0 0.0
  %1375 = vmatprep.subr.mxu0 0.0
  %1376 = vmatpush1.msra.mxu0 0.0
  %1377 = vmatprep.subr.mxu0 0.0
  %1378 = vmatpush1.msra.mxu0 0.0
  %1379 = vmatprep.subr.mxu0 0.0
  %1380 = vmatpush1.msra.mxu0 0.0
  %1381 = vmatprep.subr.mxu0 0.0
  %1382 = vmatpush1.msra.mxu0 0.0
  %1383 = vmatprep.subr.mxu0 0.0
  %1384 = vmatpush1.msra.mxu0 0.0
  %1385 = vmatprep.subr.mxu0 0.0
  %1386 = vmatpush1.msra.mxu0 0.0
  %1387 = vmatprep.subr.mxu0 0.0
  %1388 = vmatpush1.msra.mxu0 0.0
  %1389 = vmatprep.subr.mxu0 0.0
  %1390 = vmatpush1.msra.mxu0 0.0
  %1391 = vmatprep.subr.mxu0 0.0
  %1392 = vmatpush1.msra.mxu0 0.0
  %1393 = vmatprep.subr.mxu0 0.0
  %1394 = vmatpush1.msra.mxu0 0.0
  %1395 = vmatprep.subr.mxu0 0.0
  %1396 = vmatpush1.msra.mxu0 0.0
  %1397 = vmatprep.subr.mxu0 0.0
  %1398 = vmatpush1.msra.mxu0 0.0
  %1399 = vmatprep.subr.mxu0 0.0
  %1400 = vmatpush1.msra.mxu0 0.0
  %1401 = vmatprep.mubr.f32.mxu0 0.0
  %1402 = vmatmul.mubr.f32.gmra.mrb[0].mxu0 %v1329
  %v1403 = vpop.f32.mrb[0].mxu0
  %v1404 = vadd.f32 %v479, %v1403
  %v1405 = vpop.f32.mrb[0].mxu0
  %1406 = vmatprep.mubr.f32.mxu0 0.0
  %1407 = vmatmul.mubr.f32.gmra.mrb[0].mxu0 %v1332
  %v1408 = vpop.f32.mrb[0].mxu0
  %v1409 = vadd.f32 %v484, %v1408
  %v1410 = vpop.f32.mrb[0].mxu0
  %1411 = vdwg.mxu0
  %v1413 = vsel %vm486, %v48, 0
  %v1416 = vsel %vm486, %v49, 0
  %v1419 = vsel %vm493, %v213, 0
  %1421 = vmatprep.subr.mxu0 0.0
  %1422 = vmatpush1.msra.mxu0 %v209
  %1423 = vmatprep.subr.mxu0 0.0
  %1424 = vmatpush1.msra.mxu0 %v210
  %1425 = vmatprep.subr.mxu0 0.0
  %1426 = vmatpush1.msra.mxu0 %v211
  %1427 = vmatprep.subr.mxu0 0.0
  %1428 = vmatpush1.msra.mxu0 %v212
  %1429 = vmatprep.subr.mxu0 0.0
  %1430 = vmatpush1.msra.mxu0 %v1419
  %1431 = vmatprep.subr.mxu0 0.0
  %1432 = vmatpush1.msra.mxu0 0.0
  %1433 = vmatprep.subr.mxu0 0.0
  %1434 = vmatpush1.msra.mxu0 0.0
  %1435 = vmatprep.subr.mxu0 0.0
  %1436 = vmatpush1.msra.mxu0 0.0
  %1437 = vmatprep.subr.mxu0 0.0
  %1438 = vmatpush1.msra.mxu0 0.0
  %1439 = vmatprep.subr.mxu0 0.0
  %1440 = vmatpush1.msra.mxu0 0.0
  %1441 = vmatprep.subr.mxu0 0.0
  %1442 = vmatpush1.msra.mxu0 0.0
  %1443 = vmatprep.subr.mxu0 0.0
  %1444 = vmatpush1.msra.mxu0 0.0
  %1445 = vmatprep.subr.mxu0 0.0
  %1446 = vmatpush1.msra.mxu0 0.0
  %1447 = vmatprep.subr.mxu0 0.0
  %1448 = vmatpush1.msra.mxu0 0.0
  %1449 = vmatprep.subr.mxu0 0.0
  %1450 = vmatpush1.msra.mxu0 0.0
  %1451 = vmatprep.subr.mxu0 0.0
  %1452 = vmatpush1.msra.mxu0 0.0
  %1453 = vmatprep.subr.mxu0 0.0
  %1454 = vmatpush1.msra.mxu0 0.0
  %1455 = vmatprep.subr.mxu0 0.0
  %1456 = vmatpush1.msra.mxu0 0.0
  %1457 = vmatprep.subr.mxu0 0.0
  %1458 = vmatpush1.msra.mxu0 0.0
  %1459 = vmatprep.subr.mxu0 0.0
  %1460 = vmatpush1.msra.mxu0 0.0
  %1461 = vmatprep.subr.mxu0 0.0
  %1462 = vmatpush1.msra.mxu0 0.0
  %1463 = vmatprep.subr.mxu0 0.0
  %1464 = vmatpush1.msra.mxu0 0.0
  %1465 = vmatprep.subr.mxu0 0.0
  %1466 = vmatpush1.msra.mxu0 0.0
  %1467 = vmatprep.subr.mxu0 0.0
  %1468 = vmatpush1.msra.mxu0 0.0
  %1469 = vmatprep.subr.mxu0 0.0
  %1470 = vmatpush1.msra.mxu0 0.0
  %1471 = vmatprep.subr.mxu0 0.0
  %1472 = vmatpush1.msra.mxu0 0.0
  %1473 = vmatprep.subr.mxu0 0.0
  %1474 = vmatpush1.msra.mxu0 0.0
  %1475 = vmatprep.subr.mxu0 0.0
  %1476 = vmatpush1.msra.mxu0 0.0
  %1477 = vmatprep.subr.mxu0 0.0
  %1478 = vmatpush1.msra.mxu0 0.0
  %1479 = vmatprep.subr.mxu0 0.0
  %1480 = vmatpush1.msra.mxu0 0.0
  %1481 = vmatprep.subr.mxu0 0.0
  %1482 = vmatpush1.msra.mxu0 0.0
  %1483 = vmatprep.subr.mxu0 0.0
  %1484 = vmatpush1.msra.mxu0 0.0
  %1485 = vmatprep.mubr.f32.mxu0 0.0
  %1486 = vmatmul.mubr.f32.gmra.mrb[0].mxu0 %v1413
  %v1487 = vpop.f32.mrb[0].mxu0
  %v1488 = vadd.f32 %v479, %v1487
  %v1489 = vpop.f32.mrb[0].mxu0
  %1490 = vmatprep.mubr.f32.mxu0 0.0
  %1491 = vmatmul.mubr.f32.gmra.mrb[0].mxu0 %v1416
  %v1492 = vpop.f32.mrb[0].mxu0
  %v1493 = vadd.f32 %v484, %v1492
  %v1494 = vpop.f32.mrb[0].mxu0
  %1495 = vdwg.mxu0
  %v1497 = vsel %vm486, %v50, 0
  %v1500 = vsel %vm486, %v51, 0
  %v1503 = vsel %vm493, %v218, 0
  %1505 = vmatprep.subr.mxu0 0.0
  %1506 = vmatpush1.msra.mxu0 %v214
  %1507 = vmatprep.subr.mxu0 0.0
  %1508 = vmatpush1.msra.mxu0 %v215
  %1509 = vmatprep.subr.mxu0 0.0
  %1510 = vmatpush1.msra.mxu0 %v216
  %1511 = vmatprep.subr.mxu0 0.0
  %1512 = vmatpush1.msra.mxu0 %v217
  %1513 = vmatprep.subr.mxu0 0.0
  %1514 = vmatpush1.msra.mxu0 %v1503
  %1515 = vmatprep.subr.mxu0 0.0
  %1516 = vmatpush1.msra.mxu0 0.0
  %1517 = vmatprep.subr.mxu0 0.0
  %1518 = vmatpush1.msra.mxu0 0.0
  %1519 = vmatprep.subr.mxu0 0.0
  %1520 = vmatpush1.msra.mxu0 0.0
  %1521 = vmatprep.subr.mxu0 0.0
  %1522 = vmatpush1.msra.mxu0 0.0
  %1523 = vmatprep.subr.mxu0 0.0
  %1524 = vmatpush1.msra.mxu0 0.0
  %1525 = vmatprep.subr.mxu0 0.0
  %1526 = vmatpush1.msra.mxu0 0.0
  %1527 = vmatprep.subr.mxu0 0.0
  %1528 = vmatpush1.msra.mxu0 0.0
  %1529 = vmatprep.subr.mxu0 0.0
  %1530 = vmatpush1.msra.mxu0 0.0
  %1531 = vmatprep.subr.mxu0 0.0
  %1532 = vmatpush1.msra.mxu0 0.0
  %1533 = vmatprep.subr.mxu0 0.0
  %1534 = vmatpush1.msra.mxu0 0.0
  %1535 = vmatprep.subr.mxu0 0.0
  %1536 = vmatpush1.msra.mxu0 0.0
  %1537 = vmatprep.subr.mxu0 0.0
  %1538 = vmatpush1.msra.mxu0 0.0
  %1539 = vmatprep.subr.mxu0 0.0
  %1540 = vmatpush1.msra.mxu0 0.0
  %1541 = vmatprep.subr.mxu0 0.0
  %1542 = vmatpush1.msra.mxu0 0.0
  %1543 = vmatprep.subr.mxu0 0.0
  %1544 = vmatpush1.msra.mxu0 0.0
  %1545 = vmatprep.subr.mxu0 0.0
  %1546 = vmatpush1.msra.mxu0 0.0
  %1547 = vmatprep.subr.mxu0 0.0
  %1548 = vmatpush1.msra.mxu0 0.0
  %1549 = vmatprep.subr.mxu0 0.0
  %1550 = vmatpush1.msra.mxu0 0.0
  %1551 = vmatprep.subr.mxu0 0.0
  %1552 = vmatpush1.msra.mxu0 0.0
  %1553 = vmatprep.subr.mxu0 0.0
  %1554 = vmatpush1.msra.mxu0 0.0
  %1555 = vmatprep.subr.mxu0 0.0
  %1556 = vmatpush1.msra.mxu0 0.0
  %1557 = vmatprep.subr.mxu0 0.0
  %1558 = vmatpush1.msra.mxu0 0.0
  %1559 = vmatprep.subr.mxu0 0.0
  %1560 = vmatpush1.msra.mxu0 0.0
  %1561 = vmatprep.subr.mxu0 0.0
  %1562 = vmatpush1.msra.mxu0 0.0
  %1563 = vmatprep.subr.mxu0 0.0
  %1564 = vmatpush1.msra.mxu0 0.0
  %1565 = vmatprep.subr.mxu0 0.0
  %1566 = vmatpush1.msra.mxu0 0.0
  %1567 = vmatprep.subr.mxu0 0.0
  %1568 = vmatpush1.msra.mxu0 0.0
  %1569 = vmatprep.mubr.f32.mxu0 0.0
  %1570 = vmatmul.mubr.f32.gmra.mrb[0].mxu0 %v1497
  %v1571 = vpop.f32.mrb[0].mxu0
  %v1572 = vadd.f32 %v479, %v1571
  %v1573 = vpop.f32.mrb[0].mxu0
  %1574 = vmatprep.mubr.f32.mxu0 0.0
  %1575 = vmatmul.mubr.f32.gmra.mrb[0].mxu0 %v1500
  %v1576 = vpop.f32.mrb[0].mxu0
  %v1577 = vadd.f32 %v484, %v1576
  %v1578 = vpop.f32.mrb[0].mxu0
  %1579 = vdwg.mxu0
  %v1581 = vsel %vm486, %v52, 0
  %v1584 = vsel %vm486, %v53, 0
  %v1587 = vsel %vm493, %v223, 0
  %1589 = vmatprep.subr.mxu0 0.0
  %1590 = vmatpush1.msra.mxu0 %v219
  %1591 = vmatprep.subr.mxu0 0.0
  %1592 = vmatpush1.msra.mxu0 %v220
  %1593 = vmatprep.subr.mxu0 0.0
  %1594 = vmatpush1.msra.mxu0 %v221
  %1595 = vmatprep.subr.mxu0 0.0
  %1596 = vmatpush1.msra.mxu0 %v222
  %1597 = vmatprep.subr.mxu0 0.0
  %1598 = vmatpush1.msra.mxu0 %v1587
  %1599 = vmatprep.subr.mxu0 0.0
  %1600 = vmatpush1.msra.mxu0 0.0
  %1601 = vmatprep.subr.mxu0 0.0
  %1602 = vmatpush1.msra.mxu0 0.0
  %1603 = vmatprep.subr.mxu0 0.0
  %1604 = vmatpush1.msra.mxu0 0.0
  %1605 = vmatprep.subr.mxu0 0.0
  %1606 = vmatpush1.msra.mxu0 0.0
  %1607 = vmatprep.subr.mxu0 0.0
  %1608 = vmatpush1.msra.mxu0 0.0
  %1609 = vmatprep.subr.mxu0 0.0
  %1610 = vmatpush1.msra.mxu0 0.0
  %1611 = vmatprep.subr.mxu0 0.0
  %1612 = vmatpush1.msra.mxu0 0.0
  %1613 = vmatprep.subr.mxu0 0.0
  %1614 = vmatpush1.msra.mxu0 0.0
  %1615 = vmatprep.subr.mxu0 0.0
  %1616 = vmatpush1.msra.mxu0 0.0
  %1617 = vmatprep.subr.mxu0 0.0
  %1618 = vmatpush1.msra.mxu0 0.0
  %1619 = vmatprep.subr.mxu0 0.0
  %1620 = vmatpush1.msra.mxu0 0.0
  %1621 = vmatprep.subr.mxu0 0.0
  %1622 = vmatpush1.msra.mxu0 0.0
  %1623 = vmatprep.subr.mxu0 0.0
  %1624 = vmatpush1.msra.mxu0 0.0
  %1625 = vmatprep.subr.mxu0 0.0
  %1626 = vmatpush1.msra.mxu0 0.0
  %1627 = vmatprep.subr.mxu0 0.0
  %1628 = vmatpush1.msra.mxu0 0.0
  %1629 = vmatprep.subr.mxu0 0.0
  %1630 = vmatpush1.msra.mxu0 0.0
  %1631 = vmatprep.subr.mxu0 0.0
  %1632 = vmatpush1.msra.mxu0 0.0
  %1633 = vmatprep.subr.mxu0 0.0
  %1634 = vmatpush1.msra.mxu0 0.0
  %1635 = vmatprep.subr.mxu0 0.0
  %1636 = vmatpush1.msra.mxu0 0.0
  %1637 = vmatprep.subr.mxu0 0.0
  %1638 = vmatpush1.msra.mxu0 0.0
  %1639 = vmatprep.subr.mxu0 0.0
  %1640 = vmatpush1.msra.mxu0 0.0
  %1641 = vmatprep.subr.mxu0 0.0
  %1642 = vmatpush1.msra.mxu0 0.0
  %1643 = vmatprep.subr.mxu0 0.0
  %1644 = vmatpush1.msra.mxu0 0.0
  %1645 = vmatprep.subr.mxu0 0.0
  %1646 = vmatpush1.msra.mxu0 0.0
  %1647 = vmatprep.subr.mxu0 0.0
  %1648 = vmatpush1.msra.mxu0 0.0
  %1649 = vmatprep.subr.mxu0 0.0
  %1650 = vmatpush1.msra.mxu0 0.0
  %1651 = vmatprep.subr.mxu0 0.0
  %1652 = vmatpush1.msra.mxu0 0.0
  %1653 = vmatprep.mubr.f32.mxu0 0.0
  %1654 = vmatmul.mubr.f32.gmra.mrb[0].mxu0 %v1581
  %v1655 = vpop.f32.mrb[0].mxu0
  %v1656 = vadd.f32 %v479, %v1655
  %v1657 = vpop.f32.mrb[0].mxu0
  %1658 = vmatprep.mubr.f32.mxu0 0.0
  %1659 = vmatmul.mubr.f32.gmra.mrb[0].mxu0 %v1584
  %v1660 = vpop.f32.mrb[0].mxu0
  %v1661 = vadd.f32 %v484, %v1660
  %v1662 = vpop.f32.mrb[0].mxu0
  %1663 = vdwg.mxu0
  %v1665 = vsel %vm486, %v54, 0
  %v1668 = vsel %vm486, %v55, 0
  %v1671 = vsel %vm493, %v228, 0
  %1673 = vmatprep.subr.mxu0 0.0
  %1674 = vmatpush1.msra.mxu0 %v224
  %1675 = vmatprep.subr.mxu0 0.0
  %1676 = vmatpush1.msra.mxu0 %v225
  %1677 = vmatprep.subr.mxu0 0.0
  %1678 = vmatpush1.msra.mxu0 %v226
  %1679 = vmatprep.subr.mxu0 0.0
  %1680 = vmatpush1.msra.mxu0 %v227
  %1681 = vmatprep.subr.mxu0 0.0
  %1682 = vmatpush1.msra.mxu0 %v1671
  %1683 = vmatprep.subr.mxu0 0.0
  %1684 = vmatpush1.msra.mxu0 0.0
  %1685 = vmatprep.subr.mxu0 0.0
  %1686 = vmatpush1.msra.mxu0 0.0
  %1687 = vmatprep.subr.mxu0 0.0
  %1688 = vmatpush1.msra.mxu0 0.0
  %1689 = vmatprep.subr.mxu0 0.0
  %1690 = vmatpush1.msra.mxu0 0.0
  %1691 = vmatprep.subr.mxu0 0.0
  %1692 = vmatpush1.msra.mxu0 0.0
  %1693 = vmatprep.subr.mxu0 0.0
  %1694 = vmatpush1.msra.mxu0 0.0
  %1695 = vmatprep.subr.mxu0 0.0
  %1696 = vmatpush1.msra.mxu0 0.0
  %1697 = vmatprep.subr.mxu0 0.0
  %1698 = vmatpush1.msra.mxu0 0.0
  %1699 = vmatprep.subr.mxu0 0.0
  %1700 = vmatpush1.msra.mxu0 0.0
  %1701 = vmatprep.subr.mxu0 0.0
  %1702 = vmatpush1.msra.mxu0 0.0
  %1703 = vmatprep.subr.mxu0 0.0
  %1704 = vmatpush1.msra.mxu0 0.0
  %1705 = vmatprep.subr.mxu0 0.0
  %1706 = vmatpush1.msra.mxu0 0.0
  %1707 = vmatprep.subr.mxu0 0.0
  %1708 = vmatpush1.msra.mxu0 0.0
  %1709 = vmatprep.subr.mxu0 0.0
  %1710 = vmatpush1.msra.mxu0 0.0
  %1711 = vmatprep.subr.mxu0 0.0
  %1712 = vmatpush1.msra.mxu0 0.0
  %1713 = vmatprep.subr.mxu0 0.0
  %1714 = vmatpush1.msra.mxu0 0.0
  %1715 = vmatprep.subr.mxu0 0.0
  %1716 = vmatpush1.msra.mxu0 0.0
  %1717 = vmatprep.subr.mxu0 0.0
  %1718 = vmatpush1.msra.mxu0 0.0
  %1719 = vmatprep.subr.mxu0 0.0
  %1720 = vmatpush1.msra.mxu0 0.0
  %1721 = vmatprep.subr.mxu0 0.0
  %1722 = vmatpush1.msra.mxu0 0.0
  %1723 = vmatprep.subr.mxu0 0.0
  %1724 = vmatpush1.msra.mxu0 0.0
  %1725 = vmatprep.subr.mxu0 0.0
  %1726 = vmatpush1.msra.mxu0 0.0
  %1727 = vmatprep.subr.mxu0 0.0
  %1728 = vmatpush1.msra.mxu0 0.0
  %1729 = vmatprep.subr.mxu0 0.0
  %1730 = vmatpush1.msra.mxu0 0.0
  %1731 = vmatprep.subr.mxu0 0.0
  %1732 = vmatpush1.msra.mxu0 0.0
  %1733 = vmatprep.subr.mxu0 0.0
  %1734 = vmatpush1.msra.mxu0 0.0
  %1735 = vmatprep.subr.mxu0 0.0
  %1736 = vmatpush1.msra.mxu0 0.0
  %1737 = vmatprep.mubr.f32.mxu0 0.0
  %1738 = vmatmul.mubr.f32.gmra.mrb[0].mxu0 %v1665
  %v1739 = vpop.f32.mrb[0].mxu0
  %v1740 = vadd.f32 %v479, %v1739
  %v1741 = vpop.f32.mrb[0].mxu0
  %1742 = vmatprep.mubr.f32.mxu0 0.0
  %1743 = vmatmul.mubr.f32.gmra.mrb[0].mxu0 %v1668
  %v1744 = vpop.f32.mrb[0].mxu0
  %v1745 = vadd.f32 %v484, %v1744
  %v1746 = vpop.f32.mrb[0].mxu0
  %1747 = vdwg.mxu0
  %v1749 = vsel %vm486, %v56, 0
  %v1752 = vsel %vm486, %v57, 0
  %v1755 = vsel %vm493, %v233, 0
  %1757 = vmatprep.subr.mxu0 0.0
  %1758 = vmatpush1.msra.mxu0 %v229
  %1759 = vmatprep.subr.mxu0 0.0
  %1760 = vmatpush1.msra.mxu0 %v230
  %1761 = vmatprep.subr.mxu0 0.0
  %1762 = vmatpush1.msra.mxu0 %v231
  %1763 = vmatprep.subr.mxu0 0.0
  %1764 = vmatpush1.msra.mxu0 %v232
  %1765 = vmatprep.subr.mxu0 0.0
  %1766 = vmatpush1.msra.mxu0 %v1755
  %1767 = vmatprep.subr.mxu0 0.0
  %1768 = vmatpush1.msra.mxu0 0.0
  %1769 = vmatprep.subr.mxu0 0.0
  %1770 = vmatpush1.msra.mxu0 0.0
  %1771 = vmatprep.subr.mxu0 0.0
  %1772 = vmatpush1.msra.mxu0 0.0
  %1773 = vmatprep.subr.mxu0 0.0
  %1774 = vmatpush1.msra.mxu0 0.0
  %1775 = vmatprep.subr.mxu0 0.0
  %1776 = vmatpush1.msra.mxu0 0.0
  %1777 = vmatprep.subr.mxu0 0.0
  %1778 = vmatpush1.msra.mxu0 0.0
  %1779 = vmatprep.subr.mxu0 0.0
  %1780 = vmatpush1.msra.mxu0 0.0
  %1781 = vmatprep.subr.mxu0 0.0
  %1782 = vmatpush1.msra.mxu0 0.0
  %1783 = vmatprep.subr.mxu0 0.0
  %1784 = vmatpush1.msra.mxu0 0.0
  %1785 = vmatprep.subr.mxu0 0.0
  %1786 = vmatpush1.msra.mxu0 0.0
  %1787 = vmatprep.subr.mxu0 0.0
  %1788 = vmatpush1.msra.mxu0 0.0
  %1789 = vmatprep.subr.mxu0 0.0
  %1790 = vmatpush1.msra.mxu0 0.0
  %1791 = vmatprep.subr.mxu0 0.0
  %1792 = vmatpush1.msra.mxu0 0.0
  %1793 = vmatprep.subr.mxu0 0.0
  %1794 = vmatpush1.msra.mxu0 0.0
  %1795 = vmatprep.subr.mxu0 0.0
  %1796 = vmatpush1.msra.mxu0 0.0
  %1797 = vmatprep.subr.mxu0 0.0
  %1798 = vmatpush1.msra.mxu0 0.0
  %1799 = vmatprep.subr.mxu0 0.0
  %1800 = vmatpush1.msra.mxu0 0.0
  %1801 = vmatprep.subr.mxu0 0.0
  %1802 = vmatpush1.msra.mxu0 0.0
  %1803 = vmatprep.subr.mxu0 0.0
  %1804 = vmatpush1.msra.mxu0 0.0
  %1805 = vmatprep.subr.mxu0 0.0
  %1806 = vmatpush1.msra.mxu0 0.0
  %1807 = vmatprep.subr.mxu0 0.0
  %1808 = vmatpush1.msra.mxu0 0.0
  %1809 = vmatprep.subr.mxu0 0.0
  %1810 = vmatpush1.msra.mxu0 0.0
  %1811 = vmatprep.subr.mxu0 0.0
  %1812 = vmatpush1.msra.mxu0 0.0
  %1813 = vmatprep.subr.mxu0 0.0
  %1814 = vmatpush1.msra.mxu0 0.0
  %1815 = vmatprep.subr.mxu0 0.0
  %1816 = vmatpush1.msra.mxu0 0.0
  %1817 = vmatprep.subr.mxu0 0.0
  %1818 = vmatpush1.msra.mxu0 0.0
  %1819 = vmatprep.subr.mxu0 0.0
  %1820 = vmatpush1.msra.mxu0 0.0
  %1821 = vmatprep.mubr.f32.mxu0 0.0
  %1822 = vmatmul.mubr.f32.gmra.mrb[0].mxu0 %v1749
  %v1823 = vpop.f32.mrb[0].mxu0
  %v1824 = vadd.f32 %v479, %v1823
  %v1825 = vpop.f32.mrb[0].mxu0
  %1826 = vmatprep.mubr.f32.mxu0 0.0
  %1827 = vmatmul.mubr.f32.gmra.mrb[0].mxu0 %v1752
  %v1828 = vpop.f32.mrb[0].mxu0
  %v1829 = vadd.f32 %v484, %v1828
  %v1830 = vpop.f32.mrb[0].mxu0
  %1831 = vdwg.mxu0
  %v1833 = vsel %vm486, %v58, 0
  %v1836 = vsel %vm486, %v59, 0
  %v1839 = vsel %vm493, %v238, 0
  %1841 = vmatprep.subr.mxu0 0.0
  %1842 = vmatpush1.msra.mxu0 %v234
  %1843 = vmatprep.subr.mxu0 0.0
  %1844 = vmatpush1.msra.mxu0 %v235
  %1845 = vmatprep.subr.mxu0 0.0
  %1846 = vmatpush1.msra.mxu0 %v236
  %1847 = vmatprep.subr.mxu0 0.0
  %1848 = vmatpush1.msra.mxu0 %v237
  %1849 = vmatprep.subr.mxu0 0.0
  %1850 = vmatpush1.msra.mxu0 %v1839
  %1851 = vmatprep.subr.mxu0 0.0
  %1852 = vmatpush1.msra.mxu0 0.0
  %1853 = vmatprep.subr.mxu0 0.0
  %1854 = vmatpush1.msra.mxu0 0.0
  %1855 = vmatprep.subr.mxu0 0.0
  %1856 = vmatpush1.msra.mxu0 0.0
  %1857 = vmatprep.subr.mxu0 0.0
  %1858 = vmatpush1.msra.mxu0 0.0
  %1859 = vmatprep.subr.mxu0 0.0
  %1860 = vmatpush1.msra.mxu0 0.0
  %1861 = vmatprep.subr.mxu0 0.0
  %1862 = vmatpush1.msra.mxu0 0.0
  %1863 = vmatprep.subr.mxu0 0.0
  %1864 = vmatpush1.msra.mxu0 0.0
  %1865 = vmatprep.subr.mxu0 0.0
  %1866 = vmatpush1.msra.mxu0 0.0
  %1867 = vmatprep.subr.mxu0 0.0
  %1868 = vmatpush1.msra.mxu0 0.0
  %1869 = vmatprep.subr.mxu0 0.0
  %1870 = vmatpush1.msra.mxu0 0.0
  %1871 = vmatprep.subr.mxu0 0.0
  %1872 = vmatpush1.msra.mxu0 0.0
  %1873 = vmatprep.subr.mxu0 0.0
  %1874 = vmatpush1.msra.mxu0 0.0
  %1875 = vmatprep.subr.mxu0 0.0
  %1876 = vmatpush1.msra.mxu0 0.0
  %1877 = vmatprep.subr.mxu0 0.0
  %1878 = vmatpush1.msra.mxu0 0.0
  %1879 = vmatprep.subr.mxu0 0.0
  %1880 = vmatpush1.msra.mxu0 0.0
  %1881 = vmatprep.subr.mxu0 0.0
  %1882 = vmatpush1.msra.mxu0 0.0
  %1883 = vmatprep.subr.mxu0 0.0
  %1884 = vmatpush1.msra.mxu0 0.0
  %1885 = vmatprep.subr.mxu0 0.0
  %1886 = vmatpush1.msra.mxu0 0.0
  %1887 = vmatprep.subr.mxu0 0.0
  %1888 = vmatpush1.msra.mxu0 0.0
  %1889 = vmatprep.subr.mxu0 0.0
  %1890 = vmatpush1.msra.mxu0 0.0
  %1891 = vmatprep.subr.mxu0 0.0
  %1892 = vmatpush1.msra.mxu0 0.0
  %1893 = vmatprep.subr.mxu0 0.0
  %1894 = vmatpush1.msra.mxu0 0.0
  %1895 = vmatprep.subr.mxu0 0.0
  %1896 = vmatpush1.msra.mxu0 0.0
  %1897 = vmatprep.subr.mxu0 0.0
  %1898 = vmatpush1.msra.mxu0 0.0
  %1899 = vmatprep.subr.mxu0 0.0
  %1900 = vmatpush1.msra.mxu0 0.0
  %1901 = vmatprep.subr.mxu0 0.0
  %1902 = vmatpush1.msra.mxu0 0.0
  %1903 = vmatprep.subr.mxu0 0.0
  %1904 = vmatpush1.msra.mxu0 0.0
  %1905 = vmatprep.mubr.f32.mxu0 0.0
  %1906 = vmatmul.mubr.f32.gmra.mrb[0].mxu0 %v1833
  %v1907 = vpop.f32.mrb[0].mxu0
  %v1908 = vadd.f32 %v479, %v1907
  %v1909 = vpop.f32.mrb[0].mxu0
  %1910 = vmatprep.mubr.f32.mxu0 0.0
  %1911 = vmatmul.mubr.f32.gmra.mrb[0].mxu0 %v1836
  %v1912 = vpop.f32.mrb[0].mxu0
  %v1913 = vadd.f32 %v484, %v1912
  %v1914 = vpop.f32.mrb[0].mxu0
  %1915 = vdwg.mxu0
  %v1917 = vsel %vm486, %v60, 0
  %v1920 = vsel %vm486, %v61, 0
  %v1923 = vsel %vm493, %v243, 0
  %1925 = vmatprep.subr.mxu0 0.0
  %1926 = vmatpush1.msra.mxu0 %v239
  %1927 = vmatprep.subr.mxu0 0.0
  %1928 = vmatpush1.msra.mxu0 %v240
  %1929 = vmatprep.subr.mxu0 0.0
  %1930 = vmatpush1.msra.mxu0 %v241
  %1931 = vmatprep.subr.mxu0 0.0
  %1932 = vmatpush1.msra.mxu0 %v242
  %1933 = vmatprep.subr.mxu0 0.0
  %1934 = vmatpush1.msra.mxu0 %v1923
  %1935 = vmatprep.subr.mxu0 0.0
  %1936 = vmatpush1.msra.mxu0 0.0
  %1937 = vmatprep.subr.mxu0 0.0
  %1938 = vmatpush1.msra.mxu0 0.0
  %1939 = vmatprep.subr.mxu0 0.0
  %1940 = vmatpush1.msra.mxu0 0.0
  %1941 = vmatprep.subr.mxu0 0.0
  %1942 = vmatpush1.msra.mxu0 0.0
  %1943 = vmatprep.subr.mxu0 0.0
  %1944 = vmatpush1.msra.mxu0 0.0
  %1945 = vmatprep.subr.mxu0 0.0
  %1946 = vmatpush1.msra.mxu0 0.0
  %1947 = vmatprep.subr.mxu0 0.0
  %1948 = vmatpush1.msra.mxu0 0.0
  %1949 = vmatprep.subr.mxu0 0.0
  %1950 = vmatpush1.msra.mxu0 0.0
  %1951 = vmatprep.subr.mxu0 0.0
  %1952 = vmatpush1.msra.mxu0 0.0
  %1953 = vmatprep.subr.mxu0 0.0
  %1954 = vmatpush1.msra.mxu0 0.0
  %1955 = vmatprep.subr.mxu0 0.0
  %1956 = vmatpush1.msra.mxu0 0.0
  %1957 = vmatprep.subr.mxu0 0.0
  %1958 = vmatpush1.msra.mxu0 0.0
  %1959 = vmatprep.subr.mxu0 0.0
  %1960 = vmatpush1.msra.mxu0 0.0
  %1961 = vmatprep.subr.mxu0 0.0
  %1962 = vmatpush1.msra.mxu0 0.0
  %1963 = vmatprep.subr.mxu0 0.0
  %1964 = vmatpush1.msra.mxu0 0.0
  %1965 = vmatprep.subr.mxu0 0.0
  %1966 = vmatpush1.msra.mxu0 0.0
  %1967 = vmatprep.subr.mxu0 0.0
  %1968 = vmatpush1.msra.mxu0 0.0
  %1969 = vmatprep.subr.mxu0 0.0
  %1970 = vmatpush1.msra.mxu0 0.0
  %1971 = vmatprep.subr.mxu0 0.0
  %1972 = vmatpush1.msra.mxu0 0.0
  %1973 = vmatprep.subr.mxu0 0.0
  %1974 = vmatpush1.msra.mxu0 0.0
  %1975 = vmatprep.subr.mxu0 0.0
  %1976 = vmatpush1.msra.mxu0 0.0
  %1977 = vmatprep.subr.mxu0 0.0
  %1978 = vmatpush1.msra.mxu0 0.0
  %1979 = vmatprep.subr.mxu0 0.0
  %1980 = vmatpush1.msra.mxu0 0.0
  %1981 = vmatprep.subr.mxu0 0.0
  %1982 = vmatpush1.msra.mxu0 0.0
  %1983 = vmatprep.subr.mxu0 0.0
  %1984 = vmatpush1.msra.mxu0 0.0
  %1985 = vmatprep.subr.mxu0 0.0
  %1986 = vmatpush1.msra.mxu0 0.0
  %1987 = vmatprep.subr.mxu0 0.0
  %1988 = vmatpush1.msra.mxu0 0.0
  %1989 = vmatprep.mubr.f32.mxu0 0.0
  %1990 = vmatmul.mubr.f32.gmra.mrb[0].mxu0 %v1917
  %v1991 = vpop.f32.mrb[0].mxu0
  %v1992 = vadd.f32 %v479, %v1991
  %v1993 = vpop.f32.mrb[0].mxu0
  %1994 = vmatprep.mubr.f32.mxu0 0.0
  %1995 = vmatmul.mubr.f32.gmra.mrb[0].mxu0 %v1920
  %v1996 = vpop.f32.mrb[0].mxu0
  %v1997 = vadd.f32 %v484, %v1996
  %v1998 = vpop.f32.mrb[0].mxu0
  %1999 = vdwg.mxu0
  %v2001 = vsel %vm486, %v62, 0
  %v2004 = vsel %vm486, %v63, 0
  %v2007 = vsel %vm493, %v248, 0
  %2009 = vmatprep.subr.mxu0 0.0
  %2010 = vmatpush1.msra.mxu0 %v244
  %2011 = vmatprep.subr.mxu0 0.0
  %2012 = vmatpush1.msra.mxu0 %v245
  %2013 = vmatprep.subr.mxu0 0.0
  %2014 = vmatpush1.msra.mxu0 %v246
  %2015 = vmatprep.subr.mxu0 0.0
  %2016 = vmatpush1.msra.mxu0 %v247
  %2017 = vmatprep.subr.mxu0 0.0
  %2018 = vmatpush1.msra.mxu0 %v2007
  %2019 = vmatprep.subr.mxu0 0.0
  %2020 = vmatpush1.msra.mxu0 0.0
  %2021 = vmatprep.subr.mxu0 0.0
  %2022 = vmatpush1.msra.mxu0 0.0
  %2023 = vmatprep.subr.mxu0 0.0
  %2024 = vmatpush1.msra.mxu0 0.0
  %2025 = vmatprep.subr.mxu0 0.0
  %2026 = vmatpush1.msra.mxu0 0.0
  %2027 = vmatprep.subr.mxu0 0.0
  %2028 = vmatpush1.msra.mxu0 0.0
  %2029 = vmatprep.subr.mxu0 0.0
  %2030 = vmatpush1.msra.mxu0 0.0
  %2031 = vmatprep.subr.mxu0 0.0
  %2032 = vmatpush1.msra.mxu0 0.0
  %2033 = vmatprep.subr.mxu0 0.0
  %2034 = vmatpush1.msra.mxu0 0.0
  %2035 = vmatprep.subr.mxu0 0.0
  %2036 = vmatpush1.msra.mxu0 0.0
  %2037 = vmatprep.subr.mxu0 0.0
  %2038 = vmatpush1.msra.mxu0 0.0
  %2039 = vmatprep.subr.mxu0 0.0
  %2040 = vmatpush1.msra.mxu0 0.0
  %2041 = vmatprep.subr.mxu0 0.0
  %2042 = vmatpush1.msra.mxu0 0.0
  %2043 = vmatprep.subr.mxu0 0.0
  %2044 = vmatpush1.msra.mxu0 0.0
  %2045 = vmatprep.subr.mxu0 0.0
  %2046 = vmatpush1.msra.mxu0 0.0
  %2047 = vmatprep.subr.mxu0 0.0
  %2048 = vmatpush1.msra.mxu0 0.0
  %2049 = vmatprep.subr.mxu0 0.0
  %2050 = vmatpush1.msra.mxu0 0.0
  %2051 = vmatprep.subr.mxu0 0.0
  %2052 = vmatpush1.msra.mxu0 0.0
  %2053 = vmatprep.subr.mxu0 0.0
  %2054 = vmatpush1.msra.mxu0 0.0
  %2055 = vmatprep.subr.mxu0 0.0
  %2056 = vmatpush1.msra.mxu0 0.0
  %2057 = vmatprep.subr.mxu0 0.0
  %2058 = vmatpush1.msra.mxu0 0.0
  %2059 = vmatprep.subr.mxu0 0.0
  %2060 = vmatpush1.msra.mxu0 0.0
  %2061 = vmatprep.subr.mxu0 0.0
  %2062 = vmatpush1.msra.mxu0 0.0
  %2063 = vmatprep.subr.mxu0 0.0
  %2064 = vmatpush1.msra.mxu0 0.0
  %2065 = vmatprep.subr.mxu0 0.0
  %2066 = vmatpush1.msra.mxu0 0.0
  %2067 = vmatprep.subr.mxu0 0.0
  %2068 = vmatpush1.msra.mxu0 0.0
  %2069 = vmatprep.subr.mxu0 0.0
  %2070 = vmatpush1.msra.mxu0 0.0
  %2071 = vmatprep.subr.mxu0 0.0
  %2072 = vmatpush1.msra.mxu0 0.0
  %2073 = vmatprep.mubr.f32.mxu0 0.0
  %2074 = vmatmul.mubr.f32.gmra.mrb[0].mxu0 %v2001
  %v2075 = vpop.f32.mrb[0].mxu0
  %v2076 = vadd.f32 %v479, %v2075
  %v2077 = vpop.f32.mrb[0].mxu0
  %2078 = vmatprep.mubr.f32.mxu0 0.0
  %2079 = vmatmul.mubr.f32.gmra.mrb[0].mxu0 %v2004
  %v2080 = vpop.f32.mrb[0].mxu0
  %v2081 = vadd.f32 %v484, %v2080
  %v2082 = vpop.f32.mrb[0].mxu0
  %2083 = vdwg.mxu0
  %v2085 = vsel %vm486, %v64, 0
  %v2088 = vsel %vm486, %v65, 0
  %v2091 = vsel %vm493, %v253, 0
  %2093 = vmatprep.subr.mxu0 0.0
  %2094 = vmatpush1.msra.mxu0 %v249
  %2095 = vmatprep.subr.mxu0 0.0
  %2096 = vmatpush1.msra.mxu0 %v250
  %2097 = vmatprep.subr.mxu0 0.0
  %2098 = vmatpush1.msra.mxu0 %v251
  %2099 = vmatprep.subr.mxu0 0.0
  %2100 = vmatpush1.msra.mxu0 %v252
  %2101 = vmatprep.subr.mxu0 0.0
  %2102 = vmatpush1.msra.mxu0 %v2091
  %2103 = vmatprep.subr.mxu0 0.0
  %2104 = vmatpush1.msra.mxu0 0.0
  %2105 = vmatprep.subr.mxu0 0.0
  %2106 = vmatpush1.msra.mxu0 0.0
  %2107 = vmatprep.subr.mxu0 0.0
  %2108 = vmatpush1.msra.mxu0 0.0
  %2109 = vmatprep.subr.mxu0 0.0
  %2110 = vmatpush1.msra.mxu0 0.0
  %2111 = vmatprep.subr.mxu0 0.0
  %2112 = vmatpush1.msra.mxu0 0.0
  %2113 = vmatprep.subr.mxu0 0.0
  %2114 = vmatpush1.msra.mxu0 0.0
  %2115 = vmatprep.subr.mxu0 0.0
  %2116 = vmatpush1.msra.mxu0 0.0
  %2117 = vmatprep.subr.mxu0 0.0
  %2118 = vmatpush1.msra.mxu0 0.0
  %2119 = vmatprep.subr.mxu0 0.0
  %2120 = vmatpush1.msra.mxu0 0.0
  %2121 = vmatprep.subr.mxu0 0.0
  %2122 = vmatpush1.msra.mxu0 0.0
  %2123 = vmatprep.subr.mxu0 0.0
  %2124 = vmatpush1.msra.mxu0 0.0
  %2125 = vmatprep.subr.mxu0 0.0
  %2126 = vmatpush1.msra.mxu0 0.0
  %2127 = vmatprep.subr.mxu0 0.0
  %2128 = vmatpush1.msra.mxu0 0.0
  %2129 = vmatprep.subr.mxu0 0.0
  %2130 = vmatpush1.msra.mxu0 0.0
  %2131 = vmatprep.subr.mxu0 0.0
  %2132 = vmatpush1.msra.mxu0 0.0
  %2133 = vmatprep.subr.mxu0 0.0
  %2134 = vmatpush1.msra.mxu0 0.0
  %2135 = vmatprep.subr.mxu0 0.0
  %2136 = vmatpush1.msra.mxu0 0.0
  %2137 = vmatprep.subr.mxu0 0.0
  %2138 = vmatpush1.msra.mxu0 0.0
  %2139 = vmatprep.subr.mxu0 0.0
  %2140 = vmatpush1.msra.mxu0 0.0
  %2141 = vmatprep.subr.mxu0 0.0
  %2142 = vmatpush1.msra.mxu0 0.0
  %2143 = vmatprep.subr.mxu0 0.0
  %2144 = vmatpush1.msra.mxu0 0.0
  %2145 = vmatprep.subr.mxu0 0.0
  %2146 = vmatpush1.msra.mxu0 0.0
  %2147 = vmatprep.subr.mxu0 0.0
  %2148 = vmatpush1.msra.mxu0 0.0
  %2149 = vmatprep.subr.mxu0 0.0
  %2150 = vmatpush1.msra.mxu0 0.0
  %2151 = vmatprep.subr.mxu0 0.0
  %2152 = vmatpush1.msra.mxu0 0.0
  %2153 = vmatprep.subr.mxu0 0.0
  %2154 = vmatpush1.msra.mxu0 0.0
  %2155 = vmatprep.subr.mxu0 0.0
  %2156 = vmatpush1.msra.mxu0 0.0
  %2157 = vmatprep.mubr.f32.mxu0 0.0
  %2158 = vmatmul.mubr.f32.gmra.mrb[0].mxu0 %v2085
  %v2159 = vpop.f32.mrb[0].mxu0
  %v2160 = vadd.f32 %v479, %v2159
  %v2161 = vpop.f32.mrb[0].mxu0
  %2162 = vmatprep.mubr.f32.mxu0 0.0
  %2163 = vmatmul.mubr.f32.gmra.mrb[0].mxu0 %v2088
  %v2164 = vpop.f32.mrb[0].mxu0
  %v2165 = vadd.f32 %v484, %v2164
  %v2166 = vpop.f32.mrb[0].mxu0
  %2167 = vdwg.mxu0
  %v2169 = vsel %vm486, %v66, 0
  %v2172 = vsel %vm486, %v67, 0
  %v2175 = vsel %vm493, %v258, 0
  %2177 = vmatprep.subr.mxu0 0.0
  %2178 = vmatpush1.msra.mxu0 %v254
  %2179 = vmatprep.subr.mxu0 0.0
  %2180 = vmatpush1.msra.mxu0 %v255
  %2181 = vmatprep.subr.mxu0 0.0
  %2182 = vmatpush1.msra.mxu0 %v256
  %2183 = vmatprep.subr.mxu0 0.0
  %2184 = vmatpush1.msra.mxu0 %v257
  %2185 = vmatprep.subr.mxu0 0.0
  %2186 = vmatpush1.msra.mxu0 %v2175
  %2187 = vmatprep.subr.mxu0 0.0
  %2188 = vmatpush1.msra.mxu0 0.0
  %2189 = vmatprep.subr.mxu0 0.0
  %2190 = vmatpush1.msra.mxu0 0.0
  %2191 = vmatprep.subr.mxu0 0.0
  %2192 = vmatpush1.msra.mxu0 0.0
  %2193 = vmatprep.subr.mxu0 0.0
  %2194 = vmatpush1.msra.mxu0 0.0
  %2195 = vmatprep.subr.mxu0 0.0
  %2196 = vmatpush1.msra.mxu0 0.0
  %2197 = vmatprep.subr.mxu0 0.0
  %2198 = vmatpush1.msra.mxu0 0.0
  %2199 = vmatprep.subr.mxu0 0.0
  %2200 = vmatpush1.msra.mxu0 0.0
  %2201 = vmatprep.subr.mxu0 0.0
  %2202 = vmatpush1.msra.mxu0 0.0
  %2203 = vmatprep.subr.mxu0 0.0
  %2204 = vmatpush1.msra.mxu0 0.0
  %2205 = vmatprep.subr.mxu0 0.0
  %2206 = vmatpush1.msra.mxu0 0.0
  %2207 = vmatprep.subr.mxu0 0.0
  %2208 = vmatpush1.msra.mxu0 0.0
  %2209 = vmatprep.subr.mxu0 0.0
  %2210 = vmatpush1.msra.mxu0 0.0
  %2211 = vmatprep.subr.mxu0 0.0
  %2212 = vmatpush1.msra.mxu0 0.0
  %2213 = vmatprep.subr.mxu0 0.0
  %2214 = vmatpush1.msra.mxu0 0.0
  %2215 = vmatprep.subr.mxu0 0.0
  %2216 = vmatpush1.msra.mxu0 0.0
  %2217 = vmatprep.subr.mxu0 0.0
  %2218 = vmatpush1.msra.mxu0 0.0
  %2219 = vmatprep.subr.mxu0 0.0
  %2220 = vmatpush1.msra.mxu0 0.0
  %2221 = vmatprep.subr.mxu0 0.0
  %2222 = vmatpush1.msra.mxu0 0.0
  %2223 = vmatprep.subr.mxu0 0.0
  %2224 = vmatpush1.msra.mxu0 0.0
  %2225 = vmatprep.subr.mxu0 0.0
  %2226 = vmatpush1.msra.mxu0 0.0
  %2227 = vmatprep.subr.mxu0 0.0
  %2228 = vmatpush1.msra.mxu0 0.0
  %2229 = vmatprep.subr.mxu0 0.0
  %2230 = vmatpush1.msra.mxu0 0.0
  %2231 = vmatprep.subr.mxu0 0.0
  %2232 = vmatpush1.msra.mxu0 0.0
  %2233 = vmatprep.subr.mxu0 0.0
  %2234 = vmatpush1.msra.mxu0 0.0
  %2235 = vmatprep.subr.mxu0 0.0
  %2236 = vmatpush1.msra.mxu0 0.0
  %2237 = vmatprep.subr.mxu0 0.0
  %2238 = vmatpush1.msra.mxu0 0.0
  %2239 = vmatprep.subr.mxu0 0.0
  %2240 = vmatpush1.msra.mxu0 0.0
  %2241 = vmatprep.mubr.f32.mxu0 0.0
  %2242 = vmatmul.mubr.f32.gmra.mrb[0].mxu0 %v2169
  %v2243 = vpop.f32.mrb[0].mxu0
  %v2244 = vadd.f32 %v479, %v2243
  %v2245 = vpop.f32.mrb[0].mxu0
  %2246 = vmatprep.mubr.f32.mxu0 0.0
  %2247 = vmatmul.mubr.f32.gmra.mrb[0].mxu0 %v2172
  %v2248 = vpop.f32.mrb[0].mxu0
  %v2249 = vadd.f32 %v484, %v2248
  %v2250 = vpop.f32.mrb[0].mxu0
  %2251 = vdwg.mxu0
  %v2253 = vsel %vm486, %v68, 0
  %v2256 = vsel %vm486, %v69, 0
  %v2259 = vsel %vm493, %v263, 0
  %2261 = vmatprep.subr.mxu0 0.0
  %2262 = vmatpush1.msra.mxu0 %v259
  %2263 = vmatprep.subr.mxu0 0.0
  %2264 = vmatpush1.msra.mxu0 %v260
  %2265 = vmatprep.subr.mxu0 0.0
  %2266 = vmatpush1.msra.mxu0 %v261
  %2267 = vmatprep.subr.mxu0 0.0
  %2268 = vmatpush1.msra.mxu0 %v262
  %2269 = vmatprep.subr.mxu0 0.0
  %2270 = vmatpush1.msra.mxu0 %v2259
  %2271 = vmatprep.subr.mxu0 0.0
  %2272 = vmatpush1.msra.mxu0 0.0
  %2273 = vmatprep.subr.mxu0 0.0
  %2274 = vmatpush1.msra.mxu0 0.0
  %2275 = vmatprep.subr.mxu0 0.0
  %2276 = vmatpush1.msra.mxu0 0.0
  %2277 = vmatprep.subr.mxu0 0.0
  %2278 = vmatpush1.msra.mxu0 0.0
  %2279 = vmatprep.subr.mxu0 0.0
  %2280 = vmatpush1.msra.mxu0 0.0
  %2281 = vmatprep.subr.mxu0 0.0
  %2282 = vmatpush1.msra.mxu0 0.0
  %2283 = vmatprep.subr.mxu0 0.0
  %2284 = vmatpush1.msra.mxu0 0.0
  %2285 = vmatprep.subr.mxu0 0.0
  %2286 = vmatpush1.msra.mxu0 0.0
  %2287 = vmatprep.subr.mxu0 0.0
  %2288 = vmatpush1.msra.mxu0 0.0
  %2289 = vmatprep.subr.mxu0 0.0
  %2290 = vmatpush1.msra.mxu0 0.0
  %2291 = vmatprep.subr.mxu0 0.0
  %2292 = vmatpush1.msra.mxu0 0.0
  %2293 = vmatprep.subr.mxu0 0.0
  %2294 = vmatpush1.msra.mxu0 0.0
  %2295 = vmatprep.subr.mxu0 0.0
  %2296 = vmatpush1.msra.mxu0 0.0
  %2297 = vmatprep.subr.mxu0 0.0
  %2298 = vmatpush1.msra.mxu0 0.0
  %2299 = vmatprep.subr.mxu0 0.0
  %2300 = vmatpush1.msra.mxu0 0.0
  %2301 = vmatprep.subr.mxu0 0.0
  %2302 = vmatpush1.msra.mxu0 0.0
  %2303 = vmatprep.subr.mxu0 0.0
  %2304 = vmatpush1.msra.mxu0 0.0
  %2305 = vmatprep.subr.mxu0 0.0
  %2306 = vmatpush1.msra.mxu0 0.0
  %2307 = vmatprep.subr.mxu0 0.0
  %2308 = vmatpush1.msra.mxu0 0.0
  %2309 = vmatprep.subr.mxu0 0.0
  %2310 = vmatpush1.msra.mxu0 0.0
  %2311 = vmatprep.subr.mxu0 0.0
  %2312 = vmatpush1.msra.mxu0 0.0
  %2313 = vmatprep.subr.mxu0 0.0
  %2314 = vmatpush1.msra.mxu0 0.0
  %2315 = vmatprep.subr.mxu0 0.0
  %2316 = vmatpush1.msra.mxu0 0.0
  %2317 = vmatprep.subr.mxu0 0.0
  %2318 = vmatpush1.msra.mxu0 0.0
  %2319 = vmatprep.subr.mxu0 0.0
  %2320 = vmatpush1.msra.mxu0 0.0
  %2321 = vmatprep.subr.mxu0 0.0
  %2322 = vmatpush1.msra.mxu0 0.0
  %2323 = vmatprep.subr.mxu0 0.0
  %2324 = vmatpush1.msra.mxu0 0.0
  %2325 = vmatprep.mubr.f32.mxu0 0.0
  %2326 = vmatmul.mubr.f32.gmra.mrb[0].mxu0 %v2253
  %v2327 = vpop.f32.mrb[0].mxu0
  %v2328 = vadd.f32 %v479, %v2327
  %v2329 = vpop.f32.mrb[0].mxu0
  %2330 = vmatprep.mubr.f32.mxu0 0.0
  %2331 = vmatmul.mubr.f32.gmra.mrb[0].mxu0 %v2256
  %v2332 = vpop.f32.mrb[0].mxu0
  %v2333 = vadd.f32 %v484, %v2332
  %v2334 = vpop.f32.mrb[0].mxu0
  %2335 = vdwg.mxu0
  %v2337 = vsel %vm486, %v70, 0
  %v2340 = vsel %vm486, %v71, 0
  %v2343 = vsel %vm493, %v268, 0
  %2345 = vmatprep.subr.mxu0 0.0
  %2346 = vmatpush1.msra.mxu0 %v264
  %2347 = vmatprep.subr.mxu0 0.0
  %2348 = vmatpush1.msra.mxu0 %v265
  %2349 = vmatprep.subr.mxu0 0.0
  %2350 = vmatpush1.msra.mxu0 %v266
  %2351 = vmatprep.subr.mxu0 0.0
  %2352 = vmatpush1.msra.mxu0 %v267
  %2353 = vmatprep.subr.mxu0 0.0
  %2354 = vmatpush1.msra.mxu0 %v2343
  %2355 = vmatprep.subr.mxu0 0.0
  %2356 = vmatpush1.msra.mxu0 0.0
  %2357 = vmatprep.subr.mxu0 0.0
  %2358 = vmatpush1.msra.mxu0 0.0
  %2359 = vmatprep.subr.mxu0 0.0
  %2360 = vmatpush1.msra.mxu0 0.0
  %2361 = vmatprep.subr.mxu0 0.0
  %2362 = vmatpush1.msra.mxu0 0.0
  %2363 = vmatprep.subr.mxu0 0.0
  %2364 = vmatpush1.msra.mxu0 0.0
  %2365 = vmatprep.subr.mxu0 0.0
  %2366 = vmatpush1.msra.mxu0 0.0
  %2367 = vmatprep.subr.mxu0 0.0
  %2368 = vmatpush1.msra.mxu0 0.0
  %2369 = vmatprep.subr.mxu0 0.0
  %2370 = vmatpush1.msra.mxu0 0.0
  %2371 = vmatprep.subr.mxu0 0.0
  %2372 = vmatpush1.msra.mxu0 0.0
  %2373 = vmatprep.subr.mxu0 0.0
  %2374 = vmatpush1.msra.mxu0 0.0
  %2375 = vmatprep.subr.mxu0 0.0
  %2376 = vmatpush1.msra.mxu0 0.0
  %2377 = vmatprep.subr.mxu0 0.0
  %2378 = vmatpush1.msra.mxu0 0.0
  %2379 = vmatprep.subr.mxu0 0.0
  %2380 = vmatpush1.msra.mxu0 0.0
  %2381 = vmatprep.subr.mxu0 0.0
  %2382 = vmatpush1.msra.mxu0 0.0
  %2383 = vmatprep.subr.mxu0 0.0
  %2384 = vmatpush1.msra.mxu0 0.0
  %2385 = vmatprep.subr.mxu0 0.0
  %2386 = vmatpush1.msra.mxu0 0.0
  %2387 = vmatprep.subr.mxu0 0.0
  %2388 = vmatpush1.msra.mxu0 0.0
  %2389 = vmatprep.subr.mxu0 0.0
  %2390 = vmatpush1.msra.mxu0 0.0
  %2391 = vmatprep.subr.mxu0 0.0
  %2392 = vmatpush1.msra.mxu0 0.0
  %2393 = vmatprep.subr.mxu0 0.0
  %2394 = vmatpush1.msra.mxu0 0.0
  %2395 = vmatprep.subr.mxu0 0.0
  %2396 = vmatpush1.msra.mxu0 0.0
  %2397 = vmatprep.subr.mxu0 0.0
  %2398 = vmatpush1.msra.mxu0 0.0
  %2399 = vmatprep.subr.mxu0 0.0
  %2400 = vmatpush1.msra.mxu0 0.0
  %2401 = vmatprep.subr.mxu0 0.0
  %2402 = vmatpush1.msra.mxu0 0.0
  %2403 = vmatprep.subr.mxu0 0.0
  %2404 = vmatpush1.msra.mxu0 0.0
  %2405 = vmatprep.subr.mxu0 0.0
  %2406 = vmatpush1.msra.mxu0 0.0
  %2407 = vmatprep.subr.mxu0 0.0
  %2408 = vmatpush1.msra.mxu0 0.0
  %2409 = vmatprep.mubr.f32.mxu0 0.0
  %2410 = vmatmul.mubr.f32.gmra.mrb[0].mxu0 %v2337
  %v2411 = vpop.f32.mrb[0].mxu0
  %v2412 = vadd.f32 %v479, %v2411
  %v2413 = vpop.f32.mrb[0].mxu0
  %2414 = vmatprep.mubr.f32.mxu0 0.0
  %2415 = vmatmul.mubr.f32.gmra.mrb[0].mxu0 %v2340
  %v2416 = vpop.f32.mrb[0].mxu0
  %v2417 = vadd.f32 %v484, %v2416
  %v2418 = vpop.f32.mrb[0].mxu0
  %2419 = vdwg.mxu0
  %v2421 = vsel %vm486, %v72, 0
  %v2424 = vsel %vm486, %v73, 0
  %v2427 = vsel %vm493, %v273, 0
  %2429 = vmatprep.subr.mxu0 0.0
  %2430 = vmatpush1.msra.mxu0 %v269
  %2431 = vmatprep.subr.mxu0 0.0
  %2432 = vmatpush1.msra.mxu0 %v270
  %2433 = vmatprep.subr.mxu0 0.0
  %2434 = vmatpush1.msra.mxu0 %v271
  %2435 = vmatprep.subr.mxu0 0.0
  %2436 = vmatpush1.msra.mxu0 %v272
  %2437 = vmatprep.subr.mxu0 0.0
  %2438 = vmatpush1.msra.mxu0 %v2427
  %2439 = vmatprep.subr.mxu0 0.0
  %2440 = vmatpush1.msra.mxu0 0.0
  %2441 = vmatprep.subr.mxu0 0.0
  %2442 = vmatpush1.msra.mxu0 0.0
  %2443 = vmatprep.subr.mxu0 0.0
  %2444 = vmatpush1.msra.mxu0 0.0
  %2445 = vmatprep.subr.mxu0 0.0
  %2446 = vmatpush1.msra.mxu0 0.0
  %2447 = vmatprep.subr.mxu0 0.0
  %2448 = vmatpush1.msra.mxu0 0.0
  %2449 = vmatprep.subr.mxu0 0.0
  %2450 = vmatpush1.msra.mxu0 0.0
  %2451 = vmatprep.subr.mxu0 0.0
  %2452 = vmatpush1.msra.mxu0 0.0
  %2453 = vmatprep.subr.mxu0 0.0
  %2454 = vmatpush1.msra.mxu0 0.0
  %2455 = vmatprep.subr.mxu0 0.0
  %2456 = vmatpush1.msra.mxu0 0.0
  %2457 = vmatprep.subr.mxu0 0.0
  %2458 = vmatpush1.msra.mxu0 0.0
  %2459 = vmatprep.subr.mxu0 0.0
  %2460 = vmatpush1.msra.mxu0 0.0
  %2461 = vmatprep.subr.mxu0 0.0
  %2462 = vmatpush1.msra.mxu0 0.0
  %2463 = vmatprep.subr.mxu0 0.0
  %2464 = vmatpush1.msra.mxu0 0.0
  %2465 = vmatprep.subr.mxu0 0.0
  %2466 = vmatpush1.msra.mxu0 0.0
  %2467 = vmatprep.subr.mxu0 0.0
  %2468 = vmatpush1.msra.mxu0 0.0
  %2469 = vmatprep.subr.mxu0 0.0
  %2470 = vmatpush1.msra.mxu0 0.0
  %2471 = vmatprep.subr.mxu0 0.0
  %2472 = vmatpush1.msra.mxu0 0.0
  %2473 = vmatprep.subr.mxu0 0.0
  %2474 = vmatpush1.msra.mxu0 0.0
  %2475 = vmatprep.subr.mxu0 0.0
  %2476 = vmatpush1.msra.mxu0 0.0
  %2477 = vmatprep.subr.mxu0 0.0
  %2478 = vmatpush1.msra.mxu0 0.0
  %2479 = vmatprep.subr.mxu0 0.0
  %2480 = vmatpush1.msra.mxu0 0.0
  %2481 = vmatprep.subr.mxu0 0.0
  %2482 = vmatpush1.msra.mxu0 0.0
  %2483 = vmatprep.subr.mxu0 0.0
  %2484 = vmatpush1.msra.mxu0 0.0
  %2485 = vmatprep.subr.mxu0 0.0
  %2486 = vmatpush1.msra.mxu0 0.0
  %2487 = vmatprep.subr.mxu0 0.0
  %2488 = vmatpush1.msra.mxu0 0.0
  %2489 = vmatprep.subr.mxu0 0.0
  %2490 = vmatpush1.msra.mxu0 0.0
  %2491 = vmatprep.subr.mxu0 0.0
  %2492 = vmatpush1.msra.mxu0 0.0
  %2493 = vmatprep.mubr.f32.mxu0 0.0
  %2494 = vmatmul.mubr.f32.gmra.mrb[0].mxu0 %v2421
  %v2495 = vpop.f32.mrb[0].mxu0
  %v2496 = vadd.f32 %v479, %v2495
  %v2497 = vpop.f32.mrb[0].mxu0
  %2498 = vmatprep.mubr.f32.mxu0 0.0
  %2499 = vmatmul.mubr.f32.gmra.mrb[0].mxu0 %v2424
  %v2500 = vpop.f32.mrb[0].mxu0
  %v2501 = vadd.f32 %v484, %v2500
  %v2502 = vpop.f32.mrb[0].mxu0
  %2503 = vdwg.mxu0
  %v2505 = vsel %vm486, %v74, 0
  %v2508 = vsel %vm486, %v75, 0
  %v2511 = vsel %vm493, %v278, 0
  %2513 = vmatprep.subr.mxu0 0.0
  %2514 = vmatpush1.msra.mxu0 %v274
  %2515 = vmatprep.subr.mxu0 0.0
  %2516 = vmatpush1.msra.mxu0 %v275
  %2517 = vmatprep.subr.mxu0 0.0
  %2518 = vmatpush1.msra.mxu0 %v276
  %2519 = vmatprep.subr.mxu0 0.0
  %2520 = vmatpush1.msra.mxu0 %v277
  %2521 = vmatprep.subr.mxu0 0.0
  %2522 = vmatpush1.msra.mxu0 %v2511
  %2523 = vmatprep.subr.mxu0 0.0
  %2524 = vmatpush1.msra.mxu0 0.0
  %2525 = vmatprep.subr.mxu0 0.0
  %2526 = vmatpush1.msra.mxu0 0.0
  %2527 = vmatprep.subr.mxu0 0.0
  %2528 = vmatpush1.msra.mxu0 0.0
  %2529 = vmatprep.subr.mxu0 0.0
  %2530 = vmatpush1.msra.mxu0 0.0
  %2531 = vmatprep.subr.mxu0 0.0
  %2532 = vmatpush1.msra.mxu0 0.0
  %2533 = vmatprep.subr.mxu0 0.0
  %2534 = vmatpush1.msra.mxu0 0.0
  %2535 = vmatprep.subr.mxu0 0.0
  %2536 = vmatpush1.msra.mxu0 0.0
  %2537 = vmatprep.subr.mxu0 0.0
  %2538 = vmatpush1.msra.mxu0 0.0
  %2539 = vmatprep.subr.mxu0 0.0
  %2540 = vmatpush1.msra.mxu0 0.0
  %2541 = vmatprep.subr.mxu0 0.0
  %2542 = vmatpush1.msra.mxu0 0.0
  %2543 = vmatprep.subr.mxu0 0.0
  %2544 = vmatpush1.msra.mxu0 0.0
  %2545 = vmatprep.subr.mxu0 0.0
  %2546 = vmatpush1.msra.mxu0 0.0
  %2547 = vmatprep.subr.mxu0 0.0
  %2548 = vmatpush1.msra.mxu0 0.0
  %2549 = vmatprep.subr.mxu0 0.0
  %2550 = vmatpush1.msra.mxu0 0.0
  %2551 = vmatprep.subr.mxu0 0.0
  %2552 = vmatpush1.msra.mxu0 0.0
  %2553 = vmatprep.subr.mxu0 0.0
  %2554 = vmatpush1.msra.mxu0 0.0
  %2555 = vmatprep.subr.mxu0 0.0
  %2556 = vmatpush1.msra.mxu0 0.0
  %2557 = vmatprep.subr.mxu0 0.0
  %2558 = vmatpush1.msra.mxu0 0.0
  %2559 = vmatprep.subr.mxu0 0.0
  %2560 = vmatpush1.msra.mxu0 0.0
  %2561 = vmatprep.subr.mxu0 0.0
  %2562 = vmatpush1.msra.mxu0 0.0
  %2563 = vmatprep.subr.mxu0 0.0
  %2564 = vmatpush1.msra.mxu0 0.0
  %2565 = vmatprep.subr.mxu0 0.0
  %2566 = vmatpush1.msra.mxu0 0.0
  %2567 = vmatprep.subr.mxu0 0.0
  %2568 = vmatpush1.msra.mxu0 0.0
  %2569 = vmatprep.subr.mxu0 0.0
  %2570 = vmatpush1.msra.mxu0 0.0
  %2571 = vmatprep.subr.mxu0 0.0
  %2572 = vmatpush1.msra.mxu0 0.0
  %2573 = vmatprep.subr.mxu0 0.0
  %2574 = vmatpush1.msra.mxu0 0.0
  %2575 = vmatprep.subr.mxu0 0.0
  %2576 = vmatpush1.msra.mxu0 0.0
  %2577 = vmatprep.mubr.f32.mxu0 0.0
  %2578 = vmatmul.mubr.f32.gmra.mrb[0].mxu0 %v2505
  %v2579 = vpop.f32.mrb[0].mxu0
  %v2580 = vadd.f32 %v479, %v2579
  %v2581 = vpop.f32.mrb[0].mxu0
  %2582 = vmatprep.mubr.f32.mxu0 0.0
  %2583 = vmatmul.mubr.f32.gmra.mrb[0].mxu0 %v2508
  %v2584 = vpop.f32.mrb[0].mxu0
  %v2585 = vadd.f32 %v484, %v2584
  %v2586 = vpop.f32.mrb[0].mxu0
  %2587 = vdwg.mxu0
  %v2589 = vsel %vm486, %v76, 0
  %v2592 = vsel %vm486, %v77, 0
  %v2595 = vsel %vm493, %v283, 0
  %2597 = vmatprep.subr.mxu0 0.0
  %2598 = vmatpush1.msra.mxu0 %v279
  %2599 = vmatprep.subr.mxu0 0.0
  %2600 = vmatpush1.msra.mxu0 %v280
  %2601 = vmatprep.subr.mxu0 0.0
  %2602 = vmatpush1.msra.mxu0 %v281
  %2603 = vmatprep.subr.mxu0 0.0
  %2604 = vmatpush1.msra.mxu0 %v282
  %2605 = vmatprep.subr.mxu0 0.0
  %2606 = vmatpush1.msra.mxu0 %v2595
  %2607 = vmatprep.subr.mxu0 0.0
  %2608 = vmatpush1.msra.mxu0 0.0
  %2609 = vmatprep.subr.mxu0 0.0
  %2610 = vmatpush1.msra.mxu0 0.0
  %2611 = vmatprep.subr.mxu0 0.0
  %2612 = vmatpush1.msra.mxu0 0.0
  %2613 = vmatprep.subr.mxu0 0.0
  %2614 = vmatpush1.msra.mxu0 0.0
  %2615 = vmatprep.subr.mxu0 0.0
  %2616 = vmatpush1.msra.mxu0 0.0
  %2617 = vmatprep.subr.mxu0 0.0
  %2618 = vmatpush1.msra.mxu0 0.0
  %2619 = vmatprep.subr.mxu0 0.0
  %2620 = vmatpush1.msra.mxu0 0.0
  %2621 = vmatprep.subr.mxu0 0.0
  %2622 = vmatpush1.msra.mxu0 0.0
  %2623 = vmatprep.subr.mxu0 0.0
  %2624 = vmatpush1.msra.mxu0 0.0
  %2625 = vmatprep.subr.mxu0 0.0
  %2626 = vmatpush1.msra.mxu0 0.0
  %2627 = vmatprep.subr.mxu0 0.0
  %2628 = vmatpush1.msra.mxu0 0.0
  %2629 = vmatprep.subr.mxu0 0.0
  %2630 = vmatpush1.msra.mxu0 0.0
  %2631 = vmatprep.subr.mxu0 0.0
  %2632 = vmatpush1.msra.mxu0 0.0
  %2633 = vmatprep.subr.mxu0 0.0
  %2634 = vmatpush1.msra.mxu0 0.0
  %2635 = vmatprep.subr.mxu0 0.0
  %2636 = vmatpush1.msra.mxu0 0.0
  %2637 = vmatprep.subr.mxu0 0.0
  %2638 = vmatpush1.msra.mxu0 0.0
  %2639 = vmatprep.subr.mxu0 0.0
  %2640 = vmatpush1.msra.mxu0 0.0
  %2641 = vmatprep.subr.mxu0 0.0
  %2642 = vmatpush1.msra.mxu0 0.0
  %2643 = vmatprep.subr.mxu0 0.0
  %2644 = vmatpush1.msra.mxu0 0.0
  %2645 = vmatprep.subr.mxu0 0.0
  %2646 = vmatpush1.msra.mxu0 0.0
  %2647 = vmatprep.subr.mxu0 0.0
  %2648 = vmatpush1.msra.mxu0 0.0
  %2649 = vmatprep.subr.mxu0 0.0
  %2650 = vmatpush1.msra.mxu0 0.0
  %2651 = vmatprep.subr.mxu0 0.0
  %2652 = vmatpush1.msra.mxu0 0.0
  %2653 = vmatprep.subr.mxu0 0.0
  %2654 = vmatpush1.msra.mxu0 0.0
  %2655 = vmatprep.subr.mxu0 0.0
  %2656 = vmatpush1.msra.mxu0 0.0
  %2657 = vmatprep.subr.mxu0 0.0
  %2658 = vmatpush1.msra.mxu0 0.0
  %2659 = vmatprep.subr.mxu0 0.0
  %2660 = vmatpush1.msra.mxu0 0.0
  %2661 = vmatprep.mubr.f32.mxu0 0.0
  %2662 = vmatmul.mubr.f32.gmra.mrb[0].mxu0 %v2589
  %v2663 = vpop.f32.mrb[0].mxu0
  %v2664 = vadd.f32 %v479, %v2663
  %v2665 = vpop.f32.mrb[0].mxu0
  %2666 = vmatprep.mubr.f32.mxu0 0.0
  %2667 = vmatmul.mubr.f32.gmra.mrb[0].mxu0 %v2592
  %v2668 = vpop.f32.mrb[0].mxu0
  %v2669 = vadd.f32 %v484, %v2668
  %v2670 = vpop.f32.mrb[0].mxu0
  %2671 = vdwg.mxu0
  %v2673 = vsel %vm486, %v78, 0
  %v2676 = vsel %vm486, %v79, 0
  %v2679 = vsel %vm493, %v288, 0
  %2681 = vmatprep.subr.mxu0 0.0
  %2682 = vmatpush1.msra.mxu0 %v284
  %2683 = vmatprep.subr.mxu0 0.0
  %2684 = vmatpush1.msra.mxu0 %v285
  %2685 = vmatprep.subr.mxu0 0.0
  %2686 = vmatpush1.msra.mxu0 %v286
  %2687 = vmatprep.subr.mxu0 0.0
  %2688 = vmatpush1.msra.mxu0 %v287
  %2689 = vmatprep.subr.mxu0 0.0
  %2690 = vmatpush1.msra.mxu0 %v2679
  %2691 = vmatprep.subr.mxu0 0.0
  %2692 = vmatpush1.msra.mxu0 0.0
  %2693 = vmatprep.subr.mxu0 0.0
  %2694 = vmatpush1.msra.mxu0 0.0
  %2695 = vmatprep.subr.mxu0 0.0
  %2696 = vmatpush1.msra.mxu0 0.0
  %2697 = vmatprep.subr.mxu0 0.0
  %2698 = vmatpush1.msra.mxu0 0.0
  %2699 = vmatprep.subr.mxu0 0.0
  %2700 = vmatpush1.msra.mxu0 0.0
  %2701 = vmatprep.subr.mxu0 0.0
  %2702 = vmatpush1.msra.mxu0 0.0
  %2703 = vmatprep.subr.mxu0 0.0
  %2704 = vmatpush1.msra.mxu0 0.0
  %2705 = vmatprep.subr.mxu0 0.0
  %2706 = vmatpush1.msra.mxu0 0.0
  %2707 = vmatprep.subr.mxu0 0.0
  %2708 = vmatpush1.msra.mxu0 0.0
  %2709 = vmatprep.subr.mxu0 0.0
  %2710 = vmatpush1.msra.mxu0 0.0
  %2711 = vmatprep.subr.mxu0 0.0
  %2712 = vmatpush1.msra.mxu0 0.0
  %2713 = vmatprep.subr.mxu0 0.0
  %2714 = vmatpush1.msra.mxu0 0.0
  %2715 = vmatprep.subr.mxu0 0.0
  %2716 = vmatpush1.msra.mxu0 0.0
  %2717 = vmatprep.subr.mxu0 0.0
  %2718 = vmatpush1.msra.mxu0 0.0
  %2719 = vmatprep.subr.mxu0 0.0
  %2720 = vmatpush1.msra.mxu0 0.0
  %2721 = vmatprep.subr.mxu0 0.0
  %2722 = vmatpush1.msra.mxu0 0.0
  %2723 = vmatprep.subr.mxu0 0.0
  %2724 = vmatpush1.msra.mxu0 0.0
  %2725 = vmatprep.subr.mxu0 0.0
  %2726 = vmatpush1.msra.mxu0 0.0
  %2727 = vmatprep.subr.mxu0 0.0
  %2728 = vmatpush1.msra.mxu0 0.0
  %2729 = vmatprep.subr.mxu0 0.0
  %2730 = vmatpush1.msra.mxu0 0.0
  %2731 = vmatprep.subr.mxu0 0.0
  %2732 = vmatpush1.msra.mxu0 0.0
  %2733 = vmatprep.subr.mxu0 0.0
  %2734 = vmatpush1.msra.mxu0 0.0
  %2735 = vmatprep.subr.mxu0 0.0
  %2736 = vmatpush1.msra.mxu0 0.0
  %2737 = vmatprep.subr.mxu0 0.0
  %2738 = vmatpush1.msra.mxu0 0.0
  %2739 = vmatprep.subr.mxu0 0.0
  %2740 = vmatpush1.msra.mxu0 0.0
  %2741 = vmatprep.subr.mxu0 0.0
  %2742 = vmatpush1.msra.mxu0 0.0
  %2743 = vmatprep.subr.mxu0 0.0
  %2744 = vmatpush1.msra.mxu0 0.0
  %2745 = vmatprep.mubr.f32.mxu0 0.0
  %2746 = vmatmul.mubr.f32.gmra.mrb[0].mxu0 %v2673
  %v2747 = vpop.f32.mrb[0].mxu0
  %v2748 = vadd.f32 %v479, %v2747
  %v2749 = vpop.f32.mrb[0].mxu0
  %2750 = vmatprep.mubr.f32.mxu0 0.0
  %2751 = vmatmul.mubr.f32.gmra.mrb[0].mxu0 %v2676
  %v2752 = vpop.f32.mrb[0].mxu0
  %v2753 = vadd.f32 %v484, %v2752
  %v2754 = vpop.f32.mrb[0].mxu0
  %2755 = vdwg.mxu0
  %v2757 = vsel %vm486, %v80, 0
  %v2760 = vsel %vm486, %v81, 0
  %v2763 = vsel %vm493, %v293, 0
  %2765 = vmatprep.subr.mxu0 0.0
  %2766 = vmatpush1.msra.mxu0 %v289
  %2767 = vmatprep.subr.mxu0 0.0
  %2768 = vmatpush1.msra.mxu0 %v290
  %2769 = vmatprep.subr.mxu0 0.0
  %2770 = vmatpush1.msra.mxu0 %v291
  %2771 = vmatprep.subr.mxu0 0.0
  %2772 = vmatpush1.msra.mxu0 %v292
  %2773 = vmatprep.subr.mxu0 0.0
  %2774 = vmatpush1.msra.mxu0 %v2763
  %2775 = vmatprep.subr.mxu0 0.0
  %2776 = vmatpush1.msra.mxu0 0.0
  %2777 = vmatprep.subr.mxu0 0.0
  %2778 = vmatpush1.msra.mxu0 0.0
  %2779 = vmatprep.subr.mxu0 0.0
  %2780 = vmatpush1.msra.mxu0 0.0
  %2781 = vmatprep.subr.mxu0 0.0
  %2782 = vmatpush1.msra.mxu0 0.0
  %2783 = vmatprep.subr.mxu0 0.0
  %2784 = vmatpush1.msra.mxu0 0.0
  %2785 = vmatprep.subr.mxu0 0.0
  %2786 = vmatpush1.msra.mxu0 0.0
  %2787 = vmatprep.subr.mxu0 0.0
  %2788 = vmatpush1.msra.mxu0 0.0
  %2789 = vmatprep.subr.mxu0 0.0
  %2790 = vmatpush1.msra.mxu0 0.0
  %2791 = vmatprep.subr.mxu0 0.0
  %2792 = vmatpush1.msra.mxu0 0.0
  %2793 = vmatprep.subr.mxu0 0.0
  %2794 = vmatpush1.msra.mxu0 0.0
  %2795 = vmatprep.subr.mxu0 0.0
  %2796 = vmatpush1.msra.mxu0 0.0
  %2797 = vmatprep.subr.mxu0 0.0
  %2798 = vmatpush1.msra.mxu0 0.0
  %2799 = vmatprep.subr.mxu0 0.0
  %2800 = vmatpush1.msra.mxu0 0.0
  %2801 = vmatprep.subr.mxu0 0.0
  %2802 = vmatpush1.msra.mxu0 0.0
  %2803 = vmatprep.subr.mxu0 0.0
  %2804 = vmatpush1.msra.mxu0 0.0
  %2805 = vmatprep.subr.mxu0 0.0
  %2806 = vmatpush1.msra.mxu0 0.0
  %2807 = vmatprep.subr.mxu0 0.0
  %2808 = vmatpush1.msra.mxu0 0.0
  %2809 = vmatprep.subr.mxu0 0.0
  %2810 = vmatpush1.msra.mxu0 0.0
  %2811 = vmatprep.subr.mxu0 0.0
  %2812 = vmatpush1.msra.mxu0 0.0
  %2813 = vmatprep.subr.mxu0 0.0
  %2814 = vmatpush1.msra.mxu0 0.0
  %2815 = vmatprep.subr.mxu0 0.0
  %2816 = vmatpush1.msra.mxu0 0.0
  %2817 = vmatprep.subr.mxu0 0.0
  %2818 = vmatpush1.msra.mxu0 0.0
  %2819 = vmatprep.subr.mxu0 0.0
  %2820 = vmatpush1.msra.mxu0 0.0
  %2821 = vmatprep.subr.mxu0 0.0
  %2822 = vmatpush1.msra.mxu0 0.0
  %2823 = vmatprep.subr.mxu0 0.0
  %2824 = vmatpush1.msra.mxu0 0.0
  %2825 = vmatprep.subr.mxu0 0.0
  %2826 = vmatpush1.msra.mxu0 0.0
  %2827 = vmatprep.subr.mxu0 0.0
  %2828 = vmatpush1.msra.mxu0 0.0
  %2829 = vmatprep.mubr.f32.mxu0 0.0
  %2830 = vmatmul.mubr.f32.gmra.mrb[0].mxu0 %v2757
  %v2831 = vpop.f32.mrb[0].mxu0
  %v2832 = vadd.f32 %v479, %v2831
  %v2833 = vpop.f32.mrb[0].mxu0
  %2834 = vmatprep.mubr.f32.mxu0 0.0
  %2835 = vmatmul.mubr.f32.gmra.mrb[0].mxu0 %v2760
  %v2836 = vpop.f32.mrb[0].mxu0
  %v2837 = vadd.f32 %v484, %v2836
  %v2838 = vpop.f32.mrb[0].mxu0
  %2839 = vdwg.mxu0
  %v2841 = vsel %vm486, %v82, 0
  %v2844 = vsel %vm486, %v83, 0
  %v2847 = vsel %vm493, %v298, 0
  %2849 = vmatprep.subr.mxu0 0.0
  %2850 = vmatpush1.msra.mxu0 %v294
  %2851 = vmatprep.subr.mxu0 0.0
  %2852 = vmatpush1.msra.mxu0 %v295
  %2853 = vmatprep.subr.mxu0 0.0
  %2854 = vmatpush1.msra.mxu0 %v296
  %2855 = vmatprep.subr.mxu0 0.0
  %2856 = vmatpush1.msra.mxu0 %v297
  %2857 = vmatprep.subr.mxu0 0.0
  %2858 = vmatpush1.msra.mxu0 %v2847
  %2859 = vmatprep.subr.mxu0 0.0
  %2860 = vmatpush1.msra.mxu0 0.0
  %2861 = vmatprep.subr.mxu0 0.0
  %2862 = vmatpush1.msra.mxu0 0.0
  %2863 = vmatprep.subr.mxu0 0.0
  %2864 = vmatpush1.msra.mxu0 0.0
  %2865 = vmatprep.subr.mxu0 0.0
  %2866 = vmatpush1.msra.mxu0 0.0
  %2867 = vmatprep.subr.mxu0 0.0
  %2868 = vmatpush1.msra.mxu0 0.0
  %2869 = vmatprep.subr.mxu0 0.0
  %2870 = vmatpush1.msra.mxu0 0.0
  %2871 = vmatprep.subr.mxu0 0.0
  %2872 = vmatpush1.msra.mxu0 0.0
  %2873 = vmatprep.subr.mxu0 0.0
  %2874 = vmatpush1.msra.mxu0 0.0
  %2875 = vmatprep.subr.mxu0 0.0
  %2876 = vmatpush1.msra.mxu0 0.0
  %2877 = vmatprep.subr.mxu0 0.0
  %2878 = vmatpush1.msra.mxu0 0.0
  %2879 = vmatprep.subr.mxu0 0.0
  %2880 = vmatpush1.msra.mxu0 0.0
  %2881 = vmatprep.subr.mxu0 0.0
  %2882 = vmatpush1.msra.mxu0 0.0
  %2883 = vmatprep.subr.mxu0 0.0
  %2884 = vmatpush1.msra.mxu0 0.0
  %2885 = vmatprep.subr.mxu0 0.0
  %2886 = vmatpush1.msra.mxu0 0.0
  %2887 = vmatprep.subr.mxu0 0.0
  %2888 = vmatpush1.msra.mxu0 0.0
  %2889 = vmatprep.subr.mxu0 0.0
  %2890 = vmatpush1.msra.mxu0 0.0
  %2891 = vmatprep.subr.mxu0 0.0
  %2892 = vmatpush1.msra.mxu0 0.0
  %2893 = vmatprep.subr.mxu0 0.0
  %2894 = vmatpush1.msra.mxu0 0.0
  %2895 = vmatprep.subr.mxu0 0.0
  %2896 = vmatpush1.msra.mxu0 0.0
  %2897 = vmatprep.subr.mxu0 0.0
  %2898 = vmatpush1.msra.mxu0 0.0
  %2899 = vmatprep.subr.mxu0 0.0
  %2900 = vmatpush1.msra.mxu0 0.0
  %2901 = vmatprep.subr.mxu0 0.0
  %2902 = vmatpush1.msra.mxu0 0.0
  %2903 = vmatprep.subr.mxu0 0.0
  %2904 = vmatpush1.msra.mxu0 0.0
  %2905 = vmatprep.subr.mxu0 0.0
  %2906 = vmatpush1.msra.mxu0 0.0
  %2907 = vmatprep.subr.mxu0 0.0
  %2908 = vmatpush1.msra.mxu0 0.0
  %2909 = vmatprep.subr.mxu0 0.0
  %2910 = vmatpush1.msra.mxu0 0.0
  %2911 = vmatprep.subr.mxu0 0.0
  %2912 = vmatpush1.msra.mxu0 0.0
  %2913 = vmatprep.mubr.f32.mxu0 0.0
  %2914 = vmatmul.mubr.f32.gmra.mrb[0].mxu0 %v2841
  %v2915 = vpop.f32.mrb[0].mxu0
  %v2916 = vadd.f32 %v479, %v2915
  %v2917 = vpop.f32.mrb[0].mxu0
  %2918 = vmatprep.mubr.f32.mxu0 0.0
  %2919 = vmatmul.mubr.f32.gmra.mrb[0].mxu0 %v2844
  %v2920 = vpop.f32.mrb[0].mxu0
  %v2921 = vadd.f32 %v484, %v2920
  %v2922 = vpop.f32.mrb[0].mxu0
  %2923 = vdwg.mxu0
  %v2925 = vsel %vm486, %v84, 0
  %v2928 = vsel %vm486, %v85, 0
  %v2931 = vsel %vm493, %v303, 0
  %2933 = vmatprep.subr.mxu0 0.0
  %2934 = vmatpush1.msra.mxu0 %v299
  %2935 = vmatprep.subr.mxu0 0.0
  %2936 = vmatpush1.msra.mxu0 %v300
  %2937 = vmatprep.subr.mxu0 0.0
  %2938 = vmatpush1.msra.mxu0 %v301
  %2939 = vmatprep.subr.mxu0 0.0
  %2940 = vmatpush1.msra.mxu0 %v302
  %2941 = vmatprep.subr.mxu0 0.0
  %2942 = vmatpush1.msra.mxu0 %v2931
  %2943 = vmatprep.subr.mxu0 0.0
  %2944 = vmatpush1.msra.mxu0 0.0
  %2945 = vmatprep.subr.mxu0 0.0
  %2946 = vmatpush1.msra.mxu0 0.0
  %2947 = vmatprep.subr.mxu0 0.0
  %2948 = vmatpush1.msra.mxu0 0.0
  %2949 = vmatprep.subr.mxu0 0.0
  %2950 = vmatpush1.msra.mxu0 0.0
  %2951 = vmatprep.subr.mxu0 0.0
  %2952 = vmatpush1.msra.mxu0 0.0
  %2953 = vmatprep.subr.mxu0 0.0
  %2954 = vmatpush1.msra.mxu0 0.0
  %2955 = vmatprep.subr.mxu0 0.0
  %2956 = vmatpush1.msra.mxu0 0.0
  %2957 = vmatprep.subr.mxu0 0.0
  %2958 = vmatpush1.msra.mxu0 0.0
  %2959 = vmatprep.subr.mxu0 0.0
  %2960 = vmatpush1.msra.mxu0 0.0
  %2961 = vmatprep.subr.mxu0 0.0
  %2962 = vmatpush1.msra.mxu0 0.0
  %2963 = vmatprep.subr.mxu0 0.0
  %2964 = vmatpush1.msra.mxu0 0.0
  %2965 = vmatprep.subr.mxu0 0.0
  %2966 = vmatpush1.msra.mxu0 0.0
  %2967 = vmatprep.subr.mxu0 0.0
  %2968 = vmatpush1.msra.mxu0 0.0
  %2969 = vmatprep.subr.mxu0 0.0
  %2970 = vmatpush1.msra.mxu0 0.0
  %2971 = vmatprep.subr.mxu0 0.0
  %2972 = vmatpush1.msra.mxu0 0.0
  %2973 = vmatprep.subr.mxu0 0.0
  %2974 = vmatpush1.msra.mxu0 0.0
  %2975 = vmatprep.subr.mxu0 0.0
  %2976 = vmatpush1.msra.mxu0 0.0
  %2977 = vmatprep.subr.mxu0 0.0
  %2978 = vmatpush1.msra.mxu0 0.0
  %2979 = vmatprep.subr.mxu0 0.0
  %2980 = vmatpush1.msra.mxu0 0.0
  %2981 = vmatprep.subr.mxu0 0.0
  %2982 = vmatpush1.msra.mxu0 0.0
  %2983 = vmatprep.subr.mxu0 0.0
  %2984 = vmatpush1.msra.mxu0 0.0
  %2985 = vmatprep.subr.mxu0 0.0
  %2986 = vmatpush1.msra.mxu0 0.0
  %2987 = vmatprep.subr.mxu0 0.0
  %2988 = vmatpush1.msra.mxu0 0.0
  %2989 = vmatprep.subr.mxu0 0.0
  %2990 = vmatpush1.msra.mxu0 0.0
  %2991 = vmatprep.subr.mxu0 0.0
  %2992 = vmatpush1.msra.mxu0 0.0
  %2993 = vmatprep.subr.mxu0 0.0
  %2994 = vmatpush1.msra.mxu0 0.0
  %2995 = vmatprep.subr.mxu0 0.0
  %2996 = vmatpush1.msra.mxu0 0.0
  %2997 = vmatprep.mubr.f32.mxu0 0.0
  %2998 = vmatmul.mubr.f32.gmra.mrb[0].mxu0 %v2925
  %v2999 = vpop.f32.mrb[0].mxu0
  %v3000 = vadd.f32 %v479, %v2999
  %v3001 = vpop.f32.mrb[0].mxu0
  %3002 = vmatprep.mubr.f32.mxu0 0.0
  %3003 = vmatmul.mubr.f32.gmra.mrb[0].mxu0 %v2928
  %v3004 = vpop.f32.mrb[0].mxu0
  %v3005 = vadd.f32 %v484, %v3004
  %v3006 = vpop.f32.mrb[0].mxu0
  %3007 = vdwg.mxu0
  %v3009 = vsel %vm486, %v86, 0
  %v3012 = vsel %vm486, %v87, 0
  %v3015 = vsel %vm493, %v308, 0
  %3017 = vmatprep.subr.mxu0 0.0
  %3018 = vmatpush1.msra.mxu0 %v304
  %3019 = vmatprep.subr.mxu0 0.0
  %3020 = vmatpush1.msra.mxu0 %v305
  %3021 = vmatprep.subr.mxu0 0.0
  %3022 = vmatpush1.msra.mxu0 %v306
  %3023 = vmatprep.subr.mxu0 0.0
  %3024 = vmatpush1.msra.mxu0 %v307
  %3025 = vmatprep.subr.mxu0 0.0
  %3026 = vmatpush1.msra.mxu0 %v3015
  %3027 = vmatprep.subr.mxu0 0.0
  %3028 = vmatpush1.msra.mxu0 0.0
  %3029 = vmatprep.subr.mxu0 0.0
  %3030 = vmatpush1.msra.mxu0 0.0
  %3031 = vmatprep.subr.mxu0 0.0
  %3032 = vmatpush1.msra.mxu0 0.0
  %3033 = vmatprep.subr.mxu0 0.0
  %3034 = vmatpush1.msra.mxu0 0.0
  %3035 = vmatprep.subr.mxu0 0.0
  %3036 = vmatpush1.msra.mxu0 0.0
  %3037 = vmatprep.subr.mxu0 0.0
  %3038 = vmatpush1.msra.mxu0 0.0
  %3039 = vmatprep.subr.mxu0 0.0
  %3040 = vmatpush1.msra.mxu0 0.0
  %3041 = vmatprep.subr.mxu0 0.0
  %3042 = vmatpush1.msra.mxu0 0.0
  %3043 = vmatprep.subr.mxu0 0.0
  %3044 = vmatpush1.msra.mxu0 0.0
  %3045 = vmatprep.subr.mxu0 0.0
  %3046 = vmatpush1.msra.mxu0 0.0
  %3047 = vmatprep.subr.mxu0 0.0
  %3048 = vmatpush1.msra.mxu0 0.0
  %3049 = vmatprep.subr.mxu0 0.0
  %3050 = vmatpush1.msra.mxu0 0.0
  %3051 = vmatprep.subr.mxu0 0.0
  %3052 = vmatpush1.msra.mxu0 0.0
  %3053 = vmatprep.subr.mxu0 0.0
  %3054 = vmatpush1.msra.mxu0 0.0
  %3055 = vmatprep.subr.mxu0 0.0
  %3056 = vmatpush1.msra.mxu0 0.0
  %3057 = vmatprep.subr.mxu0 0.0
  %3058 = vmatpush1.msra.mxu0 0.0
  %3059 = vmatprep.subr.mxu0 0.0
  %3060 = vmatpush1.msra.mxu0 0.0
  %3061 = vmatprep.subr.mxu0 0.0
  %3062 = vmatpush1.msra.mxu0 0.0
  %3063 = vmatprep.subr.mxu0 0.0
  %3064 = vmatpush1.msra.mxu0 0.0
  %3065 = vmatprep.subr.mxu0 0.0
  %3066 = vmatpush1.msra.mxu0 0.0
  %3067 = vmatprep.subr.mxu0 0.0
  %3068 = vmatpush1.msra.mxu0 0.0
  %3069 = vmatprep.subr.mxu0 0.0
  %3070 = vmatpush1.msra.mxu0 0.0
  %3071 = vmatprep.subr.mxu0 0.0
  %3072 = vmatpush1.msra.mxu0 0.0
  %3073 = vmatprep.subr.mxu0 0.0
  %3074 = vmatpush1.msra.mxu0 0.0
  %3075 = vmatprep.subr.mxu0 0.0
  %3076 = vmatpush1.msra.mxu0 0.0
  %3077 = vmatprep.subr.mxu0 0.0
  %3078 = vmatpush1.msra.mxu0 0.0
  %3079 = vmatprep.subr.mxu0 0.0
  %3080 = vmatpush1.msra.mxu0 0.0
  %3081 = vmatprep.mubr.f32.mxu0 0.0
  %3082 = vmatmul.mubr.f32.gmra.mrb[0].mxu0 %v3009
  %v3083 = vpop.f32.mrb[0].mxu0
  %v3084 = vadd.f32 %v479, %v3083
  %v3085 = vpop.f32.mrb[0].mxu0
  %3086 = vmatprep.mubr.f32.mxu0 0.0
  %3087 = vmatmul.mubr.f32.gmra.mrb[0].mxu0 %v3012
  %v3088 = vpop.f32.mrb[0].mxu0
  %v3089 = vadd.f32 %v484, %v3088
  %v3090 = vpop.f32.mrb[0].mxu0
  %3091 = vdwg.mxu0
  %v3093 = vsel %vm486, %v88, 0
  %v3096 = vsel %vm486, %v89, 0
  %v3099 = vsel %vm493, %v313, 0
  %3101 = vmatprep.subr.mxu0 0.0
  %3102 = vmatpush1.msra.mxu0 %v309
  %3103 = vmatprep.subr.mxu0 0.0
  %3104 = vmatpush1.msra.mxu0 %v310
  %3105 = vmatprep.subr.mxu0 0.0
  %3106 = vmatpush1.msra.mxu0 %v311
  %3107 = vmatprep.subr.mxu0 0.0
  %3108 = vmatpush1.msra.mxu0 %v312
  %3109 = vmatprep.subr.mxu0 0.0
  %3110 = vmatpush1.msra.mxu0 %v3099
  %3111 = vmatprep.subr.mxu0 0.0
  %3112 = vmatpush1.msra.mxu0 0.0
  %3113 = vmatprep.subr.mxu0 0.0
  %3114 = vmatpush1.msra.mxu0 0.0
  %3115 = vmatprep.subr.mxu0 0.0
  %3116 = vmatpush1.msra.mxu0 0.0
  %3117 = vmatprep.subr.mxu0 0.0
  %3118 = vmatpush1.msra.mxu0 0.0
  %3119 = vmatprep.subr.mxu0 0.0
  %3120 = vmatpush1.msra.mxu0 0.0
  %3121 = vmatprep.subr.mxu0 0.0
  %3122 = vmatpush1.msra.mxu0 0.0
  %3123 = vmatprep.subr.mxu0 0.0
  %3124 = vmatpush1.msra.mxu0 0.0
  %3125 = vmatprep.subr.mxu0 0.0
  %3126 = vmatpush1.msra.mxu0 0.0
  %3127 = vmatprep.subr.mxu0 0.0
  %3128 = vmatpush1.msra.mxu0 0.0
  %3129 = vmatprep.subr.mxu0 0.0
  %3130 = vmatpush1.msra.mxu0 0.0
  %3131 = vmatprep.subr.mxu0 0.0
  %3132 = vmatpush1.msra.mxu0 0.0
  %3133 = vmatprep.subr.mxu0 0.0
  %3134 = vmatpush1.msra.mxu0 0.0
  %3135 = vmatprep.subr.mxu0 0.0
  %3136 = vmatpush1.msra.mxu0 0.0
  %3137 = vmatprep.subr.mxu0 0.0
  %3138 = vmatpush1.msra.mxu0 0.0
  %3139 = vmatprep.subr.mxu0 0.0
  %3140 = vmatpush1.msra.mxu0 0.0
  %3141 = vmatprep.subr.mxu0 0.0
  %3142 = vmatpush1.msra.mxu0 0.0
  %3143 = vmatprep.subr.mxu0 0.0
  %3144 = vmatpush1.msra.mxu0 0.0
  %3145 = vmatprep.subr.mxu0 0.0
  %3146 = vmatpush1.msra.mxu0 0.0
  %3147 = vmatprep.subr.mxu0 0.0
  %3148 = vmatpush1.msra.mxu0 0.0
  %3149 = vmatprep.subr.mxu0 0.0
  %3150 = vmatpush1.msra.mxu0 0.0
  %3151 = vmatprep.subr.mxu0 0.0
  %3152 = vmatpush1.msra.mxu0 0.0
  %3153 = vmatprep.subr.mxu0 0.0
  %3154 = vmatpush1.msra.mxu0 0.0
  %3155 = vmatprep.subr.mxu0 0.0
  %3156 = vmatpush1.msra.mxu0 0.0
  %3157 = vmatprep.subr.mxu0 0.0
  %3158 = vmatpush1.msra.mxu0 0.0
  %3159 = vmatprep.subr.mxu0 0.0
  %3160 = vmatpush1.msra.mxu0 0.0
  %3161 = vmatprep.subr.mxu0 0.0
  %3162 = vmatpush1.msra.mxu0 0.0
  %3163 = vmatprep.subr.mxu0 0.0
  %3164 = vmatpush1.msra.mxu0 0.0
  %3165 = vmatprep.mubr.f32.mxu0 0.0
  %3166 = vmatmul.mubr.f32.gmra.mrb[0].mxu0 %v3093
  %v3167 = vpop.f32.mrb[0].mxu0
  %v3168 = vadd.f32 %v479, %v3167
  %v3169 = vpop.f32.mrb[0].mxu0
  %3170 = vmatprep.mubr.f32.mxu0 0.0
  %3171 = vmatmul.mubr.f32.gmra.mrb[0].mxu0 %v3096
  %v3172 = vpop.f32.mrb[0].mxu0
  %v3173 = vadd.f32 %v484, %v3172
  %v3174 = vpop.f32.mrb[0].mxu0
  %3175 = vdwg.mxu0
  %v3177 = vsel %vm486, %v90, 0
  %v3180 = vsel %vm486, %v91, 0
  %v3183 = vsel %vm493, %v318, 0
  %3185 = vmatprep.subr.mxu0 0.0
  %3186 = vmatpush1.msra.mxu0 %v314
  %3187 = vmatprep.subr.mxu0 0.0
  %3188 = vmatpush1.msra.mxu0 %v315
  %3189 = vmatprep.subr.mxu0 0.0
  %3190 = vmatpush1.msra.mxu0 %v316
  %3191 = vmatprep.subr.mxu0 0.0
  %3192 = vmatpush1.msra.mxu0 %v317
  %3193 = vmatprep.subr.mxu0 0.0
  %3194 = vmatpush1.msra.mxu0 %v3183
  %3195 = vmatprep.subr.mxu0 0.0
  %3196 = vmatpush1.msra.mxu0 0.0
  %3197 = vmatprep.subr.mxu0 0.0
  %3198 = vmatpush1.msra.mxu0 0.0
  %3199 = vmatprep.subr.mxu0 0.0
  %3200 = vmatpush1.msra.mxu0 0.0
  %3201 = vmatprep.subr.mxu0 0.0
  %3202 = vmatpush1.msra.mxu0 0.0
  %3203 = vmatprep.subr.mxu0 0.0
  %3204 = vmatpush1.msra.mxu0 0.0
  %3205 = vmatprep.subr.mxu0 0.0
  %3206 = vmatpush1.msra.mxu0 0.0
  %3207 = vmatprep.subr.mxu0 0.0
  %3208 = vmatpush1.msra.mxu0 0.0
  %3209 = vmatprep.subr.mxu0 0.0
  %3210 = vmatpush1.msra.mxu0 0.0
  %3211 = vmatprep.subr.mxu0 0.0
  %3212 = vmatpush1.msra.mxu0 0.0
  %3213 = vmatprep.subr.mxu0 0.0
  %3214 = vmatpush1.msra.mxu0 0.0
  %3215 = vmatprep.subr.mxu0 0.0
  %3216 = vmatpush1.msra.mxu0 0.0
  %3217 = vmatprep.subr.mxu0 0.0
  %3218 = vmatpush1.msra.mxu0 0.0
  %3219 = vmatprep.subr.mxu0 0.0
  %3220 = vmatpush1.msra.mxu0 0.0
  %3221 = vmatprep.subr.mxu0 0.0
  %3222 = vmatpush1.msra.mxu0 0.0
  %3223 = vmatprep.subr.mxu0 0.0
  %3224 = vmatpush1.msra.mxu0 0.0
  %3225 = vmatprep.subr.mxu0 0.0
  %3226 = vmatpush1.msra.mxu0 0.0
  %3227 = vmatprep.subr.mxu0 0.0
  %3228 = vmatpush1.msra.mxu0 0.0
  %3229 = vmatprep.subr.mxu0 0.0
  %3230 = vmatpush1.msra.mxu0 0.0
  %3231 = vmatprep.subr.mxu0 0.0
  %3232 = vmatpush1.msra.mxu0 0.0
  %3233 = vmatprep.subr.mxu0 0.0
  %3234 = vmatpush1.msra.mxu0 0.0
  %3235 = vmatprep.subr.mxu0 0.0
  %3236 = vmatpush1.msra.mxu0 0.0
  %3237 = vmatprep.subr.mxu0 0.0
  %3238 = vmatpush1.msra.mxu0 0.0
  %3239 = vmatprep.subr.mxu0 0.0
  %3240 = vmatpush1.msra.mxu0 0.0
  %3241 = vmatprep.subr.mxu0 0.0
  %3242 = vmatpush1.msra.mxu0 0.0
  %3243 = vmatprep.subr.mxu0 0.0
  %3244 = vmatpush1.msra.mxu0 0.0
  %3245 = vmatprep.subr.mxu0 0.0
  %3246 = vmatpush1.msra.mxu0 0.0
  %3247 = vmatprep.subr.mxu0 0.0
  %3248 = vmatpush1.msra.mxu0 0.0
  %3249 = vmatprep.mubr.f32.mxu0 0.0
  %3250 = vmatmul.mubr.f32.gmra.mrb[0].mxu0 %v3177
  %v3251 = vpop.f32.mrb[0].mxu0
  %v3252 = vadd.f32 %v479, %v3251
  %v3253 = vpop.f32.mrb[0].mxu0
  %3254 = vmatprep.mubr.f32.mxu0 0.0
  %3255 = vmatmul.mubr.f32.gmra.mrb[0].mxu0 %v3180
  %v3256 = vpop.f32.mrb[0].mxu0
  %v3257 = vadd.f32 %v484, %v3256
  %v3258 = vpop.f32.mrb[0].mxu0
  %3259 = vdwg.mxu0
  %v3261 = vsel %vm486, %v92, 0
  %v3264 = vsel %vm486, %v93, 0
  %v3267 = vsel %vm493, %v323, 0
  %3269 = vmatprep.subr.mxu0 0.0
  %3270 = vmatpush1.msra.mxu0 %v319
  %3271 = vmatprep.subr.mxu0 0.0
  %3272 = vmatpush1.msra.mxu0 %v320
  %3273 = vmatprep.subr.mxu0 0.0
  %3274 = vmatpush1.msra.mxu0 %v321
  %3275 = vmatprep.subr.mxu0 0.0
  %3276 = vmatpush1.msra.mxu0 %v322
  %3277 = vmatprep.subr.mxu0 0.0
  %3278 = vmatpush1.msra.mxu0 %v3267
  %3279 = vmatprep.subr.mxu0 0.0
  %3280 = vmatpush1.msra.mxu0 0.0
  %3281 = vmatprep.subr.mxu0 0.0
  %3282 = vmatpush1.msra.mxu0 0.0
  %3283 = vmatprep.subr.mxu0 0.0
  %3284 = vmatpush1.msra.mxu0 0.0
  %3285 = vmatprep.subr.mxu0 0.0
  %3286 = vmatpush1.msra.mxu0 0.0
  %3287 = vmatprep.subr.mxu0 0.0
  %3288 = vmatpush1.msra.mxu0 0.0
  %3289 = vmatprep.subr.mxu0 0.0
  %3290 = vmatpush1.msra.mxu0 0.0
  %3291 = vmatprep.subr.mxu0 0.0
  %3292 = vmatpush1.msra.mxu0 0.0
  %3293 = vmatprep.subr.mxu0 0.0
  %3294 = vmatpush1.msra.mxu0 0.0
  %3295 = vmatprep.subr.mxu0 0.0
  %3296 = vmatpush1.msra.mxu0 0.0
  %3297 = vmatprep.subr.mxu0 0.0
  %3298 = vmatpush1.msra.mxu0 0.0
  %3299 = vmatprep.subr.mxu0 0.0
  %3300 = vmatpush1.msra.mxu0 0.0
  %3301 = vmatprep.subr.mxu0 0.0
  %3302 = vmatpush1.msra.mxu0 0.0
  %3303 = vmatprep.subr.mxu0 0.0
  %3304 = vmatpush1.msra.mxu0 0.0
  %3305 = vmatprep.subr.mxu0 0.0
  %3306 = vmatpush1.msra.mxu0 0.0
  %3307 = vmatprep.subr.mxu0 0.0
  %3308 = vmatpush1.msra.mxu0 0.0
  %3309 = vmatprep.subr.mxu0 0.0
  %3310 = vmatpush1.msra.mxu0 0.0
  %3311 = vmatprep.subr.mxu0 0.0
  %3312 = vmatpush1.msra.mxu0 0.0
  %3313 = vmatprep.subr.mxu0 0.0
  %3314 = vmatpush1.msra.mxu0 0.0
  %3315 = vmatprep.subr.mxu0 0.0
  %3316 = vmatpush1.msra.mxu0 0.0
  %3317 = vmatprep.subr.mxu0 0.0
  %3318 = vmatpush1.msra.mxu0 0.0
  %3319 = vmatprep.subr.mxu0 0.0
  %3320 = vmatpush1.msra.mxu0 0.0
  %3321 = vmatprep.subr.mxu0 0.0
  %3322 = vmatpush1.msra.mxu0 0.0
  %3323 = vmatprep.subr.mxu0 0.0
  %3324 = vmatpush1.msra.mxu0 0.0
  %3325 = vmatprep.subr.mxu0 0.0
  %3326 = vmatpush1.msra.mxu0 0.0
  %3327 = vmatprep.subr.mxu0 0.0
  %3328 = vmatpush1.msra.mxu0 0.0
  %3329 = vmatprep.subr.mxu0 0.0
  %3330 = vmatpush1.msra.mxu0 0.0
  %3331 = vmatprep.subr.mxu0 0.0
  %3332 = vmatpush1.msra.mxu0 0.0
  %3333 = vmatprep.mubr.f32.mxu0 0.0
  %3334 = vmatmul.mubr.f32.gmra.mrb[0].mxu0 %v3261
  %v3335 = vpop.f32.mrb[0].mxu0
  %v3336 = vadd.f32 %v479, %v3335
  %v3337 = vpop.f32.mrb[0].mxu0
  %3338 = vmatprep.mubr.f32.mxu0 0.0
  %3339 = vmatmul.mubr.f32.gmra.mrb[0].mxu0 %v3264
  %v3340 = vpop.f32.mrb[0].mxu0
  %v3341 = vadd.f32 %v484, %v3340
  %v3342 = vpop.f32.mrb[0].mxu0
  %3343 = vdwg.mxu0
  %v3345 = vsel %vm486, %v94, 0
  %v3348 = vsel %vm486, %v95, 0
  %v3351 = vsel %vm493, %v328, 0
  %3353 = vmatprep.subr.mxu0 0.0
  %3354 = vmatpush1.msra.mxu0 %v324
  %3355 = vmatprep.subr.mxu0 0.0
  %3356 = vmatpush1.msra.mxu0 %v325
  %3357 = vmatprep.subr.mxu0 0.0
  %3358 = vmatpush1.msra.mxu0 %v326
  %3359 = vmatprep.subr.mxu0 0.0
  %3360 = vmatpush1.msra.mxu0 %v327
  %3361 = vmatprep.subr.mxu0 0.0
  %3362 = vmatpush1.msra.mxu0 %v3351
  %3363 = vmatprep.subr.mxu0 0.0
  %3364 = vmatpush1.msra.mxu0 0.0
  %3365 = vmatprep.subr.mxu0 0.0
  %3366 = vmatpush1.msra.mxu0 0.0
  %3367 = vmatprep.subr.mxu0 0.0
  %3368 = vmatpush1.msra.mxu0 0.0
  %3369 = vmatprep.subr.mxu0 0.0
  %3370 = vmatpush1.msra.mxu0 0.0
  %3371 = vmatprep.subr.mxu0 0.0
  %3372 = vmatpush1.msra.mxu0 0.0
  %3373 = vmatprep.subr.mxu0 0.0
  %3374 = vmatpush1.msra.mxu0 0.0
  %3375 = vmatprep.subr.mxu0 0.0
  %3376 = vmatpush1.msra.mxu0 0.0
  %3377 = vmatprep.subr.mxu0 0.0
  %3378 = vmatpush1.msra.mxu0 0.0
  %3379 = vmatprep.subr.mxu0 0.0
  %3380 = vmatpush1.msra.mxu0 0.0
  %3381 = vmatprep.subr.mxu0 0.0
  %3382 = vmatpush1.msra.mxu0 0.0
  %3383 = vmatprep.subr.mxu0 0.0
  %3384 = vmatpush1.msra.mxu0 0.0
  %3385 = vmatprep.subr.mxu0 0.0
  %3386 = vmatpush1.msra.mxu0 0.0
  %3387 = vmatprep.subr.mxu0 0.0
  %3388 = vmatpush1.msra.mxu0 0.0
  %3389 = vmatprep.subr.mxu0 0.0
  %3390 = vmatpush1.msra.mxu0 0.0
  %3391 = vmatprep.subr.mxu0 0.0
  %3392 = vmatpush1.msra.mxu0 0.0
  %3393 = vmatprep.subr.mxu0 0.0
  %3394 = vmatpush1.msra.mxu0 0.0
  %3395 = vmatprep.subr.mxu0 0.0
  %3396 = vmatpush1.msra.mxu0 0.0
  %3397 = vmatprep.subr.mxu0 0.0
  %3398 = vmatpush1.msra.mxu0 0.0
  %3399 = vmatprep.subr.mxu0 0.0
  %3400 = vmatpush1.msra.mxu0 0.0
  %3401 = vmatprep.subr.mxu0 0.0
  %3402 = vmatpush1.msra.mxu0 0.0
  %3403 = vmatprep.subr.mxu0 0.0
  %3404 = vmatpush1.msra.mxu0 0.0
  %3405 = vmatprep.subr.mxu0 0.0
  %3406 = vmatpush1.msra.mxu0 0.0
  %3407 = vmatprep.subr.mxu0 0.0
  %3408 = vmatpush1.msra.mxu0 0.0
  %3409 = vmatprep.subr.mxu0 0.0
  %3410 = vmatpush1.msra.mxu0 0.0
  %3411 = vmatprep.subr.mxu0 0.0
  %3412 = vmatpush1.msra.mxu0 0.0
  %3413 = vmatprep.subr.mxu0 0.0
  %3414 = vmatpush1.msra.mxu0 0.0
  %3415 = vmatprep.subr.mxu0 0.0
  %3416 = vmatpush1.msra.mxu0 0.0
  %3417 = vmatprep.mubr.f32.mxu0 0.0
  %3418 = vmatmul.mubr.f32.gmra.mrb[0].mxu0 %v3345
  %v3419 = vpop.f32.mrb[0].mxu0
  %v3420 = vadd.f32 %v479, %v3419
  %v3421 = vpop.f32.mrb[0].mxu0
  %3422 = vmatprep.mubr.f32.mxu0 0.0
  %3423 = vmatmul.mubr.f32.gmra.mrb[0].mxu0 %v3348
  %v3424 = vpop.f32.mrb[0].mxu0
  %v3425 = vadd.f32 %v484, %v3424
  %v3426 = vpop.f32.mrb[0].mxu0
  %3427 = vdwg.mxu0
  %v3429 = vsel %vm486, %v96, 0
  %v3432 = vsel %vm486, %v97, 0
  %v3435 = vsel %vm493, %v333, 0
  %3437 = vmatprep.subr.mxu0 0.0
  %3438 = vmatpush1.msra.mxu0 %v329
  %3439 = vmatprep.subr.mxu0 0.0
  %3440 = vmatpush1.msra.mxu0 %v330
  %3441 = vmatprep.subr.mxu0 0.0
  %3442 = vmatpush1.msra.mxu0 %v331
  %3443 = vmatprep.subr.mxu0 0.0
  %3444 = vmatpush1.msra.mxu0 %v332
  %3445 = vmatprep.subr.mxu0 0.0
  %3446 = vmatpush1.msra.mxu0 %v3435
  %3447 = vmatprep.subr.mxu0 0.0
  %3448 = vmatpush1.msra.mxu0 0.0
  %3449 = vmatprep.subr.mxu0 0.0
  %3450 = vmatpush1.msra.mxu0 0.0
  %3451 = vmatprep.subr.mxu0 0.0
  %3452 = vmatpush1.msra.mxu0 0.0
  %3453 = vmatprep.subr.mxu0 0.0
  %3454 = vmatpush1.msra.mxu0 0.0
  %3455 = vmatprep.subr.mxu0 0.0
  %3456 = vmatpush1.msra.mxu0 0.0
  %3457 = vmatprep.subr.mxu0 0.0
  %3458 = vmatpush1.msra.mxu0 0.0
  %3459 = vmatprep.subr.mxu0 0.0
  %3460 = vmatpush1.msra.mxu0 0.0
  %3461 = vmatprep.subr.mxu0 0.0
  %3462 = vmatpush1.msra.mxu0 0.0
  %3463 = vmatprep.subr.mxu0 0.0
  %3464 = vmatpush1.msra.mxu0 0.0
  %3465 = vmatprep.subr.mxu0 0.0
  %3466 = vmatpush1.msra.mxu0 0.0
  %3467 = vmatprep.subr.mxu0 0.0
  %3468 = vmatpush1.msra.mxu0 0.0
  %3469 = vmatprep.subr.mxu0 0.0
  %3470 = vmatpush1.msra.mxu0 0.0
  %3471 = vmatprep.subr.mxu0 0.0
  %3472 = vmatpush1.msra.mxu0 0.0
  %3473 = vmatprep.subr.mxu0 0.0
  %3474 = vmatpush1.msra.mxu0 0.0
  %3475 = vmatprep.subr.mxu0 0.0
  %3476 = vmatpush1.msra.mxu0 0.0
  %3477 = vmatprep.subr.mxu0 0.0
  %3478 = vmatpush1.msra.mxu0 0.0
  %3479 = vmatprep.subr.mxu0 0.0
  %3480 = vmatpush1.msra.mxu0 0.0
  %3481 = vmatprep.subr.mxu0 0.0
  %3482 = vmatpush1.msra.mxu0 0.0
  %3483 = vmatprep.subr.mxu0 0.0
  %3484 = vmatpush1.msra.mxu0 0.0
  %3485 = vmatprep.subr.mxu0 0.0
  %3486 = vmatpush1.msra.mxu0 0.0
  %3487 = vmatprep.subr.mxu0 0.0
  %3488 = vmatpush1.msra.mxu0 0.0
  %3489 = vmatprep.subr.mxu0 0.0
  %3490 = vmatpush1.msra.mxu0 0.0
  %3491 = vmatprep.subr.mxu0 0.0
  %3492 = vmatpush1.msra.mxu0 0.0
  %3493 = vmatprep.subr.mxu0 0.0
  %3494 = vmatpush1.msra.mxu0 0.0
  %3495 = vmatprep.subr.mxu0 0.0
  %3496 = vmatpush1.msra.mxu0 0.0
  %3497 = vmatprep.subr.mxu0 0.0
  %3498 = vmatpush1.msra.mxu0 0.0
  %3499 = vmatprep.subr.mxu0 0.0
  %3500 = vmatpush1.msra.mxu0 0.0
  %3501 = vmatprep.mubr.f32.mxu0 0.0
  %3502 = vmatmul.mubr.f32.gmra.mrb[0].mxu0 %v3429
  %v3503 = vpop.f32.mrb[0].mxu0
  %v3504 = vadd.f32 %v479, %v3503
  %v3505 = vpop.f32.mrb[0].mxu0
  %3506 = vmatprep.mubr.f32.mxu0 0.0
  %3507 = vmatmul.mubr.f32.gmra.mrb[0].mxu0 %v3432
  %v3508 = vpop.f32.mrb[0].mxu0
  %v3509 = vadd.f32 %v484, %v3508
  %v3510 = vpop.f32.mrb[0].mxu0
  %3511 = vdwg.mxu0
  %v3513 = vsel %vm486, %v98, 0
  %v3516 = vsel %vm486, %v99, 0
  %v3519 = vsel %vm493, %v338, 0
  %3521 = vmatprep.subr.mxu0 0.0
  %3522 = vmatpush1.msra.mxu0 %v334
  %3523 = vmatprep.subr.mxu0 0.0
  %3524 = vmatpush1.msra.mxu0 %v335
  %3525 = vmatprep.subr.mxu0 0.0
  %3526 = vmatpush1.msra.mxu0 %v336
  %3527 = vmatprep.subr.mxu0 0.0
  %3528 = vmatpush1.msra.mxu0 %v337
  %3529 = vmatprep.subr.mxu0 0.0
  %3530 = vmatpush1.msra.mxu0 %v3519
  %3531 = vmatprep.subr.mxu0 0.0
  %3532 = vmatpush1.msra.mxu0 0.0
  %3533 = vmatprep.subr.mxu0 0.0
  %3534 = vmatpush1.msra.mxu0 0.0
  %3535 = vmatprep.subr.mxu0 0.0
  %3536 = vmatpush1.msra.mxu0 0.0
  %3537 = vmatprep.subr.mxu0 0.0
  %3538 = vmatpush1.msra.mxu0 0.0
  %3539 = vmatprep.subr.mxu0 0.0
  %3540 = vmatpush1.msra.mxu0 0.0
  %3541 = vmatprep.subr.mxu0 0.0
  %3542 = vmatpush1.msra.mxu0 0.0
  %3543 = vmatprep.subr.mxu0 0.0
  %3544 = vmatpush1.msra.mxu0 0.0
  %3545 = vmatprep.subr.mxu0 0.0
  %3546 = vmatpush1.msra.mxu0 0.0
  %3547 = vmatprep.subr.mxu0 0.0
  %3548 = vmatpush1.msra.mxu0 0.0
  %3549 = vmatprep.subr.mxu0 0.0
  %3550 = vmatpush1.msra.mxu0 0.0
  %3551 = vmatprep.subr.mxu0 0.0
  %3552 = vmatpush1.msra.mxu0 0.0
  %3553 = vmatprep.subr.mxu0 0.0
  %3554 = vmatpush1.msra.mxu0 0.0
  %3555 = vmatprep.subr.mxu0 0.0
  %3556 = vmatpush1.msra.mxu0 0.0
  %3557 = vmatprep.subr.mxu0 0.0
  %3558 = vmatpush1.msra.mxu0 0.0
  %3559 = vmatprep.subr.mxu0 0.0
  %3560 = vmatpush1.msra.mxu0 0.0
  %3561 = vmatprep.subr.mxu0 0.0
  %3562 = vmatpush1.msra.mxu0 0.0
  %3563 = vmatprep.subr.mxu0 0.0
  %3564 = vmatpush1.msra.mxu0 0.0
  %3565 = vmatprep.subr.mxu0 0.0
  %3566 = vmatpush1.msra.mxu0 0.0
  %3567 = vmatprep.subr.mxu0 0.0
  %3568 = vmatpush1.msra.mxu0 0.0
  %3569 = vmatprep.subr.mxu0 0.0
  %3570 = vmatpush1.msra.mxu0 0.0
  %3571 = vmatprep.subr.mxu0 0.0
  %3572 = vmatpush1.msra.mxu0 0.0
  %3573 = vmatprep.subr.mxu0 0.0
  %3574 = vmatpush1.msra.mxu0 0.0
  %3575 = vmatprep.subr.mxu0 0.0
  %3576 = vmatpush1.msra.mxu0 0.0
  %3577 = vmatprep.subr.mxu0 0.0
  %3578 = vmatpush1.msra.mxu0 0.0
  %3579 = vmatprep.subr.mxu0 0.0
  %3580 = vmatpush1.msra.mxu0 0.0
  %3581 = vmatprep.subr.mxu0 0.0
  %3582 = vmatpush1.msra.mxu0 0.0
  %3583 = vmatprep.subr.mxu0 0.0
  %3584 = vmatpush1.msra.mxu0 0.0
  %3585 = vmatprep.mubr.f32.mxu0 0.0
  %3586 = vmatmul.mubr.f32.gmra.mrb[0].mxu0 %v3513
  %v3587 = vpop.f32.mrb[0].mxu0
  %v3588 = vadd.f32 %v479, %v3587
  %v3589 = vpop.f32.mrb[0].mxu0
  %3590 = vmatprep.mubr.f32.mxu0 0.0
  %3591 = vmatmul.mubr.f32.gmra.mrb[0].mxu0 %v3516
  %v3592 = vpop.f32.mrb[0].mxu0
  %v3593 = vadd.f32 %v484, %v3592
  %v3594 = vpop.f32.mrb[0].mxu0
  %3595 = vdwg.mxu0
  %v3597 = vsel %vm486, %v100, 0
  %v3600 = vsel %vm486, %v101, 0
  %v3603 = vsel %vm493, %v343, 0
  %3605 = vmatprep.subr.mxu0 0.0
  %3606 = vmatpush1.msra.mxu0 %v339
  %3607 = vmatprep.subr.mxu0 0.0
  %3608 = vmatpush1.msra.mxu0 %v340
  %3609 = vmatprep.subr.mxu0 0.0
  %3610 = vmatpush1.msra.mxu0 %v341
  %3611 = vmatprep.subr.mxu0 0.0
  %3612 = vmatpush1.msra.mxu0 %v342
  %3613 = vmatprep.subr.mxu0 0.0
  %3614 = vmatpush1.msra.mxu0 %v3603
  %3615 = vmatprep.subr.mxu0 0.0
  %3616 = vmatpush1.msra.mxu0 0.0
  %3617 = vmatprep.subr.mxu0 0.0
  %3618 = vmatpush1.msra.mxu0 0.0
  %3619 = vmatprep.subr.mxu0 0.0
  %3620 = vmatpush1.msra.mxu0 0.0
  %3621 = vmatprep.subr.mxu0 0.0
  %3622 = vmatpush1.msra.mxu0 0.0
  %3623 = vmatprep.subr.mxu0 0.0
  %3624 = vmatpush1.msra.mxu0 0.0
  %3625 = vmatprep.subr.mxu0 0.0
  %3626 = vmatpush1.msra.mxu0 0.0
  %3627 = vmatprep.subr.mxu0 0.0
  %3628 = vmatpush1.msra.mxu0 0.0
  %3629 = vmatprep.subr.mxu0 0.0
  %3630 = vmatpush1.msra.mxu0 0.0
  %3631 = vmatprep.subr.mxu0 0.0
  %3632 = vmatpush1.msra.mxu0 0.0
  %3633 = vmatprep.subr.mxu0 0.0
  %3634 = vmatpush1.msra.mxu0 0.0
  %3635 = vmatprep.subr.mxu0 0.0
  %3636 = vmatpush1.msra.mxu0 0.0
  %3637 = vmatprep.subr.mxu0 0.0
  %3638 = vmatpush1.msra.mxu0 0.0
  %3639 = vmatprep.subr.mxu0 0.0
  %3640 = vmatpush1.msra.mxu0 0.0
  %3641 = vmatprep.subr.mxu0 0.0
  %3642 = vmatpush1.msra.mxu0 0.0
  %3643 = vmatprep.subr.mxu0 0.0
  %3644 = vmatpush1.msra.mxu0 0.0
  %3645 = vmatprep.subr.mxu0 0.0
  %3646 = vmatpush1.msra.mxu0 0.0
  %3647 = vmatprep.subr.mxu0 0.0
  %3648 = vmatpush1.msra.mxu0 0.0
  %3649 = vmatprep.subr.mxu0 0.0
  %3650 = vmatpush1.msra.mxu0 0.0
  %3651 = vmatprep.subr.mxu0 0.0
  %3652 = vmatpush1.msra.mxu0 0.0
  %3653 = vmatprep.subr.mxu0 0.0
  %3654 = vmatpush1.msra.mxu0 0.0
  %3655 = vmatprep.subr.mxu0 0.0
  %3656 = vmatpush1.msra.mxu0 0.0
  %3657 = vmatprep.subr.mxu0 0.0
  %3658 = vmatpush1.msra.mxu0 0.0
  %3659 = vmatprep.subr.mxu0 0.0
  %3660 = vmatpush1.msra.mxu0 0.0
  %3661 = vmatprep.subr.mxu0 0.0
  %3662 = vmatpush1.msra.mxu0 0.0
  %3663 = vmatprep.subr.mxu0 0.0
  %3664 = vmatpush1.msra.mxu0 0.0
  %3665 = vmatprep.subr.mxu0 0.0
  %3666 = vmatpush1.msra.mxu0 0.0
  %3667 = vmatprep.subr.mxu0 0.0
  %3668 = vmatpush1.msra.mxu0 0.0
  %3669 = vmatprep.mubr.f32.mxu0 0.0
  %3670 = vmatmul.mubr.f32.gmra.mrb[0].mxu0 %v3597
  %v3671 = vpop.f32.mrb[0].mxu0
  %v3672 = vadd.f32 %v479, %v3671
  %v3673 = vpop.f32.mrb[0].mxu0
  %3674 = vmatprep.mubr.f32.mxu0 0.0
  %3675 = vmatmul.mubr.f32.gmra.mrb[0].mxu0 %v3600
  %v3676 = vpop.f32.mrb[0].mxu0
  %v3677 = vadd.f32 %v484, %v3676
  %v3678 = vpop.f32.mrb[0].mxu0
  %3679 = vdwg.mxu0
  %v3681 = vsel %vm486, %v102, 0
  %v3684 = vsel %vm486, %v103, 0
  %v3687 = vsel %vm493, %v348, 0
  %3689 = vmatprep.subr.mxu0 0.0
  %3690 = vmatpush1.msra.mxu0 %v344
  %3691 = vmatprep.subr.mxu0 0.0
  %3692 = vmatpush1.msra.mxu0 %v345
  %3693 = vmatprep.subr.mxu0 0.0
  %3694 = vmatpush1.msra.mxu0 %v346
  %3695 = vmatprep.subr.mxu0 0.0
  %3696 = vmatpush1.msra.mxu0 %v347
  %3697 = vmatprep.subr.mxu0 0.0
  %3698 = vmatpush1.msra.mxu0 %v3687
  %3699 = vmatprep.subr.mxu0 0.0
  %3700 = vmatpush1.msra.mxu0 0.0
  %3701 = vmatprep.subr.mxu0 0.0
  %3702 = vmatpush1.msra.mxu0 0.0
  %3703 = vmatprep.subr.mxu0 0.0
  %3704 = vmatpush1.msra.mxu0 0.0
  %3705 = vmatprep.subr.mxu0 0.0
  %3706 = vmatpush1.msra.mxu0 0.0
  %3707 = vmatprep.subr.mxu0 0.0
  %3708 = vmatpush1.msra.mxu0 0.0
  %3709 = vmatprep.subr.mxu0 0.0
  %3710 = vmatpush1.msra.mxu0 0.0
  %3711 = vmatprep.subr.mxu0 0.0
  %3712 = vmatpush1.msra.mxu0 0.0
  %3713 = vmatprep.subr.mxu0 0.0
  %3714 = vmatpush1.msra.mxu0 0.0
  %3715 = vmatprep.subr.mxu0 0.0
  %3716 = vmatpush1.msra.mxu0 0.0
  %3717 = vmatprep.subr.mxu0 0.0
  %3718 = vmatpush1.msra.mxu0 0.0
  %3719 = vmatprep.subr.mxu0 0.0
  %3720 = vmatpush1.msra.mxu0 0.0
  %3721 = vmatprep.subr.mxu0 0.0
  %3722 = vmatpush1.msra.mxu0 0.0
  %3723 = vmatprep.subr.mxu0 0.0
  %3724 = vmatpush1.msra.mxu0 0.0
  %3725 = vmatprep.subr.mxu0 0.0
  %3726 = vmatpush1.msra.mxu0 0.0
  %3727 = vmatprep.subr.mxu0 0.0
  %3728 = vmatpush1.msra.mxu0 0.0
  %3729 = vmatprep.subr.mxu0 0.0
  %3730 = vmatpush1.msra.mxu0 0.0
  %3731 = vmatprep.subr.mxu0 0.0
  %3732 = vmatpush1.msra.mxu0 0.0
  %3733 = vmatprep.subr.mxu0 0.0
  %3734 = vmatpush1.msra.mxu0 0.0
  %3735 = vmatprep.subr.mxu0 0.0
  %3736 = vmatpush1.msra.mxu0 0.0
  %3737 = vmatprep.subr.mxu0 0.0
  %3738 = vmatpush1.msra.mxu0 0.0
  %3739 = vmatprep.subr.mxu0 0.0
  %3740 = vmatpush1.msra.mxu0 0.0
  %3741 = vmatprep.subr.mxu0 0.0
  %3742 = vmatpush1.msra.mxu0 0.0
  %3743 = vmatprep.subr.mxu0 0.0
  %3744 = vmatpush1.msra.mxu0 0.0
  %3745 = vmatprep.subr.mxu0 0.0
  %3746 = vmatpush1.msra.mxu0 0.0
  %3747 = vmatprep.subr.mxu0 0.0
  %3748 = vmatpush1.msra.mxu0 0.0
  %3749 = vmatprep.subr.mxu0 0.0
  %3750 = vmatpush1.msra.mxu0 0.0
  %3751 = vmatprep.subr.mxu0 0.0
  %3752 = vmatpush1.msra.mxu0 0.0
  %3753 = vmatprep.mubr.f32.mxu0 0.0
  %3754 = vmatmul.mubr.f32.gmra.mrb[0].mxu0 %v3681
  %v3755 = vpop.f32.mrb[0].mxu0
  %v3756 = vadd.f32 %v479, %v3755
  %v3757 = vpop.f32.mrb[0].mxu0
  %3758 = vmatprep.mubr.f32.mxu0 0.0
  %3759 = vmatmul.mubr.f32.gmra.mrb[0].mxu0 %v3684
  %v3760 = vpop.f32.mrb[0].mxu0
  %v3761 = vadd.f32 %v484, %v3760
  %v3762 = vpop.f32.mrb[0].mxu0
  %3763 = vdwg.mxu0
  %v3765 = vsel %vm486, %v104, 0
  %v3768 = vsel %vm486, %v105, 0
  %v3771 = vsel %vm493, %v353, 0
  %3773 = vmatprep.subr.mxu0 0.0
  %3774 = vmatpush1.msra.mxu0 %v349
  %3775 = vmatprep.subr.mxu0 0.0
  %3776 = vmatpush1.msra.mxu0 %v350
  %3777 = vmatprep.subr.mxu0 0.0
  %3778 = vmatpush1.msra.mxu0 %v351
  %3779 = vmatprep.subr.mxu0 0.0
  %3780 = vmatpush1.msra.mxu0 %v352
  %3781 = vmatprep.subr.mxu0 0.0
  %3782 = vmatpush1.msra.mxu0 %v3771
  %3783 = vmatprep.subr.mxu0 0.0
  %3784 = vmatpush1.msra.mxu0 0.0
  %3785 = vmatprep.subr.mxu0 0.0
  %3786 = vmatpush1.msra.mxu0 0.0
  %3787 = vmatprep.subr.mxu0 0.0
  %3788 = vmatpush1.msra.mxu0 0.0
  %3789 = vmatprep.subr.mxu0 0.0
  %3790 = vmatpush1.msra.mxu0 0.0
  %3791 = vmatprep.subr.mxu0 0.0
  %3792 = vmatpush1.msra.mxu0 0.0
  %3793 = vmatprep.subr.mxu0 0.0
  %3794 = vmatpush1.msra.mxu0 0.0
  %3795 = vmatprep.subr.mxu0 0.0
  %3796 = vmatpush1.msra.mxu0 0.0
  %3797 = vmatprep.subr.mxu0 0.0
  %3798 = vmatpush1.msra.mxu0 0.0
  %3799 = vmatprep.subr.mxu0 0.0
  %3800 = vmatpush1.msra.mxu0 0.0
  %3801 = vmatprep.subr.mxu0 0.0
  %3802 = vmatpush1.msra.mxu0 0.0
  %3803 = vmatprep.subr.mxu0 0.0
  %3804 = vmatpush1.msra.mxu0 0.0
  %3805 = vmatprep.subr.mxu0 0.0
  %3806 = vmatpush1.msra.mxu0 0.0
  %3807 = vmatprep.subr.mxu0 0.0
  %3808 = vmatpush1.msra.mxu0 0.0
  %3809 = vmatprep.subr.mxu0 0.0
  %3810 = vmatpush1.msra.mxu0 0.0
  %3811 = vmatprep.subr.mxu0 0.0
  %3812 = vmatpush1.msra.mxu0 0.0
  %3813 = vmatprep.subr.mxu0 0.0
  %3814 = vmatpush1.msra.mxu0 0.0
  %3815 = vmatprep.subr.mxu0 0.0
  %3816 = vmatpush1.msra.mxu0 0.0
  %3817 = vmatprep.subr.mxu0 0.0
  %3818 = vmatpush1.msra.mxu0 0.0
  %3819 = vmatprep.subr.mxu0 0.0
  %3820 = vmatpush1.msra.mxu0 0.0
  %3821 = vmatprep.subr.mxu0 0.0
  %3822 = vmatpush1.msra.mxu0 0.0
  %3823 = vmatprep.subr.mxu0 0.0
  %3824 = vmatpush1.msra.mxu0 0.0
  %3825 = vmatprep.subr.mxu0 0.0
  %3826 = vmatpush1.msra.mxu0 0.0
  %3827 = vmatprep.subr.mxu0 0.0
  %3828 = vmatpush1.msra.mxu0 0.0
  %3829 = vmatprep.subr.mxu0 0.0
  %3830 = vmatpush1.msra.mxu0 0.0
  %3831 = vmatprep.subr.mxu0 0.0
  %3832 = vmatpush1.msra.mxu0 0.0
  %3833 = vmatprep.subr.mxu0 0.0
  %3834 = vmatpush1.msra.mxu0 0.0
  %3835 = vmatprep.subr.mxu0 0.0
  %3836 = vmatpush1.msra.mxu0 0.0
  %3837 = vmatprep.mubr.f32.mxu0 0.0
  %3838 = vmatmul.mubr.f32.gmra.mrb[0].mxu0 %v3765
  %v3839 = vpop.f32.mrb[0].mxu0
  %v3840 = vadd.f32 %v479, %v3839
  %v3841 = vpop.f32.mrb[0].mxu0
  %3842 = vmatprep.mubr.f32.mxu0 0.0
  %3843 = vmatmul.mubr.f32.gmra.mrb[0].mxu0 %v3768
  %v3844 = vpop.f32.mrb[0].mxu0
  %v3845 = vadd.f32 %v484, %v3844
  %v3846 = vpop.f32.mrb[0].mxu0
  %3847 = vdwg.mxu0
  %v3849 = vsel %vm486, %v106, 0
  %v3852 = vsel %vm486, %v107, 0
  %v3855 = vsel %vm493, %v358, 0
  %3857 = vmatprep.subr.mxu0 0.0
  %3858 = vmatpush1.msra.mxu0 %v354
  %3859 = vmatprep.subr.mxu0 0.0
  %3860 = vmatpush1.msra.mxu0 %v355
  %3861 = vmatprep.subr.mxu0 0.0
  %3862 = vmatpush1.msra.mxu0 %v356
  %3863 = vmatprep.subr.mxu0 0.0
  %3864 = vmatpush1.msra.mxu0 %v357
  %3865 = vmatprep.subr.mxu0 0.0
  %3866 = vmatpush1.msra.mxu0 %v3855
  %3867 = vmatprep.subr.mxu0 0.0
  %3868 = vmatpush1.msra.mxu0 0.0
  %3869 = vmatprep.subr.mxu0 0.0
  %3870 = vmatpush1.msra.mxu0 0.0
  %3871 = vmatprep.subr.mxu0 0.0
  %3872 = vmatpush1.msra.mxu0 0.0
  %3873 = vmatprep.subr.mxu0 0.0
  %3874 = vmatpush1.msra.mxu0 0.0
  %3875 = vmatprep.subr.mxu0 0.0
  %3876 = vmatpush1.msra.mxu0 0.0
  %3877 = vmatprep.subr.mxu0 0.0
  %3878 = vmatpush1.msra.mxu0 0.0
  %3879 = vmatprep.subr.mxu0 0.0
  %3880 = vmatpush1.msra.mxu0 0.0
  %3881 = vmatprep.subr.mxu0 0.0
  %3882 = vmatpush1.msra.mxu0 0.0
  %3883 = vmatprep.subr.mxu0 0.0
  %3884 = vmatpush1.msra.mxu0 0.0
  %3885 = vmatprep.subr.mxu0 0.0
  %3886 = vmatpush1.msra.mxu0 0.0
  %3887 = vmatprep.subr.mxu0 0.0
  %3888 = vmatpush1.msra.mxu0 0.0
  %3889 = vmatprep.subr.mxu0 0.0
  %3890 = vmatpush1.msra.mxu0 0.0
  %3891 = vmatprep.subr.mxu0 0.0
  %3892 = vmatpush1.msra.mxu0 0.0
  %3893 = vmatprep.subr.mxu0 0.0
  %3894 = vmatpush1.msra.mxu0 0.0
  %3895 = vmatprep.subr.mxu0 0.0
  %3896 = vmatpush1.msra.mxu0 0.0
  %3897 = vmatprep.subr.mxu0 0.0
  %3898 = vmatpush1.msra.mxu0 0.0
  %3899 = vmatprep.subr.mxu0 0.0
  %3900 = vmatpush1.msra.mxu0 0.0
  %3901 = vmatprep.subr.mxu0 0.0
  %3902 = vmatpush1.msra.mxu0 0.0
  %3903 = vmatprep.subr.mxu0 0.0
  %3904 = vmatpush1.msra.mxu0 0.0
  %3905 = vmatprep.subr.mxu0 0.0
  %3906 = vmatpush1.msra.mxu0 0.0
  %3907 = vmatprep.subr.mxu0 0.0
  %3908 = vmatpush1.msra.mxu0 0.0
  %3909 = vmatprep.subr.mxu0 0.0
  %3910 = vmatpush1.msra.mxu0 0.0
  %3911 = vmatprep.subr.mxu0 0.0
  %3912 = vmatpush1.msra.mxu0 0.0
  %3913 = vmatprep.subr.mxu0 0.0
  %3914 = vmatpush1.msra.mxu0 0.0
  %3915 = vmatprep.subr.mxu0 0.0
  %3916 = vmatpush1.msra.mxu0 0.0
  %3917 = vmatprep.subr.mxu0 0.0
  %3918 = vmatpush1.msra.mxu0 0.0
  %3919 = vmatprep.subr.mxu0 0.0
  %3920 = vmatpush1.msra.mxu0 0.0
  %3921 = vmatprep.mubr.f32.mxu0 0.0
  %3922 = vmatmul.mubr.f32.gmra.mrb[0].mxu0 %v3849
  %v3923 = vpop.f32.mrb[0].mxu0
  %v3924 = vadd.f32 %v479, %v3923
  %v3925 = vpop.f32.mrb[0].mxu0
  %3926 = vmatprep.mubr.f32.mxu0 0.0
  %3927 = vmatmul.mubr.f32.gmra.mrb[0].mxu0 %v3852
  %v3928 = vpop.f32.mrb[0].mxu0
  %v3929 = vadd.f32 %v484, %v3928
  %v3930 = vpop.f32.mrb[0].mxu0
  %3931 = vdwg.mxu0
  %v3933 = vsel %vm486, %v108, 0
  %v3936 = vsel %vm486, %v109, 0
  %v3939 = vsel %vm493, %v363, 0
  %3941 = vmatprep.subr.mxu0 0.0
  %3942 = vmatpush1.msra.mxu0 %v359
  %3943 = vmatprep.subr.mxu0 0.0
  %3944 = vmatpush1.msra.mxu0 %v360
  %3945 = vmatprep.subr.mxu0 0.0
  %3946 = vmatpush1.msra.mxu0 %v361
  %3947 = vmatprep.subr.mxu0 0.0
  %3948 = vmatpush1.msra.mxu0 %v362
  %3949 = vmatprep.subr.mxu0 0.0
  %3950 = vmatpush1.msra.mxu0 %v3939
  %3951 = vmatprep.subr.mxu0 0.0
  %3952 = vmatpush1.msra.mxu0 0.0
  %3953 = vmatprep.subr.mxu0 0.0
  %3954 = vmatpush1.msra.mxu0 0.0
  %3955 = vmatprep.subr.mxu0 0.0
  %3956 = vmatpush1.msra.mxu0 0.0
  %3957 = vmatprep.subr.mxu0 0.0
  %3958 = vmatpush1.msra.mxu0 0.0
  %3959 = vmatprep.subr.mxu0 0.0
  %3960 = vmatpush1.msra.mxu0 0.0
  %3961 = vmatprep.subr.mxu0 0.0
  %3962 = vmatpush1.msra.mxu0 0.0
  %3963 = vmatprep.subr.mxu0 0.0
  %3964 = vmatpush1.msra.mxu0 0.0
  %3965 = vmatprep.subr.mxu0 0.0
  %3966 = vmatpush1.msra.mxu0 0.0
  %3967 = vmatprep.subr.mxu0 0.0
  %3968 = vmatpush1.msra.mxu0 0.0
  %3969 = vmatprep.subr.mxu0 0.0
  %3970 = vmatpush1.msra.mxu0 0.0
  %3971 = vmatprep.subr.mxu0 0.0
  %3972 = vmatpush1.msra.mxu0 0.0
  %3973 = vmatprep.subr.mxu0 0.0
  %3974 = vmatpush1.msra.mxu0 0.0
  %3975 = vmatprep.subr.mxu0 0.0
  %3976 = vmatpush1.msra.mxu0 0.0
  %3977 = vmatprep.subr.mxu0 0.0
  %3978 = vmatpush1.msra.mxu0 0.0
  %3979 = vmatprep.subr.mxu0 0.0
  %3980 = vmatpush1.msra.mxu0 0.0
  %3981 = vmatprep.subr.mxu0 0.0
  %3982 = vmatpush1.msra.mxu0 0.0
  %3983 = vmatprep.subr.mxu0 0.0
  %3984 = vmatpush1.msra.mxu0 0.0
  %3985 = vmatprep.subr.mxu0 0.0
  %3986 = vmatpush1.msra.mxu0 0.0
  %3987 = vmatprep.subr.mxu0 0.0
  %3988 = vmatpush1.msra.mxu0 0.0
  %3989 = vmatprep.subr.mxu0 0.0
  %3990 = vmatpush1.msra.mxu0 0.0
  %3991 = vmatprep.subr.mxu0 0.0
  %3992 = vmatpush1.msra.mxu0 0.0
  %3993 = vmatprep.subr.mxu0 0.0
  %3994 = vmatpush1.msra.mxu0 0.0
  %3995 = vmatprep.subr.mxu0 0.0
  %3996 = vmatpush1.msra.mxu0 0.0
  %3997 = vmatprep.subr.mxu0 0.0
  %3998 = vmatpush1.msra.mxu0 0.0
  %3999 = vmatprep.subr.mxu0 0.0
  %4000 = vmatpush1.msra.mxu0 0.0
  %4001 = vmatprep.subr.mxu0 0.0
  %4002 = vmatpush1.msra.mxu0 0.0
  %4003 = vmatprep.subr.mxu0 0.0
  %4004 = vmatpush1.msra.mxu0 0.0
  %4005 = vmatprep.mubr.f32.mxu0 0.0
  %4006 = vmatmul.mubr.f32.gmra.mrb[0].mxu0 %v3933
  %v4007 = vpop.f32.mrb[0].mxu0
  %v4008 = vadd.f32 %v479, %v4007
  %v4009 = vpop.f32.mrb[0].mxu0
  %4010 = vmatprep.mubr.f32.mxu0 0.0
  %4011 = vmatmul.mubr.f32.gmra.mrb[0].mxu0 %v3936
  %v4012 = vpop.f32.mrb[0].mxu0
  %v4013 = vadd.f32 %v484, %v4012
  %v4014 = vpop.f32.mrb[0].mxu0
  %4015 = vdwg.mxu0
  %v4017 = vsel %vm486, %v110, 0
  %v4020 = vsel %vm486, %v111, 0
  %v4023 = vsel %vm493, %v368, 0
  %4025 = vmatprep.subr.mxu0 0.0
  %4026 = vmatpush1.msra.mxu0 %v364
  %4027 = vmatprep.subr.mxu0 0.0
  %4028 = vmatpush1.msra.mxu0 %v365
  %4029 = vmatprep.subr.mxu0 0.0
  %4030 = vmatpush1.msra.mxu0 %v366
  %4031 = vmatprep.subr.mxu0 0.0
  %4032 = vmatpush1.msra.mxu0 %v367
  %4033 = vmatprep.subr.mxu0 0.0
  %4034 = vmatpush1.msra.mxu0 %v4023
  %4035 = vmatprep.subr.mxu0 0.0
  %4036 = vmatpush1.msra.mxu0 0.0
  %4037 = vmatprep.subr.mxu0 0.0
  %4038 = vmatpush1.msra.mxu0 0.0
  %4039 = vmatprep.subr.mxu0 0.0
  %4040 = vmatpush1.msra.mxu0 0.0
  %4041 = vmatprep.subr.mxu0 0.0
  %4042 = vmatpush1.msra.mxu0 0.0
  %4043 = vmatprep.subr.mxu0 0.0
  %4044 = vmatpush1.msra.mxu0 0.0
  %4045 = vmatprep.subr.mxu0 0.0
  %4046 = vmatpush1.msra.mxu0 0.0
  %4047 = vmatprep.subr.mxu0 0.0
  %4048 = vmatpush1.msra.mxu0 0.0
  %4049 = vmatprep.subr.mxu0 0.0
  %4050 = vmatpush1.msra.mxu0 0.0
  %4051 = vmatprep.subr.mxu0 0.0
  %4052 = vmatpush1.msra.mxu0 0.0
  %4053 = vmatprep.subr.mxu0 0.0
  %4054 = vmatpush1.msra.mxu0 0.0
  %4055 = vmatprep.subr.mxu0 0.0
  %4056 = vmatpush1.msra.mxu0 0.0
  %4057 = vmatprep.subr.mxu0 0.0
  %4058 = vmatpush1.msra.mxu0 0.0
  %4059 = vmatprep.subr.mxu0 0.0
  %4060 = vmatpush1.msra.mxu0 0.0
  %4061 = vmatprep.subr.mxu0 0.0
  %4062 = vmatpush1.msra.mxu0 0.0
  %4063 = vmatprep.subr.mxu0 0.0
  %4064 = vmatpush1.msra.mxu0 0.0
  %4065 = vmatprep.subr.mxu0 0.0
  %4066 = vmatpush1.msra.mxu0 0.0
  %4067 = vmatprep.subr.mxu0 0.0
  %4068 = vmatpush1.msra.mxu0 0.0
  %4069 = vmatprep.subr.mxu0 0.0
  %4070 = vmatpush1.msra.mxu0 0.0
  %4071 = vmatprep.subr.mxu0 0.0
  %4072 = vmatpush1.msra.mxu0 0.0
  %4073 = vmatprep.subr.mxu0 0.0
  %4074 = vmatpush1.msra.mxu0 0.0
  %4075 = vmatprep.subr.mxu0 0.0
  %4076 = vmatpush1.msra.mxu0 0.0
  %4077 = vmatprep.subr.mxu0 0.0
  %4078 = vmatpush1.msra.mxu0 0.0
  %4079 = vmatprep.subr.mxu0 0.0
  %4080 = vmatpush1.msra.mxu0 0.0
  %4081 = vmatprep.subr.mxu0 0.0
  %4082 = vmatpush1.msra.mxu0 0.0
  %4083 = vmatprep.subr.mxu0 0.0
  %4084 = vmatpush1.msra.mxu0 0.0
  %4085 = vmatprep.subr.mxu0 0.0
  %4086 = vmatpush1.msra.mxu0 0.0
  %4087 = vmatprep.subr.mxu0 0.0
  %4088 = vmatpush1.msra.mxu0 0.0
  %4089 = vmatprep.mubr.f32.mxu0 0.0
  %4090 = vmatmul.mubr.f32.gmra.mrb[0].mxu0 %v4017
  %v4091 = vpop.f32.mrb[0].mxu0
  %v4092 = vadd.f32 %v479, %v4091
  %v4093 = vpop.f32.mrb[0].mxu0
  %4094 = vmatprep.mubr.f32.mxu0 0.0
  %4095 = vmatmul.mubr.f32.gmra.mrb[0].mxu0 %v4020
  %v4096 = vpop.f32.mrb[0].mxu0
  %v4097 = vadd.f32 %v484, %v4096
  %v4098 = vpop.f32.mrb[0].mxu0
  %4099 = vdwg.mxu0
  %v4101 = vsel %vm486, %v112, 0
  %v4104 = vsel %vm486, %v113, 0
  %v4107 = vsel %vm493, %v373, 0
  %4109 = vmatprep.subr.mxu0 0.0
  %4110 = vmatpush1.msra.mxu0 %v369
  %4111 = vmatprep.subr.mxu0 0.0
  %4112 = vmatpush1.msra.mxu0 %v370
  %4113 = vmatprep.subr.mxu0 0.0
  %4114 = vmatpush1.msra.mxu0 %v371
  %4115 = vmatprep.subr.mxu0 0.0
  %4116 = vmatpush1.msra.mxu0 %v372
  %4117 = vmatprep.subr.mxu0 0.0
  %4118 = vmatpush1.msra.mxu0 %v4107
  %4119 = vmatprep.subr.mxu0 0.0
  %4120 = vmatpush1.msra.mxu0 0.0
  %4121 = vmatprep.subr.mxu0 0.0
  %4122 = vmatpush1.msra.mxu0 0.0
  %4123 = vmatprep.subr.mxu0 0.0
  %4124 = vmatpush1.msra.mxu0 0.0
  %4125 = vmatprep.subr.mxu0 0.0
  %4126 = vmatpush1.msra.mxu0 0.0
  %4127 = vmatprep.subr.mxu0 0.0
  %4128 = vmatpush1.msra.mxu0 0.0
  %4129 = vmatprep.subr.mxu0 0.0
  %4130 = vmatpush1.msra.mxu0 0.0
  %4131 = vmatprep.subr.mxu0 0.0
  %4132 = vmatpush1.msra.mxu0 0.0
  %4133 = vmatprep.subr.mxu0 0.0
  %4134 = vmatpush1.msra.mxu0 0.0
  %4135 = vmatprep.subr.mxu0 0.0
  %4136 = vmatpush1.msra.mxu0 0.0
  %4137 = vmatprep.subr.mxu0 0.0
  %4138 = vmatpush1.msra.mxu0 0.0
  %4139 = vmatprep.subr.mxu0 0.0
  %4140 = vmatpush1.msra.mxu0 0.0
  %4141 = vmatprep.subr.mxu0 0.0
  %4142 = vmatpush1.msra.mxu0 0.0
  %4143 = vmatprep.subr.mxu0 0.0
  %4144 = vmatpush1.msra.mxu0 0.0
  %4145 = vmatprep.subr.mxu0 0.0
  %4146 = vmatpush1.msra.mxu0 0.0
  %4147 = vmatprep.subr.mxu0 0.0
  %4148 = vmatpush1.msra.mxu0 0.0
  %4149 = vmatprep.subr.mxu0 0.0
  %4150 = vmatpush1.msra.mxu0 0.0
  %4151 = vmatprep.subr.mxu0 0.0
  %4152 = vmatpush1.msra.mxu0 0.0
  %4153 = vmatprep.subr.mxu0 0.0
  %4154 = vmatpush1.msra.mxu0 0.0
  %4155 = vmatprep.subr.mxu0 0.0
  %4156 = vmatpush1.msra.mxu0 0.0
  %4157 = vmatprep.subr.mxu0 0.0
  %4158 = vmatpush1.msra.mxu0 0.0
  %4159 = vmatprep.subr.mxu0 0.0
  %4160 = vmatpush1.msra.mxu0 0.0
  %4161 = vmatprep.subr.mxu0 0.0
  %4162 = vmatpush1.msra.mxu0 0.0
  %4163 = vmatprep.subr.mxu0 0.0
  %4164 = vmatpush1.msra.mxu0 0.0
  %4165 = vmatprep.subr.mxu0 0.0
  %4166 = vmatpush1.msra.mxu0 0.0
  %4167 = vmatprep.subr.mxu0 0.0
  %4168 = vmatpush1.msra.mxu0 0.0
  %4169 = vmatprep.subr.mxu0 0.0
  %4170 = vmatpush1.msra.mxu0 0.0
  %4171 = vmatprep.subr.mxu0 0.0
  %4172 = vmatpush1.msra.mxu0 0.0
  %4173 = vmatprep.mubr.f32.mxu0 0.0
  %4174 = vmatmul.mubr.f32.gmra.mrb[0].mxu0 %v4101
  %v4175 = vpop.f32.mrb[0].mxu0
  %v4176 = vadd.f32 %v479, %v4175
  %v4177 = vpop.f32.mrb[0].mxu0
  %4178 = vmatprep.mubr.f32.mxu0 0.0
  %4179 = vmatmul.mubr.f32.gmra.mrb[0].mxu0 %v4104
  %v4180 = vpop.f32.mrb[0].mxu0
  %v4181 = vadd.f32 %v484, %v4180
  %v4182 = vpop.f32.mrb[0].mxu0
  %4183 = vdwg.mxu0
  %v4185 = vsel %vm486, %v114, 0
  %v4188 = vsel %vm486, %v115, 0
  %v4191 = vsel %vm493, %v378, 0
  %4193 = vmatprep.subr.mxu0 0.0
  %4194 = vmatpush1.msra.mxu0 %v374
  %4195 = vmatprep.subr.mxu0 0.0
  %4196 = vmatpush1.msra.mxu0 %v375
  %4197 = vmatprep.subr.mxu0 0.0
  %4198 = vmatpush1.msra.mxu0 %v376
  %4199 = vmatprep.subr.mxu0 0.0
  %4200 = vmatpush1.msra.mxu0 %v377
  %4201 = vmatprep.subr.mxu0 0.0
  %4202 = vmatpush1.msra.mxu0 %v4191
  %4203 = vmatprep.subr.mxu0 0.0
  %4204 = vmatpush1.msra.mxu0 0.0
  %4205 = vmatprep.subr.mxu0 0.0
  %4206 = vmatpush1.msra.mxu0 0.0
  %4207 = vmatprep.subr.mxu0 0.0
  %4208 = vmatpush1.msra.mxu0 0.0
  %4209 = vmatprep.subr.mxu0 0.0
  %4210 = vmatpush1.msra.mxu0 0.0
  %4211 = vmatprep.subr.mxu0 0.0
  %4212 = vmatpush1.msra.mxu0 0.0
  %4213 = vmatprep.subr.mxu0 0.0
  %4214 = vmatpush1.msra.mxu0 0.0
  %4215 = vmatprep.subr.mxu0 0.0
  %4216 = vmatpush1.msra.mxu0 0.0
  %4217 = vmatprep.subr.mxu0 0.0
  %4218 = vmatpush1.msra.mxu0 0.0
  %4219 = vmatprep.subr.mxu0 0.0
  %4220 = vmatpush1.msra.mxu0 0.0
  %4221 = vmatprep.subr.mxu0 0.0
  %4222 = vmatpush1.msra.mxu0 0.0
  %4223 = vmatprep.subr.mxu0 0.0
  %4224 = vmatpush1.msra.mxu0 0.0
  %4225 = vmatprep.subr.mxu0 0.0
  %4226 = vmatpush1.msra.mxu0 0.0
  %4227 = vmatprep.subr.mxu0 0.0
  %4228 = vmatpush1.msra.mxu0 0.0
  %4229 = vmatprep.subr.mxu0 0.0
  %4230 = vmatpush1.msra.mxu0 0.0
  %4231 = vmatprep.subr.mxu0 0.0
  %4232 = vmatpush1.msra.mxu0 0.0
  %4233 = vmatprep.subr.mxu0 0.0
  %4234 = vmatpush1.msra.mxu0 0.0
  %4235 = vmatprep.subr.mxu0 0.0
  %4236 = vmatpush1.msra.mxu0 0.0
  %4237 = vmatprep.subr.mxu0 0.0
  %4238 = vmatpush1.msra.mxu0 0.0
  %4239 = vmatprep.subr.mxu0 0.0
  %4240 = vmatpush1.msra.mxu0 0.0
  %4241 = vmatprep.subr.mxu0 0.0
  %4242 = vmatpush1.msra.mxu0 0.0
  %4243 = vmatprep.subr.mxu0 0.0
  %4244 = vmatpush1.msra.mxu0 0.0
  %4245 = vmatprep.subr.mxu0 0.0
  %4246 = vmatpush1.msra.mxu0 0.0
  %4247 = vmatprep.subr.mxu0 0.0
  %4248 = vmatpush1.msra.mxu0 0.0
  %4249 = vmatprep.subr.mxu0 0.0
  %4250 = vmatpush1.msra.mxu0 0.0
  %4251 = vmatprep.subr.mxu0 0.0
  %4252 = vmatpush1.msra.mxu0 0.0
  %4253 = vmatprep.subr.mxu0 0.0
  %4254 = vmatpush1.msra.mxu0 0.0
  %4255 = vmatprep.subr.mxu0 0.0
  %4256 = vmatpush1.msra.mxu0 0.0
  %4257 = vmatprep.mubr.f32.mxu0 0.0
  %4258 = vmatmul.mubr.f32.gmra.mrb[0].mxu0 %v4185
  %v4259 = vpop.f32.mrb[0].mxu0
  %v4260 = vadd.f32 %v479, %v4259
  %v4261 = vpop.f32.mrb[0].mxu0
  %4262 = vmatprep.mubr.f32.mxu0 0.0
  %4263 = vmatmul.mubr.f32.gmra.mrb[0].mxu0 %v4188
  %v4264 = vpop.f32.mrb[0].mxu0
  %v4265 = vadd.f32 %v484, %v4264
  %v4266 = vpop.f32.mrb[0].mxu0
  %4267 = vdwg.mxu0
  %v4269 = vsel %vm486, %v116, 0
  %v4272 = vsel %vm486, %v117, 0
  %v4275 = vsel %vm493, %v383, 0
  %4277 = vmatprep.subr.mxu0 0.0
  %4278 = vmatpush1.msra.mxu0 %v379
  %4279 = vmatprep.subr.mxu0 0.0
  %4280 = vmatpush1.msra.mxu0 %v380
  %4281 = vmatprep.subr.mxu0 0.0
  %4282 = vmatpush1.msra.mxu0 %v381
  %4283 = vmatprep.subr.mxu0 0.0
  %4284 = vmatpush1.msra.mxu0 %v382
  %4285 = vmatprep.subr.mxu0 0.0
  %4286 = vmatpush1.msra.mxu0 %v4275
  %4287 = vmatprep.subr.mxu0 0.0
  %4288 = vmatpush1.msra.mxu0 0.0
  %4289 = vmatprep.subr.mxu0 0.0
  %4290 = vmatpush1.msra.mxu0 0.0
  %4291 = vmatprep.subr.mxu0 0.0
  %4292 = vmatpush1.msra.mxu0 0.0
  %4293 = vmatprep.subr.mxu0 0.0
  %4294 = vmatpush1.msra.mxu0 0.0
  %4295 = vmatprep.subr.mxu0 0.0
  %4296 = vmatpush1.msra.mxu0 0.0
  %4297 = vmatprep.subr.mxu0 0.0
  %4298 = vmatpush1.msra.mxu0 0.0
  %4299 = vmatprep.subr.mxu0 0.0
  %4300 = vmatpush1.msra.mxu0 0.0
  %4301 = vmatprep.subr.mxu0 0.0
  %4302 = vmatpush1.msra.mxu0 0.0
  %4303 = vmatprep.subr.mxu0 0.0
  %4304 = vmatpush1.msra.mxu0 0.0
  %4305 = vmatprep.subr.mxu0 0.0
  %4306 = vmatpush1.msra.mxu0 0.0
  %4307 = vmatprep.subr.mxu0 0.0
  %4308 = vmatpush1.msra.mxu0 0.0
  %4309 = vmatprep.subr.mxu0 0.0
  %4310 = vmatpush1.msra.mxu0 0.0
  %4311 = vmatprep.subr.mxu0 0.0
  %4312 = vmatpush1.msra.mxu0 0.0
  %4313 = vmatprep.subr.mxu0 0.0
  %4314 = vmatpush1.msra.mxu0 0.0
  %4315 = vmatprep.subr.mxu0 0.0
  %4316 = vmatpush1.msra.mxu0 0.0
  %4317 = vmatprep.subr.mxu0 0.0
  %4318 = vmatpush1.msra.mxu0 0.0
  %4319 = vmatprep.subr.mxu0 0.0
  %4320 = vmatpush1.msra.mxu0 0.0
  %4321 = vmatprep.subr.mxu0 0.0
  %4322 = vmatpush1.msra.mxu0 0.0
  %4323 = vmatprep.subr.mxu0 0.0
  %4324 = vmatpush1.msra.mxu0 0.0
  %4325 = vmatprep.subr.mxu0 0.0
  %4326 = vmatpush1.msra.mxu0 0.0
  %4327 = vmatprep.subr.mxu0 0.0
  %4328 = vmatpush1.msra.mxu0 0.0
  %4329 = vmatprep.subr.mxu0 0.0
  %4330 = vmatpush1.msra.mxu0 0.0
  %4331 = vmatprep.subr.mxu0 0.0
  %4332 = vmatpush1.msra.mxu0 0.0
  %4333 = vmatprep.subr.mxu0 0.0
  %4334 = vmatpush1.msra.mxu0 0.0
  %4335 = vmatprep.subr.mxu0 0.0
  %4336 = vmatpush1.msra.mxu0 0.0
  %4337 = vmatprep.subr.mxu0 0.0
  %4338 = vmatpush1.msra.mxu0 0.0
  %4339 = vmatprep.subr.mxu0 0.0
  %4340 = vmatpush1.msra.mxu0 0.0
  %4341 = vmatprep.mubr.f32.mxu0 0.0
  %4342 = vmatmul.mubr.f32.gmra.mrb[0].mxu0 %v4269
  %v4343 = vpop.f32.mrb[0].mxu0
  %v4344 = vadd.f32 %v479, %v4343
  %v4345 = vpop.f32.mrb[0].mxu0
  %4346 = vmatprep.mubr.f32.mxu0 0.0
  %4347 = vmatmul.mubr.f32.gmra.mrb[0].mxu0 %v4272
  %v4348 = vpop.f32.mrb[0].mxu0
  %v4349 = vadd.f32 %v484, %v4348
  %v4350 = vpop.f32.mrb[0].mxu0
  %4351 = vdwg.mxu0
  %v4353 = vsel %vm486, %v118, 0
  %v4356 = vsel %vm486, %v119, 0
  %v4359 = vsel %vm493, %v388, 0
  %4361 = vmatprep.subr.mxu0 0.0
  %4362 = vmatpush1.msra.mxu0 %v384
  %4363 = vmatprep.subr.mxu0 0.0
  %4364 = vmatpush1.msra.mxu0 %v385
  %4365 = vmatprep.subr.mxu0 0.0
  %4366 = vmatpush1.msra.mxu0 %v386
  %4367 = vmatprep.subr.mxu0 0.0
  %4368 = vmatpush1.msra.mxu0 %v387
  %4369 = vmatprep.subr.mxu0 0.0
  %4370 = vmatpush1.msra.mxu0 %v4359
  %4371 = vmatprep.subr.mxu0 0.0
  %4372 = vmatpush1.msra.mxu0 0.0
  %4373 = vmatprep.subr.mxu0 0.0
  %4374 = vmatpush1.msra.mxu0 0.0
  %4375 = vmatprep.subr.mxu0 0.0
  %4376 = vmatpush1.msra.mxu0 0.0
  %4377 = vmatprep.subr.mxu0 0.0
  %4378 = vmatpush1.msra.mxu0 0.0
  %4379 = vmatprep.subr.mxu0 0.0
  %4380 = vmatpush1.msra.mxu0 0.0
  %4381 = vmatprep.subr.mxu0 0.0
  %4382 = vmatpush1.msra.mxu0 0.0
  %4383 = vmatprep.subr.mxu0 0.0
  %4384 = vmatpush1.msra.mxu0 0.0
  %4385 = vmatprep.subr.mxu0 0.0
  %4386 = vmatpush1.msra.mxu0 0.0
  %4387 = vmatprep.subr.mxu0 0.0
  %4388 = vmatpush1.msra.mxu0 0.0
  %4389 = vmatprep.subr.mxu0 0.0
  %4390 = vmatpush1.msra.mxu0 0.0
  %4391 = vmatprep.subr.mxu0 0.0
  %4392 = vmatpush1.msra.mxu0 0.0
  %4393 = vmatprep.subr.mxu0 0.0
  %4394 = vmatpush1.msra.mxu0 0.0
  %4395 = vmatprep.subr.mxu0 0.0
  %4396 = vmatpush1.msra.mxu0 0.0
  %4397 = vmatprep.subr.mxu0 0.0
  %4398 = vmatpush1.msra.mxu0 0.0
  %4399 = vmatprep.subr.mxu0 0.0
  %4400 = vmatpush1.msra.mxu0 0.0
  %4401 = vmatprep.subr.mxu0 0.0
  %4402 = vmatpush1.msra.mxu0 0.0
  %4403 = vmatprep.subr.mxu0 0.0
  %4404 = vmatpush1.msra.mxu0 0.0
  %4405 = vmatprep.subr.mxu0 0.0
  %4406 = vmatpush1.msra.mxu0 0.0
  %4407 = vmatprep.subr.mxu0 0.0
  %4408 = vmatpush1.msra.mxu0 0.0
  %4409 = vmatprep.subr.mxu0 0.0
  %4410 = vmatpush1.msra.mxu0 0.0
  %4411 = vmatprep.subr.mxu0 0.0
  %4412 = vmatpush1.msra.mxu0 0.0
  %4413 = vmatprep.subr.mxu0 0.0
  %4414 = vmatpush1.msra.mxu0 0.0
  %4415 = vmatprep.subr.mxu0 0.0
  %4416 = vmatpush1.msra.mxu0 0.0
  %4417 = vmatprep.subr.mxu0 0.0
  %4418 = vmatpush1.msra.mxu0 0.0
  %4419 = vmatprep.subr.mxu0 0.0
  %4420 = vmatpush1.msra.mxu0 0.0
  %4421 = vmatprep.subr.mxu0 0.0
  %4422 = vmatpush1.msra.mxu0 0.0
  %4423 = vmatprep.subr.mxu0 0.0
  %4424 = vmatpush1.msra.mxu0 0.0
  %4425 = vmatprep.mubr.f32.mxu0 0.0
  %4426 = vmatmul.mubr.f32.gmra.mrb[0].mxu0 %v4353
  %v4427 = vpop.f32.mrb[0].mxu0
  %v4428 = vadd.f32 %v479, %v4427
  %v4429 = vpop.f32.mrb[0].mxu0
  %4430 = vmatprep.mubr.f32.mxu0 0.0
  %4431 = vmatmul.mubr.f32.gmra.mrb[0].mxu0 %v4356
  %v4432 = vpop.f32.mrb[0].mxu0
  %v4433 = vadd.f32 %v484, %v4432
  %v4434 = vpop.f32.mrb[0].mxu0
  %4435 = vdwg.mxu0
  %v4437 = vsel %vm486, %v120, 0
  %v4440 = vsel %vm486, %v121, 0
  %v4443 = vsel %vm493, %v393, 0
  %4445 = vmatprep.subr.mxu0 0.0
  %4446 = vmatpush1.msra.mxu0 %v389
  %4447 = vmatprep.subr.mxu0 0.0
  %4448 = vmatpush1.msra.mxu0 %v390
  %4449 = vmatprep.subr.mxu0 0.0
  %4450 = vmatpush1.msra.mxu0 %v391
  %4451 = vmatprep.subr.mxu0 0.0
  %4452 = vmatpush1.msra.mxu0 %v392
  %4453 = vmatprep.subr.mxu0 0.0
  %4454 = vmatpush1.msra.mxu0 %v4443
  %4455 = vmatprep.subr.mxu0 0.0
  %4456 = vmatpush1.msra.mxu0 0.0
  %4457 = vmatprep.subr.mxu0 0.0
  %4458 = vmatpush1.msra.mxu0 0.0
  %4459 = vmatprep.subr.mxu0 0.0
  %4460 = vmatpush1.msra.mxu0 0.0
  %4461 = vmatprep.subr.mxu0 0.0
  %4462 = vmatpush1.msra.mxu0 0.0
  %4463 = vmatprep.subr.mxu0 0.0
  %4464 = vmatpush1.msra.mxu0 0.0
  %4465 = vmatprep.subr.mxu0 0.0
  %4466 = vmatpush1.msra.mxu0 0.0
  %4467 = vmatprep.subr.mxu0 0.0
  %4468 = vmatpush1.msra.mxu0 0.0
  %4469 = vmatprep.subr.mxu0 0.0
  %4470 = vmatpush1.msra.mxu0 0.0
  %4471 = vmatprep.subr.mxu0 0.0
  %4472 = vmatpush1.msra.mxu0 0.0
  %4473 = vmatprep.subr.mxu0 0.0
  %4474 = vmatpush1.msra.mxu0 0.0
  %4475 = vmatprep.subr.mxu0 0.0
  %4476 = vmatpush1.msra.mxu0 0.0
  %4477 = vmatprep.subr.mxu0 0.0
  %4478 = vmatpush1.msra.mxu0 0.0
  %4479 = vmatprep.subr.mxu0 0.0
  %4480 = vmatpush1.msra.mxu0 0.0
  %4481 = vmatprep.subr.mxu0 0.0
  %4482 = vmatpush1.msra.mxu0 0.0
  %4483 = vmatprep.subr.mxu0 0.0
  %4484 = vmatpush1.msra.mxu0 0.0
  %4485 = vmatprep.subr.mxu0 0.0
  %4486 = vmatpush1.msra.mxu0 0.0
  %4487 = vmatprep.subr.mxu0 0.0
  %4488 = vmatpush1.msra.mxu0 0.0
  %4489 = vmatprep.subr.mxu0 0.0
  %4490 = vmatpush1.msra.mxu0 0.0
  %4491 = vmatprep.subr.mxu0 0.0
  %4492 = vmatpush1.msra.mxu0 0.0
  %4493 = vmatprep.subr.mxu0 0.0
  %4494 = vmatpush1.msra.mxu0 0.0
  %4495 = vmatprep.subr.mxu0 0.0
  %4496 = vmatpush1.msra.mxu0 0.0
  %4497 = vmatprep.subr.mxu0 0.0
  %4498 = vmatpush1.msra.mxu0 0.0
  %4499 = vmatprep.subr.mxu0 0.0
  %4500 = vmatpush1.msra.mxu0 0.0
  %4501 = vmatprep.subr.mxu0 0.0
  %4502 = vmatpush1.msra.mxu0 0.0
  %4503 = vmatprep.subr.mxu0 0.0
  %4504 = vmatpush1.msra.mxu0 0.0
  %4505 = vmatprep.subr.mxu0 0.0
  %4506 = vmatpush1.msra.mxu0 0.0
  %4507 = vmatprep.subr.mxu0 0.0
  %4508 = vmatpush1.msra.mxu0 0.0
  %4509 = vmatprep.mubr.f32.mxu0 0.0
  %4510 = vmatmul.mubr.f32.gmra.mrb[0].mxu0 %v4437
  %v4511 = vpop.f32.mrb[0].mxu0
  %v4512 = vadd.f32 %v479, %v4511
  %v4513 = vpop.f32.mrb[0].mxu0
  %4514 = vmatprep.mubr.f32.mxu0 0.0
  %4515 = vmatmul.mubr.f32.gmra.mrb[0].mxu0 %v4440
  %v4516 = vpop.f32.mrb[0].mxu0
  %v4517 = vadd.f32 %v484, %v4516
  %v4518 = vpop.f32.mrb[0].mxu0
  %4519 = vdwg.mxu0
  %v4521 = vsel %vm486, %v122, 0
  %v4524 = vsel %vm486, %v123, 0
  %v4527 = vsel %vm493, %v398, 0
  %4529 = vmatprep.subr.mxu0 0.0
  %4530 = vmatpush1.msra.mxu0 %v394
  %4531 = vmatprep.subr.mxu0 0.0
  %4532 = vmatpush1.msra.mxu0 %v395
  %4533 = vmatprep.subr.mxu0 0.0
  %4534 = vmatpush1.msra.mxu0 %v396
  %4535 = vmatprep.subr.mxu0 0.0
  %4536 = vmatpush1.msra.mxu0 %v397
  %4537 = vmatprep.subr.mxu0 0.0
  %4538 = vmatpush1.msra.mxu0 %v4527
  %4539 = vmatprep.subr.mxu0 0.0
  %4540 = vmatpush1.msra.mxu0 0.0
  %4541 = vmatprep.subr.mxu0 0.0
  %4542 = vmatpush1.msra.mxu0 0.0
  %4543 = vmatprep.subr.mxu0 0.0
  %4544 = vmatpush1.msra.mxu0 0.0
  %4545 = vmatprep.subr.mxu0 0.0
  %4546 = vmatpush1.msra.mxu0 0.0
  %4547 = vmatprep.subr.mxu0 0.0
  %4548 = vmatpush1.msra.mxu0 0.0
  %4549 = vmatprep.subr.mxu0 0.0
  %4550 = vmatpush1.msra.mxu0 0.0
  %4551 = vmatprep.subr.mxu0 0.0
  %4552 = vmatpush1.msra.mxu0 0.0
  %4553 = vmatprep.subr.mxu0 0.0
  %4554 = vmatpush1.msra.mxu0 0.0
  %4555 = vmatprep.subr.mxu0 0.0
  %4556 = vmatpush1.msra.mxu0 0.0
  %4557 = vmatprep.subr.mxu0 0.0
  %4558 = vmatpush1.msra.mxu0 0.0
  %4559 = vmatprep.subr.mxu0 0.0
  %4560 = vmatpush1.msra.mxu0 0.0
  %4561 = vmatprep.subr.mxu0 0.0
  %4562 = vmatpush1.msra.mxu0 0.0
  %4563 = vmatprep.subr.mxu0 0.0
  %4564 = vmatpush1.msra.mxu0 0.0
  %4565 = vmatprep.subr.mxu0 0.0
  %4566 = vmatpush1.msra.mxu0 0.0
  %4567 = vmatprep.subr.mxu0 0.0
  %4568 = vmatpush1.msra.mxu0 0.0
  %4569 = vmatprep.subr.mxu0 0.0
  %4570 = vmatpush1.msra.mxu0 0.0
  %4571 = vmatprep.subr.mxu0 0.0
  %4572 = vmatpush1.msra.mxu0 0.0
  %4573 = vmatprep.subr.mxu0 0.0
  %4574 = vmatpush1.msra.mxu0 0.0
  %4575 = vmatprep.subr.mxu0 0.0
  %4576 = vmatpush1.msra.mxu0 0.0
  %4577 = vmatprep.subr.mxu0 0.0
  %4578 = vmatpush1.msra.mxu0 0.0
  %4579 = vmatprep.subr.mxu0 0.0
  %4580 = vmatpush1.msra.mxu0 0.0
  %4581 = vmatprep.subr.mxu0 0.0
  %4582 = vmatpush1.msra.mxu0 0.0
  %4583 = vmatprep.subr.mxu0 0.0
  %4584 = vmatpush1.msra.mxu0 0.0
  %4585 = vmatprep.subr.mxu0 0.0
  %4586 = vmatpush1.msra.mxu0 0.0
  %4587 = vmatprep.subr.mxu0 0.0
  %4588 = vmatpush1.msra.mxu0 0.0
  %4589 = vmatprep.subr.mxu0 0.0
  %4590 = vmatpush1.msra.mxu0 0.0
  %4591 = vmatprep.subr.mxu0 0.0
  %4592 = vmatpush1.msra.mxu0 0.0
  %4593 = vmatprep.mubr.f32.mxu0 0.0
  %4594 = vmatmul.mubr.f32.gmra.mrb[0].mxu0 %v4521
  %v4595 = vpop.f32.mrb[0].mxu0
  %v4596 = vadd.f32 %v479, %v4595
  %v4597 = vpop.f32.mrb[0].mxu0
  %4598 = vmatprep.mubr.f32.mxu0 0.0
  %4599 = vmatmul.mubr.f32.gmra.mrb[0].mxu0 %v4524
  %v4600 = vpop.f32.mrb[0].mxu0
  %v4601 = vadd.f32 %v484, %v4600
  %v4602 = vpop.f32.mrb[0].mxu0
  %4603 = vdwg.mxu0
  %v4605 = vsel %vm486, %v124, 0
  %v4608 = vsel %vm486, %v125, 0
  %v4611 = vsel %vm493, %v403, 0
  %4613 = vmatprep.subr.mxu0 0.0
  %4614 = vmatpush1.msra.mxu0 %v399
  %4615 = vmatprep.subr.mxu0 0.0
  %4616 = vmatpush1.msra.mxu0 %v400
  %4617 = vmatprep.subr.mxu0 0.0
  %4618 = vmatpush1.msra.mxu0 %v401
  %4619 = vmatprep.subr.mxu0 0.0
  %4620 = vmatpush1.msra.mxu0 %v402
  %4621 = vmatprep.subr.mxu0 0.0
  %4622 = vmatpush1.msra.mxu0 %v4611
  %4623 = vmatprep.subr.mxu0 0.0
  %4624 = vmatpush1.msra.mxu0 0.0
  %4625 = vmatprep.subr.mxu0 0.0
  %4626 = vmatpush1.msra.mxu0 0.0
  %4627 = vmatprep.subr.mxu0 0.0
  %4628 = vmatpush1.msra.mxu0 0.0
  %4629 = vmatprep.subr.mxu0 0.0
  %4630 = vmatpush1.msra.mxu0 0.0
  %4631 = vmatprep.subr.mxu0 0.0
  %4632 = vmatpush1.msra.mxu0 0.0
  %4633 = vmatprep.subr.mxu0 0.0
  %4634 = vmatpush1.msra.mxu0 0.0
  %4635 = vmatprep.subr.mxu0 0.0
  %4636 = vmatpush1.msra.mxu0 0.0
  %4637 = vmatprep.subr.mxu0 0.0
  %4638 = vmatpush1.msra.mxu0 0.0
  %4639 = vmatprep.subr.mxu0 0.0
  %4640 = vmatpush1.msra.mxu0 0.0
  %4641 = vmatprep.subr.mxu0 0.0
  %4642 = vmatpush1.msra.mxu0 0.0
  %4643 = vmatprep.subr.mxu0 0.0
  %4644 = vmatpush1.msra.mxu0 0.0
  %4645 = vmatprep.subr.mxu0 0.0
  %4646 = vmatpush1.msra.mxu0 0.0
  %4647 = vmatprep.subr.mxu0 0.0
  %4648 = vmatpush1.msra.mxu0 0.0
  %4649 = vmatprep.subr.mxu0 0.0
  %4650 = vmatpush1.msra.mxu0 0.0
  %4651 = vmatprep.subr.mxu0 0.0
  %4652 = vmatpush1.msra.mxu0 0.0
  %4653 = vmatprep.subr.mxu0 0.0
  %4654 = vmatpush1.msra.mxu0 0.0
  %4655 = vmatprep.subr.mxu0 0.0
  %4656 = vmatpush1.msra.mxu0 0.0
  %4657 = vmatprep.subr.mxu0 0.0
  %4658 = vmatpush1.msra.mxu0 0.0
  %4659 = vmatprep.subr.mxu0 0.0
  %4660 = vmatpush1.msra.mxu0 0.0
  %4661 = vmatprep.subr.mxu0 0.0
  %4662 = vmatpush1.msra.mxu0 0.0
  %4663 = vmatprep.subr.mxu0 0.0
  %4664 = vmatpush1.msra.mxu0 0.0
  %4665 = vmatprep.subr.mxu0 0.0
  %4666 = vmatpush1.msra.mxu0 0.0
  %4667 = vmatprep.subr.mxu0 0.0
  %4668 = vmatpush1.msra.mxu0 0.0
  %4669 = vmatprep.subr.mxu0 0.0
  %4670 = vmatpush1.msra.mxu0 0.0
  %4671 = vmatprep.subr.mxu0 0.0
  %4672 = vmatpush1.msra.mxu0 0.0
  %4673 = vmatprep.subr.mxu0 0.0
  %4674 = vmatpush1.msra.mxu0 0.0
  %4675 = vmatprep.subr.mxu0 0.0
  %4676 = vmatpush1.msra.mxu0 0.0
  %4677 = vmatprep.mubr.f32.mxu0 0.0
  %4678 = vmatmul.mubr.f32.gmra.mrb[0].mxu0 %v4605
  %v4679 = vpop.f32.mrb[0].mxu0
  %v4680 = vadd.f32 %v479, %v4679
  %v4681 = vpop.f32.mrb[0].mxu0
  %4682 = vmatprep.mubr.f32.mxu0 0.0
  %4683 = vmatmul.mubr.f32.gmra.mrb[0].mxu0 %v4608
  %v4684 = vpop.f32.mrb[0].mxu0
  %v4685 = vadd.f32 %v484, %v4684
  %v4686 = vpop.f32.mrb[0].mxu0
  %4687 = vdwg.mxu0
  %v4689 = vsel %vm486, %v126, 0
  %v4692 = vsel %vm486, %v127, 0
  %v4695 = vsel %vm493, %v408, 0
  %4697 = vmatprep.subr.mxu0 0.0
  %4698 = vmatpush1.msra.mxu0 %v404
  %4699 = vmatprep.subr.mxu0 0.0
  %4700 = vmatpush1.msra.mxu0 %v405
  %4701 = vmatprep.subr.mxu0 0.0
  %4702 = vmatpush1.msra.mxu0 %v406
  %4703 = vmatprep.subr.mxu0 0.0
  %4704 = vmatpush1.msra.mxu0 %v407
  %4705 = vmatprep.subr.mxu0 0.0
  %4706 = vmatpush1.msra.mxu0 %v4695
  %4707 = vmatprep.subr.mxu0 0.0
  %4708 = vmatpush1.msra.mxu0 0.0
  %4709 = vmatprep.subr.mxu0 0.0
  %4710 = vmatpush1.msra.mxu0 0.0
  %4711 = vmatprep.subr.mxu0 0.0
  %4712 = vmatpush1.msra.mxu0 0.0
  %4713 = vmatprep.subr.mxu0 0.0
  %4714 = vmatpush1.msra.mxu0 0.0
  %4715 = vmatprep.subr.mxu0 0.0
  %4716 = vmatpush1.msra.mxu0 0.0
  %4717 = vmatprep.subr.mxu0 0.0
  %4718 = vmatpush1.msra.mxu0 0.0
  %4719 = vmatprep.subr.mxu0 0.0
  %4720 = vmatpush1.msra.mxu0 0.0
  %4721 = vmatprep.subr.mxu0 0.0
  %4722 = vmatpush1.msra.mxu0 0.0
  %4723 = vmatprep.subr.mxu0 0.0
  %4724 = vmatpush1.msra.mxu0 0.0
  %4725 = vmatprep.subr.mxu0 0.0
  %4726 = vmatpush1.msra.mxu0 0.0
  %4727 = vmatprep.subr.mxu0 0.0
  %4728 = vmatpush1.msra.mxu0 0.0
  %4729 = vmatprep.subr.mxu0 0.0
  %4730 = vmatpush1.msra.mxu0 0.0
  %4731 = vmatprep.subr.mxu0 0.0
  %4732 = vmatpush1.msra.mxu0 0.0
  %4733 = vmatprep.subr.mxu0 0.0
  %4734 = vmatpush1.msra.mxu0 0.0
  %4735 = vmatprep.subr.mxu0 0.0
  %4736 = vmatpush1.msra.mxu0 0.0
  %4737 = vmatprep.subr.mxu0 0.0
  %4738 = vmatpush1.msra.mxu0 0.0
  %4739 = vmatprep.subr.mxu0 0.0
  %4740 = vmatpush1.msra.mxu0 0.0
  %4741 = vmatprep.subr.mxu0 0.0
  %4742 = vmatpush1.msra.mxu0 0.0
  %4743 = vmatprep.subr.mxu0 0.0
  %4744 = vmatpush1.msra.mxu0 0.0
  %4745 = vmatprep.subr.mxu0 0.0
  %4746 = vmatpush1.msra.mxu0 0.0
  %4747 = vmatprep.subr.mxu0 0.0
  %4748 = vmatpush1.msra.mxu0 0.0
  %4749 = vmatprep.subr.mxu0 0.0
  %4750 = vmatpush1.msra.mxu0 0.0
  %4751 = vmatprep.subr.mxu0 0.0
  %4752 = vmatpush1.msra.mxu0 0.0
  %4753 = vmatprep.subr.mxu0 0.0
  %4754 = vmatpush1.msra.mxu0 0.0
  %4755 = vmatprep.subr.mxu0 0.0
  %4756 = vmatpush1.msra.mxu0 0.0
  %4757 = vmatprep.subr.mxu0 0.0
  %4758 = vmatpush1.msra.mxu0 0.0
  %4759 = vmatprep.subr.mxu0 0.0
  %4760 = vmatpush1.msra.mxu0 0.0
  %4761 = vmatprep.mubr.f32.mxu0 0.0
  %4762 = vmatmul.mubr.f32.gmra.mrb[0].mxu0 %v4689
  %v4763 = vpop.f32.mrb[0].mxu0
  %v4764 = vadd.f32 %v479, %v4763
  %v4765 = vpop.f32.mrb[0].mxu0
  %4766 = vmatprep.mubr.f32.mxu0 0.0
  %4767 = vmatmul.mubr.f32.gmra.mrb[0].mxu0 %v4692
  %v4768 = vpop.f32.mrb[0].mxu0
  %v4769 = vadd.f32 %v484, %v4768
  %v4770 = vpop.f32.mrb[0].mxu0
  %4771 = vdwg.mxu0
  %v4773 = vsel %vm486, %v128, 0
  %v4776 = vsel %vm486, %v129, 0
  %v4779 = vsel %vm493, %v413, 0
  %4781 = vmatprep.subr.mxu0 0.0
  %4782 = vmatpush1.msra.mxu0 %v409
  %4783 = vmatprep.subr.mxu0 0.0
  %4784 = vmatpush1.msra.mxu0 %v410
  %4785 = vmatprep.subr.mxu0 0.0
  %4786 = vmatpush1.msra.mxu0 %v411
  %4787 = vmatprep.subr.mxu0 0.0
  %4788 = vmatpush1.msra.mxu0 %v412
  %4789 = vmatprep.subr.mxu0 0.0
  %4790 = vmatpush1.msra.mxu0 %v4779
  %4791 = vmatprep.subr.mxu0 0.0
  %4792 = vmatpush1.msra.mxu0 0.0
  %4793 = vmatprep.subr.mxu0 0.0
  %4794 = vmatpush1.msra.mxu0 0.0
  %4795 = vmatprep.subr.mxu0 0.0
  %4796 = vmatpush1.msra.mxu0 0.0
  %4797 = vmatprep.subr.mxu0 0.0
  %4798 = vmatpush1.msra.mxu0 0.0
  %4799 = vmatprep.subr.mxu0 0.0
  %4800 = vmatpush1.msra.mxu0 0.0
  %4801 = vmatprep.subr.mxu0 0.0
  %4802 = vmatpush1.msra.mxu0 0.0
  %4803 = vmatprep.subr.mxu0 0.0
  %4804 = vmatpush1.msra.mxu0 0.0
  %4805 = vmatprep.subr.mxu0 0.0
  %4806 = vmatpush1.msra.mxu0 0.0
  %4807 = vmatprep.subr.mxu0 0.0
  %4808 = vmatpush1.msra.mxu0 0.0
  %4809 = vmatprep.subr.mxu0 0.0
  %4810 = vmatpush1.msra.mxu0 0.0
  %4811 = vmatprep.subr.mxu0 0.0
  %4812 = vmatpush1.msra.mxu0 0.0
  %4813 = vmatprep.subr.mxu0 0.0
  %4814 = vmatpush1.msra.mxu0 0.0
  %4815 = vmatprep.subr.mxu0 0.0
  %4816 = vmatpush1.msra.mxu0 0.0
  %4817 = vmatprep.subr.mxu0 0.0
  %4818 = vmatpush1.msra.mxu0 0.0
  %4819 = vmatprep.subr.mxu0 0.0
  %4820 = vmatpush1.msra.mxu0 0.0
  %4821 = vmatprep.subr.mxu0 0.0
  %4822 = vmatpush1.msra.mxu0 0.0
  %4823 = vmatprep.subr.mxu0 0.0
  %4824 = vmatpush1.msra.mxu0 0.0
  %4825 = vmatprep.subr.mxu0 0.0
  %4826 = vmatpush1.msra.mxu0 0.0
  %4827 = vmatprep.subr.mxu0 0.0
  %4828 = vmatpush1.msra.mxu0 0.0
  %4829 = vmatprep.subr.mxu0 0.0
  %4830 = vmatpush1.msra.mxu0 0.0
  %4831 = vmatprep.subr.mxu0 0.0
  %4832 = vmatpush1.msra.mxu0 0.0
  %4833 = vmatprep.subr.mxu0 0.0
  %4834 = vmatpush1.msra.mxu0 0.0
  %4835 = vmatprep.subr.mxu0 0.0
  %4836 = vmatpush1.msra.mxu0 0.0
  %4837 = vmatprep.subr.mxu0 0.0
  %4838 = vmatpush1.msra.mxu0 0.0
  %4839 = vmatprep.subr.mxu0 0.0
  %4840 = vmatpush1.msra.mxu0 0.0
  %4841 = vmatprep.subr.mxu0 0.0
  %4842 = vmatpush1.msra.mxu0 0.0
  %4843 = vmatprep.subr.mxu0 0.0
  %4844 = vmatpush1.msra.mxu0 0.0
  %4845 = vmatprep.mubr.f32.mxu0 0.0
  %4846 = vmatmul.mubr.f32.gmra.mrb[0].mxu0 %v4773
  %v4847 = vpop.f32.mrb[0].mxu0
  %v4848 = vadd.f32 %v479, %v4847
  %v4849 = vpop.f32.mrb[0].mxu0
  %4850 = vmatprep.mubr.f32.mxu0 0.0
  %4851 = vmatmul.mubr.f32.gmra.mrb[0].mxu0 %v4776
  %v4852 = vpop.f32.mrb[0].mxu0
  %v4853 = vadd.f32 %v484, %v4852
  %v4854 = vpop.f32.mrb[0].mxu0
  %4855 = vdwg.mxu0
  %v4857 = vsel %vm486, %v130, 0
  %v4860 = vsel %vm486, %v131, 0
  %v4863 = vsel %vm493, %v418, 0
  %4865 = vmatprep.subr.mxu0 0.0
  %4866 = vmatpush1.msra.mxu0 %v414
  %4867 = vmatprep.subr.mxu0 0.0
  %4868 = vmatpush1.msra.mxu0 %v415
  %4869 = vmatprep.subr.mxu0 0.0
  %4870 = vmatpush1.msra.mxu0 %v416
  %4871 = vmatprep.subr.mxu0 0.0
  %4872 = vmatpush1.msra.mxu0 %v417
  %4873 = vmatprep.subr.mxu0 0.0
  %4874 = vmatpush1.msra.mxu0 %v4863
  %4875 = vmatprep.subr.mxu0 0.0
  %4876 = vmatpush1.msra.mxu0 0.0
  %4877 = vmatprep.subr.mxu0 0.0
  %4878 = vmatpush1.msra.mxu0 0.0
  %4879 = vmatprep.subr.mxu0 0.0
  %4880 = vmatpush1.msra.mxu0 0.0
  %4881 = vmatprep.subr.mxu0 0.0
  %4882 = vmatpush1.msra.mxu0 0.0
  %4883 = vmatprep.subr.mxu0 0.0
  %4884 = vmatpush1.msra.mxu0 0.0
  %4885 = vmatprep.subr.mxu0 0.0
  %4886 = vmatpush1.msra.mxu0 0.0
  %4887 = vmatprep.subr.mxu0 0.0
  %4888 = vmatpush1.msra.mxu0 0.0
  %4889 = vmatprep.subr.mxu0 0.0
  %4890 = vmatpush1.msra.mxu0 0.0
  %4891 = vmatprep.subr.mxu0 0.0
  %4892 = vmatpush1.msra.mxu0 0.0
  %4893 = vmatprep.subr.mxu0 0.0
  %4894 = vmatpush1.msra.mxu0 0.0
  %4895 = vmatprep.subr.mxu0 0.0
  %4896 = vmatpush1.msra.mxu0 0.0
  %4897 = vmatprep.subr.mxu0 0.0
  %4898 = vmatpush1.msra.mxu0 0.0
  %4899 = vmatprep.subr.mxu0 0.0
  %4900 = vmatpush1.msra.mxu0 0.0
  %4901 = vmatprep.subr.mxu0 0.0
  %4902 = vmatpush1.msra.mxu0 0.0
  %4903 = vmatprep.subr.mxu0 0.0
  %4904 = vmatpush1.msra.mxu0 0.0
  %4905 = vmatprep.subr.mxu0 0.0
  %4906 = vmatpush1.msra.mxu0 0.0
  %4907 = vmatprep.subr.mxu0 0.0
  %4908 = vmatpush1.msra.mxu0 0.0
  %4909 = vmatprep.subr.mxu0 0.0
  %4910 = vmatpush1.msra.mxu0 0.0
  %4911 = vmatprep.subr.mxu0 0.0
  %4912 = vmatpush1.msra.mxu0 0.0
  %4913 = vmatprep.subr.mxu0 0.0
  %4914 = vmatpush1.msra.mxu0 0.0
  %4915 = vmatprep.subr.mxu0 0.0
  %4916 = vmatpush1.msra.mxu0 0.0
  %4917 = vmatprep.subr.mxu0 0.0
  %4918 = vmatpush1.msra.mxu0 0.0
  %4919 = vmatprep.subr.mxu0 0.0
  %4920 = vmatpush1.msra.mxu0 0.0
  %4921 = vmatprep.subr.mxu0 0.0
  %4922 = vmatpush1.msra.mxu0 0.0
  %4923 = vmatprep.subr.mxu0 0.0
  %4924 = vmatpush1.msra.mxu0 0.0
  %4925 = vmatprep.subr.mxu0 0.0
  %4926 = vmatpush1.msra.mxu0 0.0
  %4927 = vmatprep.subr.mxu0 0.0
  %4928 = vmatpush1.msra.mxu0 0.0
  %4929 = vmatprep.mubr.f32.mxu0 0.0
  %4930 = vmatmul.mubr.f32.gmra.mrb[0].mxu0 %v4857
  %v4931 = vpop.f32.mrb[0].mxu0
  %v4932 = vadd.f32 %v479, %v4931
  %v4933 = vpop.f32.mrb[0].mxu0
  %4934 = vmatprep.mubr.f32.mxu0 0.0
  %4935 = vmatmul.mubr.f32.gmra.mrb[0].mxu0 %v4860
  %v4936 = vpop.f32.mrb[0].mxu0
  %v4937 = vadd.f32 %v484, %v4936
  %v4938 = vpop.f32.mrb[0].mxu0
  %4939 = vdwg.mxu0
  %v4941 = vsel %vm486, %v132, 0
  %v4944 = vsel %vm486, %v133, 0
  %v4947 = vsel %vm493, %v423, 0
  %4949 = vmatprep.subr.mxu0 0.0
  %4950 = vmatpush1.msra.mxu0 %v419
  %4951 = vmatprep.subr.mxu0 0.0
  %4952 = vmatpush1.msra.mxu0 %v420
  %4953 = vmatprep.subr.mxu0 0.0
  %4954 = vmatpush1.msra.mxu0 %v421
  %4955 = vmatprep.subr.mxu0 0.0
  %4956 = vmatpush1.msra.mxu0 %v422
  %4957 = vmatprep.subr.mxu0 0.0
  %4958 = vmatpush1.msra.mxu0 %v4947
  %4959 = vmatprep.subr.mxu0 0.0
  %4960 = vmatpush1.msra.mxu0 0.0
  %4961 = vmatprep.subr.mxu0 0.0
  %4962 = vmatpush1.msra.mxu0 0.0
  %4963 = vmatprep.subr.mxu0 0.0
  %4964 = vmatpush1.msra.mxu0 0.0
  %4965 = vmatprep.subr.mxu0 0.0
  %4966 = vmatpush1.msra.mxu0 0.0
  %4967 = vmatprep.subr.mxu0 0.0
  %4968 = vmatpush1.msra.mxu0 0.0
  %4969 = vmatprep.subr.mxu0 0.0
  %4970 = vmatpush1.msra.mxu0 0.0
  %4971 = vmatprep.subr.mxu0 0.0
  %4972 = vmatpush1.msra.mxu0 0.0
  %4973 = vmatprep.subr.mxu0 0.0
  %4974 = vmatpush1.msra.mxu0 0.0
  %4975 = vmatprep.subr.mxu0 0.0
  %4976 = vmatpush1.msra.mxu0 0.0
  %4977 = vmatprep.subr.mxu0 0.0
  %4978 = vmatpush1.msra.mxu0 0.0
  %4979 = vmatprep.subr.mxu0 0.0
  %4980 = vmatpush1.msra.mxu0 0.0
  %4981 = vmatprep.subr.mxu0 0.0
  %4982 = vmatpush1.msra.mxu0 0.0
  %4983 = vmatprep.subr.mxu0 0.0
  %4984 = vmatpush1.msra.mxu0 0.0
  %4985 = vmatprep.subr.mxu0 0.0
  %4986 = vmatpush1.msra.mxu0 0.0
  %4987 = vmatprep.subr.mxu0 0.0
  %4988 = vmatpush1.msra.mxu0 0.0
  %4989 = vmatprep.subr.mxu0 0.0
  %4990 = vmatpush1.msra.mxu0 0.0
  %4991 = vmatprep.subr.mxu0 0.0
  %4992 = vmatpush1.msra.mxu0 0.0
  %4993 = vmatprep.subr.mxu0 0.0
  %4994 = vmatpush1.msra.mxu0 0.0
  %4995 = vmatprep.subr.mxu0 0.0
  %4996 = vmatpush1.msra.mxu0 0.0
  %4997 = vmatprep.subr.mxu0 0.0
  %4998 = vmatpush1.msra.mxu0 0.0
  %4999 = vmatprep.subr.mxu0 0.0
  %5000 = vmatpush1.msra.mxu0 0.0
  %5001 = vmatprep.subr.mxu0 0.0
  %5002 = vmatpush1.msra.mxu0 0.0
  %5003 = vmatprep.subr.mxu0 0.0
  %5004 = vmatpush1.msra.mxu0 0.0
  %5005 = vmatprep.subr.mxu0 0.0
  %5006 = vmatpush1.msra.mxu0 0.0
  %5007 = vmatprep.subr.mxu0 0.0
  %5008 = vmatpush1.msra.mxu0 0.0
  %5009 = vmatprep.subr.mxu0 0.0
  %5010 = vmatpush1.msra.mxu0 0.0
  %5011 = vmatprep.subr.mxu0 0.0
  %5012 = vmatpush1.msra.mxu0 0.0
  %5013 = vmatprep.mubr.f32.mxu0 0.0
  %5014 = vmatmul.mubr.f32.gmra.mrb[0].mxu0 %v4941
  %v5015 = vpop.f32.mrb[0].mxu0
  %v5016 = vadd.f32 %v479, %v5015
  %v5017 = vpop.f32.mrb[0].mxu0
  %5018 = vmatprep.mubr.f32.mxu0 0.0
  %5019 = vmatmul.mubr.f32.gmra.mrb[0].mxu0 %v4944
  %v5020 = vpop.f32.mrb[0].mxu0
  %v5021 = vadd.f32 %v484, %v5020
  %v5022 = vpop.f32.mrb[0].mxu0
  %5023 = vdwg.mxu0
  %v5025 = vsel %vm486, %v134, 0
  %v5028 = vsel %vm486, %v135, 0
  %v5031 = vsel %vm493, %v428, 0
  %5033 = vmatprep.subr.mxu0 0.0
  %5034 = vmatpush1.msra.mxu0 %v424
  %5035 = vmatprep.subr.mxu0 0.0
  %5036 = vmatpush1.msra.mxu0 %v425
  %5037 = vmatprep.subr.mxu0 0.0
  %5038 = vmatpush1.msra.mxu0 %v426
  %5039 = vmatprep.subr.mxu0 0.0
  %5040 = vmatpush1.msra.mxu0 %v427
  %5041 = vmatprep.subr.mxu0 0.0
  %5042 = vmatpush1.msra.mxu0 %v5031
  %5043 = vmatprep.subr.mxu0 0.0
  %5044 = vmatpush1.msra.mxu0 0.0
  %5045 = vmatprep.subr.mxu0 0.0
  %5046 = vmatpush1.msra.mxu0 0.0
  %5047 = vmatprep.subr.mxu0 0.0
  %5048 = vmatpush1.msra.mxu0 0.0
  %5049 = vmatprep.subr.mxu0 0.0
  %5050 = vmatpush1.msra.mxu0 0.0
  %5051 = vmatprep.subr.mxu0 0.0
  %5052 = vmatpush1.msra.mxu0 0.0
  %5053 = vmatprep.subr.mxu0 0.0
  %5054 = vmatpush1.msra.mxu0 0.0
  %5055 = vmatprep.subr.mxu0 0.0
  %5056 = vmatpush1.msra.mxu0 0.0
  %5057 = vmatprep.subr.mxu0 0.0
  %5058 = vmatpush1.msra.mxu0 0.0
  %5059 = vmatprep.subr.mxu0 0.0
  %5060 = vmatpush1.msra.mxu0 0.0
  %5061 = vmatprep.subr.mxu0 0.0
  %5062 = vmatpush1.msra.mxu0 0.0
  %5063 = vmatprep.subr.mxu0 0.0
  %5064 = vmatpush1.msra.mxu0 0.0
  %5065 = vmatprep.subr.mxu0 0.0
  %5066 = vmatpush1.msra.mxu0 0.0
  %5067 = vmatprep.subr.mxu0 0.0
  %5068 = vmatpush1.msra.mxu0 0.0
  %5069 = vmatprep.subr.mxu0 0.0
  %5070 = vmatpush1.msra.mxu0 0.0
  %5071 = vmatprep.subr.mxu0 0.0
  %5072 = vmatpush1.msra.mxu0 0.0
  %5073 = vmatprep.subr.mxu0 0.0
  %5074 = vmatpush1.msra.mxu0 0.0
  %5075 = vmatprep.subr.mxu0 0.0
  %5076 = vmatpush1.msra.mxu0 0.0
  %5077 = vmatprep.subr.mxu0 0.0
  %5078 = vmatpush1.msra.mxu0 0.0
  %5079 = vmatprep.subr.mxu0 0.0
  %5080 = vmatpush1.msra.mxu0 0.0
  %5081 = vmatprep.subr.mxu0 0.0
  %5082 = vmatpush1.msra.mxu0 0.0
  %5083 = vmatprep.subr.mxu0 0.0
  %5084 = vmatpush1.msra.mxu0 0.0
  %5085 = vmatprep.subr.mxu0 0.0
  %5086 = vmatpush1.msra.mxu0 0.0
  %5087 = vmatprep.subr.mxu0 0.0
  %5088 = vmatpush1.msra.mxu0 0.0
  %5089 = vmatprep.subr.mxu0 0.0
  %5090 = vmatpush1.msra.mxu0 0.0
  %5091 = vmatprep.subr.mxu0 0.0
  %5092 = vmatpush1.msra.mxu0 0.0
  %5093 = vmatprep.subr.mxu0 0.0
  %5094 = vmatpush1.msra.mxu0 0.0
  %5095 = vmatprep.subr.mxu0 0.0
  %5096 = vmatpush1.msra.mxu0 0.0
  %5097 = vmatprep.mubr.f32.mxu0 0.0
  %5098 = vmatmul.mubr.f32.gmra.mrb[0].mxu0 %v5025
  %v5099 = vpop.f32.mrb[0].mxu0
  %v5100 = vadd.f32 %v479, %v5099
  %v5101 = vpop.f32.mrb[0].mxu0
  %5102 = vmatprep.mubr.f32.mxu0 0.0
  %5103 = vmatmul.mubr.f32.gmra.mrb[0].mxu0 %v5028
  %v5104 = vpop.f32.mrb[0].mxu0
  %v5105 = vadd.f32 %v484, %v5104
  %v5106 = vpop.f32.mrb[0].mxu0
  %5107 = vdwg.mxu0
  %v5109 = vsel %vm486, %v136, 0
  %v5112 = vsel %vm486, %v137, 0
  %v5115 = vsel %vm493, %v433, 0
  %5117 = vmatprep.subr.mxu0 0.0
  %5118 = vmatpush1.msra.mxu0 %v429
  %5119 = vmatprep.subr.mxu0 0.0
  %5120 = vmatpush1.msra.mxu0 %v430
  %5121 = vmatprep.subr.mxu0 0.0
  %5122 = vmatpush1.msra.mxu0 %v431
  %5123 = vmatprep.subr.mxu0 0.0
  %5124 = vmatpush1.msra.mxu0 %v432
  %5125 = vmatprep.subr.mxu0 0.0
  %5126 = vmatpush1.msra.mxu0 %v5115
  %5127 = vmatprep.subr.mxu0 0.0
  %5128 = vmatpush1.msra.mxu0 0.0
  %5129 = vmatprep.subr.mxu0 0.0
  %5130 = vmatpush1.msra.mxu0 0.0
  %5131 = vmatprep.subr.mxu0 0.0
  %5132 = vmatpush1.msra.mxu0 0.0
  %5133 = vmatprep.subr.mxu0 0.0
  %5134 = vmatpush1.msra.mxu0 0.0
  %5135 = vmatprep.subr.mxu0 0.0
  %5136 = vmatpush1.msra.mxu0 0.0
  %5137 = vmatprep.subr.mxu0 0.0
  %5138 = vmatpush1.msra.mxu0 0.0
  %5139 = vmatprep.subr.mxu0 0.0
  %5140 = vmatpush1.msra.mxu0 0.0
  %5141 = vmatprep.subr.mxu0 0.0
  %5142 = vmatpush1.msra.mxu0 0.0
  %5143 = vmatprep.subr.mxu0 0.0
  %5144 = vmatpush1.msra.mxu0 0.0
  %5145 = vmatprep.subr.mxu0 0.0
  %5146 = vmatpush1.msra.mxu0 0.0
  %5147 = vmatprep.subr.mxu0 0.0
  %5148 = vmatpush1.msra.mxu0 0.0
  %5149 = vmatprep.subr.mxu0 0.0
  %5150 = vmatpush1.msra.mxu0 0.0
  %5151 = vmatprep.subr.mxu0 0.0
  %5152 = vmatpush1.msra.mxu0 0.0
  %5153 = vmatprep.subr.mxu0 0.0
  %5154 = vmatpush1.msra.mxu0 0.0
  %5155 = vmatprep.subr.mxu0 0.0
  %5156 = vmatpush1.msra.mxu0 0.0
  %5157 = vmatprep.subr.mxu0 0.0
  %5158 = vmatpush1.msra.mxu0 0.0
  %5159 = vmatprep.subr.mxu0 0.0
  %5160 = vmatpush1.msra.mxu0 0.0
  %5161 = vmatprep.subr.mxu0 0.0
  %5162 = vmatpush1.msra.mxu0 0.0
  %5163 = vmatprep.subr.mxu0 0.0
  %5164 = vmatpush1.msra.mxu0 0.0
  %5165 = vmatprep.subr.mxu0 0.0
  %5166 = vmatpush1.msra.mxu0 0.0
  %5167 = vmatprep.subr.mxu0 0.0
  %5168 = vmatpush1.msra.mxu0 0.0
  %5169 = vmatprep.subr.mxu0 0.0
  %5170 = vmatpush1.msra.mxu0 0.0
  %5171 = vmatprep.subr.mxu0 0.0
  %5172 = vmatpush1.msra.mxu0 0.0
  %5173 = vmatprep.subr.mxu0 0.0
  %5174 = vmatpush1.msra.mxu0 0.0
  %5175 = vmatprep.subr.mxu0 0.0
  %5176 = vmatpush1.msra.mxu0 0.0
  %5177 = vmatprep.subr.mxu0 0.0
  %5178 = vmatpush1.msra.mxu0 0.0
  %5179 = vmatprep.subr.mxu0 0.0
  %5180 = vmatpush1.msra.mxu0 0.0
  %5181 = vmatprep.mubr.f32.mxu0 0.0
  %5182 = vmatmul.mubr.f32.gmra.mrb[0].mxu0 %v5109
  %v5183 = vpop.f32.mrb[0].mxu0
  %v5184 = vadd.f32 %v479, %v5183
  %v5185 = vpop.f32.mrb[0].mxu0
  %5186 = vmatprep.mubr.f32.mxu0 0.0
  %5187 = vmatmul.mubr.f32.gmra.mrb[0].mxu0 %v5112
  %v5188 = vpop.f32.mrb[0].mxu0
  %v5189 = vadd.f32 %v484, %v5188
  %v5190 = vpop.f32.mrb[0].mxu0
  %5191 = vdwg.mxu0
  %v5193 = vsel %vm486, %v138, 0
  %v5196 = vsel %vm486, %v139, 0
  %v5199 = vsel %vm493, %v438, 0
  %5201 = vmatprep.subr.mxu0 0.0
  %5202 = vmatpush1.msra.mxu0 %v434
  %5203 = vmatprep.subr.mxu0 0.0
  %5204 = vmatpush1.msra.mxu0 %v435
  %5205 = vmatprep.subr.mxu0 0.0
  %5206 = vmatpush1.msra.mxu0 %v436
  %5207 = vmatprep.subr.mxu0 0.0
  %5208 = vmatpush1.msra.mxu0 %v437
  %5209 = vmatprep.subr.mxu0 0.0
  %5210 = vmatpush1.msra.mxu0 %v5199
  %5211 = vmatprep.subr.mxu0 0.0
  %5212 = vmatpush1.msra.mxu0 0.0
  %5213 = vmatprep.subr.mxu0 0.0
  %5214 = vmatpush1.msra.mxu0 0.0
  %5215 = vmatprep.subr.mxu0 0.0
  %5216 = vmatpush1.msra.mxu0 0.0
  %5217 = vmatprep.subr.mxu0 0.0
  %5218 = vmatpush1.msra.mxu0 0.0
  %5219 = vmatprep.subr.mxu0 0.0
  %5220 = vmatpush1.msra.mxu0 0.0
  %5221 = vmatprep.subr.mxu0 0.0
  %5222 = vmatpush1.msra.mxu0 0.0
  %5223 = vmatprep.subr.mxu0 0.0
  %5224 = vmatpush1.msra.mxu0 0.0
  %5225 = vmatprep.subr.mxu0 0.0
  %5226 = vmatpush1.msra.mxu0 0.0
  %5227 = vmatprep.subr.mxu0 0.0
  %5228 = vmatpush1.msra.mxu0 0.0
  %5229 = vmatprep.subr.mxu0 0.0
  %5230 = vmatpush1.msra.mxu0 0.0
  %5231 = vmatprep.subr.mxu0 0.0
  %5232 = vmatpush1.msra.mxu0 0.0
  %5233 = vmatprep.subr.mxu0 0.0
  %5234 = vmatpush1.msra.mxu0 0.0
  %5235 = vmatprep.subr.mxu0 0.0
  %5236 = vmatpush1.msra.mxu0 0.0
  %5237 = vmatprep.subr.mxu0 0.0
  %5238 = vmatpush1.msra.mxu0 0.0
  %5239 = vmatprep.subr.mxu0 0.0
  %5240 = vmatpush1.msra.mxu0 0.0
  %5241 = vmatprep.subr.mxu0 0.0
  %5242 = vmatpush1.msra.mxu0 0.0
  %5243 = vmatprep.subr.mxu0 0.0
  %5244 = vmatpush1.msra.mxu0 0.0
  %5245 = vmatprep.subr.mxu0 0.0
  %5246 = vmatpush1.msra.mxu0 0.0
  %5247 = vmatprep.subr.mxu0 0.0
  %5248 = vmatpush1.msra.mxu0 0.0
  %5249 = vmatprep.subr.mxu0 0.0
  %5250 = vmatpush1.msra.mxu0 0.0
  %5251 = vmatprep.subr.mxu0 0.0
  %5252 = vmatpush1.msra.mxu0 0.0
  %5253 = vmatprep.subr.mxu0 0.0
  %5254 = vmatpush1.msra.mxu0 0.0
  %5255 = vmatprep.subr.mxu0 0.0
  %5256 = vmatpush1.msra.mxu0 0.0
  %5257 = vmatprep.subr.mxu0 0.0
  %5258 = vmatpush1.msra.mxu0 0.0
  %5259 = vmatprep.subr.mxu0 0.0
  %5260 = vmatpush1.msra.mxu0 0.0
  %5261 = vmatprep.subr.mxu0 0.0
  %5262 = vmatpush1.msra.mxu0 0.0
  %5263 = vmatprep.subr.mxu0 0.0
  %5264 = vmatpush1.msra.mxu0 0.0
  %5265 = vmatprep.mubr.f32.mxu0 0.0
  %5266 = vmatmul.mubr.f32.gmra.mrb[0].mxu0 %v5193
  %v5267 = vpop.f32.mrb[0].mxu0
  %v5268 = vadd.f32 %v479, %v5267
  %v5269 = vpop.f32.mrb[0].mxu0
  %5270 = vmatprep.mubr.f32.mxu0 0.0
  %5271 = vmatmul.mubr.f32.gmra.mrb[0].mxu0 %v5196
  %v5272 = vpop.f32.mrb[0].mxu0
  %v5273 = vadd.f32 %v484, %v5272
  %v5274 = vpop.f32.mrb[0].mxu0
  %5275 = vdwg.mxu0
  %v5277 = vsel %vm486, %v140, 0
  %v5280 = vsel %vm486, %v141, 0
  %v5283 = vsel %vm493, %v443, 0
  %5285 = vmatprep.subr.mxu0 0.0
  %5286 = vmatpush1.msra.mxu0 %v439
  %5287 = vmatprep.subr.mxu0 0.0
  %5288 = vmatpush1.msra.mxu0 %v440
  %5289 = vmatprep.subr.mxu0 0.0
  %5290 = vmatpush1.msra.mxu0 %v441
  %5291 = vmatprep.subr.mxu0 0.0
  %5292 = vmatpush1.msra.mxu0 %v442
  %5293 = vmatprep.subr.mxu0 0.0
  %5294 = vmatpush1.msra.mxu0 %v5283
  %5295 = vmatprep.subr.mxu0 0.0
  %5296 = vmatpush1.msra.mxu0 0.0
  %5297 = vmatprep.subr.mxu0 0.0
  %5298 = vmatpush1.msra.mxu0 0.0
  %5299 = vmatprep.subr.mxu0 0.0
  %5300 = vmatpush1.msra.mxu0 0.0
  %5301 = vmatprep.subr.mxu0 0.0
  %5302 = vmatpush1.msra.mxu0 0.0
  %5303 = vmatprep.subr.mxu0 0.0
  %5304 = vmatpush1.msra.mxu0 0.0
  %5305 = vmatprep.subr.mxu0 0.0
  %5306 = vmatpush1.msra.mxu0 0.0
  %5307 = vmatprep.subr.mxu0 0.0
  %5308 = vmatpush1.msra.mxu0 0.0
  %5309 = vmatprep.subr.mxu0 0.0
  %5310 = vmatpush1.msra.mxu0 0.0
  %5311 = vmatprep.subr.mxu0 0.0
  %5312 = vmatpush1.msra.mxu0 0.0
  %5313 = vmatprep.subr.mxu0 0.0
  %5314 = vmatpush1.msra.mxu0 0.0
  %5315 = vmatprep.subr.mxu0 0.0
  %5316 = vmatpush1.msra.mxu0 0.0
  %5317 = vmatprep.subr.mxu0 0.0
  %5318 = vmatpush1.msra.mxu0 0.0
  %5319 = vmatprep.subr.mxu0 0.0
  %5320 = vmatpush1.msra.mxu0 0.0
  %5321 = vmatprep.subr.mxu0 0.0
  %5322 = vmatpush1.msra.mxu0 0.0
  %5323 = vmatprep.subr.mxu0 0.0
  %5324 = vmatpush1.msra.mxu0 0.0
  %5325 = vmatprep.subr.mxu0 0.0
  %5326 = vmatpush1.msra.mxu0 0.0
  %5327 = vmatprep.subr.mxu0 0.0
  %5328 = vmatpush1.msra.mxu0 0.0
  %5329 = vmatprep.subr.mxu0 0.0
  %5330 = vmatpush1.msra.mxu0 0.0
  %5331 = vmatprep.subr.mxu0 0.0
  %5332 = vmatpush1.msra.mxu0 0.0
  %5333 = vmatprep.subr.mxu0 0.0
  %5334 = vmatpush1.msra.mxu0 0.0
  %5335 = vmatprep.subr.mxu0 0.0
  %5336 = vmatpush1.msra.mxu0 0.0
  %5337 = vmatprep.subr.mxu0 0.0
  %5338 = vmatpush1.msra.mxu0 0.0
  %5339 = vmatprep.subr.mxu0 0.0
  %5340 = vmatpush1.msra.mxu0 0.0
  %5341 = vmatprep.subr.mxu0 0.0
  %5342 = vmatpush1.msra.mxu0 0.0
  %5343 = vmatprep.subr.mxu0 0.0
  %5344 = vmatpush1.msra.mxu0 0.0
  %5345 = vmatprep.subr.mxu0 0.0
  %5346 = vmatpush1.msra.mxu0 0.0
  %5347 = vmatprep.subr.mxu0 0.0
  %5348 = vmatpush1.msra.mxu0 0.0
  %5349 = vmatprep.mubr.f32.mxu0 0.0
  %5350 = vmatmul.mubr.f32.gmra.mrb[0].mxu0 %v5277
  %v5351 = vpop.f32.mrb[0].mxu0
  %v5352 = vadd.f32 %v479, %v5351
  %v5353 = vpop.f32.mrb[0].mxu0
  %5354 = vmatprep.mubr.f32.mxu0 0.0
  %5355 = vmatmul.mubr.f32.gmra.mrb[0].mxu0 %v5280
  %v5356 = vpop.f32.mrb[0].mxu0
  %v5357 = vadd.f32 %v484, %v5356
  %v5358 = vpop.f32.mrb[0].mxu0
  %5359 = vdwg.mxu0
  %v5361 = vsel %vm486, %v142, 0
  %v5364 = vsel %vm486, %v143, 0
  %v5367 = vsel %vm493, %v448, 0
  %5369 = vmatprep.subr.mxu0 0.0
  %5370 = vmatpush1.msra.mxu0 %v444
  %5371 = vmatprep.subr.mxu0 0.0
  %5372 = vmatpush1.msra.mxu0 %v445
  %5373 = vmatprep.subr.mxu0 0.0
  %5374 = vmatpush1.msra.mxu0 %v446
  %5375 = vmatprep.subr.mxu0 0.0
  %5376 = vmatpush1.msra.mxu0 %v447
  %5377 = vmatprep.subr.mxu0 0.0
  %5378 = vmatpush1.msra.mxu0 %v5367
  %5379 = vmatprep.subr.mxu0 0.0
  %5380 = vmatpush1.msra.mxu0 0.0
  %5381 = vmatprep.subr.mxu0 0.0
  %5382 = vmatpush1.msra.mxu0 0.0
  %5383 = vmatprep.subr.mxu0 0.0
  %5384 = vmatpush1.msra.mxu0 0.0
  %5385 = vmatprep.subr.mxu0 0.0
  %5386 = vmatpush1.msra.mxu0 0.0
  %5387 = vmatprep.subr.mxu0 0.0
  %5388 = vmatpush1.msra.mxu0 0.0
  %5389 = vmatprep.subr.mxu0 0.0
  %5390 = vmatpush1.msra.mxu0 0.0
  %5391 = vmatprep.subr.mxu0 0.0
  %5392 = vmatpush1.msra.mxu0 0.0
  %5393 = vmatprep.subr.mxu0 0.0
  %5394 = vmatpush1.msra.mxu0 0.0
  %5395 = vmatprep.subr.mxu0 0.0
  %5396 = vmatpush1.msra.mxu0 0.0
  %5397 = vmatprep.subr.mxu0 0.0
  %5398 = vmatpush1.msra.mxu0 0.0
  %5399 = vmatprep.subr.mxu0 0.0
  %5400 = vmatpush1.msra.mxu0 0.0
  %5401 = vmatprep.subr.mxu0 0.0
  %5402 = vmatpush1.msra.mxu0 0.0
  %5403 = vmatprep.subr.mxu0 0.0
  %5404 = vmatpush1.msra.mxu0 0.0
  %5405 = vmatprep.subr.mxu0 0.0
  %5406 = vmatpush1.msra.mxu0 0.0
  %5407 = vmatprep.subr.mxu0 0.0
  %5408 = vmatpush1.msra.mxu0 0.0
  %5409 = vmatprep.subr.mxu0 0.0
  %5410 = vmatpush1.msra.mxu0 0.0
  %5411 = vmatprep.subr.mxu0 0.0
  %5412 = vmatpush1.msra.mxu0 0.0
  %5413 = vmatprep.subr.mxu0 0.0
  %5414 = vmatpush1.msra.mxu0 0.0
  %5415 = vmatprep.subr.mxu0 0.0
  %5416 = vmatpush1.msra.mxu0 0.0
  %5417 = vmatprep.subr.mxu0 0.0
  %5418 = vmatpush1.msra.mxu0 0.0
  %5419 = vmatprep.subr.mxu0 0.0
  %5420 = vmatpush1.msra.mxu0 0.0
  %5421 = vmatprep.subr.mxu0 0.0
  %5422 = vmatpush1.msra.mxu0 0.0
  %5423 = vmatprep.subr.mxu0 0.0
  %5424 = vmatpush1.msra.mxu0 0.0
  %5425 = vmatprep.subr.mxu0 0.0
  %5426 = vmatpush1.msra.mxu0 0.0
  %5427 = vmatprep.subr.mxu0 0.0
  %5428 = vmatpush1.msra.mxu0 0.0
  %5429 = vmatprep.subr.mxu0 0.0
  %5430 = vmatpush1.msra.mxu0 0.0
  %5431 = vmatprep.subr.mxu0 0.0
  %5432 = vmatpush1.msra.mxu0 0.0
  %5433 = vmatprep.mubr.f32.mxu0 0.0
  %5434 = vmatmul.mubr.f32.gmra.mrb[0].mxu0 %v5361
  %v5435 = vpop.f32.mrb[0].mxu0
  %v5436 = vadd.f32 %v479, %v5435
  %v5437 = vpop.f32.mrb[0].mxu0
  %5438 = vmatprep.mubr.f32.mxu0 0.0
  %5439 = vmatmul.mubr.f32.gmra.mrb[0].mxu0 %v5364
  %v5440 = vpop.f32.mrb[0].mxu0
  %v5441 = vadd.f32 %v484, %v5440
  %v5442 = vpop.f32.mrb[0].mxu0
  %5443 = vdwg.mxu0
  %v5445 = vsel %vm486, %v144, 0
  %v5448 = vsel %vm486, %v145, 0
  %v5451 = vsel %vm493, %v453, 0
  %5453 = vmatprep.subr.mxu0 0.0
  %5454 = vmatpush1.msra.mxu0 %v449
  %5455 = vmatprep.subr.mxu0 0.0
  %5456 = vmatpush1.msra.mxu0 %v450
  %5457 = vmatprep.subr.mxu0 0.0
  %5458 = vmatpush1.msra.mxu0 %v451
  %5459 = vmatprep.subr.mxu0 0.0
  %5460 = vmatpush1.msra.mxu0 %v452
  %5461 = vmatprep.subr.mxu0 0.0
  %5462 = vmatpush1.msra.mxu0 %v5451
  %5463 = vmatprep.subr.mxu0 0.0
  %5464 = vmatpush1.msra.mxu0 0.0
  %5465 = vmatprep.subr.mxu0 0.0
  %5466 = vmatpush1.msra.mxu0 0.0
  %5467 = vmatprep.subr.mxu0 0.0
  %5468 = vmatpush1.msra.mxu0 0.0
  %5469 = vmatprep.subr.mxu0 0.0
  %5470 = vmatpush1.msra.mxu0 0.0
  %5471 = vmatprep.subr.mxu0 0.0
  %5472 = vmatpush1.msra.mxu0 0.0
  %5473 = vmatprep.subr.mxu0 0.0
  %5474 = vmatpush1.msra.mxu0 0.0
  %5475 = vmatprep.subr.mxu0 0.0
  %5476 = vmatpush1.msra.mxu0 0.0
  %5477 = vmatprep.subr.mxu0 0.0
  %5478 = vmatpush1.msra.mxu0 0.0
  %5479 = vmatprep.subr.mxu0 0.0
  %5480 = vmatpush1.msra.mxu0 0.0
  %5481 = vmatprep.subr.mxu0 0.0
  %5482 = vmatpush1.msra.mxu0 0.0
  %5483 = vmatprep.subr.mxu0 0.0
  %5484 = vmatpush1.msra.mxu0 0.0
  %5485 = vmatprep.subr.mxu0 0.0
  %5486 = vmatpush1.msra.mxu0 0.0
  %5487 = vmatprep.subr.mxu0 0.0
  %5488 = vmatpush1.msra.mxu0 0.0
  %5489 = vmatprep.subr.mxu0 0.0
  %5490 = vmatpush1.msra.mxu0 0.0
  %5491 = vmatprep.subr.mxu0 0.0
  %5492 = vmatpush1.msra.mxu0 0.0
  %5493 = vmatprep.subr.mxu0 0.0
  %5494 = vmatpush1.msra.mxu0 0.0
  %5495 = vmatprep.subr.mxu0 0.0
  %5496 = vmatpush1.msra.mxu0 0.0
  %5497 = vmatprep.subr.mxu0 0.0
  %5498 = vmatpush1.msra.mxu0 0.0
  %5499 = vmatprep.subr.mxu0 0.0
  %5500 = vmatpush1.msra.mxu0 0.0
  %5501 = vmatprep.subr.mxu0 0.0
  %5502 = vmatpush1.msra.mxu0 0.0
  %5503 = vmatprep.subr.mxu0 0.0
  %5504 = vmatpush1.msra.mxu0 0.0
  %5505 = vmatprep.subr.mxu0 0.0
  %5506 = vmatpush1.msra.mxu0 0.0
  %5507 = vmatprep.subr.mxu0 0.0
  %5508 = vmatpush1.msra.mxu0 0.0
  %5509 = vmatprep.subr.mxu0 0.0
  %5510 = vmatpush1.msra.mxu0 0.0
  %5511 = vmatprep.subr.mxu0 0.0
  %5512 = vmatpush1.msra.mxu0 0.0
  %5513 = vmatprep.subr.mxu0 0.0
  %5514 = vmatpush1.msra.mxu0 0.0
  %5515 = vmatprep.subr.mxu0 0.0
  %5516 = vmatpush1.msra.mxu0 0.0
  %5517 = vmatprep.mubr.f32.mxu0 0.0
  %5518 = vmatmul.mubr.f32.gmra.mrb[0].mxu0 %v5445
  %v5519 = vpop.f32.mrb[0].mxu0
  %v5520 = vadd.f32 %v479, %v5519
  %v5521 = vpop.f32.mrb[0].mxu0
  %5522 = vmatprep.mubr.f32.mxu0 0.0
  %5523 = vmatmul.mubr.f32.gmra.mrb[0].mxu0 %v5448
  %v5524 = vpop.f32.mrb[0].mxu0
  %v5525 = vadd.f32 %v484, %v5524
  %v5526 = vpop.f32.mrb[0].mxu0
  %5527 = vdwg.mxu0
  %v5529 = vsel %vm486, %v146, 0
  %v5532 = vsel %vm486, %v147, 0
  %v5535 = vsel %vm493, %v458, 0
  %5537 = vmatprep.subr.mxu0 0.0
  %5538 = vmatpush1.msra.mxu0 %v454
  %5539 = vmatprep.subr.mxu0 0.0
  %5540 = vmatpush1.msra.mxu0 %v455
  %5541 = vmatprep.subr.mxu0 0.0
  %5542 = vmatpush1.msra.mxu0 %v456
  %5543 = vmatprep.subr.mxu0 0.0
  %5544 = vmatpush1.msra.mxu0 %v457
  %5545 = vmatprep.subr.mxu0 0.0
  %5546 = vmatpush1.msra.mxu0 %v5535
  %5547 = vmatprep.subr.mxu0 0.0
  %5548 = vmatpush1.msra.mxu0 0.0
  %5549 = vmatprep.subr.mxu0 0.0
  %5550 = vmatpush1.msra.mxu0 0.0
  %5551 = vmatprep.subr.mxu0 0.0
  %5552 = vmatpush1.msra.mxu0 0.0
  %5553 = vmatprep.subr.mxu0 0.0
  %5554 = vmatpush1.msra.mxu0 0.0
  %5555 = vmatprep.subr.mxu0 0.0
  %5556 = vmatpush1.msra.mxu0 0.0
  %5557 = vmatprep.subr.mxu0 0.0
  %5558 = vmatpush1.msra.mxu0 0.0
  %5559 = vmatprep.subr.mxu0 0.0
  %5560 = vmatpush1.msra.mxu0 0.0
  %5561 = vmatprep.subr.mxu0 0.0
  %5562 = vmatpush1.msra.mxu0 0.0
  %5563 = vmatprep.subr.mxu0 0.0
  %5564 = vmatpush1.msra.mxu0 0.0
  %5565 = vmatprep.subr.mxu0 0.0
  %5566 = vmatpush1.msra.mxu0 0.0
  %5567 = vmatprep.subr.mxu0 0.0
  %5568 = vmatpush1.msra.mxu0 0.0
  %5569 = vmatprep.subr.mxu0 0.0
  %5570 = vmatpush1.msra.mxu0 0.0
  %5571 = vmatprep.subr.mxu0 0.0
  %5572 = vmatpush1.msra.mxu0 0.0
  %5573 = vmatprep.subr.mxu0 0.0
  %5574 = vmatpush1.msra.mxu0 0.0
  %5575 = vmatprep.subr.mxu0 0.0
  %5576 = vmatpush1.msra.mxu0 0.0
  %5577 = vmatprep.subr.mxu0 0.0
  %5578 = vmatpush1.msra.mxu0 0.0
  %5579 = vmatprep.subr.mxu0 0.0
  %5580 = vmatpush1.msra.mxu0 0.0
  %5581 = vmatprep.subr.mxu0 0.0
  %5582 = vmatpush1.msra.mxu0 0.0
  %5583 = vmatprep.subr.mxu0 0.0
  %5584 = vmatpush1.msra.mxu0 0.0
  %5585 = vmatprep.subr.mxu0 0.0
  %5586 = vmatpush1.msra.mxu0 0.0
  %5587 = vmatprep.subr.mxu0 0.0
  %5588 = vmatpush1.msra.mxu0 0.0
  %5589 = vmatprep.subr.mxu0 0.0
  %5590 = vmatpush1.msra.mxu0 0.0
  %5591 = vmatprep.subr.mxu0 0.0
  %5592 = vmatpush1.msra.mxu0 0.0
  %5593 = vmatprep.subr.mxu0 0.0
  %5594 = vmatpush1.msra.mxu0 0.0
  %5595 = vmatprep.subr.mxu0 0.0
  %5596 = vmatpush1.msra.mxu0 0.0
  %5597 = vmatprep.subr.mxu0 0.0
  %5598 = vmatpush1.msra.mxu0 0.0
  %5599 = vmatprep.subr.mxu0 0.0
  %5600 = vmatpush1.msra.mxu0 0.0
  %5601 = vmatprep.mubr.f32.mxu0 0.0
  %5602 = vmatmul.mubr.f32.gmra.mrb[0].mxu0 %v5529
  %v5603 = vpop.f32.mrb[0].mxu0
  %v5604 = vadd.f32 %v479, %v5603
  %v5605 = vpop.f32.mrb[0].mxu0
  %5606 = vmatprep.mubr.f32.mxu0 0.0
  %5607 = vmatmul.mubr.f32.gmra.mrb[0].mxu0 %v5532
  %v5608 = vpop.f32.mrb[0].mxu0
  %v5609 = vadd.f32 %v484, %v5608
  %v5610 = vpop.f32.mrb[0].mxu0
  %5611 = vdwg.mxu0
  %v5613 = vsel %vm486, %v148, 0
  %v5616 = vsel %vm486, %v149, 0
  %v5619 = vsel %vm493, %v463, 0
  %5621 = vmatprep.subr.mxu0 0.0
  %5622 = vmatpush1.msra.mxu0 %v459
  %5623 = vmatprep.subr.mxu0 0.0
  %5624 = vmatpush1.msra.mxu0 %v460
  %5625 = vmatprep.subr.mxu0 0.0
  %5626 = vmatpush1.msra.mxu0 %v461
  %5627 = vmatprep.subr.mxu0 0.0
  %5628 = vmatpush1.msra.mxu0 %v462
  %5629 = vmatprep.subr.mxu0 0.0
  %5630 = vmatpush1.msra.mxu0 %v5619
  %5631 = vmatprep.subr.mxu0 0.0
  %5632 = vmatpush1.msra.mxu0 0.0
  %5633 = vmatprep.subr.mxu0 0.0
  %5634 = vmatpush1.msra.mxu0 0.0
  %5635 = vmatprep.subr.mxu0 0.0
  %5636 = vmatpush1.msra.mxu0 0.0
  %5637 = vmatprep.subr.mxu0 0.0
  %5638 = vmatpush1.msra.mxu0 0.0
  %5639 = vmatprep.subr.mxu0 0.0
  %5640 = vmatpush1.msra.mxu0 0.0
  %5641 = vmatprep.subr.mxu0 0.0
  %5642 = vmatpush1.msra.mxu0 0.0
  %5643 = vmatprep.subr.mxu0 0.0
  %5644 = vmatpush1.msra.mxu0 0.0
  %5645 = vmatprep.subr.mxu0 0.0
  %5646 = vmatpush1.msra.mxu0 0.0
  %5647 = vmatprep.subr.mxu0 0.0
  %5648 = vmatpush1.msra.mxu0 0.0
  %5649 = vmatprep.subr.mxu0 0.0
  %5650 = vmatpush1.msra.mxu0 0.0
  %5651 = vmatprep.subr.mxu0 0.0
  %5652 = vmatpush1.msra.mxu0 0.0
  %5653 = vmatprep.subr.mxu0 0.0
  %5654 = vmatpush1.msra.mxu0 0.0
  %5655 = vmatprep.subr.mxu0 0.0
  %5656 = vmatpush1.msra.mxu0 0.0
  %5657 = vmatprep.subr.mxu0 0.0
  %5658 = vmatpush1.msra.mxu0 0.0
  %5659 = vmatprep.subr.mxu0 0.0
  %5660 = vmatpush1.msra.mxu0 0.0
  %5661 = vmatprep.subr.mxu0 0.0
  %5662 = vmatpush1.msra.mxu0 0.0
  %5663 = vmatprep.subr.mxu0 0.0
  %5664 = vmatpush1.msra.mxu0 0.0
  %5665 = vmatprep.subr.mxu0 0.0
  %5666 = vmatpush1.msra.mxu0 0.0
  %5667 = vmatprep.subr.mxu0 0.0
  %5668 = vmatpush1.msra.mxu0 0.0
  %5669 = vmatprep.subr.mxu0 0.0
  %5670 = vmatpush1.msra.mxu0 0.0
  %5671 = vmatprep.subr.mxu0 0.0
  %5672 = vmatpush1.msra.mxu0 0.0
  %5673 = vmatprep.subr.mxu0 0.0
  %5674 = vmatpush1.msra.mxu0 0.0
  %5675 = vmatprep.subr.mxu0 0.0
  %5676 = vmatpush1.msra.mxu0 0.0
  %5677 = vmatprep.subr.mxu0 0.0
  %5678 = vmatpush1.msra.mxu0 0.0
  %5679 = vmatprep.subr.mxu0 0.0
  %5680 = vmatpush1.msra.mxu0 0.0
  %5681 = vmatprep.subr.mxu0 0.0
  %5682 = vmatpush1.msra.mxu0 0.0
  %5683 = vmatprep.subr.mxu0 0.0
  %5684 = vmatpush1.msra.mxu0 0.0
  %5685 = vmatprep.mubr.f32.mxu0 0.0
  %5686 = vmatmul.mubr.f32.gmra.mrb[0].mxu0 %v5613
  %v5687 = vpop.f32.mrb[0].mxu0
  %v5688 = vadd.f32 %v479, %v5687
  %v5689 = vpop.f32.mrb[0].mxu0
  %5690 = vmatprep.mubr.f32.mxu0 0.0
  %5691 = vmatmul.mubr.f32.gmra.mrb[0].mxu0 %v5616
  %v5692 = vpop.f32.mrb[0].mxu0
  %v5693 = vadd.f32 %v484, %v5692
  %v5694 = vpop.f32.mrb[0].mxu0
  %5695 = vdwg.mxu0
  %v5697 = vsel %vm486, %v150, 0
  %v5700 = vsel %vm486, %v151, 0
  %v5703 = vsel %vm493, %v468, 0
  %5705 = vmatprep.subr.mxu0 0.0
  %5706 = vmatpush1.msra.mxu0 %v464
  %5707 = vmatprep.subr.mxu0 0.0
  %5708 = vmatpush1.msra.mxu0 %v465
  %5709 = vmatprep.subr.mxu0 0.0
  %5710 = vmatpush1.msra.mxu0 %v466
  %5711 = vmatprep.subr.mxu0 0.0
  %5712 = vmatpush1.msra.mxu0 %v467
  %5713 = vmatprep.subr.mxu0 0.0
  %5714 = vmatpush1.msra.mxu0 %v5703
  %5715 = vmatprep.subr.mxu0 0.0
  %5716 = vmatpush1.msra.mxu0 0.0
  %5717 = vmatprep.subr.mxu0 0.0
  %5718 = vmatpush1.msra.mxu0 0.0
  %5719 = vmatprep.subr.mxu0 0.0
  %5720 = vmatpush1.msra.mxu0 0.0
  %5721 = vmatprep.subr.mxu0 0.0
  %5722 = vmatpush1.msra.mxu0 0.0
  %5723 = vmatprep.subr.mxu0 0.0
  %5724 = vmatpush1.msra.mxu0 0.0
  %5725 = vmatprep.subr.mxu0 0.0
  %5726 = vmatpush1.msra.mxu0 0.0
  %5727 = vmatprep.subr.mxu0 0.0
  %5728 = vmatpush1.msra.mxu0 0.0
  %5729 = vmatprep.subr.mxu0 0.0
  %5730 = vmatpush1.msra.mxu0 0.0
  %5731 = vmatprep.subr.mxu0 0.0
  %5732 = vmatpush1.msra.mxu0 0.0
  %5733 = vmatprep.subr.mxu0 0.0
  %5734 = vmatpush1.msra.mxu0 0.0
  %5735 = vmatprep.subr.mxu0 0.0
  %5736 = vmatpush1.msra.mxu0 0.0
  %5737 = vmatprep.subr.mxu0 0.0
  %5738 = vmatpush1.msra.mxu0 0.0
  %5739 = vmatprep.subr.mxu0 0.0
  %5740 = vmatpush1.msra.mxu0 0.0
  %5741 = vmatprep.subr.mxu0 0.0
  %5742 = vmatpush1.msra.mxu0 0.0
  %5743 = vmatprep.subr.mxu0 0.0
  %5744 = vmatpush1.msra.mxu0 0.0
  %5745 = vmatprep.subr.mxu0 0.0
  %5746 = vmatpush1.msra.mxu0 0.0
  %5747 = vmatprep.subr.mxu0 0.0
  %5748 = vmatpush1.msra.mxu0 0.0
  %5749 = vmatprep.subr.mxu0 0.0
  %5750 = vmatpush1.msra.mxu0 0.0
  %5751 = vmatprep.subr.mxu0 0.0
  %5752 = vmatpush1.msra.mxu0 0.0
  %5753 = vmatprep.subr.mxu0 0.0
  %5754 = vmatpush1.msra.mxu0 0.0
  %5755 = vmatprep.subr.mxu0 0.0
  %5756 = vmatpush1.msra.mxu0 0.0
  %5757 = vmatprep.subr.mxu0 0.0
  %5758 = vmatpush1.msra.mxu0 0.0
  %5759 = vmatprep.subr.mxu0 0.0
  %5760 = vmatpush1.msra.mxu0 0.0
  %5761 = vmatprep.subr.mxu0 0.0
  %5762 = vmatpush1.msra.mxu0 0.0
  %5763 = vmatprep.subr.mxu0 0.0
  %5764 = vmatpush1.msra.mxu0 0.0
  %5765 = vmatprep.subr.mxu0 0.0
  %5766 = vmatpush1.msra.mxu0 0.0
  %5767 = vmatprep.subr.mxu0 0.0
  %5768 = vmatpush1.msra.mxu0 0.0
  %5769 = vmatprep.mubr.f32.mxu0 0.0
  %5770 = vmatmul.mubr.f32.gmra.mrb[0].mxu0 %v5697
  %v5771 = vpop.f32.mrb[0].mxu0
  %v5772 = vadd.f32 %v479, %v5771
  %v5773 = vpop.f32.mrb[0].mxu0
  %5774 = vmatprep.mubr.f32.mxu0 0.0
  %5775 = vmatmul.mubr.f32.gmra.mrb[0].mxu0 %v5700
  %v5776 = vpop.f32.mrb[0].mxu0
  %v5777 = vadd.f32 %v484, %v5776
  %v5778 = vpop.f32.mrb[0].mxu0
  %5779 = vdwg.mxu0
  %v5781 = vsel %vm486, %v152, 0
  %v5784 = vsel %vm486, %v153, 0
  %v5787 = vsel %vm493, %v473, 0
  %5789 = vmatprep.subr.mxu0 0.0
  %5790 = vmatpush1.msra.mxu0 %v469
  %5791 = vmatprep.subr.mxu0 0.0
  %5792 = vmatpush1.msra.mxu0 %v470
  %5793 = vmatprep.subr.mxu0 0.0
  %5794 = vmatpush1.msra.mxu0 %v471
  %5795 = vmatprep.subr.mxu0 0.0
  %5796 = vmatpush1.msra.mxu0 %v472
  %5797 = vmatprep.subr.mxu0 0.0
  %5798 = vmatpush1.msra.mxu0 %v5787
  %5799 = vmatprep.subr.mxu0 0.0
  %5800 = vmatpush1.msra.mxu0 0.0
  %5801 = vmatprep.subr.mxu0 0.0
  %5802 = vmatpush1.msra.mxu0 0.0
  %5803 = vmatprep.subr.mxu0 0.0
  %5804 = vmatpush1.msra.mxu0 0.0
  %5805 = vmatprep.subr.mxu0 0.0
  %5806 = vmatpush1.msra.mxu0 0.0
  %5807 = vmatprep.subr.mxu0 0.0
  %5808 = vmatpush1.msra.mxu0 0.0
  %5809 = vmatprep.subr.mxu0 0.0
  %5810 = vmatpush1.msra.mxu0 0.0
  %5811 = vmatprep.subr.mxu0 0.0
  %5812 = vmatpush1.msra.mxu0 0.0
  %5813 = vmatprep.subr.mxu0 0.0
  %5814 = vmatpush1.msra.mxu0 0.0
  %5815 = vmatprep.subr.mxu0 0.0
  %5816 = vmatpush1.msra.mxu0 0.0
  %5817 = vmatprep.subr.mxu0 0.0
  %5818 = vmatpush1.msra.mxu0 0.0
  %5819 = vmatprep.subr.mxu0 0.0
  %5820 = vmatpush1.msra.mxu0 0.0
  %5821 = vmatprep.subr.mxu0 0.0
  %5822 = vmatpush1.msra.mxu0 0.0
  %5823 = vmatprep.subr.mxu0 0.0
  %5824 = vmatpush1.msra.mxu0 0.0
  %5825 = vmatprep.subr.mxu0 0.0
  %5826 = vmatpush1.msra.mxu0 0.0
  %5827 = vmatprep.subr.mxu0 0.0
  %5828 = vmatpush1.msra.mxu0 0.0
  %5829 = vmatprep.subr.mxu0 0.0
  %5830 = vmatpush1.msra.mxu0 0.0
  %5831 = vmatprep.subr.mxu0 0.0
  %5832 = vmatpush1.msra.mxu0 0.0
  %5833 = vmatprep.subr.mxu0 0.0
  %5834 = vmatpush1.msra.mxu0 0.0
  %5835 = vmatprep.subr.mxu0 0.0
  %5836 = vmatpush1.msra.mxu0 0.0
  %5837 = vmatprep.subr.mxu0 0.0
  %5838 = vmatpush1.msra.mxu0 0.0
  %5839 = vmatprep.subr.mxu0 0.0
  %5840 = vmatpush1.msra.mxu0 0.0
  %5841 = vmatprep.subr.mxu0 0.0
  %5842 = vmatpush1.msra.mxu0 0.0
  %5843 = vmatprep.subr.mxu0 0.0
  %5844 = vmatpush1.msra.mxu0 0.0
  %5845 = vmatprep.subr.mxu0 0.0
  %5846 = vmatpush1.msra.mxu0 0.0
  %5847 = vmatprep.subr.mxu0 0.0
  %5848 = vmatpush1.msra.mxu0 0.0
  %5849 = vmatprep.subr.mxu0 0.0
  %5850 = vmatpush1.msra.mxu0 0.0
  %5851 = vmatprep.subr.mxu0 0.0
  %5852 = vmatpush1.msra.mxu0 0.0
  %5853 = vmatprep.mubr.f32.mxu0 0.0
  %5854 = vmatmul.mubr.f32.gmra.mrb[0].mxu0 %v5781
  %v5855 = vpop.f32.mrb[0].mxu0
  %v5856 = vadd.f32 %v479, %v5855
  %v5857 = vpop.f32.mrb[0].mxu0
  %5858 = vmatprep.mubr.f32.mxu0 0.0
  %5859 = vmatmul.mubr.f32.gmra.mrb[0].mxu0 %v5784
  %v5860 = vpop.f32.mrb[0].mxu0
  %v5861 = vadd.f32 %v484, %v5860
  %v5862 = vpop.f32.mrb[0].mxu0
  %5863 = vdwg.mxu0
  %v5864 = vxor.u32 %v564, 2147483648
  %v5865 = vxor.u32 %v569, 2147483648
  %v5866 = vxor.u32 %v648, 2147483648
  %v5867 = vxor.u32 %v653, 2147483648
  %v5868 = vxor.u32 %v732, 2147483648
  %v5869 = vxor.u32 %v737, 2147483648
  %v5870 = vxor.u32 %v816, 2147483648
  %v5871 = vxor.u32 %v821, 2147483648
  %v5872 = vxor.u32 %v900, 2147483648
  %v5873 = vxor.u32 %v905, 2147483648
  %v5874 = vxor.u32 %v984, 2147483648
  %v5875 = vxor.u32 %v989, 2147483648
  %v5876 = vxor.u32 %v1068, 2147483648
  %v5877 = vxor.u32 %v1073, 2147483648
  %v5878 = vxor.u32 %v1152, 2147483648
  %v5879 = vxor.u32 %v1157, 2147483648
  %v5880 = vxor.u32 %v1236, 2147483648
  %v5881 = vxor.u32 %v1241, 2147483648
  %v5882 = vxor.u32 %v1320, 2147483648
  %v5883 = vxor.u32 %v1325, 2147483648
  %v5884 = vxor.u32 %v1404, 2147483648
  %v5885 = vxor.u32 %v1409, 2147483648
  %v5886 = vxor.u32 %v1488, 2147483648
  %v5887 = vxor.u32 %v1493, 2147483648
  %v5888 = vxor.u32 %v1572, 2147483648
  %v5889 = vxor.u32 %v1577, 2147483648
  %v5890 = vxor.u32 %v1656, 2147483648
  %v5891 = vxor.u32 %v1661, 2147483648
  %v5892 = vxor.u32 %v1740, 2147483648
  %v5893 = vxor.u32 %v1745, 2147483648
  %v5894 = vxor.u32 %v1824, 2147483648
  %v5895 = vxor.u32 %v1829, 2147483648
  %v5896 = vxor.u32 %v1908, 2147483648
  %v5897 = vxor.u32 %v1913, 2147483648
  %v5898 = vxor.u32 %v1992, 2147483648
  %v5899 = vxor.u32 %v1997, 2147483648
  %v5900 = vxor.u32 %v2076, 2147483648
  %v5901 = vxor.u32 %v2081, 2147483648
  %v5902 = vxor.u32 %v2160, 2147483648
  %v5903 = vxor.u32 %v2165, 2147483648
  %v5904 = vxor.u32 %v2244, 2147483648
  %v5905 = vxor.u32 %v2249, 2147483648
  %v5906 = vxor.u32 %v2328, 2147483648
  %v5907 = vxor.u32 %v2333, 2147483648
  %v5908 = vxor.u32 %v2412, 2147483648
  %v5909 = vxor.u32 %v2417, 2147483648
  %v5910 = vxor.u32 %v2496, 2147483648
  %v5911 = vxor.u32 %v2501, 2147483648
  %v5912 = vxor.u32 %v2580, 2147483648
  %v5913 = vxor.u32 %v2585, 2147483648
  %v5914 = vxor.u32 %v2664, 2147483648
  %v5915 = vxor.u32 %v2669, 2147483648
  %v5916 = vxor.u32 %v2748, 2147483648
  %v5917 = vxor.u32 %v2753, 2147483648
  %v5918 = vxor.u32 %v2832, 2147483648
  %v5919 = vxor.u32 %v2837, 2147483648
  %v5920 = vxor.u32 %v2916, 2147483648
  %v5921 = vxor.u32 %v2921, 2147483648
  %v5922 = vxor.u32 %v3000, 2147483648
  %v5923 = vxor.u32 %v3005, 2147483648
  %v5924 = vxor.u32 %v3084, 2147483648
  %v5925 = vxor.u32 %v3089, 2147483648
  %v5926 = vxor.u32 %v3168, 2147483648
  %v5927 = vxor.u32 %v3173, 2147483648
  %v5928 = vxor.u32 %v3252, 2147483648
  %v5929 = vxor.u32 %v3257, 2147483648
  %v5930 = vxor.u32 %v3336, 2147483648
  %v5931 = vxor.u32 %v3341, 2147483648
  %v5932 = vxor.u32 %v3420, 2147483648
  %v5933 = vxor.u32 %v3425, 2147483648
  %v5934 = vxor.u32 %v3504, 2147483648
  %v5935 = vxor.u32 %v3509, 2147483648
  %v5936 = vxor.u32 %v3588, 2147483648
  %v5937 = vxor.u32 %v3593, 2147483648
  %v5938 = vxor.u32 %v3672, 2147483648
  %v5939 = vxor.u32 %v3677, 2147483648
  %v5940 = vxor.u32 %v3756, 2147483648
  %v5941 = vxor.u32 %v3761, 2147483648
  %v5942 = vxor.u32 %v3840, 2147483648
  %v5943 = vxor.u32 %v3845, 2147483648
  %v5944 = vxor.u32 %v3924, 2147483648
  %v5945 = vxor.u32 %v3929, 2147483648
  %v5946 = vxor.u32 %v4008, 2147483648
  %v5947 = vxor.u32 %v4013, 2147483648
  %v5948 = vxor.u32 %v4092, 2147483648
  %v5949 = vxor.u32 %v4097, 2147483648
  %v5950 = vxor.u32 %v4176, 2147483648
  %v5951 = vxor.u32 %v4181, 2147483648
  %v5952 = vxor.u32 %v4260, 2147483648
  %v5953 = vxor.u32 %v4265, 2147483648
  %v5954 = vxor.u32 %v4344, 2147483648
  %v5955 = vxor.u32 %v4349, 2147483648
  %v5956 = vxor.u32 %v4428, 2147483648
  %v5957 = vxor.u32 %v4433, 2147483648
  %v5958 = vxor.u32 %v4512, 2147483648
  %v5959 = vxor.u32 %v4517, 2147483648
  %v5960 = vxor.u32 %v4596, 2147483648
  %v5961 = vxor.u32 %v4601, 2147483648
  %v5962 = vxor.u32 %v4680, 2147483648
  %v5963 = vxor.u32 %v4685, 2147483648
  %v5964 = vxor.u32 %v4764, 2147483648
  %v5965 = vxor.u32 %v4769, 2147483648
  %v5966 = vxor.u32 %v4848, 2147483648
  %v5967 = vxor.u32 %v4853, 2147483648
  %v5968 = vxor.u32 %v4932, 2147483648
  %v5969 = vxor.u32 %v4937, 2147483648
  %v5970 = vxor.u32 %v5016, 2147483648
  %v5971 = vxor.u32 %v5021, 2147483648
  %v5972 = vxor.u32 %v5100, 2147483648
  %v5973 = vxor.u32 %v5105, 2147483648
  %v5974 = vxor.u32 %v5184, 2147483648
  %v5975 = vxor.u32 %v5189, 2147483648
  %v5976 = vxor.u32 %v5268, 2147483648
  %v5977 = vxor.u32 %v5273, 2147483648
  %v5978 = vxor.u32 %v5352, 2147483648
  %v5979 = vxor.u32 %v5357, 2147483648
  %v5980 = vxor.u32 %v5436, 2147483648
  %v5981 = vxor.u32 %v5441, 2147483648
  %v5982 = vxor.u32 %v5520, 2147483648
  %v5983 = vxor.u32 %v5525, 2147483648
  %v5984 = vxor.u32 %v5604, 2147483648
  %v5985 = vxor.u32 %v5609, 2147483648
  %v5986 = vxor.u32 %v5688, 2147483648
  %v5987 = vxor.u32 %v5693, 2147483648
  %v5988 = vxor.u32 %v5772, 2147483648
  %v5989 = vxor.u32 %v5777, 2147483648
  %v5990 = vxor.u32 %v5856, 2147483648
  %v5991 = vxor.u32 %v5861, 2147483648
  %v5992 = vmul.f32 %v5864, 1.442695
  %v5993 = vpow.pop %v5992
  %v5994 = vmul.f32 %v5865, 1.442695
  %v5995 = vpow.pop %v5994
  %v5996 = vmul.f32 %v5866, 1.442695
  %v5997 = vpow.pop %v5996
  %v5998 = vmul.f32 %v5867, 1.442695
  %v5999 = vpow.pop %v5998
  %v6000 = vmul.f32 %v5868, 1.442695
  %v6001 = vpow.pop %v6000
  %v6002 = vmul.f32 %v5869, 1.442695
  %v6003 = vpow.pop %v6002
  %v6004 = vmul.f32 %v5870, 1.442695
  %v6005 = vpow.pop %v6004
  %v6006 = vmul.f32 %v5871, 1.442695
  %v6007 = vpow.pop %v6006
  %v6008 = vmul.f32 %v5872, 1.442695
  %v6009 = vpow.pop %v6008
  %v6010 = vmul.f32 %v5873, 1.442695
  %v6011 = vpow.pop %v6010
  %v6012 = vmul.f32 %v5874, 1.442695
  %v6013 = vpow.pop %v6012
  %v6014 = vmul.f32 %v5875, 1.442695
  %v6015 = vpow.pop %v6014
  %v6016 = vmul.f32 %v5876, 1.442695
  %v6017 = vpow.pop %v6016
  %v6018 = vmul.f32 %v5877, 1.442695
  %v6019 = vpow.pop %v6018
  %v6020 = vmul.f32 %v5878, 1.442695
  %v6021 = vpow.pop %v6020
  %v6022 = vmul.f32 %v5879, 1.442695
  %v6023 = vpow.pop %v6022
  %v6024 = vmul.f32 %v5880, 1.442695
  %v6025 = vpow.pop %v6024
  %v6026 = vmul.f32 %v5881, 1.442695
  %v6027 = vpow.pop %v6026
  %v6028 = vmul.f32 %v5882, 1.442695
  %v6029 = vpow.pop %v6028
  %v6030 = vmul.f32 %v5883, 1.442695
  %v6031 = vpow.pop %v6030
  %v6032 = vmul.f32 %v5884, 1.442695
  %v6033 = vpow.pop %v6032
  %v6034 = vmul.f32 %v5885, 1.442695
  %v6035 = vpow.pop %v6034
  %v6036 = vmul.f32 %v5886, 1.442695
  %v6037 = vpow.pop %v6036
  %v6038 = vmul.f32 %v5887, 1.442695
  %v6039 = vpow.pop %v6038
  %v6040 = vmul.f32 %v5888, 1.442695
  %v6041 = vpow.pop %v6040
  %v6042 = vmul.f32 %v5889, 1.442695
  %v6043 = vpow.pop %v6042
  %v6044 = vmul.f32 %v5890, 1.442695
  %v6045 = vpow.pop %v6044
  %v6046 = vmul.f32 %v5891, 1.442695
  %v6047 = vpow.pop %v6046
  %v6048 = vmul.f32 %v5892, 1.442695
  %v6049 = vpow.pop %v6048
  %v6050 = vmul.f32 %v5893, 1.442695
  %v6051 = vpow.pop %v6050
  %v6052 = vmul.f32 %v5894, 1.442695
  %v6053 = vpow.pop %v6052
  %v6054 = vmul.f32 %v5895, 1.442695
  %v6055 = vpow.pop %v6054
  %v6056 = vmul.f32 %v5896, 1.442695
  %v6057 = vpow.pop %v6056
  %v6058 = vmul.f32 %v5897, 1.442695
  %v6059 = vpow.pop %v6058
  %v6060 = vmul.f32 %v5898, 1.442695
  %v6061 = vpow.pop %v6060
  %v6062 = vmul.f32 %v5899, 1.442695
  %v6063 = vpow.pop %v6062
  %v6064 = vmul.f32 %v5900, 1.442695
  %v6065 = vpow.pop %v6064
  %v6066 = vmul.f32 %v5901, 1.442695
  %v6067 = vpow.pop %v6066
  %v6068 = vmul.f32 %v5902, 1.442695
  %v6069 = vpow.pop %v6068
  %v6070 = vmul.f32 %v5903, 1.442695
  %v6071 = vpow.pop %v6070
  %v6072 = vmul.f32 %v5904, 1.442695
  %v6073 = vpow.pop %v6072
  %v6074 = vmul.f32 %v5905, 1.442695
  %v6075 = vpow.pop %v6074
  %v6076 = vmul.f32 %v5906, 1.442695
  %v6077 = vpow.pop %v6076
  %v6078 = vmul.f32 %v5907, 1.442695
  %v6079 = vpow.pop %v6078
  %v6080 = vmul.f32 %v5908, 1.442695
  %v6081 = vpow.pop %v6080
  %v6082 = vmul.f32 %v5909, 1.442695
  %v6083 = vpow.pop %v6082
  %v6084 = vmul.f32 %v5910, 1.442695
  %v6085 = vpow.pop %v6084
  %v6086 = vmul.f32 %v5911, 1.442695
  %v6087 = vpow.pop %v6086
  %v6088 = vmul.f32 %v5912, 1.442695
  %v6089 = vpow.pop %v6088
  %v6090 = vmul.f32 %v5913, 1.442695
  %v6091 = vpow.pop %v6090
  %v6092 = vmul.f32 %v5914, 1.442695
  %v6093 = vpow.pop %v6092
  %v6094 = vmul.f32 %v5915, 1.442695
  %v6095 = vpow.pop %v6094
  %v6096 = vmul.f32 %v5916, 1.442695
  %v6097 = vpow.pop %v6096
  %v6098 = vmul.f32 %v5917, 1.442695
  %v6099 = vpow.pop %v6098
  %v6100 = vmul.f32 %v5918, 1.442695
  %v6101 = vpow.pop %v6100
  %v6102 = vmul.f32 %v5919, 1.442695
  %v6103 = vpow.pop %v6102
  %v6104 = vmul.f32 %v5920, 1.442695
  %v6105 = vpow.pop %v6104
  %v6106 = vmul.f32 %v5921, 1.442695
  %v6107 = vpow.pop %v6106
  %v6108 = vmul.f32 %v5922, 1.442695
  %v6109 = vpow.pop %v6108
  %v6110 = vmul.f32 %v5923, 1.442695
  %v6111 = vpow.pop %v6110
  %v6112 = vmul.f32 %v5924, 1.442695
  %v6113 = vpow.pop %v6112
  %v6114 = vmul.f32 %v5925, 1.442695
  %v6115 = vpow.pop %v6114
  %v6116 = vmul.f32 %v5926, 1.442695
  %v6117 = vpow.pop %v6116
  %v6118 = vmul.f32 %v5927, 1.442695
  %v6119 = vpow.pop %v6118
  %v6120 = vmul.f32 %v5928, 1.442695
  %v6121 = vpow.pop %v6120
  %v6122 = vmul.f32 %v5929, 1.442695
  %v6123 = vpow.pop %v6122
  %v6124 = vmul.f32 %v5930, 1.442695
  %v6125 = vpow.pop %v6124
  %v6126 = vmul.f32 %v5931, 1.442695
  %v6127 = vpow.pop %v6126
  %v6128 = vmul.f32 %v5932, 1.442695
  %v6129 = vpow.pop %v6128
  %v6130 = vmul.f32 %v5933, 1.442695
  %v6131 = vpow.pop %v6130
  %v6132 = vmul.f32 %v5934, 1.442695
  %v6133 = vpow.pop %v6132
  %v6134 = vmul.f32 %v5935, 1.442695
  %v6135 = vpow.pop %v6134
  %v6136 = vmul.f32 %v5936, 1.442695
  %v6137 = vpow.pop %v6136
  %v6138 = vmul.f32 %v5937, 1.442695
  %v6139 = vpow.pop %v6138
  %v6140 = vmul.f32 %v5938, 1.442695
  %v6141 = vpow.pop %v6140
  %v6142 = vmul.f32 %v5939, 1.442695
  %v6143 = vpow.pop %v6142
  %v6144 = vmul.f32 %v5940, 1.442695
  %v6145 = vpow.pop %v6144
  %v6146 = vmul.f32 %v5941, 1.442695
  %v6147 = vpow.pop %v6146
  %v6148 = vmul.f32 %v5942, 1.442695
  %v6149 = vpow.pop %v6148
  %v6150 = vmul.f32 %v5943, 1.442695
  %v6151 = vpow.pop %v6150
  %v6152 = vmul.f32 %v5944, 1.442695
  %v6153 = vpow.pop %v6152
  %v6154 = vmul.f32 %v5945, 1.442695
  %v6155 = vpow.pop %v6154
  %v6156 = vmul.f32 %v5946, 1.442695
  %v6157 = vpow.pop %v6156
  %v6158 = vmul.f32 %v5947, 1.442695
  %v6159 = vpow.pop %v6158
  %v6160 = vmul.f32 %v5948, 1.442695
  %v6161 = vpow.pop %v6160
  %v6162 = vmul.f32 %v5949, 1.442695
  %v6163 = vpow.pop %v6162
  %v6164 = vmul.f32 %v5950, 1.442695
  %v6165 = vpow.pop %v6164
  %v6166 = vmul.f32 %v5951, 1.442695
  %v6167 = vpow.pop %v6166
  %v6168 = vmul.f32 %v5952, 1.442695
  %v6169 = vpow.pop %v6168
  %v6170 = vmul.f32 %v5953, 1.442695
  %v6171 = vpow.pop %v6170
  %v6172 = vmul.f32 %v5954, 1.442695
  %v6173 = vpow.pop %v6172
  %v6174 = vmul.f32 %v5955, 1.442695
  %v6175 = vpow.pop %v6174
  %v6176 = vmul.f32 %v5956, 1.442695
  %v6177 = vpow.pop %v6176
  %v6178 = vmul.f32 %v5957, 1.442695
  %v6179 = vpow.pop %v6178
  %v6180 = vmul.f32 %v5958, 1.442695
  %v6181 = vpow.pop %v6180
  %v6182 = vmul.f32 %v5959, 1.442695
  %v6183 = vpow.pop %v6182
  %v6184 = vmul.f32 %v5960, 1.442695
  %v6185 = vpow.pop %v6184
  %v6186 = vmul.f32 %v5961, 1.442695
  %v6187 = vpow.pop %v6186
  %v6188 = vmul.f32 %v5962, 1.442695
  %v6189 = vpow.pop %v6188
  %v6190 = vmul.f32 %v5963, 1.442695
  %v6191 = vpow.pop %v6190
  %v6192 = vmul.f32 %v5964, 1.442695
  %v6193 = vpow.pop %v6192
  %v6194 = vmul.f32 %v5965, 1.442695
  %v6195 = vpow.pop %v6194
  %v6196 = vmul.f32 %v5966, 1.442695
  %v6197 = vpow.pop %v6196
  %v6198 = vmul.f32 %v5967, 1.442695
  %v6199 = vpow.pop %v6198
  %v6200 = vmul.f32 %v5968, 1.442695
  %v6201 = vpow.pop %v6200
  %v6202 = vmul.f32 %v5969, 1.442695
  %v6203 = vpow.pop %v6202
  %v6204 = vmul.f32 %v5970, 1.442695
  %v6205 = vpow.pop %v6204
  %v6206 = vmul.f32 %v5971, 1.442695
  %v6207 = vpow.pop %v6206
  %v6208 = vmul.f32 %v5972, 1.442695
  %v6209 = vpow.pop %v6208
  %v6210 = vmul.f32 %v5973, 1.442695
  %v6211 = vpow.pop %v6210
  %v6212 = vmul.f32 %v5974, 1.442695
  %v6213 = vpow.pop %v6212
  %v6214 = vmul.f32 %v5975, 1.442695
  %v6215 = vpow.pop %v6214
  %v6216 = vmul.f32 %v5976, 1.442695
  %v6217 = vpow.pop %v6216
  %v6218 = vmul.f32 %v5977, 1.442695
  %v6219 = vpow.pop %v6218
  %v6220 = vmul.f32 %v5978, 1.442695
  %v6221 = vpow.pop %v6220
  %v6222 = vmul.f32 %v5979, 1.442695
  %v6223 = vpow.pop %v6222
  %v6224 = vmul.f32 %v5980, 1.442695
  %v6225 = vpow.pop %v6224
  %v6226 = vmul.f32 %v5981, 1.442695
  %v6227 = vpow.pop %v6226
  %v6228 = vmul.f32 %v5982, 1.442695
  %v6229 = vpow.pop %v6228
  %v6230 = vmul.f32 %v5983, 1.442695
  %v6231 = vpow.pop %v6230
  %v6232 = vmul.f32 %v5984, 1.442695
  %v6233 = vpow.pop %v6232
  %v6234 = vmul.f32 %v5985, 1.442695
  %v6235 = vpow.pop %v6234
  %v6236 = vmul.f32 %v5986, 1.442695
  %v6237 = vpow.pop %v6236
  %v6238 = vmul.f32 %v5987, 1.442695
  %v6239 = vpow.pop %v6238
  %v6240 = vmul.f32 %v5988, 1.442695
  %v6241 = vpow.pop %v6240
  %v6242 = vmul.f32 %v5989, 1.442695
  %v6243 = vpow.pop %v6242
  %v6244 = vmul.f32 %v5990, 1.442695
  %v6245 = vpow.pop %v6244
  %v6246 = vmul.f32 %v5991, 1.442695
  %v6247 = vpow.pop %v6246
  %v6248 = vadd.f32 %v5993, 1.0
  %v6249 = vadd.f32 %v5995, 1.0
  %v6250 = vadd.f32 %v5997, 1.0
  %v6251 = vadd.f32 %v5999, 1.0
  %v6252 = vadd.f32 %v6001, 1.0
  %v6253 = vadd.f32 %v6003, 1.0
  %v6254 = vadd.f32 %v6005, 1.0
  %v6255 = vadd.f32 %v6007, 1.0
  %v6256 = vadd.f32 %v6009, 1.0
  %v6257 = vadd.f32 %v6011, 1.0
  %v6258 = vadd.f32 %v6013, 1.0
  %v6259 = vadd.f32 %v6015, 1.0
  %v6260 = vadd.f32 %v6017, 1.0
  %v6261 = vadd.f32 %v6019, 1.0
  %v6262 = vadd.f32 %v6021, 1.0
  %v6263 = vadd.f32 %v6023, 1.0
  %v6264 = vadd.f32 %v6025, 1.0
  %v6265 = vadd.f32 %v6027, 1.0
  %v6266 = vadd.f32 %v6029, 1.0
  %v6267 = vadd.f32 %v6031, 1.0
  %v6268 = vadd.f32 %v6033, 1.0
  %v6269 = vadd.f32 %v6035, 1.0
  %v6270 = vadd.f32 %v6037, 1.0
  %v6271 = vadd.f32 %v6039, 1.0
  %v6272 = vadd.f32 %v6041, 1.0
  %v6273 = vadd.f32 %v6043, 1.0
  %v6274 = vadd.f32 %v6045, 1.0
  %v6275 = vadd.f32 %v6047, 1.0
  %v6276 = vadd.f32 %v6049, 1.0
  %v6277 = vadd.f32 %v6051, 1.0
  %v6278 = vadd.f32 %v6053, 1.0
  %v6279 = vadd.f32 %v6055, 1.0
  %v6280 = vadd.f32 %v6057, 1.0
  %v6281 = vadd.f32 %v6059, 1.0
  %v6282 = vadd.f32 %v6061, 1.0
  %v6283 = vadd.f32 %v6063, 1.0
  %v6284 = vadd.f32 %v6065, 1.0
  %v6285 = vadd.f32 %v6067, 1.0
  %v6286 = vadd.f32 %v6069, 1.0
  %v6287 = vadd.f32 %v6071, 1.0
  %v6288 = vadd.f32 %v6073, 1.0
  %v6289 = vadd.f32 %v6075, 1.0
  %v6290 = vadd.f32 %v6077, 1.0
  %v6291 = vadd.f32 %v6079, 1.0
  %v6292 = vadd.f32 %v6081, 1.0
  %v6293 = vadd.f32 %v6083, 1.0
  %v6294 = vadd.f32 %v6085, 1.0
  %v6295 = vadd.f32 %v6087, 1.0
  %v6296 = vadd.f32 %v6089, 1.0
  %v6297 = vadd.f32 %v6091, 1.0
  %v6298 = vadd.f32 %v6093, 1.0
  %v6299 = vadd.f32 %v6095, 1.0
  %v6300 = vadd.f32 %v6097, 1.0
  %v6301 = vadd.f32 %v6099, 1.0
  %v6302 = vadd.f32 %v6101, 1.0
  %v6303 = vadd.f32 %v6103, 1.0
  %v6304 = vadd.f32 %v6105, 1.0
  %v6305 = vadd.f32 %v6107, 1.0
  %v6306 = vadd.f32 %v6109, 1.0
  %v6307 = vadd.f32 %v6111, 1.0
  %v6308 = vadd.f32 %v6113, 1.0
  %v6309 = vadd.f32 %v6115, 1.0
  %v6310 = vadd.f32 %v6117, 1.0
  %v6311 = vadd.f32 %v6119, 1.0
  %v6312 = vadd.f32 %v6121, 1.0
  %v6313 = vadd.f32 %v6123, 1.0
  %v6314 = vadd.f32 %v6125, 1.0
  %v6315 = vadd.f32 %v6127, 1.0
  %v6316 = vadd.f32 %v6129, 1.0
  %v6317 = vadd.f32 %v6131, 1.0
  %v6318 = vadd.f32 %v6133, 1.0
  %v6319 = vadd.f32 %v6135, 1.0
  %v6320 = vadd.f32 %v6137, 1.0
  %v6321 = vadd.f32 %v6139, 1.0
  %v6322 = vadd.f32 %v6141, 1.0
  %v6323 = vadd.f32 %v6143, 1.0
  %v6324 = vadd.f32 %v6145, 1.0
  %v6325 = vadd.f32 %v6147, 1.0
  %v6326 = vadd.f32 %v6149, 1.0
  %v6327 = vadd.f32 %v6151, 1.0
  %v6328 = vadd.f32 %v6153, 1.0
  %v6329 = vadd.f32 %v6155, 1.0
  %v6330 = vadd.f32 %v6157, 1.0
  %v6331 = vadd.f32 %v6159, 1.0
  %v6332 = vadd.f32 %v6161, 1.0
  %v6333 = vadd.f32 %v6163, 1.0
  %v6334 = vadd.f32 %v6165, 1.0
  %v6335 = vadd.f32 %v6167, 1.0
  %v6336 = vadd.f32 %v6169, 1.0
  %v6337 = vadd.f32 %v6171, 1.0
  %v6338 = vadd.f32 %v6173, 1.0
  %v6339 = vadd.f32 %v6175, 1.0
  %v6340 = vadd.f32 %v6177, 1.0
  %v6341 = vadd.f32 %v6179, 1.0
  %v6342 = vadd.f32 %v6181, 1.0
  %v6343 = vadd.f32 %v6183, 1.0
  %v6344 = vadd.f32 %v6185, 1.0
  %v6345 = vadd.f32 %v6187, 1.0
  %v6346 = vadd.f32 %v6189, 1.0
  %v6347 = vadd.f32 %v6191, 1.0
  %v6348 = vadd.f32 %v6193, 1.0
  %v6349 = vadd.f32 %v6195, 1.0
  %v6350 = vadd.f32 %v6197, 1.0
  %v6351 = vadd.f32 %v6199, 1.0
  %v6352 = vadd.f32 %v6201, 1.0
  %v6353 = vadd.f32 %v6203, 1.0
  %v6354 = vadd.f32 %v6205, 1.0
  %v6355 = vadd.f32 %v6207, 1.0
  %v6356 = vadd.f32 %v6209, 1.0
  %v6357 = vadd.f32 %v6211, 1.0
  %v6358 = vadd.f32 %v6213, 1.0
  %v6359 = vadd.f32 %v6215, 1.0
  %v6360 = vadd.f32 %v6217, 1.0
  %v6361 = vadd.f32 %v6219, 1.0
  %v6362 = vadd.f32 %v6221, 1.0
  %v6363 = vadd.f32 %v6223, 1.0
  %v6364 = vadd.f32 %v6225, 1.0
  %v6365 = vadd.f32 %v6227, 1.0
  %v6366 = vadd.f32 %v6229, 1.0
  %v6367 = vadd.f32 %v6231, 1.0
  %v6368 = vadd.f32 %v6233, 1.0
  %v6369 = vadd.f32 %v6235, 1.0
  %v6370 = vadd.f32 %v6237, 1.0
  %v6371 = vadd.f32 %v6239, 1.0
  %v6372 = vadd.f32 %v6241, 1.0
  %v6373 = vadd.f32 %v6243, 1.0
  %v6374 = vadd.f32 %v6245, 1.0
  %v6375 = vadd.f32 %v6247, 1.0
  %v6376 = vrcp.pop %v6248
  %v6377 = vmul.f32 1.0, %v6376
  %v6378 = vrcp.pop %v6249
  %v6379 = vmul.f32 1.0, %v6378
  %v6380 = vrcp.pop %v6250
  %v6381 = vmul.f32 1.0, %v6380
  %v6382 = vrcp.pop %v6251
  %v6383 = vmul.f32 1.0, %v6382
  %v6384 = vrcp.pop %v6252
  %v6385 = vmul.f32 1.0, %v6384
  %v6386 = vrcp.pop %v6253
  %v6387 = vmul.f32 1.0, %v6386
  %v6388 = vrcp.pop %v6254
  %v6389 = vmul.f32 1.0, %v6388
  %v6390 = vrcp.pop %v6255
  %v6391 = vmul.f32 1.0, %v6390
  %v6392 = vrcp.pop %v6256
  %v6393 = vmul.f32 1.0, %v6392
  %v6394 = vrcp.pop %v6257
  %v6395 = vmul.f32 1.0, %v6394
  %v6396 = vrcp.pop %v6258
  %v6397 = vmul.f32 1.0, %v6396
  %v6398 = vrcp.pop %v6259
  %v6399 = vmul.f32 1.0, %v6398
  %v6400 = vrcp.pop %v6260
  %v6401 = vmul.f32 1.0, %v6400
  %v6402 = vrcp.pop %v6261
  %v6403 = vmul.f32 1.0, %v6402
  %v6404 = vrcp.pop %v6262
  %v6405 = vmul.f32 1.0, %v6404
  %v6406 = vrcp.pop %v6263
  %v6407 = vmul.f32 1.0, %v6406
  %v6408 = vrcp.pop %v6264
  %v6409 = vmul.f32 1.0, %v6408
  %v6410 = vrcp.pop %v6265
  %v6411 = vmul.f32 1.0, %v6410
  %v6412 = vrcp.pop %v6266
  %v6413 = vmul.f32 1.0, %v6412
  %v6414 = vrcp.pop %v6267
  %v6415 = vmul.f32 1.0, %v6414
  %v6416 = vrcp.pop %v6268
  %v6417 = vmul.f32 1.0, %v6416
  %v6418 = vrcp.pop %v6269
  %v6419 = vmul.f32 1.0, %v6418
  %v6420 = vrcp.pop %v6270
  %v6421 = vmul.f32 1.0, %v6420
  %v6422 = vrcp.pop %v6271
  %v6423 = vmul.f32 1.0, %v6422
  %v6424 = vrcp.pop %v6272
  %v6425 = vmul.f32 1.0, %v6424
  %v6426 = vrcp.pop %v6273
  %v6427 = vmul.f32 1.0, %v6426
  %v6428 = vrcp.pop %v6274
  %v6429 = vmul.f32 1.0, %v6428
  %v6430 = vrcp.pop %v6275
  %v6431 = vmul.f32 1.0, %v6430
  %v6432 = vrcp.pop %v6276
  %v6433 = vmul.f32 1.0, %v6432
  %v6434 = vrcp.pop %v6277
  %v6435 = vmul.f32 1.0, %v6434
  %v6436 = vrcp.pop %v6278
  %v6437 = vmul.f32 1.0, %v6436
  %v6438 = vrcp.pop %v6279
  %v6439 = vmul.f32 1.0, %v6438
  %v6440 = vrcp.pop %v6280
  %v6441 = vmul.f32 1.0, %v6440
  %v6442 = vrcp.pop %v6281
  %v6443 = vmul.f32 1.0, %v6442
  %v6444 = vrcp.pop %v6282
  %v6445 = vmul.f32 1.0, %v6444
  %v6446 = vrcp.pop %v6283
  %v6447 = vmul.f32 1.0, %v6446
  %v6448 = vrcp.pop %v6284
  %v6449 = vmul.f32 1.0, %v6448
  %v6450 = vrcp.pop %v6285
  %v6451 = vmul.f32 1.0, %v6450
  %v6452 = vrcp.pop %v6286
  %v6453 = vmul.f32 1.0, %v6452
  %v6454 = vrcp.pop %v6287
  %v6455 = vmul.f32 1.0, %v6454
  %v6456 = vrcp.pop %v6288
  %v6457 = vmul.f32 1.0, %v6456
  %v6458 = vrcp.pop %v6289
  %v6459 = vmul.f32 1.0, %v6458
  %v6460 = vrcp.pop %v6290
  %v6461 = vmul.f32 1.0, %v6460
  %v6462 = vrcp.pop %v6291
  %v6463 = vmul.f32 1.0, %v6462
  %v6464 = vrcp.pop %v6292
  %v6465 = vmul.f32 1.0, %v6464
  %v6466 = vrcp.pop %v6293
  %v6467 = vmul.f32 1.0, %v6466
  %v6468 = vrcp.pop %v6294
  %v6469 = vmul.f32 1.0, %v6468
  %v6470 = vrcp.pop %v6295
  %v6471 = vmul.f32 1.0, %v6470
  %v6472 = vrcp.pop %v6296
  %v6473 = vmul.f32 1.0, %v6472
  %v6474 = vrcp.pop %v6297
  %v6475 = vmul.f32 1.0, %v6474
  %v6476 = vrcp.pop %v6298
  %v6477 = vmul.f32 1.0, %v6476
  %v6478 = vrcp.pop %v6299
  %v6479 = vmul.f32 1.0, %v6478
  %v6480 = vrcp.pop %v6300
  %v6481 = vmul.f32 1.0, %v6480
  %v6482 = vrcp.pop %v6301
  %v6483 = vmul.f32 1.0, %v6482
  %v6484 = vrcp.pop %v6302
  %v6485 = vmul.f32 1.0, %v6484
  %v6486 = vrcp.pop %v6303
  %v6487 = vmul.f32 1.0, %v6486
  %v6488 = vrcp.pop %v6304
  %v6489 = vmul.f32 1.0, %v6488
  %v6490 = vrcp.pop %v6305
  %v6491 = vmul.f32 1.0, %v6490
  %v6492 = vrcp.pop %v6306
  %v6493 = vmul.f32 1.0, %v6492
  %v6494 = vrcp.pop %v6307
  %v6495 = vmul.f32 1.0, %v6494
  %v6496 = vrcp.pop %v6308
  %v6497 = vmul.f32 1.0, %v6496
  %v6498 = vrcp.pop %v6309
  %v6499 = vmul.f32 1.0, %v6498
  %v6500 = vrcp.pop %v6310
  %v6501 = vmul.f32 1.0, %v6500
  %v6502 = vrcp.pop %v6311
  %v6503 = vmul.f32 1.0, %v6502
  %v6504 = vrcp.pop %v6312
  %v6505 = vmul.f32 1.0, %v6504
  %v6506 = vrcp.pop %v6313
  %v6507 = vmul.f32 1.0, %v6506
  %v6508 = vrcp.pop %v6314
  %v6509 = vmul.f32 1.0, %v6508
  %v6510 = vrcp.pop %v6315
  %v6511 = vmul.f32 1.0, %v6510
  %v6512 = vrcp.pop %v6316
  %v6513 = vmul.f32 1.0, %v6512
  %v6514 = vrcp.pop %v6317
  %v6515 = vmul.f32 1.0, %v6514
  %v6516 = vrcp.pop %v6318
  %v6517 = vmul.f32 1.0, %v6516
  %v6518 = vrcp.pop %v6319
  %v6519 = vmul.f32 1.0, %v6518
  %v6520 = vrcp.pop %v6320
  %v6521 = vmul.f32 1.0, %v6520
  %v6522 = vrcp.pop %v6321
  %v6523 = vmul.f32 1.0, %v6522
  %v6524 = vrcp.pop %v6322
  %v6525 = vmul.f32 1.0, %v6524
  %v6526 = vrcp.pop %v6323
  %v6527 = vmul.f32 1.0, %v6526
  %v6528 = vrcp.pop %v6324
  %v6529 = vmul.f32 1.0, %v6528
  %v6530 = vrcp.pop %v6325
  %v6531 = vmul.f32 1.0, %v6530
  %v6532 = vrcp.pop %v6326
  %v6533 = vmul.f32 1.0, %v6532
  %v6534 = vrcp.pop %v6327
  %v6535 = vmul.f32 1.0, %v6534
  %v6536 = vrcp.pop %v6328
  %v6537 = vmul.f32 1.0, %v6536
  %v6538 = vrcp.pop %v6329
  %v6539 = vmul.f32 1.0, %v6538
  %v6540 = vrcp.pop %v6330
  %v6541 = vmul.f32 1.0, %v6540
  %v6542 = vrcp.pop %v6331
  %v6543 = vmul.f32 1.0, %v6542
  %v6544 = vrcp.pop %v6332
  %v6545 = vmul.f32 1.0, %v6544
  %v6546 = vrcp.pop %v6333
  %v6547 = vmul.f32 1.0, %v6546
  %v6548 = vrcp.pop %v6334
  %v6549 = vmul.f32 1.0, %v6548
  %v6550 = vrcp.pop %v6335
  %v6551 = vmul.f32 1.0, %v6550
  %v6552 = vrcp.pop %v6336
  %v6553 = vmul.f32 1.0, %v6552
  %v6554 = vrcp.pop %v6337
  %v6555 = vmul.f32 1.0, %v6554
  %v6556 = vrcp.pop %v6338
  %v6557 = vmul.f32 1.0, %v6556
  %v6558 = vrcp.pop %v6339
  %v6559 = vmul.f32 1.0, %v6558
  %v6560 = vrcp.pop %v6340
  %v6561 = vmul.f32 1.0, %v6560
  %v6562 = vrcp.pop %v6341
  %v6563 = vmul.f32 1.0, %v6562
  %v6564 = vrcp.pop %v6342
  %v6565 = vmul.f32 1.0, %v6564
  %v6566 = vrcp.pop %v6343
  %v6567 = vmul.f32 1.0, %v6566
  %v6568 = vrcp.pop %v6344
  %v6569 = vmul.f32 1.0, %v6568
  %v6570 = vrcp.pop %v6345
  %v6571 = vmul.f32 1.0, %v6570
  %v6572 = vrcp.pop %v6346
  %v6573 = vmul.f32 1.0, %v6572
  %v6574 = vrcp.pop %v6347
  %v6575 = vmul.f32 1.0, %v6574
  %v6576 = vrcp.pop %v6348
  %v6577 = vmul.f32 1.0, %v6576
  %v6578 = vrcp.pop %v6349
  %v6579 = vmul.f32 1.0, %v6578
  %v6580 = vrcp.pop %v6350
  %v6581 = vmul.f32 1.0, %v6580
  %v6582 = vrcp.pop %v6351
  %v6583 = vmul.f32 1.0, %v6582
  %v6584 = vrcp.pop %v6352
  %v6585 = vmul.f32 1.0, %v6584
  %v6586 = vrcp.pop %v6353
  %v6587 = vmul.f32 1.0, %v6586
  %v6588 = vrcp.pop %v6354
  %v6589 = vmul.f32 1.0, %v6588
  %v6590 = vrcp.pop %v6355
  %v6591 = vmul.f32 1.0, %v6590
  %v6592 = vrcp.pop %v6356
  %v6593 = vmul.f32 1.0, %v6592
  %v6594 = vrcp.pop %v6357
  %v6595 = vmul.f32 1.0, %v6594
  %v6596 = vrcp.pop %v6358
  %v6597 = vmul.f32 1.0, %v6596
  %v6598 = vrcp.pop %v6359
  %v6599 = vmul.f32 1.0, %v6598
  %v6600 = vrcp.pop %v6360
  %v6601 = vmul.f32 1.0, %v6600
  %v6602 = vrcp.pop %v6361
  %v6603 = vmul.f32 1.0, %v6602
  %v6604 = vrcp.pop %v6362
  %v6605 = vmul.f32 1.0, %v6604
  %v6606 = vrcp.pop %v6363
  %v6607 = vmul.f32 1.0, %v6606
  %v6608 = vrcp.pop %v6364
  %v6609 = vmul.f32 1.0, %v6608
  %v6610 = vrcp.pop %v6365
  %v6611 = vmul.f32 1.0, %v6610
  %v6612 = vrcp.pop %v6366
  %v6613 = vmul.f32 1.0, %v6612
  %v6614 = vrcp.pop %v6367
  %v6615 = vmul.f32 1.0, %v6614
  %v6616 = vrcp.pop %v6368
  %v6617 = vmul.f32 1.0, %v6616
  %v6618 = vrcp.pop %v6369
  %v6619 = vmul.f32 1.0, %v6618
  %v6620 = vrcp.pop %v6370
  %v6621 = vmul.f32 1.0, %v6620
  %v6622 = vrcp.pop %v6371
  %v6623 = vmul.f32 1.0, %v6622
  %v6624 = vrcp.pop %v6372
  %v6625 = vmul.f32 1.0, %v6624
  %v6626 = vrcp.pop %v6373
  %v6627 = vmul.f32 1.0, %v6626
  %v6628 = vrcp.pop %v6374
  %v6629 = vmul.f32 1.0, %v6628
  %v6630 = vrcp.pop %v6375
  %v6631 = vmul.f32 1.0, %v6630
  %v6632 = vmul.f32 %v564, %v6377
  %v6633 = vmul.f32 %v569, %v6379
  %v6634 = vmul.f32 %v648, %v6381
  %v6635 = vmul.f32 %v653, %v6383
  %v6636 = vmul.f32 %v732, %v6385
  %v6637 = vmul.f32 %v737, %v6387
  %v6638 = vmul.f32 %v816, %v6389
  %v6639 = vmul.f32 %v821, %v6391
  %v6640 = vmul.f32 %v900, %v6393
  %v6641 = vmul.f32 %v905, %v6395
  %v6642 = vmul.f32 %v984, %v6397
  %v6643 = vmul.f32 %v989, %v6399
  %v6644 = vmul.f32 %v1068, %v6401
  %v6645 = vmul.f32 %v1073, %v6403
  %v6646 = vmul.f32 %v1152, %v6405
  %v6647 = vmul.f32 %v1157, %v6407
  %v6648 = vmul.f32 %v1236, %v6409
  %v6649 = vmul.f32 %v1241, %v6411
  %v6650 = vmul.f32 %v1320, %v6413
  %v6651 = vmul.f32 %v1325, %v6415
  %v6652 = vmul.f32 %v1404, %v6417
  %v6653 = vmul.f32 %v1409, %v6419
  %v6654 = vmul.f32 %v1488, %v6421
  %v6655 = vmul.f32 %v1493, %v6423
  %v6656 = vmul.f32 %v1572, %v6425
  %v6657 = vmul.f32 %v1577, %v6427
  %v6658 = vmul.f32 %v1656, %v6429
  %v6659 = vmul.f32 %v1661, %v6431
  %v6660 = vmul.f32 %v1740, %v6433
  %v6661 = vmul.f32 %v1745, %v6435
  %v6662 = vmul.f32 %v1824, %v6437
  %v6663 = vmul.f32 %v1829, %v6439
  %v6664 = vmul.f32 %v1908, %v6441
  %v6665 = vmul.f32 %v1913, %v6443
  %v6666 = vmul.f32 %v1992, %v6445
  %v6667 = vmul.f32 %v1997, %v6447
  %v6668 = vmul.f32 %v2076, %v6449
  %v6669 = vmul.f32 %v2081, %v6451
  %v6670 = vmul.f32 %v2160, %v6453
  %v6671 = vmul.f32 %v2165, %v6455
  %v6672 = vmul.f32 %v2244, %v6457
  %v6673 = vmul.f32 %v2249, %v6459
  %v6674 = vmul.f32 %v2328, %v6461
  %v6675 = vmul.f32 %v2333, %v6463
  %v6676 = vmul.f32 %v2412, %v6465
  %v6677 = vmul.f32 %v2417, %v6467
  %v6678 = vmul.f32 %v2496, %v6469
  %v6679 = vmul.f32 %v2501, %v6471
  %v6680 = vmul.f32 %v2580, %v6473
  %v6681 = vmul.f32 %v2585, %v6475
  %v6682 = vmul.f32 %v2664, %v6477
  %v6683 = vmul.f32 %v2669, %v6479
  %v6684 = vmul.f32 %v2748, %v6481
  %v6685 = vmul.f32 %v2753, %v6483
  %v6686 = vmul.f32 %v2832, %v6485
  %v6687 = vmul.f32 %v2837, %v6487
  %v6688 = vmul.f32 %v2916, %v6489
  %v6689 = vmul.f32 %v2921, %v6491
  %v6690 = vmul.f32 %v3000, %v6493
  %v6691 = vmul.f32 %v3005, %v6495
  %v6692 = vmul.f32 %v3084, %v6497
  %v6693 = vmul.f32 %v3089, %v6499
  %v6694 = vmul.f32 %v3168, %v6501
  %v6695 = vmul.f32 %v3173, %v6503
  %v6696 = vmul.f32 %v3252, %v6505
  %v6697 = vmul.f32 %v3257, %v6507
  %v6698 = vmul.f32 %v3336, %v6509
  %v6699 = vmul.f32 %v3341, %v6511
  %v6700 = vmul.f32 %v3420, %v6513
  %v6701 = vmul.f32 %v3425, %v6515
  %v6702 = vmul.f32 %v3504, %v6517
  %v6703 = vmul.f32 %v3509, %v6519
  %v6704 = vmul.f32 %v3588, %v6521
  %v6705 = vmul.f32 %v3593, %v6523
  %v6706 = vmul.f32 %v3672, %v6525
  %v6707 = vmul.f32 %v3677, %v6527
  %v6708 = vmul.f32 %v3756, %v6529
  %v6709 = vmul.f32 %v3761, %v6531
  %v6710 = vmul.f32 %v3840, %v6533
  %v6711 = vmul.f32 %v3845, %v6535
  %v6712 = vmul.f32 %v3924, %v6537
  %v6713 = vmul.f32 %v3929, %v6539
  %v6714 = vmul.f32 %v4008, %v6541
  %v6715 = vmul.f32 %v4013, %v6543
  %v6716 = vmul.f32 %v4092, %v6545
  %v6717 = vmul.f32 %v4097, %v6547
  %v6718 = vmul.f32 %v4176, %v6549
  %v6719 = vmul.f32 %v4181, %v6551
  %v6720 = vmul.f32 %v4260, %v6553
  %v6721 = vmul.f32 %v4265, %v6555
  %v6722 = vmul.f32 %v4344, %v6557
  %v6723 = vmul.f32 %v4349, %v6559
  %v6724 = vmul.f32 %v4428, %v6561
  %v6725 = vmul.f32 %v4433, %v6563
  %v6726 = vmul.f32 %v4512, %v6565
  %v6727 = vmul.f32 %v4517, %v6567
  %v6728 = vmul.f32 %v4596, %v6569
  %v6729 = vmul.f32 %v4601, %v6571
  %v6730 = vmul.f32 %v4680, %v6573
  %v6731 = vmul.f32 %v4685, %v6575
  %v6732 = vmul.f32 %v4764, %v6577
  %v6733 = vmul.f32 %v4769, %v6579
  %v6734 = vmul.f32 %v4848, %v6581
  %v6735 = vmul.f32 %v4853, %v6583
  %v6736 = vmul.f32 %v4932, %v6585
  %v6737 = vmul.f32 %v4937, %v6587
  %v6738 = vmul.f32 %v5016, %v6589
  %v6739 = vmul.f32 %v5021, %v6591
  %v6740 = vmul.f32 %v5100, %v6593
  %v6741 = vmul.f32 %v5105, %v6595
  %v6742 = vmul.f32 %v5184, %v6597
  %v6743 = vmul.f32 %v5189, %v6599
  %v6744 = vmul.f32 %v5268, %v6601
  %v6745 = vmul.f32 %v5273, %v6603
  %v6746 = vmul.f32 %v5352, %v6605
  %v6747 = vmul.f32 %v5357, %v6607
  %v6748 = vmul.f32 %v5436, %v6609
  %v6749 = vmul.f32 %v5441, %v6611
  %v6750 = vmul.f32 %v5520, %v6613
  %v6751 = vmul.f32 %v5525, %v6615
  %v6752 = vmul.f32 %v5604, %v6617
  %v6753 = vmul.f32 %v5609, %v6619
  %v6754 = vmul.f32 %v5688, %v6621
  %v6755 = vmul.f32 %v5693, %v6623
  %v6756 = vmul.f32 %v5772, %v6625
  %v6757 = vmul.f32 %v5777, %v6627
  %v6758 = vmul.f32 %v5856, %v6629
  %v6759 = vmul.f32 %v5861, %v6631
  %v6760 = vld [vmem:[%s3] sm:$0xff]
  %v6761 = vld [vmem:[%s3 + $0x8] sm:$0xff]
  %v6762 = vld [vmem:[%s3 + $0x10] sm:$0xff]
  %v6763 = vld [vmem:[%s3 + $0x18] sm:$0xff]
  %v6764 = vld [vmem:[%s3 + $0x20] sm:$0xff]
  %v6765 = vld [vmem:[%s3 + $0x28] sm:$0xff]
  %v6766 = vld [vmem:[%s3 + $0x30] sm:$0xff]
  %v6767 = vld [vmem:[%s3 + $0x38] sm:$0xff]
  %v6768 = vld [vmem:[%s3 + $0x40] sm:$0xff]
  %v6769 = vld [vmem:[%s3 + $0x48] sm:$0xff]
  %v6770 = vld [vmem:[%s3 + $0x50] sm:$0xff]
  %v6771 = vld [vmem:[%s3 + $0x58] sm:$0xff]
  %v6772 = vld [vmem:[%s3 + $0x60] sm:$0xff]
  %v6773 = vld [vmem:[%s3 + $0x68] sm:$0xff]
  %v6774 = vld [vmem:[%s3 + $0x70] sm:$0xff]
  %v6775 = vld [vmem:[%s3 + $0x78] sm:$0xff]
  %v6776 = vld [vmem:[%s3 + $0x80] sm:$0xff]
  %v6777 = vld [vmem:[%s3 + $0x88] sm:$0xff]
  %v6778 = vld [vmem:[%s3 + $0x90] sm:$0xff]
  %v6779 = vld [vmem:[%s3 + $0x98] sm:$0xff]
  %v6780 = vld [vmem:[%s3 + $0xa0] sm:$0xff]
  %v6781 = vld [vmem:[%s3 + $0xa8] sm:$0xff]
  %v6782 = vld [vmem:[%s3 + $0xb0] sm:$0xff]
  %v6783 = vld [vmem:[%s3 + $0xb8] sm:$0xff]
  %v6784 = vld [vmem:[%s3 + $0xc0] sm:$0xff]
  %v6785 = vld [vmem:[%s3 + $0xc8] sm:$0xff]
  %v6786 = vld [vmem:[%s3 + $0xd0] sm:$0xff]
  %v6787 = vld [vmem:[%s3 + $0xd8] sm:$0xff]
  %v6788 = vld [vmem:[%s3 + $0xe0] sm:$0xff]
  %v6789 = vld [vmem:[%s3 + $0xe8] sm:$0xff]
  %v6790 = vld [vmem:[%s3 + $0xf0] sm:$0xff]
  %v6791 = vld [vmem:[%s3 + $0xf8] sm:$0xff]
  %v6792 = vld [vmem:[%s3 + $0x100] sm:$0xff]
  %v6793 = vld [vmem:[%s3 + $0x108] sm:$0xff]
  %v6794 = vld [vmem:[%s3 + $0x110] sm:$0xff]
  %v6795 = vld [vmem:[%s3 + $0x118] sm:$0xff]
  %v6796 = vld [vmem:[%s3 + $0x120] sm:$0xff]
  %v6797 = vld [vmem:[%s3 + $0x128] sm:$0xff]
  %v6798 = vld [vmem:[%s3 + $0x130] sm:$0xff]
  %v6799 = vld [vmem:[%s3 + $0x138] sm:$0xff]
  %v6800 = vld [vmem:[%s3 + $0x140] sm:$0xff]
  %v6801 = vld [vmem:[%s3 + $0x148] sm:$0xff]
  %v6802 = vld [vmem:[%s3 + $0x150] sm:$0xff]
  %v6803 = vld [vmem:[%s3 + $0x158] sm:$0xff]
  %v6804 = vld [vmem:[%s3 + $0x160] sm:$0xff]
  %v6805 = vld [vmem:[%s3 + $0x168] sm:$0xff]
  %v6806 = vld [vmem:[%s3 + $0x170] sm:$0xff]
  %v6807 = vld [vmem:[%s3 + $0x178] sm:$0xff]
  %v6808 = vld [vmem:[%s3 + $0x180] sm:$0xff]
  %v6809 = vld [vmem:[%s3 + $0x188] sm:$0xff]
  %v6810 = vld [vmem:[%s3 + $0x190] sm:$0xff]
  %v6811 = vld [vmem:[%s3 + $0x198] sm:$0xff]
  %v6812 = vld [vmem:[%s3 + $0x1a0] sm:$0xff]
  %v6813 = vld [vmem:[%s3 + $0x1a8] sm:$0xff]
  %v6814 = vld [vmem:[%s3 + $0x1b0] sm:$0xff]
  %v6815 = vld [vmem:[%s3 + $0x1b8] sm:$0xff]
  %v6816 = vld [vmem:[%s3 + $0x1c0] sm:$0xff]
  %v6817 = vld [vmem:[%s3 + $0x1c8] sm:$0xff]
  %v6818 = vld [vmem:[%s3 + $0x1d0] sm:$0xff]
  %v6819 = vld [vmem:[%s3 + $0x1d8] sm:$0xff]
  %v6820 = vld [vmem:[%s3 + $0x1e0] sm:$0xff]
  %v6821 = vld [vmem:[%s3 + $0x1e8] sm:$0xff]
  %v6822 = vld [vmem:[%s3 + $0x1f0] sm:$0xff]
  %v6823 = vld [vmem:[%s3 + $0x1f8] sm:$0xff]
  %v6824 = vld [vmem:[%s3 + $0x200] sm:$0xff]
  %v6825 = vld [vmem:[%s3 + $0x208] sm:$0xff]
  %v6826 = vld [vmem:[%s3 + $0x210] sm:$0xff]
  %v6827 = vld [vmem:[%s3 + $0x218] sm:$0xff]
  %v6828 = vld [vmem:[%s3 + $0x220] sm:$0xff]
  %v6829 = vld [vmem:[%s3 + $0x228] sm:$0xff]
  %v6830 = vld [vmem:[%s3 + $0x230] sm:$0xff]
  %v6831 = vld [vmem:[%s3 + $0x238] sm:$0xff]
  %v6832 = vld [vmem:[%s3 + $0x240] sm:$0xff]
  %v6833 = vld [vmem:[%s3 + $0x248] sm:$0xff]
  %v6834 = vld [vmem:[%s3 + $0x250] sm:$0xff]
  %v6835 = vld [vmem:[%s3 + $0x258] sm:$0xff]
  %v6836 = vld [vmem:[%s3 + $0x260] sm:$0xff]
  %v6837 = vld [vmem:[%s3 + $0x268] sm:$0xff]
  %v6838 = vld [vmem:[%s3 + $0x270] sm:$0xff]
  %v6839 = vld [vmem:[%s3 + $0x278] sm:$0xff]
  %v6840 = vld [vmem:[%s3 + $0x280] sm:$0xff]
  %v6841 = vld [vmem:[%s3 + $0x288] sm:$0xff]
  %v6842 = vld [vmem:[%s3 + $0x290] sm:$0xff]
  %v6843 = vld [vmem:[%s3 + $0x298] sm:$0xff]
  %v6844 = vld [vmem:[%s3 + $0x2a0] sm:$0xff]
  %v6845 = vld [vmem:[%s3 + $0x2a8] sm:$0xff]
  %v6846 = vld [vmem:[%s3 + $0x2b0] sm:$0xff]
  %v6847 = vld [vmem:[%s3 + $0x2b8] sm:$0xff]
  %v6848 = vld [vmem:[%s3 + $0x2c0] sm:$0xff]
  %v6849 = vld [vmem:[%s3 + $0x2c8] sm:$0xff]
  %v6850 = vld [vmem:[%s3 + $0x2d0] sm:$0xff]
  %v6851 = vld [vmem:[%s3 + $0x2d8] sm:$0xff]
  %v6852 = vld [vmem:[%s3 + $0x2e0] sm:$0xff]
  %v6853 = vld [vmem:[%s3 + $0x2e8] sm:$0xff]
  %v6854 = vld [vmem:[%s3 + $0x2f0] sm:$0xff]
  %v6855 = vld [vmem:[%s3 + $0x2f8] sm:$0xff]
  %v6856 = vld [vmem:[%s3 + $0x300] sm:$0xff]
  %v6857 = vld [vmem:[%s3 + $0x308] sm:$0xff]
  %v6858 = vld [vmem:[%s3 + $0x310] sm:$0xff]
  %v6859 = vld [vmem:[%s3 + $0x318] sm:$0xff]
  %v6860 = vld [vmem:[%s3 + $0x320] sm:$0xff]
  %v6861 = vld [vmem:[%s3 + $0x328] sm:$0xff]
  %v6862 = vld [vmem:[%s3 + $0x330] sm:$0xff]
  %v6863 = vld [vmem:[%s3 + $0x338] sm:$0xff]
  %v6864 = vld [vmem:[%s3 + $0x340] sm:$0xff]
  %v6865 = vld [vmem:[%s3 + $0x348] sm:$0xff]
  %v6866 = vld [vmem:[%s3 + $0x350] sm:$0xff]
  %v6867 = vld [vmem:[%s3 + $0x358] sm:$0xff]
  %v6868 = vld [vmem:[%s3 + $0x360] sm:$0xff]
  %v6869 = vld [vmem:[%s3 + $0x368] sm:$0xff]
  %v6870 = vld [vmem:[%s3 + $0x370] sm:$0xff]
  %v6871 = vld [vmem:[%s3 + $0x378] sm:$0xff]
  %v6872 = vld [vmem:[%s3 + $0x380] sm:$0xff]
  %v6873 = vld [vmem:[%s3 + $0x388] sm:$0xff]
  %v6874 = vld [vmem:[%s3 + $0x390] sm:$0xff]
  %v6875 = vld [vmem:[%s3 + $0x398] sm:$0xff]
  %v6876 = vld [vmem:[%s3 + $0x3a0] sm:$0xff]
  %v6877 = vld [vmem:[%s3 + $0x3a8] sm:$0xff]
  %v6878 = vld [vmem:[%s3 + $0x3b0] sm:$0xff]
  %v6879 = vld [vmem:[%s3 + $0x3b8] sm:$0xff]
  %v6880 = vld [vmem:[%s3 + $0x3c0] sm:$0xff]
  %v6881 = vld [vmem:[%s3 + $0x3c8] sm:$0xff]
  %v6882 = vld [vmem:[%s3 + $0x3d0] sm:$0xff]
  %v6883 = vld [vmem:[%s3 + $0x3d8] sm:$0xff]
  %v6884 = vld [vmem:[%s3 + $0x3e0] sm:$0xff]
  %v6885 = vld [vmem:[%s3 + $0x3e8] sm:$0xff]
  %v6886 = vld [vmem:[%s3 + $0x3f0] sm:$0xff]
  %v6887 = vld [vmem:[%s3 + $0x3f8] sm:$0xff]
  %v6888 = vld [vmem:[%s4] sm:$0xff]
  %v6889 = vld [vmem:[%s4 + $0x8] sm:$0xff]
  %v6890 = vld [vmem:[%s4 + $0x10] sm:$0xff]
  %v6891 = vld [vmem:[%s4 + $0x18] sm:$0xff]
  %v6892 = vld [vmem:[%s4 + $0x20] sm:$0xff]
  %v6893 = vld [vmem:[%s4 + $0x28] sm:$0xff]
  %v6894 = vld [vmem:[%s4 + $0x30] sm:$0xff]
  %v6895 = vld [vmem:[%s4 + $0x38] sm:$0xff]
  %v6896 = vld [vmem:[%s4 + $0x40] sm:$0xff]
  %v6897 = vld [vmem:[%s4 + $0x48] sm:$0xff]
  %v6898 = vld [vmem:[%s4 + $0x50] sm:$0xff]
  %v6899 = vld [vmem:[%s4 + $0x58] sm:$0xff]
  %v6900 = vld [vmem:[%s4 + $0x60] sm:$0xff]
  %v6901 = vld [vmem:[%s4 + $0x68] sm:$0xff]
  %v6902 = vld [vmem:[%s4 + $0x70] sm:$0xff]
  %v6903 = vld [vmem:[%s4 + $0x78] sm:$0xff]
  %6905 = vset.pattern.permute.xlu0 0
  %6906 = vperm.xlu0 %6905, %v6888
  %v6907 = vpop.permute.xlu0 %6906
  %6910 = vset.pattern.permute.xlu0 0
  %6911 = vperm.xlu0 %6910, %v6889
  %v6912 = vpop.permute.xlu0 %6911
  %6915 = vset.pattern.permute.xlu0 0
  %6916 = vperm.xlu0 %6915, %v6890
  %v6917 = vpop.permute.xlu0 %6916
  %6920 = vset.pattern.permute.xlu0 0
  %6921 = vperm.xlu0 %6920, %v6891
  %v6922 = vpop.permute.xlu0 %6921
  %6925 = vset.pattern.permute.xlu0 0
  %6926 = vperm.xlu0 %6925, %v6892
  %v6927 = vpop.permute.xlu0 %6926
  %6930 = vset.pattern.permute.xlu0 0
  %6931 = vperm.xlu0 %6930, %v6893
  %v6932 = vpop.permute.xlu0 %6931
  %6935 = vset.pattern.permute.xlu0 0
  %6936 = vperm.xlu0 %6935, %v6894
  %v6937 = vpop.permute.xlu0 %6936
  %6940 = vset.pattern.permute.xlu0 0
  %6941 = vperm.xlu0 %6940, %v6895
  %v6942 = vpop.permute.xlu0 %6941
  %6945 = vset.pattern.permute.xlu0 0
  %6946 = vperm.xlu0 %6945, %v6896
  %v6947 = vpop.permute.xlu0 %6946
  %6950 = vset.pattern.permute.xlu0 0
  %6951 = vperm.xlu0 %6950, %v6897
  %v6952 = vpop.permute.xlu0 %6951
  %6955 = vset.pattern.permute.xlu0 0
  %6956 = vperm.xlu0 %6955, %v6898
  %v6957 = vpop.permute.xlu0 %6956
  %6960 = vset.pattern.permute.xlu0 0
  %6961 = vperm.xlu0 %6960, %v6899
  %v6962 = vpop.permute.xlu0 %6961
  %6965 = vset.pattern.permute.xlu0 0
  %6966 = vperm.xlu0 %6965, %v6900
  %v6967 = vpop.permute.xlu0 %6966
  %6970 = vset.pattern.permute.xlu0 0
  %6971 = vperm.xlu0 %6970, %v6901
  %v6972 = vpop.permute.xlu0 %6971
  %6975 = vset.pattern.permute.xlu0 0
  %6976 = vperm.xlu0 %6975, %v6902
  %v6977 = vpop.permute.xlu0 %6976
  %6980 = vset.pattern.permute.xlu0 0
  %6981 = vperm.xlu0 %6980, %v6903
  %v6982 = vpop.permute.xlu0 %6981
  %6984 = vmatprep.subr.mxu0 0.0
  %6985 = vmatpush1.msra.mxu0 %v6632
  %6986 = vmatprep.subr.mxu0 0.0
  %6987 = vmatpush1.msra.mxu0 %v6633
  %6988 = vmatprep.subr.mxu0 0.0
  %6989 = vmatpush1.msra.mxu0 %v6634
  %6990 = vmatprep.subr.mxu0 0.0
  %6991 = vmatpush1.msra.mxu0 %v6635
  %6992 = vmatprep.subr.mxu0 0.0
  %6993 = vmatpush1.msra.mxu0 %v6636
  %6994 = vmatprep.subr.mxu0 0.0
  %6995 = vmatpush1.msra.mxu0 %v6637
  %6996 = vmatprep.subr.mxu0 0.0
  %6997 = vmatpush1.msra.mxu0 %v6638
  %6998 = vmatprep.subr.mxu0 0.0
  %6999 = vmatpush1.msra.mxu0 %v6639
  %7000 = vmatprep.subr.mxu0 0.0
  %7001 = vmatpush1.msra.mxu0 %v6640
  %7002 = vmatprep.subr.mxu0 0.0
  %7003 = vmatpush1.msra.mxu0 %v6641
  %7004 = vmatprep.subr.mxu0 0.0
  %7005 = vmatpush1.msra.mxu0 %v6642
  %7006 = vmatprep.subr.mxu0 0.0
  %7007 = vmatpush1.msra.mxu0 %v6643
  %7008 = vmatprep.subr.mxu0 0.0
  %7009 = vmatpush1.msra.mxu0 %v6644
  %7010 = vmatprep.subr.mxu0 0.0
  %7011 = vmatpush1.msra.mxu0 %v6645
  %7012 = vmatprep.subr.mxu0 0.0
  %7013 = vmatpush1.msra.mxu0 %v6646
  %7014 = vmatprep.subr.mxu0 0.0
  %7015 = vmatpush1.msra.mxu0 %v6647
  %7016 = vmatprep.subr.mxu0 0.0
  %7017 = vmatpush1.msra.mxu0 %v6648
  %7018 = vmatprep.subr.mxu0 0.0
  %7019 = vmatpush1.msra.mxu0 %v6649
  %7020 = vmatprep.subr.mxu0 0.0
  %7021 = vmatpush1.msra.mxu0 %v6650
  %7022 = vmatprep.subr.mxu0 0.0
  %7023 = vmatpush1.msra.mxu0 %v6651
  %7024 = vmatprep.subr.mxu0 0.0
  %7025 = vmatpush1.msra.mxu0 %v6652
  %7026 = vmatprep.subr.mxu0 0.0
  %7027 = vmatpush1.msra.mxu0 %v6653
  %7028 = vmatprep.subr.mxu0 0.0
  %7029 = vmatpush1.msra.mxu0 %v6654
  %7030 = vmatprep.subr.mxu0 0.0
  %7031 = vmatpush1.msra.mxu0 %v6655
  %7032 = vmatprep.subr.mxu0 0.0
  %7033 = vmatpush1.msra.mxu0 %v6656
  %7034 = vmatprep.subr.mxu0 0.0
  %7035 = vmatpush1.msra.mxu0 %v6657
  %7036 = vmatprep.subr.mxu0 0.0
  %7037 = vmatpush1.msra.mxu0 %v6658
  %7038 = vmatprep.subr.mxu0 0.0
  %7039 = vmatpush1.msra.mxu0 %v6659
  %7040 = vmatprep.subr.mxu0 0.0
  %7041 = vmatpush1.msra.mxu0 %v6660
  %7042 = vmatprep.subr.mxu0 0.0
  %7043 = vmatpush1.msra.mxu0 %v6661
  %7044 = vmatprep.subr.mxu0 0.0
  %7045 = vmatpush1.msra.mxu0 %v6662
  %7046 = vmatprep.subr.mxu0 0.0
  %7047 = vmatpush1.msra.mxu0 %v6663
  %7048 = vmatprep.mubr.f32.mxu0 %v6761
  %7049 = vmatmul.mubr.f32.gmra.mrb[0].mxu0 %v6760
  %v7050 = vpop.f32.mrb[0].mxu0
  %v7051 = vadd.f32 %v6907, %v7050
  %v7052 = vpop.f32.mrb[0].mxu0
  %7053 = vmatprep.mubr.f32.mxu0 %v6769
  %7054 = vmatmul.mubr.f32.gmra.mrb[0].mxu0 %v6768
  %v7055 = vpop.f32.mrb[0].mxu0
  %v7056 = vadd.f32 %v6912, %v7055
  %v7057 = vpop.f32.mrb[0].mxu0
  %7058 = vmatprep.mubr.f32.mxu0 %v6777
  %7059 = vmatmul.mubr.f32.gmra.mrb[0].mxu0 %v6776
  %v7060 = vpop.f32.mrb[0].mxu0
  %v7061 = vadd.f32 %v6917, %v7060
  %v7062 = vpop.f32.mrb[0].mxu0
  %7063 = vmatprep.mubr.f32.mxu0 %v6785
  %7064 = vmatmul.mubr.f32.gmra.mrb[0].mxu0 %v6784
  %v7065 = vpop.f32.mrb[0].mxu0
  %v7066 = vadd.f32 %v6922, %v7065
  %v7067 = vpop.f32.mrb[0].mxu0
  %7068 = vmatprep.mubr.f32.mxu0 %v6793
  %7069 = vmatmul.mubr.f32.gmra.mrb[0].mxu0 %v6792
  %v7070 = vpop.f32.mrb[0].mxu0
  %v7071 = vadd.f32 %v6927, %v7070
  %v7072 = vpop.f32.mrb[0].mxu0
  %7073 = vmatprep.mubr.f32.mxu0 %v6801
  %7074 = vmatmul.mubr.f32.gmra.mrb[0].mxu0 %v6800
  %v7075 = vpop.f32.mrb[0].mxu0
  %v7076 = vadd.f32 %v6932, %v7075
  %v7077 = vpop.f32.mrb[0].mxu0
  %7078 = vmatprep.mubr.f32.mxu0 %v6809
  %7079 = vmatmul.mubr.f32.gmra.mrb[0].mxu0 %v6808
  %v7080 = vpop.f32.mrb[0].mxu0
  %v7081 = vadd.f32 %v6937, %v7080
  %v7082 = vpop.f32.mrb[0].mxu0
  %7083 = vmatprep.mubr.f32.mxu0 %v6817
  %7084 = vmatmul.mubr.f32.gmra.mrb[0].mxu0 %v6816
  %v7085 = vpop.f32.mrb[0].mxu0
  %v7086 = vadd.f32 %v6942, %v7085
  %v7087 = vpop.f32.mrb[0].mxu0
  %7088 = vmatprep.mubr.f32.mxu0 %v6825
  %7089 = vmatmul.mubr.f32.gmra.mrb[0].mxu0 %v6824
  %v7090 = vpop.f32.mrb[0].mxu0
  %v7091 = vadd.f32 %v6947, %v7090
  %v7092 = vpop.f32.mrb[0].mxu0
  %7093 = vmatprep.mubr.f32.mxu0 %v6833
  %7094 = vmatmul.mubr.f32.gmra.mrb[0].mxu0 %v6832
  %v7095 = vpop.f32.mrb[0].mxu0
  %v7096 = vadd.f32 %v6952, %v7095
  %v7097 = vpop.f32.mrb[0].mxu0
  %7098 = vmatprep.mubr.f32.mxu0 %v6841
  %7099 = vmatmul.mubr.f32.gmra.mrb[0].mxu0 %v6840
  %v7100 = vpop.f32.mrb[0].mxu0
  %v7101 = vadd.f32 %v6957, %v7100
  %v7102 = vpop.f32.mrb[0].mxu0
  %7103 = vmatprep.mubr.f32.mxu0 %v6849
  %7104 = vmatmul.mubr.f32.gmra.mrb[0].mxu0 %v6848
  %v7105 = vpop.f32.mrb[0].mxu0
  %v7106 = vadd.f32 %v6962, %v7105
  %v7107 = vpop.f32.mrb[0].mxu0
  %7108 = vmatprep.mubr.f32.mxu0 %v6857
  %7109 = vmatmul.mubr.f32.gmra.mrb[0].mxu0 %v6856
  %v7110 = vpop.f32.mrb[0].mxu0
  %v7111 = vadd.f32 %v6967, %v7110
  %v7112 = vpop.f32.mrb[0].mxu0
  %7113 = vmatprep.mubr.f32.mxu0 %v6865
  %7114 = vmatmul.mubr.f32.gmra.mrb[0].mxu0 %v6864
  %v7115 = vpop.f32.mrb[0].mxu0
  %v7116 = vadd.f32 %v6972, %v7115
  %v7117 = vpop.f32.mrb[0].mxu0
  %7118 = vmatprep.mubr.f32.mxu0 %v6873
  %7119 = vmatmul.mubr.f32.gmra.mrb[0].mxu0 %v6872
  %v7120 = vpop.f32.mrb[0].mxu0
  %v7121 = vadd.f32 %v6977, %v7120
  %v7122 = vpop.f32.mrb[0].mxu0
  %7123 = vmatprep.mubr.f32.mxu0 %v6881
  %7124 = vmatmul.mubr.f32.gmra.mrb[0].mxu0 %v6880
  %v7125 = vpop.f32.mrb[0].mxu0
  %v7126 = vadd.f32 %v6982, %v7125
  %v7127 = vpop.f32.mrb[0].mxu0
  %7128 = vdwg.mxu0
  %7129 = vmatprep.subr.mxu0 0.0
  %7130 = vmatpush1.msra.mxu0 %v6664
  %7131 = vmatprep.subr.mxu0 0.0
  %7132 = vmatpush1.msra.mxu0 %v6665
  %7133 = vmatprep.subr.mxu0 0.0
  %7134 = vmatpush1.msra.mxu0 %v6666
  %7135 = vmatprep.subr.mxu0 0.0
  %7136 = vmatpush1.msra.mxu0 %v6667
  %7137 = vmatprep.subr.mxu0 0.0
  %7138 = vmatpush1.msra.mxu0 %v6668
  %7139 = vmatprep.subr.mxu0 0.0
  %7140 = vmatpush1.msra.mxu0 %v6669
  %7141 = vmatprep.subr.mxu0 0.0
  %7142 = vmatpush1.msra.mxu0 %v6670
  %7143 = vmatprep.subr.mxu0 0.0
  %7144 = vmatpush1.msra.mxu0 %v6671
  %7145 = vmatprep.subr.mxu0 0.0
  %7146 = vmatpush1.msra.mxu0 %v6672
  %7147 = vmatprep.subr.mxu0 0.0
  %7148 = vmatpush1.msra.mxu0 %v6673
  %7149 = vmatprep.subr.mxu0 0.0
  %7150 = vmatpush1.msra.mxu0 %v6674
  %7151 = vmatprep.subr.mxu0 0.0
  %7152 = vmatpush1.msra.mxu0 %v6675
  %7153 = vmatprep.subr.mxu0 0.0
  %7154 = vmatpush1.msra.mxu0 %v6676
  %7155 = vmatprep.subr.mxu0 0.0
  %7156 = vmatpush1.msra.mxu0 %v6677
  %7157 = vmatprep.subr.mxu0 0.0
  %7158 = vmatpush1.msra.mxu0 %v6678
  %7159 = vmatprep.subr.mxu0 0.0
  %7160 = vmatpush1.msra.mxu0 %v6679
  %7161 = vmatprep.subr.mxu0 0.0
  %7162 = vmatpush1.msra.mxu0 %v6680
  %7163 = vmatprep.subr.mxu0 0.0
  %7164 = vmatpush1.msra.mxu0 %v6681
  %7165 = vmatprep.subr.mxu0 0.0
  %7166 = vmatpush1.msra.mxu0 %v6682
  %7167 = vmatprep.subr.mxu0 0.0
  %7168 = vmatpush1.msra.mxu0 %v6683
  %7169 = vmatprep.subr.mxu0 0.0
  %7170 = vmatpush1.msra.mxu0 %v6684
  %7171 = vmatprep.subr.mxu0 0.0
  %7172 = vmatpush1.msra.mxu0 %v6685
  %7173 = vmatprep.subr.mxu0 0.0
  %7174 = vmatpush1.msra.mxu0 %v6686
  %7175 = vmatprep.subr.mxu0 0.0
  %7176 = vmatpush1.msra.mxu0 %v6687
  %7177 = vmatprep.subr.mxu0 0.0
  %7178 = vmatpush1.msra.mxu0 %v6688
  %7179 = vmatprep.subr.mxu0 0.0
  %7180 = vmatpush1.msra.mxu0 %v6689
  %7181 = vmatprep.subr.mxu0 0.0
  %7182 = vmatpush1.msra.mxu0 %v6690
  %7183 = vmatprep.subr.mxu0 0.0
  %7184 = vmatpush1.msra.mxu0 %v6691
  %7185 = vmatprep.subr.mxu0 0.0
  %7186 = vmatpush1.msra.mxu0 %v6692
  %7187 = vmatprep.subr.mxu0 0.0
  %7188 = vmatpush1.msra.mxu0 %v6693
  %7189 = vmatprep.subr.mxu0 0.0
  %7190 = vmatpush1.msra.mxu0 %v6694
  %7191 = vmatprep.subr.mxu0 0.0
  %7192 = vmatpush1.msra.mxu0 %v6695
  %7193 = vmatprep.mubr.f32.mxu0 %v6763
  %7194 = vmatmul.mubr.f32.gmra.mrb[0].mxu0 %v6762
  %v7195 = vpop.f32.mrb[0].mxu0
  %v7196 = vadd.f32 %v7051, %v7195
  %v7197 = vpop.f32.mrb[0].mxu0
  %7198 = vmatprep.mubr.f32.mxu0 %v6771
  %7199 = vmatmul.mubr.f32.gmra.mrb[0].mxu0 %v6770
  %v7200 = vpop.f32.mrb[0].mxu0
  %v7201 = vadd.f32 %v7056, %v7200
  %v7202 = vpop.f32.mrb[0].mxu0
  %7203 = vmatprep.mubr.f32.mxu0 %v6779
  %7204 = vmatmul.mubr.f32.gmra.mrb[0].mxu0 %v6778
  %v7205 = vpop.f32.mrb[0].mxu0
  %v7206 = vadd.f32 %v7061, %v7205
  %v7207 = vpop.f32.mrb[0].mxu0
  %7208 = vmatprep.mubr.f32.mxu0 %v6787
  %7209 = vmatmul.mubr.f32.gmra.mrb[0].mxu0 %v6786
  %v7210 = vpop.f32.mrb[0].mxu0
  %v7211 = vadd.f32 %v7066, %v7210
  %v7212 = vpop.f32.mrb[0].mxu0
  %7213 = vmatprep.mubr.f32.mxu0 %v6795
  %7214 = vmatmul.mubr.f32.gmra.mrb[0].mxu0 %v6794
  %v7215 = vpop.f32.mrb[0].mxu0
  %v7216 = vadd.f32 %v7071, %v7215
  %v7217 = vpop.f32.mrb[0].mxu0
  %7218 = vmatprep.mubr.f32.mxu0 %v6803
  %7219 = vmatmul.mubr.f32.gmra.mrb[0].mxu0 %v6802
  %v7220 = vpop.f32.mrb[0].mxu0
  %v7221 = vadd.f32 %v7076, %v7220
  %v7222 = vpop.f32.mrb[0].mxu0
  %7223 = vmatprep.mubr.f32.mxu0 %v6811
  %7224 = vmatmul.mubr.f32.gmra.mrb[0].mxu0 %v6810
  %v7225 = vpop.f32.mrb[0].mxu0
  %v7226 = vadd.f32 %v7081, %v7225
  %v7227 = vpop.f32.mrb[0].mxu0
  %7228 = vmatprep.mubr.f32.mxu0 %v6819
  %7229 = vmatmul.mubr.f32.gmra.mrb[0].mxu0 %v6818
  %v7230 = vpop.f32.mrb[0].mxu0
  %v7231 = vadd.f32 %v7086, %v7230
  %v7232 = vpop.f32.mrb[0].mxu0
  %7233 = vmatprep.mubr.f32.mxu0 %v6827
  %7234 = vmatmul.mubr.f32.gmra.mrb[0].mxu0 %v6826
  %v7235 = vpop.f32.mrb[0].mxu0
  %v7236 = vadd.f32 %v7091, %v7235
  %v7237 = vpop.f32.mrb[0].mxu0
  %7238 = vmatprep.mubr.f32.mxu0 %v6835
  %7239 = vmatmul.mubr.f32.gmra.mrb[0].mxu0 %v6834
  %v7240 = vpop.f32.mrb[0].mxu0
  %v7241 = vadd.f32 %v7096, %v7240
  %v7242 = vpop.f32.mrb[0].mxu0
  %7243 = vmatprep.mubr.f32.mxu0 %v6843
  %7244 = vmatmul.mubr.f32.gmra.mrb[0].mxu0 %v6842
  %v7245 = vpop.f32.mrb[0].mxu0
  %v7246 = vadd.f32 %v7101, %v7245
  %v7247 = vpop.f32.mrb[0].mxu0
  %7248 = vmatprep.mubr.f32.mxu0 %v6851
  %7249 = vmatmul.mubr.f32.gmra.mrb[0].mxu0 %v6850
  %v7250 = vpop.f32.mrb[0].mxu0
  %v7251 = vadd.f32 %v7106, %v7250
  %v7252 = vpop.f32.mrb[0].mxu0
  %7253 = vmatprep.mubr.f32.mxu0 %v6859
  %7254 = vmatmul.mubr.f32.gmra.mrb[0].mxu0 %v6858
  %v7255 = vpop.f32.mrb[0].mxu0
  %v7256 = vadd.f32 %v7111, %v7255
  %v7257 = vpop.f32.mrb[0].mxu0
  %7258 = vmatprep.mubr.f32.mxu0 %v6867
  %7259 = vmatmul.mubr.f32.gmra.mrb[0].mxu0 %v6866
  %v7260 = vpop.f32.mrb[0].mxu0
  %v7261 = vadd.f32 %v7116, %v7260
  %v7262 = vpop.f32.mrb[0].mxu0
  %7263 = vmatprep.mubr.f32.mxu0 %v6875
  %7264 = vmatmul.mubr.f32.gmra.mrb[0].mxu0 %v6874
  %v7265 = vpop.f32.mrb[0].mxu0
  %v7266 = vadd.f32 %v7121, %v7265
  %v7267 = vpop.f32.mrb[0].mxu0
  %7268 = vmatprep.mubr.f32.mxu0 %v6883
  %7269 = vmatmul.mubr.f32.gmra.mrb[0].mxu0 %v6882
  %v7270 = vpop.f32.mrb[0].mxu0
  %v7271 = vadd.f32 %v7126, %v7270
  %v7272 = vpop.f32.mrb[0].mxu0
  %7273 = vdwg.mxu0
  %7274 = vmatprep.subr.mxu0 0.0
  %7275 = vmatpush1.msra.mxu0 %v6696
  %7276 = vmatprep.subr.mxu0 0.0
  %7277 = vmatpush1.msra.mxu0 %v6697
  %7278 = vmatprep.subr.mxu0 0.0
  %7279 = vmatpush1.msra.mxu0 %v6698
  %7280 = vmatprep.subr.mxu0 0.0
  %7281 = vmatpush1.msra.mxu0 %v6699
  %7282 = vmatprep.subr.mxu0 0.0
  %7283 = vmatpush1.msra.mxu0 %v6700
  %7284 = vmatprep.subr.mxu0 0.0
  %7285 = vmatpush1.msra.mxu0 %v6701
  %7286 = vmatprep.subr.mxu0 0.0
  %7287 = vmatpush1.msra.mxu0 %v6702
  %7288 = vmatprep.subr.mxu0 0.0
  %7289 = vmatpush1.msra.mxu0 %v6703
  %7290 = vmatprep.subr.mxu0 0.0
  %7291 = vmatpush1.msra.mxu0 %v6704
  %7292 = vmatprep.subr.mxu0 0.0
  %7293 = vmatpush1.msra.mxu0 %v6705
  %7294 = vmatprep.subr.mxu0 0.0
  %7295 = vmatpush1.msra.mxu0 %v6706
  %7296 = vmatprep.subr.mxu0 0.0
  %7297 = vmatpush1.msra.mxu0 %v6707
  %7298 = vmatprep.subr.mxu0 0.0
  %7299 = vmatpush1.msra.mxu0 %v6708
  %7300 = vmatprep.subr.mxu0 0.0
  %7301 = vmatpush1.msra.mxu0 %v6709
  %7302 = vmatprep.subr.mxu0 0.0
  %7303 = vmatpush1.msra.mxu0 %v6710
  %7304 = vmatprep.subr.mxu0 0.0
  %7305 = vmatpush1.msra.mxu0 %v6711
  %7306 = vmatprep.subr.mxu0 0.0
  %7307 = vmatpush1.msra.mxu0 %v6712
  %7308 = vmatprep.subr.mxu0 0.0
  %7309 = vmatpush1.msra.mxu0 %v6713
  %7310 = vmatprep.subr.mxu0 0.0
  %7311 = vmatpush1.msra.mxu0 %v6714
  %7312 = vmatprep.subr.mxu0 0.0
  %7313 = vmatpush1.msra.mxu0 %v6715
  %7314 = vmatprep.subr.mxu0 0.0
  %7315 = vmatpush1.msra.mxu0 %v6716
  %7316 = vmatprep.subr.mxu0 0.0
  %7317 = vmatpush1.msra.mxu0 %v6717
  %7318 = vmatprep.subr.mxu0 0.0
  %7319 = vmatpush1.msra.mxu0 %v6718
  %7320 = vmatprep.subr.mxu0 0.0
  %7321 = vmatpush1.msra.mxu0 %v6719
  %7322 = vmatprep.subr.mxu0 0.0
  %7323 = vmatpush1.msra.mxu0 %v6720
  %7324 = vmatprep.subr.mxu0 0.0
  %7325 = vmatpush1.msra.mxu0 %v6721
  %7326 = vmatprep.subr.mxu0 0.0
  %7327 = vmatpush1.msra.mxu0 %v6722
  %7328 = vmatprep.subr.mxu0 0.0
  %7329 = vmatpush1.msra.mxu0 %v6723
  %7330 = vmatprep.subr.mxu0 0.0
  %7331 = vmatpush1.msra.mxu0 %v6724
  %7332 = vmatprep.subr.mxu0 0.0
  %7333 = vmatpush1.msra.mxu0 %v6725
  %7334 = vmatprep.subr.mxu0 0.0
  %7335 = vmatpush1.msra.mxu0 %v6726
  %7336 = vmatprep.subr.mxu0 0.0
  %7337 = vmatpush1.msra.mxu0 %v6727
  %7338 = vmatprep.mubr.f32.mxu0 %v6765
  %7339 = vmatmul.mubr.f32.gmra.mrb[0].mxu0 %v6764
  %v7340 = vpop.f32.mrb[0].mxu0
  %v7341 = vadd.f32 %v7196, %v7340
  %v7342 = vpop.f32.mrb[0].mxu0
  %7343 = vmatprep.mubr.f32.mxu0 %v6773
  %7344 = vmatmul.mubr.f32.gmra.mrb[0].mxu0 %v6772
  %v7345 = vpop.f32.mrb[0].mxu0
  %v7346 = vadd.f32 %v7201, %v7345
  %v7347 = vpop.f32.mrb[0].mxu0
  %7348 = vmatprep.mubr.f32.mxu0 %v6781
  %7349 = vmatmul.mubr.f32.gmra.mrb[0].mxu0 %v6780
  %v7350 = vpop.f32.mrb[0].mxu0
  %v7351 = vadd.f32 %v7206, %v7350
  %v7352 = vpop.f32.mrb[0].mxu0
  %7353 = vmatprep.mubr.f32.mxu0 %v6789
  %7354 = vmatmul.mubr.f32.gmra.mrb[0].mxu0 %v6788
  %v7355 = vpop.f32.mrb[0].mxu0
  %v7356 = vadd.f32 %v7211, %v7355
  %v7357 = vpop.f32.mrb[0].mxu0
  %7358 = vmatprep.mubr.f32.mxu0 %v6797
  %7359 = vmatmul.mubr.f32.gmra.mrb[0].mxu0 %v6796
  %v7360 = vpop.f32.mrb[0].mxu0
  %v7361 = vadd.f32 %v7216, %v7360
  %v7362 = vpop.f32.mrb[0].mxu0
  %7363 = vmatprep.mubr.f32.mxu0 %v6805
  %7364 = vmatmul.mubr.f32.gmra.mrb[0].mxu0 %v6804
  %v7365 = vpop.f32.mrb[0].mxu0
  %v7366 = vadd.f32 %v7221, %v7365
  %v7367 = vpop.f32.mrb[0].mxu0
  %7368 = vmatprep.mubr.f32.mxu0 %v6813
  %7369 = vmatmul.mubr.f32.gmra.mrb[0].mxu0 %v6812
  %v7370 = vpop.f32.mrb[0].mxu0
  %v7371 = vadd.f32 %v7226, %v7370
  %v7372 = vpop.f32.mrb[0].mxu0
  %7373 = vmatprep.mubr.f32.mxu0 %v6821
  %7374 = vmatmul.mubr.f32.gmra.mrb[0].mxu0 %v6820
  %v7375 = vpop.f32.mrb[0].mxu0
  %v7376 = vadd.f32 %v7231, %v7375
  %v7377 = vpop.f32.mrb[0].mxu0
  %7378 = vmatprep.mubr.f32.mxu0 %v6829
  %7379 = vmatmul.mubr.f32.gmra.mrb[0].mxu0 %v6828
  %v7380 = vpop.f32.mrb[0].mxu0
  %v7381 = vadd.f32 %v7236, %v7380
  %v7382 = vpop.f32.mrb[0].mxu0
  %7383 = vmatprep.mubr.f32.mxu0 %v6837
  %7384 = vmatmul.mubr.f32.gmra.mrb[0].mxu0 %v6836
  %v7385 = vpop.f32.mrb[0].mxu0
  %v7386 = vadd.f32 %v7241, %v7385
  %v7387 = vpop.f32.mrb[0].mxu0
  %7388 = vmatprep.mubr.f32.mxu0 %v6845
  %7389 = vmatmul.mubr.f32.gmra.mrb[0].mxu0 %v6844
  %v7390 = vpop.f32.mrb[0].mxu0
  %v7391 = vadd.f32 %v7246, %v7390
  %v7392 = vpop.f32.mrb[0].mxu0
  %7393 = vmatprep.mubr.f32.mxu0 %v6853
  %7394 = vmatmul.mubr.f32.gmra.mrb[0].mxu0 %v6852
  %v7395 = vpop.f32.mrb[0].mxu0
  %v7396 = vadd.f32 %v7251, %v7395
  %v7397 = vpop.f32.mrb[0].mxu0
  %7398 = vmatprep.mubr.f32.mxu0 %v6861
  %7399 = vmatmul.mubr.f32.gmra.mrb[0].mxu0 %v6860
  %v7400 = vpop.f32.mrb[0].mxu0
  %v7401 = vadd.f32 %v7256, %v7400
  %v7402 = vpop.f32.mrb[0].mxu0
  %7403 = vmatprep.mubr.f32.mxu0 %v6869
  %7404 = vmatmul.mubr.f32.gmra.mrb[0].mxu0 %v6868
  %v7405 = vpop.f32.mrb[0].mxu0
  %v7406 = vadd.f32 %v7261, %v7405
  %v7407 = vpop.f32.mrb[0].mxu0
  %7408 = vmatprep.mubr.f32.mxu0 %v6877
  %7409 = vmatmul.mubr.f32.gmra.mrb[0].mxu0 %v6876
  %v7410 = vpop.f32.mrb[0].mxu0
  %v7411 = vadd.f32 %v7266, %v7410
  %v7412 = vpop.f32.mrb[0].mxu0
  %7413 = vmatprep.mubr.f32.mxu0 %v6885
  %7414 = vmatmul.mubr.f32.gmra.mrb[0].mxu0 %v6884
  %v7415 = vpop.f32.mrb[0].mxu0
  %v7416 = vadd.f32 %v7271, %v7415
  %v7417 = vpop.f32.mrb[0].mxu0
  %7418 = vdwg.mxu0
  %7419 = vmatprep.subr.mxu0 0.0
  %7420 = vmatpush1.msra.mxu0 %v6728
  %7421 = vmatprep.subr.mxu0 0.0
  %7422 = vmatpush1.msra.mxu0 %v6729
  %7423 = vmatprep.subr.mxu0 0.0
  %7424 = vmatpush1.msra.mxu0 %v6730
  %7425 = vmatprep.subr.mxu0 0.0
  %7426 = vmatpush1.msra.mxu0 %v6731
  %7427 = vmatprep.subr.mxu0 0.0
  %7428 = vmatpush1.msra.mxu0 %v6732
  %7429 = vmatprep.subr.mxu0 0.0
  %7430 = vmatpush1.msra.mxu0 %v6733
  %7431 = vmatprep.subr.mxu0 0.0
  %7432 = vmatpush1.msra.mxu0 %v6734
  %7433 = vmatprep.subr.mxu0 0.0
  %7434 = vmatpush1.msra.mxu0 %v6735
  %7435 = vmatprep.subr.mxu0 0.0
  %7436 = vmatpush1.msra.mxu0 %v6736
  %7437 = vmatprep.subr.mxu0 0.0
  %7438 = vmatpush1.msra.mxu0 %v6737
  %7439 = vmatprep.subr.mxu0 0.0
  %7440 = vmatpush1.msra.mxu0 %v6738
  %7441 = vmatprep.subr.mxu0 0.0
  %7442 = vmatpush1.msra.mxu0 %v6739
  %7443 = vmatprep.subr.mxu0 0.0
  %7444 = vmatpush1.msra.mxu0 %v6740
  %7445 = vmatprep.subr.mxu0 0.0
  %7446 = vmatpush1.msra.mxu0 %v6741
  %7447 = vmatprep.subr.mxu0 0.0
  %7448 = vmatpush1.msra.mxu0 %v6742
  %7449 = vmatprep.subr.mxu0 0.0
  %7450 = vmatpush1.msra.mxu0 %v6743
  %7451 = vmatprep.subr.mxu0 0.0
  %7452 = vmatpush1.msra.mxu0 %v6744
  %7453 = vmatprep.subr.mxu0 0.0
  %7454 = vmatpush1.msra.mxu0 %v6745
  %7455 = vmatprep.subr.mxu0 0.0
  %7456 = vmatpush1.msra.mxu0 %v6746
  %7457 = vmatprep.subr.mxu0 0.0
  %7458 = vmatpush1.msra.mxu0 %v6747
  %7459 = vmatprep.subr.mxu0 0.0
  %7460 = vmatpush1.msra.mxu0 %v6748
  %7461 = vmatprep.subr.mxu0 0.0
  %7462 = vmatpush1.msra.mxu0 %v6749
  %7463 = vmatprep.subr.mxu0 0.0
  %7464 = vmatpush1.msra.mxu0 %v6750
  %7465 = vmatprep.subr.mxu0 0.0
  %7466 = vmatpush1.msra.mxu0 %v6751
  %7467 = vmatprep.subr.mxu0 0.0
  %7468 = vmatpush1.msra.mxu0 %v6752
  %7469 = vmatprep.subr.mxu0 0.0
  %7470 = vmatpush1.msra.mxu0 %v6753
  %7471 = vmatprep.subr.mxu0 0.0
  %7472 = vmatpush1.msra.mxu0 %v6754
  %7473 = vmatprep.subr.mxu0 0.0
  %7474 = vmatpush1.msra.mxu0 %v6755
  %7475 = vmatprep.subr.mxu0 0.0
  %7476 = vmatpush1.msra.mxu0 %v6756
  %7477 = vmatprep.subr.mxu0 0.0
  %7478 = vmatpush1.msra.mxu0 %v6757
  %7479 = vmatprep.subr.mxu0 0.0
  %7480 = vmatpush1.msra.mxu0 %v6758
  %7481 = vmatprep.subr.mxu0 0.0
  %7482 = vmatpush1.msra.mxu0 %v6759
  %7483 = vmatprep.mubr.f32.mxu0 %v6767
  %7484 = vmatmul.mubr.f32.gmra.mrb[0].mxu0 %v6766
  %v7485 = vpop.f32.mrb[0].mxu0
  %v7486 = vadd.f32 %v7341, %v7485
  %v7487 = vpop.f32.mrb[0].mxu0
  %7488 = vmatprep.mubr.f32.mxu0 %v6775
  %7489 = vmatmul.mubr.f32.gmra.mrb[0].mxu0 %v6774
  %v7490 = vpop.f32.mrb[0].mxu0
  %v7491 = vadd.f32 %v7346, %v7490
  %v7492 = vpop.f32.mrb[0].mxu0
  %7493 = vmatprep.mubr.f32.mxu0 %v6783
  %7494 = vmatmul.mubr.f32.gmra.mrb[0].mxu0 %v6782
  %v7495 = vpop.f32.mrb[0].mxu0
  %v7496 = vadd.f32 %v7351, %v7495
  %v7497 = vpop.f32.mrb[0].mxu0
  %7498 = vmatprep.mubr.f32.mxu0 %v6791
  %7499 = vmatmul.mubr.f32.gmra.mrb[0].mxu0 %v6790
  %v7500 = vpop.f32.mrb[0].mxu0
  %v7501 = vadd.f32 %v7356, %v7500
  %v7502 = vpop.f32.mrb[0].mxu0
  %7503 = vmatprep.mubr.f32.mxu0 %v6799
  %7504 = vmatmul.mubr.f32.gmra.mrb[0].mxu0 %v6798
  %v7505 = vpop.f32.mrb[0].mxu0
  %v7506 = vadd.f32 %v7361, %v7505
  %v7507 = vpop.f32.mrb[0].mxu0
  %7508 = vmatprep.mubr.f32.mxu0 %v6807
  %7509 = vmatmul.mubr.f32.gmra.mrb[0].mxu0 %v6806
  %v7510 = vpop.f32.mrb[0].mxu0
  %v7511 = vadd.f32 %v7366, %v7510
  %v7512 = vpop.f32.mrb[0].mxu0
  %7513 = vmatprep.mubr.f32.mxu0 %v6815
  %7514 = vmatmul.mubr.f32.gmra.mrb[0].mxu0 %v6814
  %v7515 = vpop.f32.mrb[0].mxu0
  %v7516 = vadd.f32 %v7371, %v7515
  %v7517 = vpop.f32.mrb[0].mxu0
  %7518 = vmatprep.mubr.f32.mxu0 %v6823
  %7519 = vmatmul.mubr.f32.gmra.mrb[0].mxu0 %v6822
  %v7520 = vpop.f32.mrb[0].mxu0
  %v7521 = vadd.f32 %v7376, %v7520
  %v7522 = vpop.f32.mrb[0].mxu0
  %7523 = vmatprep.mubr.f32.mxu0 %v6831
  %7524 = vmatmul.mubr.f32.gmra.mrb[0].mxu0 %v6830
  %v7525 = vpop.f32.mrb[0].mxu0
  %v7526 = vadd.f32 %v7381, %v7525
  %v7527 = vpop.f32.mrb[0].mxu0
  %7528 = vmatprep.mubr.f32.mxu0 %v6839
  %7529 = vmatmul.mubr.f32.gmra.mrb[0].mxu0 %v6838
  %v7530 = vpop.f32.mrb[0].mxu0
  %v7531 = vadd.f32 %v7386, %v7530
  %v7532 = vpop.f32.mrb[0].mxu0
  %7533 = vmatprep.mubr.f32.mxu0 %v6847
  %7534 = vmatmul.mubr.f32.gmra.mrb[0].mxu0 %v6846
  %v7535 = vpop.f32.mrb[0].mxu0
  %v7536 = vadd.f32 %v7391, %v7535
  %v7537 = vpop.f32.mrb[0].mxu0
  %7538 = vmatprep.mubr.f32.mxu0 %v6855
  %7539 = vmatmul.mubr.f32.gmra.mrb[0].mxu0 %v6854
  %v7540 = vpop.f32.mrb[0].mxu0
  %v7541 = vadd.f32 %v7396, %v7540
  %v7542 = vpop.f32.mrb[0].mxu0
  %7543 = vmatprep.mubr.f32.mxu0 %v6863
  %7544 = vmatmul.mubr.f32.gmra.mrb[0].mxu0 %v6862
  %v7545 = vpop.f32.mrb[0].mxu0
  %v7546 = vadd.f32 %v7401, %v7545
  %v7547 = vpop.f32.mrb[0].mxu0
  %7548 = vmatprep.mubr.f32.mxu0 %v6871
  %7549 = vmatmul.mubr.f32.gmra.mrb[0].mxu0 %v6870
  %v7550 = vpop.f32.mrb[0].mxu0
  %v7551 = vadd.f32 %v7406, %v7550
  %v7552 = vpop.f32.mrb[0].mxu0
  %7553 = vmatprep.mubr.f32.mxu0 %v6879
  %7554 = vmatmul.mubr.f32.gmra.mrb[0].mxu0 %v6878
  %v7555 = vpop.f32.mrb[0].mxu0
  %v7556 = vadd.f32 %v7411, %v7555
  %v7557 = vpop.f32.mrb[0].mxu0
  %7558 = vmatprep.mubr.f32.mxu0 %v6887
  %7559 = vmatmul.mubr.f32.gmra.mrb[0].mxu0 %v6886
  %v7560 = vpop.f32.mrb[0].mxu0
  %v7561 = vadd.f32 %v7416, %v7560
  %v7562 = vpop.f32.mrb[0].mxu0
  %7563 = vdwg.mxu0
  %v7564 = vxor.u32 %v7486, 2147483648
  %v7565 = vxor.u32 %v7491, 2147483648
  %v7566 = vxor.u32 %v7496, 2147483648
  %v7567 = vxor.u32 %v7501, 2147483648
  %v7568 = vxor.u32 %v7506, 2147483648
  %v7569 = vxor.u32 %v7511, 2147483648
  %v7570 = vxor.u32 %v7516, 2147483648
  %v7571 = vxor.u32 %v7521, 2147483648
  %v7572 = vxor.u32 %v7526, 2147483648
  %v7573 = vxor.u32 %v7531, 2147483648
  %v7574 = vxor.u32 %v7536, 2147483648
  %v7575 = vxor.u32 %v7541, 2147483648
  %v7576 = vxor.u32 %v7546, 2147483648
  %v7577 = vxor.u32 %v7551, 2147483648
  %v7578 = vxor.u32 %v7556, 2147483648
  %v7579 = vxor.u32 %v7561, 2147483648
  %v7580 = vmul.f32 %v7564, 1.442695
  %v7581 = vpow.pop %v7580
  %v7582 = vmul.f32 %v7565, 1.442695
  %v7583 = vpow.pop %v7582
  %v7584 = vmul.f32 %v7566, 1.442695
  %v7585 = vpow.pop %v7584
  %v7586 = vmul.f32 %v7567, 1.442695
  %v7587 = vpow.pop %v7586
  %v7588 = vmul.f32 %v7568, 1.442695
  %v7589 = vpow.pop %v7588
  %v7590 = vmul.f32 %v7569, 1.442695
  %v7591 = vpow.pop %v7590
  %v7592 = vmul.f32 %v7570, 1.442695
  %v7593 = vpow.pop %v7592
  %v7594 = vmul.f32 %v7571, 1.442695
  %v7595 = vpow.pop %v7594
  %v7596 = vmul.f32 %v7572, 1.442695
  %v7597 = vpow.pop %v7596
  %v7598 = vmul.f32 %v7573, 1.442695
  %v7599 = vpow.pop %v7598
  %v7600 = vmul.f32 %v7574, 1.442695
  %v7601 = vpow.pop %v7600
  %v7602 = vmul.f32 %v7575, 1.442695
  %v7603 = vpow.pop %v7602
  %v7604 = vmul.f32 %v7576, 1.442695
  %v7605 = vpow.pop %v7604
  %v7606 = vmul.f32 %v7577, 1.442695
  %v7607 = vpow.pop %v7606
  %v7608 = vmul.f32 %v7578, 1.442695
  %v7609 = vpow.pop %v7608
  %v7610 = vmul.f32 %v7579, 1.442695
  %v7611 = vpow.pop %v7610
  %v7612 = vadd.f32 %v7581, 1.0
  %v7613 = vadd.f32 %v7583, 1.0
  %v7614 = vadd.f32 %v7585, 1.0
  %v7615 = vadd.f32 %v7587, 1.0
  %v7616 = vadd.f32 %v7589, 1.0
  %v7617 = vadd.f32 %v7591, 1.0
  %v7618 = vadd.f32 %v7593, 1.0
  %v7619 = vadd.f32 %v7595, 1.0
  %v7620 = vadd.f32 %v7597, 1.0
  %v7621 = vadd.f32 %v7599, 1.0
  %v7622 = vadd.f32 %v7601, 1.0
  %v7623 = vadd.f32 %v7603, 1.0
  %v7624 = vadd.f32 %v7605, 1.0
  %v7625 = vadd.f32 %v7607, 1.0
  %v7626 = vadd.f32 %v7609, 1.0
  %v7627 = vadd.f32 %v7611, 1.0
  %v7628 = vrcp.pop %v7612
  %v7629 = vmul.f32 1.0, %v7628
  %v7630 = vrcp.pop %v7613
  %v7631 = vmul.f32 1.0, %v7630
  %v7632 = vrcp.pop %v7614
  %v7633 = vmul.f32 1.0, %v7632
  %v7634 = vrcp.pop %v7615
  %v7635 = vmul.f32 1.0, %v7634
  %v7636 = vrcp.pop %v7616
  %v7637 = vmul.f32 1.0, %v7636
  %v7638 = vrcp.pop %v7617
  %v7639 = vmul.f32 1.0, %v7638
  %v7640 = vrcp.pop %v7618
  %v7641 = vmul.f32 1.0, %v7640
  %v7642 = vrcp.pop %v7619
  %v7643 = vmul.f32 1.0, %v7642
  %v7644 = vrcp.pop %v7620
  %v7645 = vmul.f32 1.0, %v7644
  %v7646 = vrcp.pop %v7621
  %v7647 = vmul.f32 1.0, %v7646
  %v7648 = vrcp.pop %v7622
  %v7649 = vmul.f32 1.0, %v7648
  %v7650 = vrcp.pop %v7623
  %v7651 = vmul.f32 1.0, %v7650
  %v7652 = vrcp.pop %v7624
  %v7653 = vmul.f32 1.0, %v7652
  %v7654 = vrcp.pop %v7625
  %v7655 = vmul.f32 1.0, %v7654
  %v7656 = vrcp.pop %v7626
  %v7657 = vmul.f32 1.0, %v7656
  %v7658 = vrcp.pop %v7627
  %v7659 = vmul.f32 1.0, %v7658
  %v7660 = vsub.f32 1.0, %v7629
  %v7661 = vsub.f32 1.0, %v7631
  %v7662 = vsub.f32 1.0, %v7633
  %v7663 = vsub.f32 1.0, %v7635
  %v7664 = vsub.f32 1.0, %v7637
  %v7665 = vsub.f32 1.0, %v7639
  %v7666 = vsub.f32 1.0, %v7641
  %v7667 = vsub.f32 1.0, %v7643
  %v7668 = vsub.f32 1.0, %v7645
  %v7669 = vsub.f32 1.0, %v7647
  %v7670 = vsub.f32 1.0, %v7649
  %v7671 = vsub.f32 1.0, %v7651
  %v7672 = vsub.f32 1.0, %v7653
  %v7673 = vsub.f32 1.0, %v7655
  %v7674 = vsub.f32 1.0, %v7657
  %v7675 = vsub.f32 1.0, %v7659
  %v7676 = vmul.f32 %v7486, %v7660
  %v7677 = vmul.f32 %v7491, %v7661
  %v7678 = vmul.f32 %v7496, %v7662
  %v7679 = vmul.f32 %v7501, %v7663
  %v7680 = vmul.f32 %v7506, %v7664
  %v7681 = vmul.f32 %v7511, %v7665
  %v7682 = vmul.f32 %v7516, %v7666
  %v7683 = vmul.f32 %v7521, %v7667
  %v7684 = vmul.f32 %v7526, %v7668
  %v7685 = vmul.f32 %v7531, %v7669
  %v7686 = vmul.f32 %v7536, %v7670
  %v7687 = vmul.f32 %v7541, %v7671
  %v7688 = vmul.f32 %v7546, %v7672
  %v7689 = vmul.f32 %v7551, %v7673
  %v7690 = vmul.f32 %v7556, %v7674
  %v7691 = vmul.f32 %v7561, %v7675
  %v7692 = vadd.f32 %v7676, 1.0
  %v7693 = vadd.f32 %v7677, 1.0
  %v7694 = vadd.f32 %v7678, 1.0
  %v7695 = vadd.f32 %v7679, 1.0
  %v7696 = vadd.f32 %v7680, 1.0
  %v7697 = vadd.f32 %v7681, 1.0
  %v7698 = vadd.f32 %v7682, 1.0
  %v7699 = vadd.f32 %v7683, 1.0
  %v7700 = vadd.f32 %v7684, 1.0
  %v7701 = vadd.f32 %v7685, 1.0
  %v7702 = vadd.f32 %v7686, 1.0
  %v7703 = vadd.f32 %v7687, 1.0
  %v7704 = vadd.f32 %v7688, 1.0
  %v7705 = vadd.f32 %v7689, 1.0
  %v7706 = vadd.f32 %v7690, 1.0
  %v7707 = vadd.f32 %v7691, 1.0
  %v7708 = vmul.f32 %v7629, %v7692
  %v7709 = vmul.f32 %v7631, %v7693
  %v7710 = vmul.f32 %v7633, %v7694
  %v7711 = vmul.f32 %v7635, %v7695
  %v7712 = vmul.f32 %v7637, %v7696
  %v7713 = vmul.f32 %v7639, %v7697
  %v7714 = vmul.f32 %v7641, %v7698
  %v7715 = vmul.f32 %v7643, %v7699
  %v7716 = vmul.f32 %v7645, %v7700
  %v7717 = vmul.f32 %v7647, %v7701
  %v7718 = vmul.f32 %v7649, %v7702
  %v7719 = vmul.f32 %v7651, %v7703
  %v7720 = vmul.f32 %v7653, %v7704
  %v7721 = vmul.f32 %v7655, %v7705
  %v7722 = vmul.f32 %v7657, %v7706
  %v7723 = vmul.f32 %v7659, %v7707
  %v7724 = vld [vmem:[%s5] sm:$0xff]
  %v7725 = vld [vmem:[%s5 + $0x8] sm:$0xff]
  %v7726 = vld [vmem:[%s5 + $0x10] sm:$0xff]
  %v7727 = vld [vmem:[%s5 + $0x18] sm:$0xff]
  %v7728 = vld [vmem:[%s5 + $0x20] sm:$0xff]
  %v7729 = vld [vmem:[%s5 + $0x28] sm:$0xff]
  %v7730 = vld [vmem:[%s5 + $0x30] sm:$0xff]
  %v7731 = vld [vmem:[%s5 + $0x38] sm:$0xff]
  %v7732 = vld [vmem:[%s5 + $0x40] sm:$0xff]
  %v7733 = vld [vmem:[%s5 + $0x48] sm:$0xff]
  %v7734 = vld [vmem:[%s5 + $0x50] sm:$0xff]
  %v7735 = vld [vmem:[%s5 + $0x58] sm:$0xff]
  %v7736 = vld [vmem:[%s5 + $0x60] sm:$0xff]
  %v7737 = vld [vmem:[%s5 + $0x68] sm:$0xff]
  %v7738 = vld [vmem:[%s5 + $0x70] sm:$0xff]
  %v7739 = vld [vmem:[%s5 + $0x78] sm:$0xff]
  %v7740 = vld [vmem:[%s6] sm:$0xff]
  %v7741 = vld [vmem:[%s6 + $0x8] sm:$0xff]
  %v7742 = vld [vmem:[%s6 + $0x10] sm:$0xff]
  %v7743 = vld [vmem:[%s6 + $0x18] sm:$0xff]
  %v7744 = vld [vmem:[%s6 + $0x20] sm:$0xff]
  %v7745 = vld [vmem:[%s6 + $0x28] sm:$0xff]
  %v7746 = vld [vmem:[%s6 + $0x30] sm:$0xff]
  %v7747 = vld [vmem:[%s6 + $0x38] sm:$0xff]
  %v7748 = vld [vmem:[%s6 + $0x40] sm:$0xff]
  %v7749 = vld [vmem:[%s6 + $0x48] sm:$0xff]
  %v7750 = vld [vmem:[%s6 + $0x50] sm:$0xff]
  %v7751 = vld [vmem:[%s6 + $0x58] sm:$0xff]
  %v7752 = vld [vmem:[%s6 + $0x60] sm:$0xff]
  %v7753 = vld [vmem:[%s6 + $0x68] sm:$0xff]
  %v7754 = vld [vmem:[%s6 + $0x70] sm:$0xff]
  %v7755 = vld [vmem:[%s6 + $0x78] sm:$0xff]
  %7757 = vset.pattern.permute.xlu0 0
  %7758 = vperm.xlu0 %7757, %v7740
  %v7759 = vpop.permute.xlu0 %7758
  %7762 = vset.pattern.permute.xlu0 0
  %7763 = vperm.xlu0 %7762, %v7741
  %v7764 = vpop.permute.xlu0 %7763
  %7767 = vset.pattern.permute.xlu0 0
  %7768 = vperm.xlu0 %7767, %v7742
  %v7769 = vpop.permute.xlu0 %7768
  %7772 = vset.pattern.permute.xlu0 0
  %7773 = vperm.xlu0 %7772, %v7743
  %v7774 = vpop.permute.xlu0 %7773
  %7777 = vset.pattern.permute.xlu0 0
  %7778 = vperm.xlu0 %7777, %v7744
  %v7779 = vpop.permute.xlu0 %7778
  %7782 = vset.pattern.permute.xlu0 0
  %7783 = vperm.xlu0 %7782, %v7745
  %v7784 = vpop.permute.xlu0 %7783
  %7787 = vset.pattern.permute.xlu0 0
  %7788 = vperm.xlu0 %7787, %v7746
  %v7789 = vpop.permute.xlu0 %7788
  %7792 = vset.pattern.permute.xlu0 0
  %7793 = vperm.xlu0 %7792, %v7747
  %v7794 = vpop.permute.xlu0 %7793
  %7797 = vset.pattern.permute.xlu0 0
  %7798 = vperm.xlu0 %7797, %v7748
  %v7799 = vpop.permute.xlu0 %7798
  %7802 = vset.pattern.permute.xlu0 0
  %7803 = vperm.xlu0 %7802, %v7749
  %v7804 = vpop.permute.xlu0 %7803
  %7807 = vset.pattern.permute.xlu0 0
  %7808 = vperm.xlu0 %7807, %v7750
  %v7809 = vpop.permute.xlu0 %7808
  %7812 = vset.pattern.permute.xlu0 0
  %7813 = vperm.xlu0 %7812, %v7751
  %v7814 = vpop.permute.xlu0 %7813
  %7817 = vset.pattern.permute.xlu0 0
  %7818 = vperm.xlu0 %7817, %v7752
  %v7819 = vpop.permute.xlu0 %7818
  %7822 = vset.pattern.permute.xlu0 0
  %7823 = vperm.xlu0 %7822, %v7753
  %v7824 = vpop.permute.xlu0 %7823
  %7827 = vset.pattern.permute.xlu0 0
  %7828 = vperm.xlu0 %7827, %v7754
  %v7829 = vpop.permute.xlu0 %7828
  %7832 = vset.pattern.permute.xlu0 0
  %7833 = vperm.xlu0 %7832, %v7755
  %v7834 = vpop.permute.xlu0 %7833
  %7836 = vmatprep.subr.mxu0 0.0
  %7837 = vmatpush1.msra.mxu0 %v7708
  %7838 = vmatprep.subr.mxu0 0.0
  %7839 = vmatpush1.msra.mxu0 %v7709
  %7840 = vmatprep.subr.mxu0 0.0
  %7841 = vmatpush1.msra.mxu0 %v7710
  %7842 = vmatprep.subr.mxu0 0.0
  %7843 = vmatpush1.msra.mxu0 %v7711
  %7844 = vmatprep.subr.mxu0 0.0
  %7845 = vmatpush1.msra.mxu0 %v7712
  %7846 = vmatprep.subr.mxu0 0.0
  %7847 = vmatpush1.msra.mxu0 %v7713
  %7848 = vmatprep.subr.mxu0 0.0
  %7849 = vmatpush1.msra.mxu0 %v7714
  %7850 = vmatprep.subr.mxu0 0.0
  %7851 = vmatpush1.msra.mxu0 %v7715
  %7852 = vmatprep.subr.mxu0 0.0
  %7853 = vmatpush1.msra.mxu0 %v7716
  %7854 = vmatprep.subr.mxu0 0.0
  %7855 = vmatpush1.msra.mxu0 %v7717
  %7856 = vmatprep.subr.mxu0 0.0
  %7857 = vmatpush1.msra.mxu0 %v7718
  %7858 = vmatprep.subr.mxu0 0.0
  %7859 = vmatpush1.msra.mxu0 %v7719
  %7860 = vmatprep.subr.mxu0 0.0
  %7861 = vmatpush1.msra.mxu0 %v7720
  %7862 = vmatprep.subr.mxu0 0.0
  %7863 = vmatpush1.msra.mxu0 %v7721
  %7864 = vmatprep.subr.mxu0 0.0
  %7865 = vmatpush1.msra.mxu0 %v7722
  %7866 = vmatprep.subr.mxu0 0.0
  %7867 = vmatpush1.msra.mxu0 %v7723
  %7868 = vmatprep.subr.mxu0 0.0
  %7869 = vmatpush1.msra.mxu0 0.0
  %7870 = vmatprep.subr.mxu0 0.0
  %7871 = vmatpush1.msra.mxu0 0.0
  %7872 = vmatprep.subr.mxu0 0.0
  %7873 = vmatpush1.msra.mxu0 0.0
  %7874 = vmatprep.subr.mxu0 0.0
  %7875 = vmatpush1.msra.mxu0 0.0
  %7876 = vmatprep.subr.mxu0 0.0
  %7877 = vmatpush1.msra.mxu0 0.0
  %7878 = vmatprep.subr.mxu0 0.0
  %7879 = vmatpush1.msra.mxu0 0.0
  %7880 = vmatprep.subr.mxu0 0.0
  %7881 = vmatpush1.msra.mxu0 0.0
  %7882 = vmatprep.subr.mxu0 0.0
  %7883 = vmatpush1.msra.mxu0 0.0
  %7884 = vmatprep.subr.mxu0 0.0
  %7885 = vmatpush1.msra.mxu0 0.0
  %7886 = vmatprep.subr.mxu0 0.0
  %7887 = vmatpush1.msra.mxu0 0.0
  %7888 = vmatprep.subr.mxu0 0.0
  %7889 = vmatpush1.msra.mxu0 0.0
  %7890 = vmatprep.subr.mxu0 0.0
  %7891 = vmatpush1.msra.mxu0 0.0
  %7892 = vmatprep.subr.mxu0 0.0
  %7893 = vmatpush1.msra.mxu0 0.0
  %7894 = vmatprep.subr.mxu0 0.0
  %7895 = vmatpush1.msra.mxu0 0.0
  %7896 = vmatprep.subr.mxu0 0.0
  %7897 = vmatpush1.msra.mxu0 0.0
  %7898 = vmatprep.subr.mxu0 0.0
  %7899 = vmatpush1.msra.mxu0 0.0
  %7900 = vmatprep.mubr.f32.mxu0 0.0
  %7901 = vmatmul.mubr.f32.gmra.mrb[0].mxu0 %v7724
  %v7902 = vpop.f32.mrb[0].mxu0
  %v7903 = vadd.f32 %v7759, %v7902
  %v7904 = vpop.f32.mrb[0].mxu0
  %7905 = vmatprep.mubr.f32.mxu0 0.0
  %7906 = vmatmul.mubr.f32.gmra.mrb[0].mxu0 %v7725
  %v7907 = vpop.f32.mrb[0].mxu0
  %v7908 = vadd.f32 %v7764, %v7907
  %v7909 = vpop.f32.mrb[0].mxu0
  %7910 = vmatprep.mubr.f32.mxu0 0.0
  %7911 = vmatmul.mubr.f32.gmra.mrb[0].mxu0 %v7726
  %v7912 = vpop.f32.mrb[0].mxu0
  %v7913 = vadd.f32 %v7769, %v7912
  %v7914 = vpop.f32.mrb[0].mxu0
  %7915 = vmatprep.mubr.f32.mxu0 0.0
  %7916 = vmatmul.mubr.f32.gmra.mrb[0].mxu0 %v7727
  %v7917 = vpop.f32.mrb[0].mxu0
  %v7918 = vadd.f32 %v7774, %v7917
  %v7919 = vpop.f32.mrb[0].mxu0
  %7920 = vmatprep.mubr.f32.mxu0 0.0
  %7921 = vmatmul.mubr.f32.gmra.mrb[0].mxu0 %v7728
  %v7922 = vpop.f32.mrb[0].mxu0
  %v7923 = vadd.f32 %v7779, %v7922
  %v7924 = vpop.f32.mrb[0].mxu0
  %7925 = vmatprep.mubr.f32.mxu0 0.0
  %7926 = vmatmul.mubr.f32.gmra.mrb[0].mxu0 %v7729
  %v7927 = vpop.f32.mrb[0].mxu0
  %v7928 = vadd.f32 %v7784, %v7927
  %v7929 = vpop.f32.mrb[0].mxu0
  %7930 = vmatprep.mubr.f32.mxu0 0.0
  %7931 = vmatmul.mubr.f32.gmra.mrb[0].mxu0 %v7730
  %v7932 = vpop.f32.mrb[0].mxu0
  %v7933 = vadd.f32 %v7789, %v7932
  %v7934 = vpop.f32.mrb[0].mxu0
  %7935 = vmatprep.mubr.f32.mxu0 0.0
  %7936 = vmatmul.mubr.f32.gmra.mrb[0].mxu0 %v7731
  %v7937 = vpop.f32.mrb[0].mxu0
  %v7938 = vadd.f32 %v7794, %v7937
  %v7939 = vpop.f32.mrb[0].mxu0
  %7940 = vmatprep.mubr.f32.mxu0 0.0
  %7941 = vmatmul.mubr.f32.gmra.mrb[0].mxu0 %v7732
  %v7942 = vpop.f32.mrb[0].mxu0
  %v7943 = vadd.f32 %v7799, %v7942
  %v7944 = vpop.f32.mrb[0].mxu0
  %7945 = vmatprep.mubr.f32.mxu0 0.0
  %7946 = vmatmul.mubr.f32.gmra.mrb[0].mxu0 %v7733
  %v7947 = vpop.f32.mrb[0].mxu0
  %v7948 = vadd.f32 %v7804, %v7947
  %v7949 = vpop.f32.mrb[0].mxu0
  %7950 = vmatprep.mubr.f32.mxu0 0.0
  %7951 = vmatmul.mubr.f32.gmra.mrb[0].mxu0 %v7734
  %v7952 = vpop.f32.mrb[0].mxu0
  %v7953 = vadd.f32 %v7809, %v7952
  %v7954 = vpop.f32.mrb[0].mxu0
  %7955 = vmatprep.mubr.f32.mxu0 0.0
  %7956 = vmatmul.mubr.f32.gmra.mrb[0].mxu0 %v7735
  %v7957 = vpop.f32.mrb[0].mxu0
  %v7958 = vadd.f32 %v7814, %v7957
  %v7959 = vpop.f32.mrb[0].mxu0
  %7960 = vmatprep.mubr.f32.mxu0 0.0
  %7961 = vmatmul.mubr.f32.gmra.mrb[0].mxu0 %v7736
  %v7962 = vpop.f32.mrb[0].mxu0
  %v7963 = vadd.f32 %v7819, %v7962
  %v7964 = vpop.f32.mrb[0].mxu0
  %7965 = vmatprep.mubr.f32.mxu0 0.0
  %7966 = vmatmul.mubr.f32.gmra.mrb[0].mxu0 %v7737
  %v7967 = vpop.f32.mrb[0].mxu0
  %v7968 = vadd.f32 %v7824, %v7967
  %v7969 = vpop.f32.mrb[0].mxu0
  %7970 = vmatprep.mubr.f32.mxu0 0.0
  %7971 = vmatmul.mubr.f32.gmra.mrb[0].mxu0 %v7738
  %v7972 = vpop.f32.mrb[0].mxu0
  %v7973 = vadd.f32 %v7829, %v7972
  %v7974 = vpop.f32.mrb[0].mxu0
  %7975 = vmatprep.mubr.f32.mxu0 0.0
  %7976 = vmatmul.mubr.f32.gmra.mrb[0].mxu0 %v7739
  %v7977 = vpop.f32.mrb[0].mxu0
  %v7978 = vadd.f32 %v7834, %v7977
  %v7979 = vpop.f32.mrb[0].mxu0
  %7980 = vdwg.mxu0
  %7981 = vst [vmem:[%s7] sm:$0xff] %v7903
  %7982 = vst [vmem:[%s7 + $0x8] sm:$0xff] %v7908
  %7983 = vst [vmem:[%s7 + $0x10] sm:$0xff] %v7913
  %7984 = vst [vmem:[%s7 + $0x18] sm:$0xff] %v7918
  %7985 = vst [vmem:[%s7 + $0x20] sm:$0xff] %v7923
  %7986 = vst [vmem:[%s7 + $0x28] sm:$0xff] %v7928
  %7987 = vst [vmem:[%s7 + $0x30] sm:$0xff] %v7933
  %7988 = vst [vmem:[%s7 + $0x38] sm:$0xff] %v7938
  %7989 = vst [vmem:[%s7 + $0x40] sm:$0xff] %v7943
  %7990 = vst [vmem:[%s7 + $0x48] sm:$0xff] %v7948
  %7991 = vst [vmem:[%s7 + $0x50] sm:$0xff] %v7953
  %7992 = vst [vmem:[%s7 + $0x58] sm:$0xff] %v7958
  %7993 = vst [vmem:[%s7 + $0x60] sm:$0xff] %v7963
  %7994 = vst [vmem:[%s7 + $0x68] sm:$0xff] %v7968
  %7995 = vst [vmem:[%s7 + $0x70] sm:$0xff] %v7973
  %7996 = vst [vmem:[%s7 + $0x78] sm:$0xff] %v7978
  // Predicated region
  $region30: #{ac_network_forward.1} parent=0 // pred_check
    _
  $region31: #{ac_network_forward.1} parent=0 // pred_check_branch
    %7998 = sbr.rel (0) target = $region33
  $region32: #{ac_network_forward.1} parent=0 // pred_region
    _
  $region33: #{ac_network_forward.1} parent=0 // pred_fallthru
    _
  // Predicated region
  $region34: #{ac_network_forward.1} parent=0 // pred_check
    _
  $region35: #{ac_network_forward.1} parent=0 // pred_check_branch
    %8000 = sbr.rel (0) target = $region37
  $region36: #{ac_network_forward.1} parent=0 // pred_region
    _
  $region37: #{ac_network_forward.1} parent=0 // pred_fallthru
    _

</llo_original>
